<compile_context>
chip_gen: v6e
topology: v6e:2x2x1
jax: 0.10.0
libtpu: 0.0.40
codegen_flags: <defaults>
</compile_context>

<pallas_src>
import jax
import jax.numpy as jnp
from jax import lax
from jax.experimental import pallas as pl
from jax.experimental.pallas import tpu as pltpu


_WPAD = 8  # sublane-aligned halo width on the W axis of the VMEM pad scratches


# ----------------------------------------------------------------------------
# Fused Pallas kernel (one grid step == one batch element, everything in VMEM)
# ----------------------------------------------------------------------------
def make_xception_block_kernel(H, W, Ho, Wo, stride, dilation,
                               first_relu, has_residual, final_relu):
    HW = H * W
    HoWo = Ho * Wo
    f32 = jnp.float32

    def depthwise3x3(pad_ref, h, dw_w, dil):
        """Depthwise 3x3 (stride 1, `dil` dilation, SAME) via a zero-bordered
        VMEM scratch.  The interior store is sublane-aligned (offset _WPAD);
        the 9 taps are cheap value slices of the re-loaded padded tile."""
        pad_ref[...] = jnp.zeros_like(pad_ref)        # keeps halo zero; makes
        pad_ref[dil:dil + H, _WPAD:_WPAD + W, :] = h  # grid steps independent
        xp = pad_ref[...]                             # (H+2*dil, W+2*_WPAD, C)
        acc = None
        for kw in range(3):
            c0 = _WPAD - dil + kw * dil
            xw = xp[:, c0:c0 + W, :]                  # (H+2*dil, W, C)
            for kh in range(3):
                tap = xw[kh * dil:kh * dil + H] * dw_w[kh, kw]  # (1,C) bcast
                acc = tap if acc is None else acc + tap
        return acc                                    # (H, W, C) f32

    def kernel(*refs):
        it = iter(refs)
        x_ref = next(it)
        sel_ref = next(it) if stride > 1 else None
        ds = [tuple(next(it) for _ in range(6)) for _ in range(3)]
        if has_residual:
            res_w_ref, res_s_ref, res_b_ref = (next(it) for _ in range(3))
        out_ref = next(it)
        pad1_ref, pad2_ref, pad3_ref = next(it), next(it), next(it)

        x = x_ref[0]                                  # (H, W, Cin) NHWC tile
        h = jnp.maximum(x, 0.0) if first_relu else x

        # ---- DSConv 1 & 2 (stride 1, dilation 1):
        #      depthwise -> BN -> ReLU -> pointwise (MXU) -> BN -> block ReLU.
        for pad_ref, (dw_w, dw_s, dw_b, pw_w, pw_s, pw_b) in (
                (pad1_ref, ds[0]), (pad2_ref, ds[1])):
            a = depthwise3x3(pad_ref, h, dw_w[...], 1)
            a = jnp.maximum(a * dw_s[...] + dw_b[...], 0.0)
            y = jnp.dot(a.reshape(HW, a.shape[-1]), pw_w[...],
                        preferred_element_type=f32)
            y = jnp.maximum(y * pw_s[...] + pw_b[...], 0.0)
            h = y.reshape(H, W, y.shape[-1])

        # ---- DSConv 3 (stride, dilation): only strided positions reach the
        #      pointwise matmul / BN / residual / store.
        dw_w, dw_s, dw_b, pw_wt, pw_s, pw_b = ds[2]
        a = depthwise3x3(pad3_ref, h, dw_w[...], dilation)
        a = jnp.maximum(a * dw_s[...] + dw_b[...], 0.0)
        a = a.reshape(HW, a.shape[-1])
        if stride > 1:
            # in-kernel spatial subsample as a tiny 0/1 selector matmul
            a = jnp.dot(sel_ref[...], a, preferred_element_type=f32)  # (HoWo,C1)

        # pointwise 1x1 produced directly in channel-major (C2, Ho*Wo) form:
        # lane-dense store + the wrapper only reshapes (already NCHW order).
        yt = lax.dot_general(pw_wt[...], a, (((1,), (1,)), ((), ())),
                             preferred_element_type=f32)              # (C2,HoWo)
        yt = yt * pw_s[...] + pw_b[...]

        if has_residual:
            xf = x.reshape(HW, x.shape[-1])           # pre-first-ReLU input
            if stride > 1:
                xf = jnp.dot(sel_ref[...], xf, preferred_element_type=f32)
            rt = lax.dot_general(res_w_ref[...], xf, (((1,), (1,)), ((), ())),
                                 preferred_element_type=f32)          # (C2,HoWo)
            yt = yt + rt * res_s_ref[...] + res_b_ref[...]
        if final_relu:
            yt = jnp.maximum(yt, 0.0)

        out_ref[...] = yt.reshape(1, yt.shape[0], yt.shape[1])

    return kernel


# ----------------------------------------------------------------------------
# Wrapper: assembles inputs / BlockSpecs and calls the fused kernel once.
# ----------------------------------------------------------------------------
def _const_spec(arr):
    shape = arr.shape
    return pl.BlockSpec(shape, lambda n: (0,) * len(shape))


def xception_block_forward(x_nchw, params, stride, residual_type,
                           first_relu=True, dilation=1):
    """XceptionBlock forward (inference-mode BN).  NCHW in / NCHW out."""
    assert residual_type in ('conv', 'sum', 'none')
    assert dilation <= _WPAD
    N, Cin, H, W = x_nchw.shape
    C0 = params['ds1']['pw_w'].shape[1]
    C1 = params['ds2']['pw_w'].shape[1]
    C2 = params['ds3']['pw_w'].shape[1]
    Ho = (H - 1) // stride + 1
    Wo = (W - 1) // stride + 1
    f32 = jnp.float32

    x = jnp.transpose(x_nchw, (0, 2, 3, 1)).astype(f32)   # NCHW -> NHWC

    has_residual = residual_type in ('conv', 'sum')
    final_relu = residual_type == 'none'
    if residual_type == 'sum':
        # identity shortcut: PyTorch requires matching shapes here
        assert stride == 1 and Cin == C2, "'sum' residual needs stride=1, Cin==Cout"

    inputs = [x]
    in_specs = [pl.BlockSpec((1, H, W, Cin), lambda n: (n, 0, 0, 0))]

    def add(arr):
        arr = arr.astype(f32)
        inputs.append(arr)
        in_specs.append(_const_spec(arr))

    if stride > 1:
        # 0/1 selector picking output position (i,j) <- input (stride*i, stride*j)
        r = jnp.arange(Ho * Wo)
        tgt = (r // Wo) * (stride * W) + (r % Wo) * stride
        add((jnp.arange(H * W)[None, :] == tgt[:, None]).astype(f32))

    for name in ('ds1', 'ds2'):
        p = params[name]
        for a in (p['dw_w'], p['dw_scale'], p['dw_bias'],
                  p['pw_w'], p['pw_scale'], p['pw_bias']):
            add(a)
    p = params['ds3']
    for a in (p['dw_w'], p['dw_scale'], p['dw_bias'],
              p['pw_w'].T,                          # transposed for (C2,HoWo) output
              p['pw_scale'].reshape(C2, 1), p['pw_bias'].reshape(C2, 1)):
        add(a)

    if residual_type == 'conv':
        rp = params['res']
        add(rp['w'].T)                              # (C2, Cin)
        add(rp['scale'].reshape(C2, 1))
        add(rp['bias'].reshape(C2, 1))
    elif residual_type == 'sum':
        add(jnp.eye(C2, dtype=f32))                 # identity 1x1 "conv"
        add(jnp.ones((C2, 1), f32))
        add(jnp.zeros((C2, 1), f32))

    kernel = make_xception_block_kernel(H, W, Ho, Wo, stride, dilation,
                                        first_relu, has_residual, final_relu)

    out = pl.pallas_call(
        kernel,
        out_shape=jax.ShapeDtypeStruct((N, C2, Ho * Wo), f32),
        grid=(N,),
        in_specs=in_specs,
        out_specs=pl.BlockSpec((1, C2, Ho * Wo), lambda n: (n, 0, 0)),
        scratch_shapes=[                            # zero-bordered pad buffers
            pltpu.VMEM((H + 2, W + 2 * _WPAD, Cin), f32),
            pltpu.VMEM((H + 2, W + 2 * _WPAD, C0), f32),
            pltpu.VMEM((H + 2 * dilation, W + 2 * _WPAD, C1), f32),
        ],
        compiler_params=pltpu.CompilerParams(
            dimension_semantics=("parallel",)),     # v7x: split batch over 2 TCs
    )(*inputs)

    # (N, C2, Ho*Wo) is already channel-major -> plain reshape gives NCHW.
    return out.reshape(N, C2, Ho, Wo)


# ----------------------------------------------------------------------------
# Deterministic synthetic parameters (BatchNorm folded to scale/bias)
# ----------------------------------------------------------------------------
def _bn_fold(key, c, eps=1e-5):
    k1, k2, k3, k4 = jax.random.split(key, 4)
    gamma = 1.0 + 0.1 * jax.random.normal(k1, (1, c), jnp.float32)
    beta = 0.1 * jax.random.normal(k2, (1, c), jnp.float32)
    mean = 0.1 * jax.random.normal(k3, (1, c), jnp.float32)
    var = 0.5 + jnp.abs(jax.random.normal(k4, (1, c), jnp.float32))
    scale = gamma / jnp.sqrt(var + eps)
    bias = beta - mean * scale
    return scale, bias


def _dsconv_params(key, cin, cout):
    k1, k2, k3, k4 = jax.random.split(key, 4)
    dw_w = 0.3 * jax.random.normal(k1, (3, 3, 1, cin), jnp.float32)
    dw_scale, dw_bias = _bn_fold(k2, cin)
    pw_w = jax.random.normal(k3, (cin, cout), jnp.float32) / jnp.sqrt(cin)
    pw_scale, pw_bias = _bn_fold(k4, cout)
    return dict(dw_w=dw_w, dw_scale=dw_scale, dw_bias=dw_bias,
                pw_w=pw_w, pw_scale=pw_scale, pw_bias=pw_bias)


def init_params(key, in_ch, out_chs, residual_type):
    k1, k2, k3, k4, k5 = jax.random.split(key, 5)
    params = {
        'ds1': _dsconv_params(k1, in_ch, out_chs[0]),
        'ds2': _dsconv_params(k2, out_chs[0], out_chs[1]),
        'ds3': _dsconv_params(k3, out_chs[1], out_chs[2]),
    }
    if residual_type == 'conv':
        w = jax.random.normal(k4, (in_ch, out_chs[2]),
                              jnp.float32) / jnp.sqrt(in_ch)
        scale, bias = _bn_fold(k5, out_chs[2])
        params['res'] = dict(w=w, scale=scale, bias=bias)
    return params


# ----------------------------------------------------------------------------
# Pure-JAX reference (for correctness check)
# ----------------------------------------------------------------------------
def _dsconv_ref(x, p, stride, dilation, pre_relu, post_relu):
    if pre_relu:
        x = jnp.maximum(x, 0.0)
    cin = x.shape[-1]
    dw = lax.conv_general_dilated(
        x, p['dw_w'], window_strides=(stride, stride),
        padding=[(dilation, dilation), (dilation, dilation)],
        rhs_dilation=(dilation, dilation),
        dimension_numbers=('NHWC', 'HWIO', 'NHWC'),
        feature_group_count=cin)
    dw = jnp.maximum(dw * p['dw_scale'] + p['dw_bias'], 0.0)
    pw = jnp.einsum('nhwc,cd->nhwd', dw, p['pw_w'])
    pw = pw * p['pw_scale'] + p['pw_bias']
    if post_relu:
        pw = jnp.maximum(pw, 0.0)
    return pw


def xception_block_ref(x_nchw, params, stride, residual_type,
                       first_relu=True, dilation=1):
    x = jnp.transpose(x_nchw, (0, 2, 3, 1))
    residual = x
    h = _dsconv_ref(x, params['ds1'], 1, 1, first_relu, True)
    h = _dsconv_ref(h, params['ds2'], 1, 1, False, True)
    h = _dsconv_ref(h, params['ds3'], stride, dilation, False,
                    residual_type == 'none')
    if residual_type == 'conv':
        r = residual[:, ::stride, ::stride, :]
        r = jnp.einsum('nhwc,cd->nhwd', r, params['res']['w'])
        r = r * params['res']['scale'] + params['res']['bias']
        h = h + r
    elif residual_type == 'sum':
        h = h + residual
    return jnp.transpose(h, (0, 3, 1, 2))


# ----------------------------------------------------------------------------
# Demo
# ----------------------------------------------------------------------------
if __name__ == "__main__":
    key = jax.random.PRNGKey(0)

    def run_case(k, N, in_ch, out_chs, H, W, stride, residual_type,
                 first_relu, dilation):
        kx, kp = jax.random.split(k)
        x = jax.random.normal(kx, (N, in_ch, H, W), jnp.float32)
        params = init_params(kp, in_ch, out_chs, residual_type)
        y = jax.block_until_ready(
            xception_block_forward(x, params, stride, residual_type,
                                   first_relu, dilation))
        Ho = (H - 1) // stride + 1
        Wo = (W - 1) // stride + 1
        assert y.shape == (N, out_chs[2], Ho, Wo), y.shape
        y_ref = xception_block_ref(x, params, stride, residual_type,
                                   first_relu, dilation)
        err = float(jnp.max(jnp.abs(y - y_ref)))
        assert err < 1e-3, f"{residual_type}/stride{stride}: max abs err {err}"

    k1, k2, k3 = jax.random.split(key, 3)
    # main demo: 'conv' residual, stride 2
    run_case(k1, 2, 4, [8, 8, 8], 16, 16, 2, 'conv', True, 1)
    # identity ('sum') residual, stride 1
    run_case(k2, 2, 8, [8, 8, 8], 16, 16, 1, 'sum', True, 1)
    # 'none' residual, dilated, no first ReLU
    run_case(k3, 2, 8, [8, 8, 8], 16, 16, 1, 'none', False, 2)

    print("KERNEL_OK")
</pallas_src>

<mosaic_0001>
module attributes {stable_mosaic.version = 11 : i64} {
  func.func @kernel(%arg0: i32, %arg1: memref<1x16x16x4xf32, #tpu.memory_space<vmem>>, %arg2: memref<64x256xf32, #tpu.memory_space<vmem>>, %arg3: memref<3x3x1x4xf32, #tpu.memory_space<vmem>>, %arg4: memref<1x4xf32, #tpu.memory_space<vmem>>, %arg5: memref<1x4xf32, #tpu.memory_space<vmem>>, %arg6: memref<4x8xf32, #tpu.memory_space<vmem>>, %arg7: memref<1x8xf32, #tpu.memory_space<vmem>>, %arg8: memref<1x8xf32, #tpu.memory_space<vmem>>, %arg9: memref<3x3x1x8xf32, #tpu.memory_space<vmem>>, %arg10: memref<1x8xf32, #tpu.memory_space<vmem>>, %arg11: memref<1x8xf32, #tpu.memory_space<vmem>>, %arg12: memref<8x8xf32, #tpu.memory_space<vmem>>, %arg13: memref<1x8xf32, #tpu.memory_space<vmem>>, %arg14: memref<1x8xf32, #tpu.memory_space<vmem>>, %arg15: memref<3x3x1x8xf32, #tpu.memory_space<vmem>>, %arg16: memref<1x8xf32, #tpu.memory_space<vmem>>, %arg17: memref<1x8xf32, #tpu.memory_space<vmem>>, %arg18: memref<8x8xf32, #tpu.memory_space<vmem>>, %arg19: memref<8x1xf32, #tpu.memory_space<vmem>>, %arg20: memref<8x1xf32, #tpu.memory_space<vmem>>, %arg21: memref<8x4xf32, #tpu.memory_space<vmem>>, %arg22: memref<8x1xf32, #tpu.memory_space<vmem>>, %arg23: memref<8x1xf32, #tpu.memory_space<vmem>>, %arg24: memref<1x8x64xf32, #tpu.memory_space<vmem>>, %arg25: memref<18x32x4xf32, #tpu.memory_space<vmem>>, %arg26: memref<18x32x8xf32, #tpu.memory_space<vmem>>, %arg27: memref<18x32x8xf32, #tpu.memory_space<vmem>>) attributes {dimension_semantics = [#tpu.dimension_semantics<parallel>], iteration_bounds = array<i64: 2>, scalar_prefetch = 0 : i64, scratch_operands = 3 : i64, tpu.core_type = #tpu.core_type<tc>, window_params = [{transform_indices = @transform_0, window_bounds = array<i64: 1, 16, 16, 4>}, {pipeline_mode = #tpu.pipeline_mode<synchronous>, transform_indices = @transform_1, window_bounds = array<i64: 64, 256>}, {pipeline_mode = #tpu.pipeline_mode<synchronous>, transform_indices = @transform_2, window_bounds = array<i64: 3, 3, 1, 4>}, {pipeline_mode = #tpu.pipeline_mode<synchronous>, transform_indices = @transform_3, window_bounds = array<i64: 1, 4>}, {pipeline_mode = #tpu.pipeline_mode<synchronous>, transform_indices = @transform_4, window_bounds = array<i64: 1, 4>}, {pipeline_mode = #tpu.pipeline_mode<synchronous>, transform_indices = @transform_5, window_bounds = array<i64: 4, 8>}, {pipeline_mode = #tpu.pipeline_mode<synchronous>, transform_indices = @transform_6, window_bounds = array<i64: 1, 8>}, {pipeline_mode = #tpu.pipeline_mode<synchronous>, transform_indices = @transform_7, window_bounds = array<i64: 1, 8>}, {pipeline_mode = #tpu.pipeline_mode<synchronous>, transform_indices = @transform_8, window_bounds = array<i64: 3, 3, 1, 8>}, {pipeline_mode = #tpu.pipeline_mode<synchronous>, transform_indices = @transform_9, window_bounds = array<i64: 1, 8>}, {pipeline_mode = #tpu.pipeline_mode<synchronous>, transform_indices = @transform_10, window_bounds = array<i64: 1, 8>}, {pipeline_mode = #tpu.pipeline_mode<synchronous>, transform_indices = @transform_11, window_bounds = array<i64: 8, 8>}, {pipeline_mode = #tpu.pipeline_mode<synchronous>, transform_indices = @transform_12, window_bounds = array<i64: 1, 8>}, {pipeline_mode = #tpu.pipeline_mode<synchronous>, transform_indices = @transform_13, window_bounds = array<i64: 1, 8>}, {pipeline_mode = #tpu.pipeline_mode<synchronous>, transform_indices = @transform_14, window_bounds = array<i64: 3, 3, 1, 8>}, {pipeline_mode = #tpu.pipeline_mode<synchronous>, transform_indices = @transform_15, window_bounds = array<i64: 1, 8>}, {pipeline_mode = #tpu.pipeline_mode<synchronous>, transform_indices = @transform_16, window_bounds = array<i64: 1, 8>}, {pipeline_mode = #tpu.pipeline_mode<synchronous>, transform_indices = @transform_17, window_bounds = array<i64: 8, 8>}, {pipeline_mode = #tpu.pipeline_mode<synchronous>, transform_indices = @transform_18, window_bounds = array<i64: 8, 1>}, {pipeline_mode = #tpu.pipeline_mode<synchronous>, transform_indices = @transform_19, window_bounds = array<i64: 8, 1>}, {pipeline_mode = #tpu.pipeline_mode<synchronous>, transform_indices = @transform_20, window_bounds = array<i64: 8, 4>}, {pipeline_mode = #tpu.pipeline_mode<synchronous>, transform_indices = @transform_21, window_bounds = array<i64: 8, 1>}, {pipeline_mode = #tpu.pipeline_mode<synchronous>, transform_indices = @transform_22, window_bounds = array<i64: 8, 1>}, {transform_indices = @transform_23, window_bounds = array<i64: 1, 8, 64>}]} {
    %c0 = arith.constant 0 : index
    %c0_0 = arith.constant 0 : index
    %c0_1 = arith.constant 0 : index
    %c0_2 = arith.constant 0 : index
    %0 = vector.load %arg1[%c0, %c0_0, %c0_1, %c0_2] : memref<1x16x16x4xf32, #tpu.memory_space<vmem>>, vector<1x16x16x4xf32>
    %1 = vector.shape_cast %0 : vector<1x16x16x4xf32> to vector<16x16x4xf32>
    %cst = arith.constant 0.000000e+00 : f32
    %2 = vector.broadcast %cst : f32 to vector<16x16x4xf32>
    %3 = arith.maximumf %1, %2 : vector<16x16x4xf32>
    %c0_3 = arith.constant 0 : index
    %c0_4 = arith.constant 0 : index
    %c0_5 = arith.constant 0 : index
    %c0_6 = arith.constant 0 : index
    %4 = vector.load %arg3[%c0_3, %c0_4, %c0_5, %c0_6] : memref<3x3x1x4xf32, #tpu.memory_space<vmem>>, vector<3x3x1x4xf32>
    %cst_7 = arith.constant 0.000000e+00 : f32
    %5 = vector.broadcast %cst_7 : f32 to vector<18x32x4xf32>
    %c0_8 = arith.constant 0 : index
    %c0_9 = arith.constant 0 : index
    %c0_10 = arith.constant 0 : index
    %6 = vector.load %arg25[%c0_8, %c0_9, %c0_10] : memref<18x32x4xf32, #tpu.memory_space<vmem>>, vector<18x32x4xf32>
    tpu.vector_store %arg25[%c0_8, %c0_9, %c0_10], %5 {strides = array<i32>} : memref<18x32x4xf32, #tpu.memory_space<vmem>>, vector<18x32x4xf32>,
    %c1 = arith.constant 1 : index
    %c8 = arith.constant 8 : index
    %c0_11 = arith.constant 0 : index
    %7 = vector.load %arg25[%c1, %c8, %c0_11] : memref<18x32x4xf32, #tpu.memory_space<vmem>>, vector<16x16x4xf32>
    tpu.vector_store %arg25[%c1, %c8, %c0_11], %3 {strides = array<i32>} : memref<18x32x4xf32, #tpu.memory_space<vmem>>, vector<16x16x4xf32>,
    %c0_12 = arith.constant 0 : index
    %c0_13 = arith.constant 0 : index
    %c0_14 = arith.constant 0 : index
    %8 = vector.load %arg25[%c0_12, %c0_13, %c0_14] : memref<18x32x4xf32, #tpu.memory_space<vmem>>, vector<18x32x4xf32>
    %9 = vector.extract_strided_slice %8 {offsets = [0, 7, 0], sizes = [18, 16, 4], strides = [1, 1, 1]} : vector<18x32x4xf32> to vector<18x16x4xf32>
    %10 = vector.extract_strided_slice %9 {offsets = [0, 0, 0], sizes = [16, 16, 4], strides = [1, 1, 1]} : vector<18x16x4xf32> to vector<16x16x4xf32>
    %11 = vector.extract_strided_slice %4 {offsets = [0, 0, 0, 0], sizes = [1, 1, 1, 4], strides = [1, 1, 1, 1]} : vector<3x3x1x4xf32> to vector<1x1x1x4xf32>
    %12 = vector.shape_cast %11 : vector<1x1x1x4xf32> to vector<1x4xf32>
    %13 = vector.shape_cast %12 : vector<1x4xf32> to vector<1x1x4xf32>
    %14 = vector.broadcast %13 : vector<1x1x4xf32> to vector<16x16x4xf32>
    %15 = arith.mulf %10, %14 : vector<16x16x4xf32>
    %16 = vector.extract_strided_slice %9 {offsets = [1, 0, 0], sizes = [16, 16, 4], strides = [1, 1, 1]} : vector<18x16x4xf32> to vector<16x16x4xf32>
    %17 = vector.extract_strided_slice %4 {offsets = [1, 0, 0, 0], sizes = [1, 1, 1, 4], strides = [1, 1, 1, 1]} : vector<3x3x1x4xf32> to vector<1x1x1x4xf32>
    %18 = vector.shape_cast %17 : vector<1x1x1x4xf32> to vector<1x4xf32>
    %19 = vector.shape_cast %18 : vector<1x4xf32> to vector<1x1x4xf32>
    %20 = vector.broadcast %19 : vector<1x1x4xf32> to vector<16x16x4xf32>
    %21 = arith.mulf %16, %20 : vector<16x16x4xf32>
    %22 = arith.addf %15, %21 : vector<16x16x4xf32>
    %23 = vector.extract_strided_slice %9 {offsets = [2, 0, 0], sizes = [16, 16, 4], strides = [1, 1, 1]} : vector<18x16x4xf32> to vector<16x16x4xf32>
    %24 = vector.extract_strided_slice %4 {offsets = [2, 0, 0, 0], sizes = [1, 1, 1, 4], strides = [1, 1, 1, 1]} : vector<3x3x1x4xf32> to vector<1x1x1x4xf32>
    %25 = vector.shape_cast %24 : vector<1x1x1x4xf32> to vector<1x4xf32>
    %26 = vector.shape_cast %25 : vector<1x4xf32> to vector<1x1x4xf32>
    %27 = vector.broadcast %26 : vector<1x1x4xf32> to vector<16x16x4xf32>
    %28 = arith.mulf %23, %27 : vector<16x16x4xf32>
    %29 = arith.addf %22, %28 : vector<16x16x4xf32>
    %30 = vector.extract_strided_slice %8 {offsets = [0, 8, 0], sizes = [18, 16, 4], strides = [1, 1, 1]} : vector<18x32x4xf32> to vector<18x16x4xf32>
    %31 = vector.extract_strided_slice %30 {offsets = [0, 0, 0], sizes = [16, 16, 4], strides = [1, 1, 1]} : vector<18x16x4xf32> to vector<16x16x4xf32>
    %32 = vector.extract_strided_slice %4 {offsets = [0, 1, 0, 0], sizes = [1, 1, 1, 4], strides = [1, 1, 1, 1]} : vector<3x3x1x4xf32> to vector<1x1x1x4xf32>
    %33 = vector.shape_cast %32 : vector<1x1x1x4xf32> to vector<1x4xf32>
    %34 = vector.shape_cast %33 : vector<1x4xf32> to vector<1x1x4xf32>
    %35 = vector.broadcast %34 : vector<1x1x4xf32> to vector<16x16x4xf32>
    %36 = arith.mulf %31, %35 : vector<16x16x4xf32>
    %37 = arith.addf %29, %36 : vector<16x16x4xf32>
    %38 = vector.extract_strided_slice %30 {offsets = [1, 0, 0], sizes = [16, 16, 4], strides = [1, 1, 1]} : vector<18x16x4xf32> to vector<16x16x4xf32>
    %39 = vector.extract_strided_slice %4 {offsets = [1, 1, 0, 0], sizes = [1, 1, 1, 4], strides = [1, 1, 1, 1]} : vector<3x3x1x4xf32> to vector<1x1x1x4xf32>
    %40 = vector.shape_cast %39 : vector<1x1x1x4xf32> to vector<1x4xf32>
    %41 = vector.shape_cast %40 : vector<1x4xf32> to vector<1x1x4xf32>
    %42 = vector.broadcast %41 : vector<1x1x4xf32> to vector<16x16x4xf32>
    %43 = arith.mulf %38, %42 : vector<16x16x4xf32>
    %44 = arith.addf %37, %43 : vector<16x16x4xf32>
    %45 = vector.extract_strided_slice %30 {offsets = [2, 0, 0], sizes = [16, 16, 4], strides = [1, 1, 1]} : vector<18x16x4xf32> to vector<16x16x4xf32>
    %46 = vector.extract_strided_slice %4 {offsets = [2, 1, 0, 0], sizes = [1, 1, 1, 4], strides = [1, 1, 1, 1]} : vector<3x3x1x4xf32> to vector<1x1x1x4xf32>
    %47 = vector.shape_cast %46 : vector<1x1x1x4xf32> to vector<1x4xf32>
    %48 = vector.shape_cast %47 : vector<1x4xf32> to vector<1x1x4xf32>
    %49 = vector.broadcast %48 : vector<1x1x4xf32> to vector<16x16x4xf32>
    %50 = arith.mulf %45, %49 : vector<16x16x4xf32>
    %51 = arith.addf %44, %50 : vector<16x16x4xf32>
    %52 = vector.extract_strided_slice %8 {offsets = [0, 9, 0], sizes = [18, 16, 4], strides = [1, 1, 1]} : vector<18x32x4xf32> to vector<18x16x4xf32>
    %53 = vector.extract_strided_slice %52 {offsets = [0, 0, 0], sizes = [16, 16, 4], strides = [1, 1, 1]} : vector<18x16x4xf32> to vector<16x16x4xf32>
    %54 = vector.extract_strided_slice %4 {offsets = [0, 2, 0, 0], sizes = [1, 1, 1, 4], strides = [1, 1, 1, 1]} : vector<3x3x1x4xf32> to vector<1x1x1x4xf32>
    %55 = vector.shape_cast %54 : vector<1x1x1x4xf32> to vector<1x4xf32>
    %56 = vector.shape_cast %55 : vector<1x4xf32> to vector<1x1x4xf32>
    %57 = vector.broadcast %56 : vector<1x1x4xf32> to vector<16x16x4xf32>
    %58 = arith.mulf %53, %57 : vector<16x16x4xf32>
    %59 = arith.addf %51, %58 : vector<16x16x4xf32>
    %60 = vector.extract_strided_slice %52 {offsets = [1, 0, 0], sizes = [16, 16, 4], strides = [1, 1, 1]} : vector<18x16x4xf32> to vector<16x16x4xf32>
    %61 = vector.extract_strided_slice %4 {offsets = [1, 2, 0, 0], sizes = [1, 1, 1, 4], strides = [1, 1, 1, 1]} : vector<3x3x1x4xf32> to vector<1x1x1x4xf32>
    %62 = vector.shape_cast %61 : vector<1x1x1x4xf32> to vector<1x4xf32>
    %63 = vector.shape_cast %62 : vector<1x4xf32> to vector<1x1x4xf32>
    %64 = vector.broadcast %63 : vector<1x1x4xf32> to vector<16x16x4xf32>
    %65 = arith.mulf %60, %64 : vector<16x16x4xf32>
    %66 = arith.addf %59, %65 : vector<16x16x4xf32>
    %67 = vector.extract_strided_slice %52 {offsets = [2, 0, 0], sizes = [16, 16, 4], strides = [1, 1, 1]} : vector<18x16x4xf32> to vector<16x16x4xf32>
    %68 = vector.extract_strided_slice %4 {offsets = [2, 2, 0, 0], sizes = [1, 1, 1, 4], strides = [1, 1, 1, 1]} : vector<3x3x1x4xf32> to vector<1x1x1x4xf32>
    %69 = vector.shape_cast %68 : vector<1x1x1x4xf32> to vector<1x4xf32>
    %70 = vector.shape_cast %69 : vector<1x4xf32> to vector<1x1x4xf32>
    %71 = vector.broadcast %70 : vector<1x1x4xf32> to vector<16x16x4xf32>
    %72 = arith.mulf %67, %71 : vector<16x16x4xf32>
    %73 = arith.addf %66, %72 : vector<16x16x4xf32>
    %c0_15 = arith.constant 0 : index
    %c0_16 = arith.constant 0 : index
    %74 = vector.load %arg4[%c0_15, %c0_16] : memref<1x4xf32, #tpu.memory_space<vmem>>, vector<1x4xf32>
    %75 = vector.shape_cast %74 : vector<1x4xf32> to vector<1x1x4xf32>
    %76 = vector.broadcast %75 : vector<1x1x4xf32> to vector<16x16x4xf32>
    %77 = arith.mulf %73, %76 : vector<16x16x4xf32>
    %c0_17 = arith.constant 0 : index
    %c0_18 = arith.constant 0 : index
    %78 = vector.load %arg5[%c0_17, %c0_18] : memref<1x4xf32, #tpu.memory_space<vmem>>, vector<1x4xf32>
    %79 = vector.shape_cast %78 : vector<1x4xf32> to vector<1x1x4xf32>
    %80 = vector.broadcast %79 : vector<1x1x4xf32> to vector<16x16x4xf32>
    %81 = arith.addf %77, %80 : vector<16x16x4xf32>
    %cst_19 = arith.constant 0.000000e+00 : f32
    %82 = vector.broadcast %cst_19 : f32 to vector<16x16x4xf32>
    %83 = arith.maximumf %81, %82 : vector<16x16x4xf32>
    %84 = vector.shape_cast %83 : vector<16x16x4xf32> to vector<256x4xf32>
    %c0_20 = arith.constant 0 : index
    %c0_21 = arith.constant 0 : index
    %85 = vector.load %arg6[%c0_20, %c0_21] : memref<4x8xf32, #tpu.memory_space<vmem>>, vector<4x8xf32>
    %cst_22 = arith.constant dense<0.000000e+00> : vector<256x8xf32>
    %86 = tpu.matmul %84, %85, %cst_22 {dimension_numbers = #tpu.dot_dimension_numbers<[1], [0], [0], [1], [0, 0, 1, 1], [], []>} : vector<256x4xf32>, vector<4x8xf32>, vector<256x8xf32> -> vector<256x8xf32>
    %c0_23 = arith.constant 0 : index
    %c0_24 = arith.constant 0 : index
    %87 = vector.load %arg7[%c0_23, %c0_24] : memref<1x8xf32, #tpu.memory_space<vmem>>, vector<1x8xf32>
    %88 = vector.broadcast %87 : vector<1x8xf32> to vector<256x8xf32>
    %89 = arith.mulf %86, %88 : vector<256x8xf32>
    %c0_25 = arith.constant 0 : index
    %c0_26 = arith.constant 0 : index
    %90 = vector.load %arg8[%c0_25, %c0_26] : memref<1x8xf32, #tpu.memory_space<vmem>>, vector<1x8xf32>
    %91 = vector.broadcast %90 : vector<1x8xf32> to vector<256x8xf32>
    %92 = arith.addf %89, %91 : vector<256x8xf32>
    %cst_27 = arith.constant 0.000000e+00 : f32
    %93 = vector.broadcast %cst_27 : f32 to vector<256x8xf32>
    %94 = arith.maximumf %92, %93 : vector<256x8xf32>
    %95 = vector.shape_cast %94 : vector<256x8xf32> to vector<16x16x8xf32>
    %c0_28 = arith.constant 0 : index
    %c0_29 = arith.constant 0 : index
    %c0_30 = arith.constant 0 : index
    %c0_31 = arith.constant 0 : index
    %96 = vector.load %arg9[%c0_28, %c0_29, %c0_30, %c0_31] : memref<3x3x1x8xf32, #tpu.memory_space<vmem>>, vector<3x3x1x8xf32>
    %cst_32 = arith.constant 0.000000e+00 : f32
    %97 = vector.broadcast %cst_32 : f32 to vector<18x32x8xf32>
    %c0_33 = arith.constant 0 : index
    %c0_34 = arith.constant 0 : index
    %c0_35 = arith.constant 0 : index
    %98 = vector.load %arg26[%c0_33, %c0_34, %c0_35] : memref<18x32x8xf32, #tpu.memory_space<vmem>>, vector<18x32x8xf32>
    tpu.vector_store %arg26[%c0_33, %c0_34, %c0_35], %97 {strides = array<i32>} : memref<18x32x8xf32, #tpu.memory_space<vmem>>, vector<18x32x8xf32>,
    %c1_36 = arith.constant 1 : index
    %c8_37 = arith.constant 8 : index
    %c0_38 = arith.constant 0 : index
    %99 = vector.load %arg26[%c1_36, %c8_37, %c0_38] : memref<18x32x8xf32, #tpu.memory_space<vmem>>, vector<16x16x8xf32>
    tpu.vector_store %arg26[%c1_36, %c8_37, %c0_38], %95 {strides = array<i32>} : memref<18x32x8xf32, #tpu.memory_space<vmem>>, vector<16x16x8xf32>,
    %c0_39 = arith.constant 0 : index
    %c0_40 = arith.constant 0 : index
    %c0_41 = arith.constant 0 : index
    %100 = vector.load %arg26[%c0_39, %c0_40, %c0_41] : memref<18x32x8xf32, #tpu.memory_space<vmem>>, vector<18x32x8xf32>
    %101 = vector.extract_strided_slice %100 {offsets = [0, 7, 0], sizes = [18, 16, 8], strides = [1, 1, 1]} : vector<18x32x8xf32> to vector<18x16x8xf32>
    %102 = vector.extract_strided_slice %101 {offsets = [0, 0, 0], sizes = [16, 16, 8], strides = [1, 1, 1]} : vector<18x16x8xf32> to vector<16x16x8xf32>
    %103 = vector.extract_strided_slice %96 {offsets = [0, 0, 0, 0], sizes = [1, 1, 1, 8], strides = [1, 1, 1, 1]} : vector<3x3x1x8xf32> to vector<1x1x1x8xf32>
    %104 = vector.shape_cast %103 : vector<1x1x1x8xf32> to vector<1x8xf32>
    %105 = vector.shape_cast %104 : vector<1x8xf32> to vector<1x1x8xf32>
    %106 = vector.broadcast %105 : vector<1x1x8xf32> to vector<16x16x8xf32>
    %107 = arith.mulf %102, %106 : vector<16x16x8xf32>
    %108 = vector.extract_strided_slice %101 {offsets = [1, 0, 0], sizes = [16, 16, 8], strides = [1, 1, 1]} : vector<18x16x8xf32> to vector<16x16x8xf32>
    %109 = vector.extract_strided_slice %96 {offsets = [1, 0, 0, 0], sizes = [1, 1, 1, 8], strides = [1, 1, 1, 1]} : vector<3x3x1x8xf32> to vector<1x1x1x8xf32>
    %110 = vector.shape_cast %109 : vector<1x1x1x8xf32> to vector<1x8xf32>
    %111 = vector.shape_cast %110 : vector<1x8xf32> to vector<1x1x8xf32>
    %112 = vector.broadcast %111 : vector<1x1x8xf32> to vector<16x16x8xf32>
    %113 = arith.mulf %108, %112 : vector<16x16x8xf32>
    %114 = arith.addf %107, %113 : vector<16x16x8xf32>
    %115 = vector.extract_strided_slice %101 {offsets = [2, 0, 0], sizes = [16, 16, 8], strides = [1, 1, 1]} : vector<18x16x8xf32> to vector<16x16x8xf32>
    %116 = vector.extract_strided_slice %96 {offsets = [2, 0, 0, 0], sizes = [1, 1, 1, 8], strides = [1, 1, 1, 1]} : vector<3x3x1x8xf32> to vector<1x1x1x8xf32>
    %117 = vector.shape_cast %116 : vector<1x1x1x8xf32> to vector<1x8xf32>
    %118 = vector.shape_cast %117 : vector<1x8xf32> to vector<1x1x8xf32>
    %119 = vector.broadcast %118 : vector<1x1x8xf32> to vector<16x16x8xf32>
    %120 = arith.mulf %115, %119 : vector<16x16x8xf32>
    %121 = arith.addf %114, %120 : vector<16x16x8xf32>
    %122 = vector.extract_strided_slice %100 {offsets = [0, 8, 0], sizes = [18, 16, 8], strides = [1, 1, 1]} : vector<18x32x8xf32> to vector<18x16x8xf32>
    %123 = vector.extract_strided_slice %122 {offsets = [0, 0, 0], sizes = [16, 16, 8], strides = [1, 1, 1]} : vector<18x16x8xf32> to vector<16x16x8xf32>
    %124 = vector.extract_strided_slice %96 {offsets = [0, 1, 0, 0], sizes = [1, 1, 1, 8], strides = [1, 1, 1, 1]} : vector<3x3x1x8xf32> to vector<1x1x1x8xf32>
    %125 = vector.shape_cast %124 : vector<1x1x1x8xf32> to vector<1x8xf32>
    %126 = vector.shape_cast %125 : vector<1x8xf32> to vector<1x1x8xf32>
    %127 = vector.broadcast %126 : vector<1x1x8xf32> to vector<16x16x8xf32>
    %128 = arith.mulf %123, %127 : vector<16x16x8xf32>
    %129 = arith.addf %121, %128 : vector<16x16x8xf32>
    %130 = vector.extract_strided_slice %122 {offsets = [1, 0, 0], sizes = [16, 16, 8], strides = [1, 1, 1]} : vector<18x16x8xf32> to vector<16x16x8xf32>
    %131 = vector.extract_strided_slice %96 {offsets = [1, 1, 0, 0], sizes = [1, 1, 1, 8], strides = [1, 1, 1, 1]} : vector<3x3x1x8xf32> to vector<1x1x1x8xf32>
    %132 = vector.shape_cast %131 : vector<1x1x1x8xf32> to vector<1x8xf32>
    %133 = vector.shape_cast %132 : vector<1x8xf32> to vector<1x1x8xf32>
    %134 = vector.broadcast %133 : vector<1x1x8xf32> to vector<16x16x8xf32>
    %135 = arith.mulf %130, %134 : vector<16x16x8xf32>
    %136 = arith.addf %129, %135 : vector<16x16x8xf32>
    %137 = vector.extract_strided_slice %122 {offsets = [2, 0, 0], sizes = [16, 16, 8], strides = [1, 1, 1]} : vector<18x16x8xf32> to vector<16x16x8xf32>
    %138 = vector.extract_strided_slice %96 {offsets = [2, 1, 0, 0], sizes = [1, 1, 1, 8], strides = [1, 1, 1, 1]} : vector<3x3x1x8xf32> to vector<1x1x1x8xf32>
    %139 = vector.shape_cast %138 : vector<1x1x1x8xf32> to vector<1x8xf32>
    %140 = vector.shape_cast %139 : vector<1x8xf32> to vector<1x1x8xf32>
    %141 = vector.broadcast %140 : vector<1x1x8xf32> to vector<16x16x8xf32>
    %142 = arith.mulf %137, %141 : vector<16x16x8xf32>
    %143 = arith.addf %136, %142 : vector<16x16x8xf32>
    %144 = vector.extract_strided_slice %100 {offsets = [0, 9, 0], sizes = [18, 16, 8], strides = [1, 1, 1]} : vector<18x32x8xf32> to vector<18x16x8xf32>
    %145 = vector.extract_strided_slice %144 {offsets = [0, 0, 0], sizes = [16, 16, 8], strides = [1, 1, 1]} : vector<18x16x8xf32> to vector<16x16x8xf32>
    %146 = vector.extract_strided_slice %96 {offsets = [0, 2, 0, 0], sizes = [1, 1, 1, 8], strides = [1, 1, 1, 1]} : vector<3x3x1x8xf32> to vector<1x1x1x8xf32>
    %147 = vector.shape_cast %146 : vector<1x1x1x8xf32> to vector<1x8xf32>
    %148 = vector.shape_cast %147 : vector<1x8xf32> to vector<1x1x8xf32>
    %149 = vector.broadcast %148 : vector<1x1x8xf32> to vector<16x16x8xf32>
    %150 = arith.mulf %145, %149 : vector<16x16x8xf32>
    %151 = arith.addf %143, %150 : vector<16x16x8xf32>
    %152 = vector.extract_strided_slice %144 {offsets = [1, 0, 0], sizes = [16, 16, 8], strides = [1, 1, 1]} : vector<18x16x8xf32> to vector<16x16x8xf32>
    %153 = vector.extract_strided_slice %96 {offsets = [1, 2, 0, 0], sizes = [1, 1, 1, 8], strides = [1, 1, 1, 1]} : vector<3x3x1x8xf32> to vector<1x1x1x8xf32>
    %154 = vector.shape_cast %153 : vector<1x1x1x8xf32> to vector<1x8xf32>
    %155 = vector.shape_cast %154 : vector<1x8xf32> to vector<1x1x8xf32>
    %156 = vector.broadcast %155 : vector<1x1x8xf32> to vector<16x16x8xf32>
    %157 = arith.mulf %152, %156 : vector<16x16x8xf32>
    %158 = arith.addf %151, %157 : vector<16x16x8xf32>
    %159 = vector.extract_strided_slice %144 {offsets = [2, 0, 0], sizes = [16, 16, 8], strides = [1, 1, 1]} : vector<18x16x8xf32> to vector<16x16x8xf32>
    %160 = vector.extract_strided_slice %96 {offsets = [2, 2, 0, 0], sizes = [1, 1, 1, 8], strides = [1, 1, 1, 1]} : vector<3x3x1x8xf32> to vector<1x1x1x8xf32>
    %161 = vector.shape_cast %160 : vector<1x1x1x8xf32> to vector<1x8xf32>
    %162 = vector.shape_cast %161 : vector<1x8xf32> to vector<1x1x8xf32>
    %163 = vector.broadcast %162 : vector<1x1x8xf32> to vector<16x16x8xf32>
    %164 = arith.mulf %159, %163 : vector<16x16x8xf32>
    %165 = arith.addf %158, %164 : vector<16x16x8xf32>
    %c0_42 = arith.constant 0 : index
    %c0_43 = arith.constant 0 : index
    %166 = vector.load %arg10[%c0_42, %c0_43] : memref<1x8xf32, #tpu.memory_space<vmem>>, vector<1x8xf32>
    %167 = vector.shape_cast %166 : vector<1x8xf32> to vector<1x1x8xf32>
    %168 = vector.broadcast %167 : vector<1x1x8xf32> to vector<16x16x8xf32>
    %169 = arith.mulf %165, %168 : vector<16x16x8xf32>
    %c0_44 = arith.constant 0 : index
    %c0_45 = arith.constant 0 : index
    %170 = vector.load %arg11[%c0_44, %c0_45] : memref<1x8xf32, #tpu.memory_space<vmem>>, vector<1x8xf32>
    %171 = vector.shape_cast %170 : vector<1x8xf32> to vector<1x1x8xf32>
    %172 = vector.broadcast %171 : vector<1x1x8xf32> to vector<16x16x8xf32>
    %173 = arith.addf %169, %172 : vector<16x16x8xf32>
    %cst_46 = arith.constant 0.000000e+00 : f32
    %174 = vector.broadcast %cst_46 : f32 to vector<16x16x8xf32>
    %175 = arith.maximumf %173, %174 : vector<16x16x8xf32>
    %176 = vector.shape_cast %175 : vector<16x16x8xf32> to vector<256x8xf32>
    %c0_47 = arith.constant 0 : index
    %c0_48 = arith.constant 0 : index
    %177 = vector.load %arg12[%c0_47, %c0_48] : memref<8x8xf32, #tpu.memory_space<vmem>>, vector<8x8xf32>
    %cst_49 = arith.constant dense<0.000000e+00> : vector<256x8xf32>
    %178 = tpu.matmul %176, %177, %cst_49 {dimension_numbers = #tpu.dot_dimension_numbers<[1], [0], [0], [1], [0, 0, 1, 1], [], []>} : vector<256x8xf32>, vector<8x8xf32>, vector<256x8xf32> -> vector<256x8xf32>
    %c0_50 = arith.constant 0 : index
    %c0_51 = arith.constant 0 : index
    %179 = vector.load %arg13[%c0_50, %c0_51] : memref<1x8xf32, #tpu.memory_space<vmem>>, vector<1x8xf32>
    %180 = vector.broadcast %179 : vector<1x8xf32> to vector<256x8xf32>
    %181 = arith.mulf %178, %180 : vector<256x8xf32>
    %c0_52 = arith.constant 0 : index
    %c0_53 = arith.constant 0 : index
    %182 = vector.load %arg14[%c0_52, %c0_53] : memref<1x8xf32, #tpu.memory_space<vmem>>, vector<1x8xf32>
    %183 = vector.broadcast %182 : vector<1x8xf32> to vector<256x8xf32>
    %184 = arith.addf %181, %183 : vector<256x8xf32>
    %cst_54 = arith.constant 0.000000e+00 : f32
    %185 = vector.broadcast %cst_54 : f32 to vector<256x8xf32>
    %186 = arith.maximumf %184, %185 : vector<256x8xf32>
    %187 = vector.shape_cast %186 : vector<256x8xf32> to vector<16x16x8xf32>
    %c0_55 = arith.constant 0 : index
    %c0_56 = arith.constant 0 : index
    %c0_57 = arith.constant 0 : index
    %c0_58 = arith.constant 0 : index
    %188 = vector.load %arg15[%c0_55, %c0_56, %c0_57, %c0_58] : memref<3x3x1x8xf32, #tpu.memory_space<vmem>>, vector<3x3x1x8xf32>
    %cst_59 = arith.constant 0.000000e+00 : f32
    %189 = vector.broadcast %cst_59 : f32 to vector<18x32x8xf32>
    %c0_60 = arith.constant 0 : index
    %c0_61 = arith.constant 0 : index
    %c0_62 = arith.constant 0 : index
    %190 = vector.load %arg27[%c0_60, %c0_61, %c0_62] : memref<18x32x8xf32, #tpu.memory_space<vmem>>, vector<18x32x8xf32>
    tpu.vector_store %arg27[%c0_60, %c0_61, %c0_62], %189 {strides = array<i32>} : memref<18x32x8xf32, #tpu.memory_space<vmem>>, vector<18x32x8xf32>,
    %c1_63 = arith.constant 1 : index
    %c8_64 = arith.constant 8 : index
    %c0_65 = arith.constant 0 : index
    %191 = vector.load %arg27[%c1_63, %c8_64, %c0_65] : memref<18x32x8xf32, #tpu.memory_space<vmem>>, vector<16x16x8xf32>
    tpu.vector_store %arg27[%c1_63, %c8_64, %c0_65], %187 {strides = array<i32>} : memref<18x32x8xf32, #tpu.memory_space<vmem>>, vector<16x16x8xf32>,
    %c0_66 = arith.constant 0 : index
    %c0_67 = arith.constant 0 : index
    %c0_68 = arith.constant 0 : index
    %192 = vector.load %arg27[%c0_66, %c0_67, %c0_68] : memref<18x32x8xf32, #tpu.memory_space<vmem>>, vector<18x32x8xf32>
    %193 = vector.extract_strided_slice %192 {offsets = [0, 7, 0], sizes = [18, 16, 8], strides = [1, 1, 1]} : vector<18x32x8xf32> to vector<18x16x8xf32>
    %194 = vector.extract_strided_slice %193 {offsets = [0, 0, 0], sizes = [16, 16, 8], strides = [1, 1, 1]} : vector<18x16x8xf32> to vector<16x16x8xf32>
    %195 = vector.extract_strided_slice %188 {offsets = [0, 0, 0, 0], sizes = [1, 1, 1, 8], strides = [1, 1, 1, 1]} : vector<3x3x1x8xf32> to vector<1x1x1x8xf32>
    %196 = vector.shape_cast %195 : vector<1x1x1x8xf32> to vector<1x8xf32>
    %197 = vector.shape_cast %196 : vector<1x8xf32> to vector<1x1x8xf32>
    %198 = vector.broadcast %197 : vector<1x1x8xf32> to vector<16x16x8xf32>
    %199 = arith.mulf %194, %198 : vector<16x16x8xf32>
    %200 = vector.extract_strided_slice %193 {offsets = [1, 0, 0], sizes = [16, 16, 8], strides = [1, 1, 1]} : vector<18x16x8xf32> to vector<16x16x8xf32>
    %201 = vector.extract_strided_slice %188 {offsets = [1, 0, 0, 0], sizes = [1, 1, 1, 8], strides = [1, 1, 1, 1]} : vector<3x3x1x8xf32> to vector<1x1x1x8xf32>
    %202 = vector.shape_cast %201 : vector<1x1x1x8xf32> to vector<1x8xf32>
    %203 = vector.shape_cast %202 : vector<1x8xf32> to vector<1x1x8xf32>
    %204 = vector.broadcast %203 : vector<1x1x8xf32> to vector<16x16x8xf32>
    %205 = arith.mulf %200, %204 : vector<16x16x8xf32>
    %206 = arith.addf %199, %205 : vector<16x16x8xf32>
    %207 = vector.extract_strided_slice %193 {offsets = [2, 0, 0], sizes = [16, 16, 8], strides = [1, 1, 1]} : vector<18x16x8xf32> to vector<16x16x8xf32>
    %208 = vector.extract_strided_slice %188 {offsets = [2, 0, 0, 0], sizes = [1, 1, 1, 8], strides = [1, 1, 1, 1]} : vector<3x3x1x8xf32> to vector<1x1x1x8xf32>
    %209 = vector.shape_cast %208 : vector<1x1x1x8xf32> to vector<1x8xf32>
    %210 = vector.shape_cast %209 : vector<1x8xf32> to vector<1x1x8xf32>
    %211 = vector.broadcast %210 : vector<1x1x8xf32> to vector<16x16x8xf32>
    %212 = arith.mulf %207, %211 : vector<16x16x8xf32>
    %213 = arith.addf %206, %212 : vector<16x16x8xf32>
    %214 = vector.extract_strided_slice %192 {offsets = [0, 8, 0], sizes = [18, 16, 8], strides = [1, 1, 1]} : vector<18x32x8xf32> to vector<18x16x8xf32>
    %215 = vector.extract_strided_slice %214 {offsets = [0, 0, 0], sizes = [16, 16, 8], strides = [1, 1, 1]} : vector<18x16x8xf32> to vector<16x16x8xf32>
    %216 = vector.extract_strided_slice %188 {offsets = [0, 1, 0, 0], sizes = [1, 1, 1, 8], strides = [1, 1, 1, 1]} : vector<3x3x1x8xf32> to vector<1x1x1x8xf32>
    %217 = vector.shape_cast %216 : vector<1x1x1x8xf32> to vector<1x8xf32>
    %218 = vector.shape_cast %217 : vector<1x8xf32> to vector<1x1x8xf32>
    %219 = vector.broadcast %218 : vector<1x1x8xf32> to vector<16x16x8xf32>
    %220 = arith.mulf %215, %219 : vector<16x16x8xf32>
    %221 = arith.addf %213, %220 : vector<16x16x8xf32>
    %222 = vector.extract_strided_slice %214 {offsets = [1, 0, 0], sizes = [16, 16, 8], strides = [1, 1, 1]} : vector<18x16x8xf32> to vector<16x16x8xf32>
    %223 = vector.extract_strided_slice %188 {offsets = [1, 1, 0, 0], sizes = [1, 1, 1, 8], strides = [1, 1, 1, 1]} : vector<3x3x1x8xf32> to vector<1x1x1x8xf32>
    %224 = vector.shape_cast %223 : vector<1x1x1x8xf32> to vector<1x8xf32>
    %225 = vector.shape_cast %224 : vector<1x8xf32> to vector<1x1x8xf32>
    %226 = vector.broadcast %225 : vector<1x1x8xf32> to vector<16x16x8xf32>
    %227 = arith.mulf %222, %226 : vector<16x16x8xf32>
    %228 = arith.addf %221, %227 : vector<16x16x8xf32>
    %229 = vector.extract_strided_slice %214 {offsets = [2, 0, 0], sizes = [16, 16, 8], strides = [1, 1, 1]} : vector<18x16x8xf32> to vector<16x16x8xf32>
    %230 = vector.extract_strided_slice %188 {offsets = [2, 1, 0, 0], sizes = [1, 1, 1, 8], strides = [1, 1, 1, 1]} : vector<3x3x1x8xf32> to vector<1x1x1x8xf32>
    %231 = vector.shape_cast %230 : vector<1x1x1x8xf32> to vector<1x8xf32>
    %232 = vector.shape_cast %231 : vector<1x8xf32> to vector<1x1x8xf32>
    %233 = vector.broadcast %232 : vector<1x1x8xf32> to vector<16x16x8xf32>
    %234 = arith.mulf %229, %233 : vector<16x16x8xf32>
    %235 = arith.addf %228, %234 : vector<16x16x8xf32>
    %236 = vector.extract_strided_slice %192 {offsets = [0, 9, 0], sizes = [18, 16, 8], strides = [1, 1, 1]} : vector<18x32x8xf32> to vector<18x16x8xf32>
    %237 = vector.extract_strided_slice %236 {offsets = [0, 0, 0], sizes = [16, 16, 8], strides = [1, 1, 1]} : vector<18x16x8xf32> to vector<16x16x8xf32>
    %238 = vector.extract_strided_slice %188 {offsets = [0, 2, 0, 0], sizes = [1, 1, 1, 8], strides = [1, 1, 1, 1]} : vector<3x3x1x8xf32> to vector<1x1x1x8xf32>
    %239 = vector.shape_cast %238 : vector<1x1x1x8xf32> to vector<1x8xf32>
    %240 = vector.shape_cast %239 : vector<1x8xf32> to vector<1x1x8xf32>
    %241 = vector.broadcast %240 : vector<1x1x8xf32> to vector<16x16x8xf32>
    %242 = arith.mulf %237, %241 : vector<16x16x8xf32>
    %243 = arith.addf %235, %242 : vector<16x16x8xf32>
    %244 = vector.extract_strided_slice %236 {offsets = [1, 0, 0], sizes = [16, 16, 8], strides = [1, 1, 1]} : vector<18x16x8xf32> to vector<16x16x8xf32>
    %245 = vector.extract_strided_slice %188 {offsets = [1, 2, 0, 0], sizes = [1, 1, 1, 8], strides = [1, 1, 1, 1]} : vector<3x3x1x8xf32> to vector<1x1x1x8xf32>
    %246 = vector.shape_cast %245 : vector<1x1x1x8xf32> to vector<1x8xf32>
    %247 = vector.shape_cast %246 : vector<1x8xf32> to vector<1x1x8xf32>
    %248 = vector.broadcast %247 : vector<1x1x8xf32> to vector<16x16x8xf32>
    %249 = arith.mulf %244, %248 : vector<16x16x8xf32>
    %250 = arith.addf %243, %249 : vector<16x16x8xf32>
    %251 = vector.extract_strided_slice %236 {offsets = [2, 0, 0], sizes = [16, 16, 8], strides = [1, 1, 1]} : vector<18x16x8xf32> to vector<16x16x8xf32>
    %252 = vector.extract_strided_slice %188 {offsets = [2, 2, 0, 0], sizes = [1, 1, 1, 8], strides = [1, 1, 1, 1]} : vector<3x3x1x8xf32> to vector<1x1x1x8xf32>
    %253 = vector.shape_cast %252 : vector<1x1x1x8xf32> to vector<1x8xf32>
    %254 = vector.shape_cast %253 : vector<1x8xf32> to vector<1x1x8xf32>
    %255 = vector.broadcast %254 : vector<1x1x8xf32> to vector<16x16x8xf32>
    %256 = arith.mulf %251, %255 : vector<16x16x8xf32>
    %257 = arith.addf %250, %256 : vector<16x16x8xf32>
    %c0_69 = arith.constant 0 : index
    %c0_70 = arith.constant 0 : index
    %258 = vector.load %arg16[%c0_69, %c0_70] : memref<1x8xf32, #tpu.memory_space<vmem>>, vector<1x8xf32>
    %259 = vector.shape_cast %258 : vector<1x8xf32> to vector<1x1x8xf32>
    %260 = vector.broadcast %259 : vector<1x1x8xf32> to vector<16x16x8xf32>
    %261 = arith.mulf %257, %260 : vector<16x16x8xf32>
    %c0_71 = arith.constant 0 : index
    %c0_72 = arith.constant 0 : index
    %262 = vector.load %arg17[%c0_71, %c0_72] : memref<1x8xf32, #tpu.memory_space<vmem>>, vector<1x8xf32>
    %263 = vector.shape_cast %262 : vector<1x8xf32> to vector<1x1x8xf32>
    %264 = vector.broadcast %263 : vector<1x1x8xf32> to vector<16x16x8xf32>
    %265 = arith.addf %261, %264 : vector<16x16x8xf32>
    %cst_73 = arith.constant 0.000000e+00 : f32
    %266 = vector.broadcast %cst_73 : f32 to vector<16x16x8xf32>
    %267 = arith.maximumf %265, %266 : vector<16x16x8xf32>
    %268 = vector.shape_cast %267 : vector<16x16x8xf32> to vector<256x8xf32>
    %c0_74 = arith.constant 0 : index
    %c0_75 = arith.constant 0 : index
    %269 = vector.load %arg2[%c0_74, %c0_75] : memref<64x256xf32, #tpu.memory_space<vmem>>, vector<64x256xf32>
    %cst_76 = arith.constant dense<0.000000e+00> : vector<64x8xf32>
    %270 = tpu.matmul %269, %268, %cst_76 {dimension_numbers = #tpu.dot_dimension_numbers<[1], [0], [0], [1], [0, 0, 1, 1], [], []>} : vector<64x256xf32>, vector<256x8xf32>, vector<64x8xf32> -> vector<64x8xf32>
    %c0_77 = arith.constant 0 : index
    %c0_78 = arith.constant 0 : index
    %271 = vector.load %arg18[%c0_77, %c0_78] : memref<8x8xf32, #tpu.memory_space<vmem>>, vector<8x8xf32>
    %cst_79 = arith.constant dense<0.000000e+00> : vector<8x64xf32>
    %272 = tpu.matmul %271, %270, %cst_79 {dimension_numbers = #tpu.dot_dimension_numbers<[1], [1], [0], [0], [0, 0, 1, 0], [], []>} : vector<8x8xf32>, vector<64x8xf32>, vector<8x64xf32> -> vector<8x64xf32>
    %c0_80 = arith.constant 0 : index
    %c0_81 = arith.constant 0 : index
    %273 = vector.load %arg19[%c0_80, %c0_81] : memref<8x1xf32, #tpu.memory_space<vmem>>, vector<8x1xf32>
    %274 = vector.broadcast %273 : vector<8x1xf32> to vector<8x64xf32>
    %275 = arith.mulf %272, %274 : vector<8x64xf32>
    %c0_82 = arith.constant 0 : index
    %c0_83 = arith.constant 0 : index
    %276 = vector.load %arg20[%c0_82, %c0_83] : memref<8x1xf32, #tpu.memory_space<vmem>>, vector<8x1xf32>
    %277 = vector.broadcast %276 : vector<8x1xf32> to vector<8x64xf32>
    %278 = arith.addf %275, %277 : vector<8x64xf32>
    %279 = vector.shape_cast %1 : vector<16x16x4xf32> to vector<256x4xf32>
    %c0_84 = arith.constant 0 : index
    %c0_85 = arith.constant 0 : index
    %280 = vector.load %arg2[%c0_84, %c0_85] : memref<64x256xf32, #tpu.memory_space<vmem>>, vector<64x256xf32>
    %cst_86 = arith.constant dense<0.000000e+00> : vector<64x4xf32>
    %281 = tpu.matmul %280, %279, %cst_86 {dimension_numbers = #tpu.dot_dimension_numbers<[1], [0], [0], [1], [0, 0, 1, 1], [], []>} : vector<64x256xf32>, vector<256x4xf32>, vector<64x4xf32> -> vector<64x4xf32>
    %c0_87 = arith.constant 0 : index
    %c0_88 = arith.constant 0 : index
    %282 = vector.load %arg21[%c0_87, %c0_88] : memref<8x4xf32, #tpu.memory_space<vmem>>, vector<8x4xf32>
    %cst_89 = arith.constant dense<0.000000e+00> : vector<8x64xf32>
    %283 = tpu.matmul %282, %281, %cst_89 {dimension_numbers = #tpu.dot_dimension_numbers<[1], [1], [0], [0], [0, 0, 1, 0], [], []>} : vector<8x4xf32>, vector<64x4xf32>, vector<8x64xf32> -> vector<8x64xf32>
    %c0_90 = arith.constant 0 : index
    %c0_91 = arith.constant 0 : index
    %284 = vector.load %arg22[%c0_90, %c0_91] : memref<8x1xf32, #tpu.memory_space<vmem>>, vector<8x1xf32>
    %285 = vector.broadcast %284 : vector<8x1xf32> to vector<8x64xf32>
    %286 = arith.mulf %283, %285 : vector<8x64xf32>
    %287 = arith.addf %278, %286 : vector<8x64xf32>
    %c0_92 = arith.constant 0 : index
    %c0_93 = arith.constant 0 : index
    %288 = vector.load %arg23[%c0_92, %c0_93] : memref<8x1xf32, #tpu.memory_space<vmem>>, vector<8x1xf32>
    %289 = vector.broadcast %288 : vector<8x1xf32> to vector<8x64xf32>
    %290 = arith.addf %287, %289 : vector<8x64xf32>
    %291 = vector.shape_cast %290 : vector<8x64xf32> to vector<1x8x64xf32>
    %c0_94 = arith.constant 0 : index
    %c0_95 = arith.constant 0 : index
    %c0_96 = arith.constant 0 : index
    %292 = vector.load %arg24[%c0_94, %c0_95, %c0_96] : memref<1x8x64xf32, #tpu.memory_space<vmem>>, vector<1x8x64xf32>
    tpu.vector_store %arg24[%c0_94, %c0_95, %c0_96], %291 {strides = array<i32>} : memref<1x8x64xf32, #tpu.memory_space<vmem>>, vector<1x8x64xf32>,
    return
  }
  func.func @transform_0(%arg0: i32) -> (i32, i32, i32, i32) {
    %c0_i32 = arith.constant 0 : i32
    %c0_i32_0 = arith.constant 0 : i32
    %c0_i32_1 = arith.constant 0 : i32
    %c0_i32_2 = arith.constant 0 : i32
    return %arg0, %c0_i32, %c0_i32_0, %c0_i32_1 : i32, i32, i32, i32
  }
  func.func @transform_1(%arg0: i32) -> (i32, i32) {
    %c0_i32 = arith.constant 0 : i32
    %c0_i32_0 = arith.constant 0 : i32
    %c0_i32_1 = arith.constant 0 : i32
    return %c0_i32, %c0_i32_0 : i32, i32
  }
  func.func @transform_2(%arg0: i32) -> (i32, i32, i32, i32) {
    %c0_i32 = arith.constant 0 : i32
    %c0_i32_0 = arith.constant 0 : i32
    %c0_i32_1 = arith.constant 0 : i32
    %c0_i32_2 = arith.constant 0 : i32
    %c0_i32_3 = arith.constant 0 : i32
    return %c0_i32, %c0_i32_0, %c0_i32_1, %c0_i32_2 : i32, i32, i32, i32
  }
  func.func @transform_3(%arg0: i32) -> (i32, i32) {
    %c0_i32 = arith.constant 0 : i32
    %c0_i32_0 = arith.constant 0 : i32
    %c0_i32_1 = arith.constant 0 : i32
    return %c0_i32, %c0_i32_0 : i32, i32
  }
  func.func @transform_4(%arg0: i32) -> (i32, i32) {
    %c0_i32 = arith.constant 0 : i32
    %c0_i32_0 = arith.constant 0 : i32
    %c0_i32_1 = arith.constant 0 : i32
    return %c0_i32, %c0_i32_0 : i32, i32
  }
  func.func @transform_5(%arg0: i32) -> (i32, i32) {
    %c0_i32 = arith.constant 0 : i32
    %c0_i32_0 = arith.constant 0 : i32
    %c0_i32_1 = arith.constant 0 : i32
    return %c0_i32, %c0_i32_0 : i32, i32
  }
  func.func @transform_6(%arg0: i32) -> (i32, i32) {
    %c0_i32 = arith.constant 0 : i32
    %c0_i32_0 = arith.constant 0 : i32
    %c0_i32_1 = arith.constant 0 : i32
    return %c0_i32, %c0_i32_0 : i32, i32
  }
  func.func @transform_7(%arg0: i32) -> (i32, i32) {
    %c0_i32 = arith.constant 0 : i32
    %c0_i32_0 = arith.constant 0 : i32
    %c0_i32_1 = arith.constant 0 : i32
    return %c0_i32, %c0_i32_0 : i32, i32
  }
  func.func @transform_8(%arg0: i32) -> (i32, i32, i32, i32) {
    %c0_i32 = arith.constant 0 : i32
    %c0_i32_0 = arith.constant 0 : i32
    %c0_i32_1 = arith.constant 0 : i32
    %c0_i32_2 = arith.constant 0 : i32
    %c0_i32_3 = arith.constant 0 : i32
    return %c0_i32, %c0_i32_0, %c0_i32_1, %c0_i32_2 : i32, i32, i32, i32
  }
  func.func @transform_9(%arg0: i32) -> (i32, i32) {
    %c0_i32 = arith.constant 0 : i32
    %c0_i32_0 = arith.constant 0 : i32
    %c0_i32_1 = arith.constant 0 : i32
    return %c0_i32, %c0_i32_0 : i32, i32
  }
  func.func @transform_10(%arg0: i32) -> (i32, i32) {
    %c0_i32 = arith.constant 0 : i32
    %c0_i32_0 = arith.constant 0 : i32
    %c0_i32_1 = arith.constant 0 : i32
    return %c0_i32, %c0_i32_0 : i32, i32
  }
  func.func @transform_11(%arg0: i32) -> (i32, i32) {
    %c0_i32 = arith.constant 0 : i32
    %c0_i32_0 = arith.constant 0 : i32
    %c0_i32_1 = arith.constant 0 : i32
    return %c0_i32, %c0_i32_0 : i32, i32
  }
  func.func @transform_12(%arg0: i32) -> (i32, i32) {
    %c0_i32 = arith.constant 0 : i32
    %c0_i32_0 = arith.constant 0 : i32
    %c0_i32_1 = arith.constant 0 : i32
    return %c0_i32, %c0_i32_0 : i32, i32
  }
  func.func @transform_13(%arg0: i32) -> (i32, i32) {
    %c0_i32 = arith.constant 0 : i32
    %c0_i32_0 = arith.constant 0 : i32
    %c0_i32_1 = arith.constant 0 : i32
    return %c0_i32, %c0_i32_0 : i32, i32
  }
  func.func @transform_14(%arg0: i32) -> (i32, i32, i32, i32) {
    %c0_i32 = arith.constant 0 : i32
    %c0_i32_0 = arith.constant 0 : i32
    %c0_i32_1 = arith.constant 0 : i32
    %c0_i32_2 = arith.constant 0 : i32
    %c0_i32_3 = arith.constant 0 : i32
    return %c0_i32, %c0_i32_0, %c0_i32_1, %c0_i32_2 : i32, i32, i32, i32
  }
  func.func @transform_15(%arg0: i32) -> (i32, i32) {
    %c0_i32 = arith.constant 0 : i32
    %c0_i32_0 = arith.constant 0 : i32
    %c0_i32_1 = arith.constant 0 : i32
    return %c0_i32, %c0_i32_0 : i32, i32
  }
  func.func @transform_16(%arg0: i32) -> (i32, i32) {
    %c0_i32 = arith.constant 0 : i32
    %c0_i32_0 = arith.constant 0 : i32
    %c0_i32_1 = arith.constant 0 : i32
    return %c0_i32, %c0_i32_0 : i32, i32
  }
  func.func @transform_17(%arg0: i32) -> (i32, i32) {
    %c0_i32 = arith.constant 0 : i32
    %c0_i32_0 = arith.constant 0 : i32
    %c0_i32_1 = arith.constant 0 : i32
    return %c0_i32, %c0_i32_0 : i32, i32
  }
  func.func @transform_18(%arg0: i32) -> (i32, i32) {
    %c0_i32 = arith.constant 0 : i32
    %c0_i32_0 = arith.constant 0 : i32
    %c0_i32_1 = arith.constant 0 : i32
    return %c0_i32, %c0_i32_0 : i32, i32
  }
  func.func @transform_19(%arg0: i32) -> (i32, i32) {
    %c0_i32 = arith.constant 0 : i32
    %c0_i32_0 = arith.constant 0 : i32
    %c0_i32_1 = arith.constant 0 : i32
    return %c0_i32, %c0_i32_0 : i32, i32
  }
  func.func @transform_20(%arg0: i32) -> (i32, i32) {
    %c0_i32 = arith.constant 0 : i32
    %c0_i32_0 = arith.constant 0 : i32
    %c0_i32_1 = arith.constant 0 : i32
    return %c0_i32, %c0_i32_0 : i32, i32
  }
  func.func @transform_21(%arg0: i32) -> (i32, i32) {
    %c0_i32 = arith.constant 0 : i32
    %c0_i32_0 = arith.constant 0 : i32
    %c0_i32_1 = arith.constant 0 : i32
    return %c0_i32, %c0_i32_0 : i32, i32
  }
  func.func @transform_22(%arg0: i32) -> (i32, i32) {
    %c0_i32 = arith.constant 0 : i32
    %c0_i32_0 = arith.constant 0 : i32
    %c0_i32_1 = arith.constant 0 : i32
    return %c0_i32, %c0_i32_0 : i32, i32
  }
  func.func @transform_23(%arg0: i32) -> (i32, i32, i32) {
    %c0_i32 = arith.constant 0 : i32
    %c0_i32_0 = arith.constant 0 : i32
    %c0_i32_1 = arith.constant 0 : i32
    return %arg0, %c0_i32, %c0_i32_0 : i32, i32, i32
  }
}

</mosaic_0001>

<llo_original>
// kernel: tpu_custom_call.1
$region0: #{tpu_custom_call.1}
  #allocation0 [shape = 'u32[]', space=smem, size = 0x4, offset = 0x4, fixed_abs, tag = 'smem constant byte address 0x4 - core index']
  #allocation1 [shape = 'u32[144,128]{1,0:T(1,128)}', space=vmem, size = 0x12000, scoped, tag = 'internal scratch']
  #allocation2 [shape = 'f32[18,32,4]{2,1,0:T(8,128)}', space=vmem, size = 0x48000, scoped, tag = 'scratch operand']
  #allocation3 [shape = 'f32[18,32,8]{2,1,0:T(8,128)}', space=vmem, size = 0x48000, scoped, tag = 'scratch operand']
  #allocation4 [shape = 'f32[18,32,8]{2,1,0:T(8,128)}', space=vmem, size = 0x48000, scoped, tag = 'scratch operand']
  %s0 = inlined_call_operand.vmem [shape: f32[2,16,16,4], index: 0, kind: input, shape index: {}]
  %s1 = inlined_call_operand.vmem [shape: f32[64,256], index: 1, kind: input, shape index: {}]
  %s2 = inlined_call_operand.vmem [shape: f32[3,3,1,4], index: 2, kind: input, shape index: {}]
  %s3 = inlined_call_operand.vmem [shape: f32[1,4], index: 3, kind: input, shape index: {}]
  %s4 = inlined_call_operand.vmem [shape: f32[1,4], index: 4, kind: input, shape index: {}]
  %s5 = inlined_call_operand.vmem [shape: f32[4,8], index: 5, kind: input, shape index: {}]
  %s6 = inlined_call_operand.vmem [shape: f32[1,8], index: 6, kind: input, shape index: {}]
  %s7 = inlined_call_operand.vmem [shape: f32[1,8], index: 7, kind: input, shape index: {}]
  %s8 = inlined_call_operand.vmem [shape: f32[3,3,1,8], index: 8, kind: input, shape index: {}]
  %s9 = inlined_call_operand.vmem [shape: f32[1,8], index: 9, kind: input, shape index: {}]
  %s10 = inlined_call_operand.vmem [shape: f32[1,8], index: 10, kind: input, shape index: {}]
  %s11 = inlined_call_operand.vmem [shape: f32[8,8], index: 11, kind: input, shape index: {}]
  %s12 = inlined_call_operand.vmem [shape: f32[1,8], index: 12, kind: input, shape index: {}]
  %s13 = inlined_call_operand.vmem [shape: f32[1,8], index: 13, kind: input, shape index: {}]
  %s14 = inlined_call_operand.vmem [shape: f32[3,3,1,8], index: 14, kind: input, shape index: {}]
  %s15 = inlined_call_operand.vmem [shape: f32[1,8], index: 15, kind: input, shape index: {}]
  %s16 = inlined_call_operand.vmem [shape: f32[1,8], index: 16, kind: input, shape index: {}]
  %s17 = inlined_call_operand.vmem [shape: f32[8,8], index: 17, kind: input, shape index: {}]
  %s18 = inlined_call_operand.vmem [shape: f32[8,1], index: 18, kind: input, shape index: {}]
  %s19 = inlined_call_operand.vmem [shape: f32[8,1], index: 19, kind: input, shape index: {}]
  %s20 = inlined_call_operand.vmem [shape: f32[8,4], index: 20, kind: input, shape index: {}]
  %s21 = inlined_call_operand.vmem [shape: f32[8,1], index: 21, kind: input, shape index: {}]
  %s22 = inlined_call_operand.vmem [shape: f32[8,1], index: 22, kind: input, shape index: {}]
  %s23 = inlined_call_operand.hbm [shape: f32[2,8,64], index: 23, kind: output, shape index: {}]
  %s24 = sld [smem:[#allocation0]]
  $region125: #{tpu_custom_call.1} parent=0
    _
  %s26 = ssub.s32 1, %s24
  %s27 = scalar_select 0, %s26, %s24
  $region1: #{tpu_custom_call.1} parent=0
    #allocation5 [shape = 'u8[8192]{0}', space=vmem, size = 0x2000, scoped, tag = 'output window, operand 0']
    #allocation6 [shape = 's32[2]{0}', space=sflag, size = 0x8, scoped, tag = 'scoped memory for tpu_custom_call.1']
    %28 = vsyncpa [#allocation6], 0
    %s29 = scalar_lea.sflag [#allocation6], 1
    %30 = vsyncpa %s29, 0
    loop: start=0, step=1, limit=4
    $region2: #{tpu_custom_call.1} parent=1 // loop_pre_header
      _
    $region3: #{tpu_custom_call.1} parent=1 // loop_header
      %s32 = sphi 0, %s36
      %p33 = scmp.ge.s32.totalorder %s32, 4
      %s42 = sphi 0, %s44
      %s45 = sphi 0, %s42
      %s46 = sphi 0, %s45
      %s62 = sphi 0, %s46
      %s66 = sphi 0, %s66
      %s68 = sphi 0, %s66
      %s69 = sphi 0, %s68
      %s83 = sphi 0, %s69
      %s87 = sphi 0, %s87
      %s89 = sphi 0, %s87
      %s90 = sphi 0, %s89
      %s104 = sphi 0, %s90
      %s108 = sphi 0, %s108
      %s110 = sphi 0, %s108
      %s111 = sphi 0, %s110
      %s125 = sphi 0, %s111
      %s129 = sphi 0, %s129
      %s131 = sphi 0, %s129
      %s132 = sphi 0, %s131
      %s146 = sphi 0, %s132
      %s150 = sphi 0, %s150
      %s152 = sphi 0, %s150
      %s153 = sphi 0, %s152
      %s167 = sphi 0, %s153
      %s171 = sphi 0, %s171
      %s173 = sphi 0, %s171
      %s174 = sphi 0, %s173
      %s188 = sphi 0, %s174
      %s192 = sphi 0, %s192
      %s194 = sphi 0, %s192
      %s195 = sphi 0, %s194
      %s209 = sphi 0, %s195
      %s213 = sphi 0, %s213
      %s215 = sphi 0, %s213
      %s216 = sphi 0, %s215
      %s230 = sphi 0, %s216
      %s234 = sphi 0, %s234
      %s236 = sphi 0, %s234
      %s237 = sphi 0, %s236
      %s251 = sphi 0, %s237
      %s255 = sphi 0, %s255
      %s257 = sphi 0, %s255
      %s258 = sphi 0, %s257
      %s272 = sphi 0, %s258
      %s276 = sphi 0, %s276
      %s278 = sphi 0, %s276
      %s279 = sphi 0, %s278
      %s293 = sphi 0, %s279
      %s297 = sphi 0, %s297
      %s299 = sphi 0, %s297
      %s300 = sphi 0, %s299
      %s314 = sphi 0, %s300
      %s318 = sphi 0, %s318
      %s320 = sphi 0, %s318
      %s321 = sphi 0, %s320
      %s335 = sphi 0, %s321
      %s339 = sphi 0, %s339
      %s341 = sphi 0, %s339
      %s342 = sphi 0, %s341
      %s356 = sphi 0, %s342
      %s360 = sphi 0, %s360
      %s362 = sphi 0, %s360
      %s363 = sphi 0, %s362
      %s377 = sphi 0, %s363
      %s381 = sphi 0, %s381
      %s383 = sphi 0, %s381
      %s384 = sphi 0, %s383
      %s398 = sphi 0, %s384
      %s402 = sphi 0, %s402
      %s404 = sphi 0, %s402
      %s405 = sphi 0, %s404
      %s419 = sphi 0, %s405
      %s423 = sphi 0, %s423
      %s425 = sphi 0, %s423
      %s426 = sphi 0, %s425
      %s440 = sphi 0, %s426
      %s444 = sphi 0, %s444
      %s446 = sphi 0, %s444
      %s447 = sphi 0, %s446
      %s461 = sphi 0, %s447
      %s465 = sphi 0, %s465
      %s467 = sphi 0, %s465
      %s468 = sphi 0, %s467
      %s482 = sphi 0, %s468
      %s486 = sphi 0, %s486
      %s488 = sphi 0, %s486
      %s489 = sphi 0, %s488
      %s503 = sphi 0, %s489
      %s507 = sphi 0, %s507
      %s509 = sphi 0, %s507
      %s510 = sphi 0, %s509
      %s524 = sphi 0, %s510
      %s530 = sphi 0, %s532
      %s533 = sphi 0, %s530
      %s534 = sphi 0, %s533
      %s550 = sphi 0, %s534
    $region4: #{tpu_custom_call.1} parent=1 // loop_header_branch
      %35 = sbr.rel (%p33) target = $region8
    $region5: #{tpu_custom_call.1} parent=1 // loop_body
      %s37 = ssub.s32 %s32, 1
      %s38 = ssub.s32 %s32, 2
      %s39 = sadd.s32 %s32, 1
      %s40 = ssub.s32 %s32, %s39
      %p41 = scmp.eq.s32.totalorder %s40, 0
      %s43 = sadd.s32 %s42, 1
      %s44 = scalar_select %p41, %s42, %s43
      %p47 = pneg %p41
      %p48 = scmp.eq.s32.totalorder %s32, 1
      %p49 = por %p47, %p48
      %p50 = scmp.ne.s32.totalorder %s42, %s45
      %p51 = scmp.eq.s32.totalorder %s32, 0
      %p52 = por %p50, %p51
      %p53 = scmp.ne.s32.totalorder %s42, %s45
      %p54 = scmp.eq.s32.totalorder %s37, 1
      %p55 = por %p53, %p54
      %p56 = scmp.ne.s32.totalorder %s45, %s46
      %p57 = scmp.eq.s32.totalorder %s37, 0
      %p58 = por %p56, %p57
      %p59 = scmp.ne.s32.totalorder %s45, %s46
      %p60 = scmp.eq.s32.totalorder %s38, 1
      %p61 = por %p59, %p60
      %p63 = scmp.ne.s32.totalorder %s46, %s62
      %p64 = scmp.eq.s32.totalorder %s38, 0
      %p65 = por %p63, %p64
      %s67 = sadd.s32 %s66, 1
      %p70 = scmp.eq.s32.totalorder %s32, 1
      %p71 = scmp.ne.s32.totalorder %s66, %s68
      %p72 = scmp.eq.s32.totalorder %s32, 0
      %p73 = por %p71, %p72
      %p74 = scmp.ne.s32.totalorder %s66, %s68
      %p75 = scmp.eq.s32.totalorder %s37, 1
      %p76 = por %p74, %p75
      %p77 = scmp.ne.s32.totalorder %s68, %s69
      %p78 = scmp.eq.s32.totalorder %s37, 0
      %p79 = por %p77, %p78
      %p80 = scmp.ne.s32.totalorder %s68, %s69
      %p81 = scmp.eq.s32.totalorder %s38, 1
      %p82 = por %p80, %p81
      %p84 = scmp.ne.s32.totalorder %s69, %s83
      %p85 = scmp.eq.s32.totalorder %s38, 0
      %p86 = por %p84, %p85
      %s88 = sadd.s32 %s87, 1
      %p91 = scmp.eq.s32.totalorder %s32, 1
      %p92 = scmp.ne.s32.totalorder %s87, %s89
      %p93 = scmp.eq.s32.totalorder %s32, 0
      %p94 = por %p92, %p93
      %p95 = scmp.ne.s32.totalorder %s87, %s89
      %p96 = scmp.eq.s32.totalorder %s37, 1
      %p97 = por %p95, %p96
      %p98 = scmp.ne.s32.totalorder %s89, %s90
      %p99 = scmp.eq.s32.totalorder %s37, 0
      %p100 = por %p98, %p99
      %p101 = scmp.ne.s32.totalorder %s89, %s90
      %p102 = scmp.eq.s32.totalorder %s38, 1
      %p103 = por %p101, %p102
      %p105 = scmp.ne.s32.totalorder %s90, %s104
      %p106 = scmp.eq.s32.totalorder %s38, 0
      %p107 = por %p105, %p106
      %s109 = sadd.s32 %s108, 1
      %p112 = scmp.eq.s32.totalorder %s32, 1
      %p113 = scmp.ne.s32.totalorder %s108, %s110
      %p114 = scmp.eq.s32.totalorder %s32, 0
      %p115 = por %p113, %p114
      %p116 = scmp.ne.s32.totalorder %s108, %s110
      %p117 = scmp.eq.s32.totalorder %s37, 1
      %p118 = por %p116, %p117
      %p119 = scmp.ne.s32.totalorder %s110, %s111
      %p120 = scmp.eq.s32.totalorder %s37, 0
      %p121 = por %p119, %p120
      %p122 = scmp.ne.s32.totalorder %s110, %s111
      %p123 = scmp.eq.s32.totalorder %s38, 1
      %p124 = por %p122, %p123
      %p126 = scmp.ne.s32.totalorder %s111, %s125
      %p127 = scmp.eq.s32.totalorder %s38, 0
      %p128 = por %p126, %p127
      %s130 = sadd.s32 %s129, 1
      %p133 = scmp.eq.s32.totalorder %s32, 1
      %p134 = scmp.ne.s32.totalorder %s129, %s131
      %p135 = scmp.eq.s32.totalorder %s32, 0
      %p136 = por %p134, %p135
      %p137 = scmp.ne.s32.totalorder %s129, %s131
      %p138 = scmp.eq.s32.totalorder %s37, 1
      %p139 = por %p137, %p138
      %p140 = scmp.ne.s32.totalorder %s131, %s132
      %p141 = scmp.eq.s32.totalorder %s37, 0
      %p142 = por %p140, %p141
      %p143 = scmp.ne.s32.totalorder %s131, %s132
      %p144 = scmp.eq.s32.totalorder %s38, 1
      %p145 = por %p143, %p144
      %p147 = scmp.ne.s32.totalorder %s132, %s146
      %p148 = scmp.eq.s32.totalorder %s38, 0
      %p149 = por %p147, %p148
      %s151 = sadd.s32 %s150, 1
      %p154 = scmp.eq.s32.totalorder %s32, 1
      %p155 = scmp.ne.s32.totalorder %s150, %s152
      %p156 = scmp.eq.s32.totalorder %s32, 0
      %p157 = por %p155, %p156
      %p158 = scmp.ne.s32.totalorder %s150, %s152
      %p159 = scmp.eq.s32.totalorder %s37, 1
      %p160 = por %p158, %p159
      %p161 = scmp.ne.s32.totalorder %s152, %s153
      %p162 = scmp.eq.s32.totalorder %s37, 0
      %p163 = por %p161, %p162
      %p164 = scmp.ne.s32.totalorder %s152, %s153
      %p165 = scmp.eq.s32.totalorder %s38, 1
      %p166 = por %p164, %p165
      %p168 = scmp.ne.s32.totalorder %s153, %s167
      %p169 = scmp.eq.s32.totalorder %s38, 0
      %p170 = por %p168, %p169
      %s172 = sadd.s32 %s171, 1
      %p175 = scmp.eq.s32.totalorder %s32, 1
      %p176 = scmp.ne.s32.totalorder %s171, %s173
      %p177 = scmp.eq.s32.totalorder %s32, 0
      %p178 = por %p176, %p177
      %p179 = scmp.ne.s32.totalorder %s171, %s173
      %p180 = scmp.eq.s32.totalorder %s37, 1
      %p181 = por %p179, %p180
      %p182 = scmp.ne.s32.totalorder %s173, %s174
      %p183 = scmp.eq.s32.totalorder %s37, 0
      %p184 = por %p182, %p183
      %p185 = scmp.ne.s32.totalorder %s173, %s174
      %p186 = scmp.eq.s32.totalorder %s38, 1
      %p187 = por %p185, %p186
      %p189 = scmp.ne.s32.totalorder %s174, %s188
      %p190 = scmp.eq.s32.totalorder %s38, 0
      %p191 = por %p189, %p190
      %s193 = sadd.s32 %s192, 1
      %p196 = scmp.eq.s32.totalorder %s32, 1
      %p197 = scmp.ne.s32.totalorder %s192, %s194
      %p198 = scmp.eq.s32.totalorder %s32, 0
      %p199 = por %p197, %p198
      %p200 = scmp.ne.s32.totalorder %s192, %s194
      %p201 = scmp.eq.s32.totalorder %s37, 1
      %p202 = por %p200, %p201
      %p203 = scmp.ne.s32.totalorder %s194, %s195
      %p204 = scmp.eq.s32.totalorder %s37, 0
      %p205 = por %p203, %p204
      %p206 = scmp.ne.s32.totalorder %s194, %s195
      %p207 = scmp.eq.s32.totalorder %s38, 1
      %p208 = por %p206, %p207
      %p210 = scmp.ne.s32.totalorder %s195, %s209
      %p211 = scmp.eq.s32.totalorder %s38, 0
      %p212 = por %p210, %p211
      %s214 = sadd.s32 %s213, 1
      %p217 = scmp.eq.s32.totalorder %s32, 1
      %p218 = scmp.ne.s32.totalorder %s213, %s215
      %p219 = scmp.eq.s32.totalorder %s32, 0
      %p220 = por %p218, %p219
      %p221 = scmp.ne.s32.totalorder %s213, %s215
      %p222 = scmp.eq.s32.totalorder %s37, 1
      %p223 = por %p221, %p222
      %p224 = scmp.ne.s32.totalorder %s215, %s216
      %p225 = scmp.eq.s32.totalorder %s37, 0
      %p226 = por %p224, %p225
      %p227 = scmp.ne.s32.totalorder %s215, %s216
      %p228 = scmp.eq.s32.totalorder %s38, 1
      %p229 = por %p227, %p228
      %p231 = scmp.ne.s32.totalorder %s216, %s230
      %p232 = scmp.eq.s32.totalorder %s38, 0
      %p233 = por %p231, %p232
      %s235 = sadd.s32 %s234, 1
      %p238 = scmp.eq.s32.totalorder %s32, 1
      %p239 = scmp.ne.s32.totalorder %s234, %s236
      %p240 = scmp.eq.s32.totalorder %s32, 0
      %p241 = por %p239, %p240
      %p242 = scmp.ne.s32.totalorder %s234, %s236
      %p243 = scmp.eq.s32.totalorder %s37, 1
      %p244 = por %p242, %p243
      %p245 = scmp.ne.s32.totalorder %s236, %s237
      %p246 = scmp.eq.s32.totalorder %s37, 0
      %p247 = por %p245, %p246
      %p248 = scmp.ne.s32.totalorder %s236, %s237
      %p249 = scmp.eq.s32.totalorder %s38, 1
      %p250 = por %p248, %p249
      %p252 = scmp.ne.s32.totalorder %s237, %s251
      %p253 = scmp.eq.s32.totalorder %s38, 0
      %p254 = por %p252, %p253
      %s256 = sadd.s32 %s255, 1
      %p259 = scmp.eq.s32.totalorder %s32, 1
      %p260 = scmp.ne.s32.totalorder %s255, %s257
      %p261 = scmp.eq.s32.totalorder %s32, 0
      %p262 = por %p260, %p261
      %p263 = scmp.ne.s32.totalorder %s255, %s257
      %p264 = scmp.eq.s32.totalorder %s37, 1
      %p265 = por %p263, %p264
      %p266 = scmp.ne.s32.totalorder %s257, %s258
      %p267 = scmp.eq.s32.totalorder %s37, 0
      %p268 = por %p266, %p267
      %p269 = scmp.ne.s32.totalorder %s257, %s258
      %p270 = scmp.eq.s32.totalorder %s38, 1
      %p271 = por %p269, %p270
      %p273 = scmp.ne.s32.totalorder %s258, %s272
      %p274 = scmp.eq.s32.totalorder %s38, 0
      %p275 = por %p273, %p274
      %s277 = sadd.s32 %s276, 1
      %p280 = scmp.eq.s32.totalorder %s32, 1
      %p281 = scmp.ne.s32.totalorder %s276, %s278
      %p282 = scmp.eq.s32.totalorder %s32, 0
      %p283 = por %p281, %p282
      %p284 = scmp.ne.s32.totalorder %s276, %s278
      %p285 = scmp.eq.s32.totalorder %s37, 1
      %p286 = por %p284, %p285
      %p287 = scmp.ne.s32.totalorder %s278, %s279
      %p288 = scmp.eq.s32.totalorder %s37, 0
      %p289 = por %p287, %p288
      %p290 = scmp.ne.s32.totalorder %s278, %s279
      %p291 = scmp.eq.s32.totalorder %s38, 1
      %p292 = por %p290, %p291
      %p294 = scmp.ne.s32.totalorder %s279, %s293
      %p295 = scmp.eq.s32.totalorder %s38, 0
      %p296 = por %p294, %p295
      %s298 = sadd.s32 %s297, 1
      %p301 = scmp.eq.s32.totalorder %s32, 1
      %p302 = scmp.ne.s32.totalorder %s297, %s299
      %p303 = scmp.eq.s32.totalorder %s32, 0
      %p304 = por %p302, %p303
      %p305 = scmp.ne.s32.totalorder %s297, %s299
      %p306 = scmp.eq.s32.totalorder %s37, 1
      %p307 = por %p305, %p306
      %p308 = scmp.ne.s32.totalorder %s299, %s300
      %p309 = scmp.eq.s32.totalorder %s37, 0
      %p310 = por %p308, %p309
      %p311 = scmp.ne.s32.totalorder %s299, %s300
      %p312 = scmp.eq.s32.totalorder %s38, 1
      %p313 = por %p311, %p312
      %p315 = scmp.ne.s32.totalorder %s300, %s314
      %p316 = scmp.eq.s32.totalorder %s38, 0
      %p317 = por %p315, %p316
      %s319 = sadd.s32 %s318, 1
      %p322 = scmp.eq.s32.totalorder %s32, 1
      %p323 = scmp.ne.s32.totalorder %s318, %s320
      %p324 = scmp.eq.s32.totalorder %s32, 0
      %p325 = por %p323, %p324
      %p326 = scmp.ne.s32.totalorder %s318, %s320
      %p327 = scmp.eq.s32.totalorder %s37, 1
      %p328 = por %p326, %p327
      %p329 = scmp.ne.s32.totalorder %s320, %s321
      %p330 = scmp.eq.s32.totalorder %s37, 0
      %p331 = por %p329, %p330
      %p332 = scmp.ne.s32.totalorder %s320, %s321
      %p333 = scmp.eq.s32.totalorder %s38, 1
      %p334 = por %p332, %p333
      %p336 = scmp.ne.s32.totalorder %s321, %s335
      %p337 = scmp.eq.s32.totalorder %s38, 0
      %p338 = por %p336, %p337
      %s340 = sadd.s32 %s339, 1
      %p343 = scmp.eq.s32.totalorder %s32, 1
      %p344 = scmp.ne.s32.totalorder %s339, %s341
      %p345 = scmp.eq.s32.totalorder %s32, 0
      %p346 = por %p344, %p345
      %p347 = scmp.ne.s32.totalorder %s339, %s341
      %p348 = scmp.eq.s32.totalorder %s37, 1
      %p349 = por %p347, %p348
      %p350 = scmp.ne.s32.totalorder %s341, %s342
      %p351 = scmp.eq.s32.totalorder %s37, 0
      %p352 = por %p350, %p351
      %p353 = scmp.ne.s32.totalorder %s341, %s342
      %p354 = scmp.eq.s32.totalorder %s38, 1
      %p355 = por %p353, %p354
      %p357 = scmp.ne.s32.totalorder %s342, %s356
      %p358 = scmp.eq.s32.totalorder %s38, 0
      %p359 = por %p357, %p358
      %s361 = sadd.s32 %s360, 1
      %p364 = scmp.eq.s32.totalorder %s32, 1
      %p365 = scmp.ne.s32.totalorder %s360, %s362
      %p366 = scmp.eq.s32.totalorder %s32, 0
      %p367 = por %p365, %p366
      %p368 = scmp.ne.s32.totalorder %s360, %s362
      %p369 = scmp.eq.s32.totalorder %s37, 1
      %p370 = por %p368, %p369
      %p371 = scmp.ne.s32.totalorder %s362, %s363
      %p372 = scmp.eq.s32.totalorder %s37, 0
      %p373 = por %p371, %p372
      %p374 = scmp.ne.s32.totalorder %s362, %s363
      %p375 = scmp.eq.s32.totalorder %s38, 1
      %p376 = por %p374, %p375
      %p378 = scmp.ne.s32.totalorder %s363, %s377
      %p379 = scmp.eq.s32.totalorder %s38, 0
      %p380 = por %p378, %p379
      %s382 = sadd.s32 %s381, 1
      %p385 = scmp.eq.s32.totalorder %s32, 1
      %p386 = scmp.ne.s32.totalorder %s381, %s383
      %p387 = scmp.eq.s32.totalorder %s32, 0
      %p388 = por %p386, %p387
      %p389 = scmp.ne.s32.totalorder %s381, %s383
      %p390 = scmp.eq.s32.totalorder %s37, 1
      %p391 = por %p389, %p390
      %p392 = scmp.ne.s32.totalorder %s383, %s384
      %p393 = scmp.eq.s32.totalorder %s37, 0
      %p394 = por %p392, %p393
      %p395 = scmp.ne.s32.totalorder %s383, %s384
      %p396 = scmp.eq.s32.totalorder %s38, 1
      %p397 = por %p395, %p396
      %p399 = scmp.ne.s32.totalorder %s384, %s398
      %p400 = scmp.eq.s32.totalorder %s38, 0
      %p401 = por %p399, %p400
      %s403 = sadd.s32 %s402, 1
      %p406 = scmp.eq.s32.totalorder %s32, 1
      %p407 = scmp.ne.s32.totalorder %s402, %s404
      %p408 = scmp.eq.s32.totalorder %s32, 0
      %p409 = por %p407, %p408
      %p410 = scmp.ne.s32.totalorder %s402, %s404
      %p411 = scmp.eq.s32.totalorder %s37, 1
      %p412 = por %p410, %p411
      %p413 = scmp.ne.s32.totalorder %s404, %s405
      %p414 = scmp.eq.s32.totalorder %s37, 0
      %p415 = por %p413, %p414
      %p416 = scmp.ne.s32.totalorder %s404, %s405
      %p417 = scmp.eq.s32.totalorder %s38, 1
      %p418 = por %p416, %p417
      %p420 = scmp.ne.s32.totalorder %s405, %s419
      %p421 = scmp.eq.s32.totalorder %s38, 0
      %p422 = por %p420, %p421
      %s424 = sadd.s32 %s423, 1
      %p427 = scmp.eq.s32.totalorder %s32, 1
      %p428 = scmp.ne.s32.totalorder %s423, %s425
      %p429 = scmp.eq.s32.totalorder %s32, 0
      %p430 = por %p428, %p429
      %p431 = scmp.ne.s32.totalorder %s423, %s425
      %p432 = scmp.eq.s32.totalorder %s37, 1
      %p433 = por %p431, %p432
      %p434 = scmp.ne.s32.totalorder %s425, %s426
      %p435 = scmp.eq.s32.totalorder %s37, 0
      %p436 = por %p434, %p435
      %p437 = scmp.ne.s32.totalorder %s425, %s426
      %p438 = scmp.eq.s32.totalorder %s38, 1
      %p439 = por %p437, %p438
      %p441 = scmp.ne.s32.totalorder %s426, %s440
      %p442 = scmp.eq.s32.totalorder %s38, 0
      %p443 = por %p441, %p442
      %s445 = sadd.s32 %s444, 1
      %p448 = scmp.eq.s32.totalorder %s32, 1
      %p449 = scmp.ne.s32.totalorder %s444, %s446
      %p450 = scmp.eq.s32.totalorder %s32, 0
      %p451 = por %p449, %p450
      %p452 = scmp.ne.s32.totalorder %s444, %s446
      %p453 = scmp.eq.s32.totalorder %s37, 1
      %p454 = por %p452, %p453
      %p455 = scmp.ne.s32.totalorder %s446, %s447
      %p456 = scmp.eq.s32.totalorder %s37, 0
      %p457 = por %p455, %p456
      %p458 = scmp.ne.s32.totalorder %s446, %s447
      %p459 = scmp.eq.s32.totalorder %s38, 1
      %p460 = por %p458, %p459
      %p462 = scmp.ne.s32.totalorder %s447, %s461
      %p463 = scmp.eq.s32.totalorder %s38, 0
      %p464 = por %p462, %p463
      %s466 = sadd.s32 %s465, 1
      %p469 = scmp.eq.s32.totalorder %s32, 1
      %p470 = scmp.ne.s32.totalorder %s465, %s467
      %p471 = scmp.eq.s32.totalorder %s32, 0
      %p472 = por %p470, %p471
      %p473 = scmp.ne.s32.totalorder %s465, %s467
      %p474 = scmp.eq.s32.totalorder %s37, 1
      %p475 = por %p473, %p474
      %p476 = scmp.ne.s32.totalorder %s467, %s468
      %p477 = scmp.eq.s32.totalorder %s37, 0
      %p478 = por %p476, %p477
      %p479 = scmp.ne.s32.totalorder %s467, %s468
      %p480 = scmp.eq.s32.totalorder %s38, 1
      %p481 = por %p479, %p480
      %p483 = scmp.ne.s32.totalorder %s468, %s482
      %p484 = scmp.eq.s32.totalorder %s38, 0
      %p485 = por %p483, %p484
      %s487 = sadd.s32 %s486, 1
      %p490 = scmp.eq.s32.totalorder %s32, 1
      %p491 = scmp.ne.s32.totalorder %s486, %s488
      %p492 = scmp.eq.s32.totalorder %s32, 0
      %p493 = por %p491, %p492
      %p494 = scmp.ne.s32.totalorder %s486, %s488
      %p495 = scmp.eq.s32.totalorder %s37, 1
      %p496 = por %p494, %p495
      %p497 = scmp.ne.s32.totalorder %s488, %s489
      %p498 = scmp.eq.s32.totalorder %s37, 0
      %p499 = por %p497, %p498
      %p500 = scmp.ne.s32.totalorder %s488, %s489
      %p501 = scmp.eq.s32.totalorder %s38, 1
      %p502 = por %p500, %p501
      %p504 = scmp.ne.s32.totalorder %s489, %s503
      %p505 = scmp.eq.s32.totalorder %s38, 0
      %p506 = por %p504, %p505
      %s508 = sadd.s32 %s507, 1
      %p511 = scmp.eq.s32.totalorder %s32, 1
      %p512 = scmp.ne.s32.totalorder %s507, %s509
      %p513 = scmp.eq.s32.totalorder %s32, 0
      %p514 = por %p512, %p513
      %p515 = scmp.ne.s32.totalorder %s507, %s509
      %p516 = scmp.eq.s32.totalorder %s37, 1
      %p517 = por %p515, %p516
      %p518 = scmp.ne.s32.totalorder %s509, %s510
      %p519 = scmp.eq.s32.totalorder %s37, 0
      %p520 = por %p518, %p519
      %p521 = scmp.ne.s32.totalorder %s509, %s510
      %p522 = scmp.eq.s32.totalorder %s38, 1
      %p523 = por %p521, %p522
      %p525 = scmp.ne.s32.totalorder %s510, %s524
      %p526 = scmp.eq.s32.totalorder %s38, 0
      %p527 = por %p525, %p526
      %s528 = ssub.s32 %s32, %s39
      %p529 = scmp.eq.s32.totalorder %s528, 0
      %s531 = sadd.s32 %s530, 1
      %s532 = scalar_select %p529, %s530, %s531
      %p535 = pneg %p529
      %p536 = scmp.eq.s32.totalorder %s32, 1
      %p537 = por %p535, %p536
      %p538 = scmp.ne.s32.totalorder %s530, %s533
      %p539 = scmp.eq.s32.totalorder %s32, 0
      %p540 = por %p538, %p539
      %p541 = scmp.ne.s32.totalorder %s530, %s533
      %p542 = scmp.eq.s32.totalorder %s37, 1
      %p543 = por %p541, %p542
      %p544 = scmp.ne.s32.totalorder %s533, %s534
      %p545 = scmp.eq.s32.totalorder %s37, 0
      %p546 = por %p544, %p545
      %p547 = scmp.ne.s32.totalorder %s533, %s534
      %p548 = scmp.eq.s32.totalorder %s38, 1
      %p549 = por %p547, %p548
      %p551 = scmp.ne.s32.totalorder %s534, %s550
      %p552 = scmp.eq.s32.totalorder %s38, 0
      %p553 = por %p551, %p552
      %p554 = scmp.le.s32.totalorder 1, %s32
      %p555 = scmp.lt.s32.totalorder %s32, 3
      %p556 = pnand %p554, %p555
      %p557 = pneg %p556
      // Predicated region
      $region9: #{tpu_custom_call.1} parent=5 // pred_check
        _
      $region10: #{tpu_custom_call.1} parent=5 // pred_check_branch
        %559 = sbr.rel (%p556) target = $region12
      $region11: #{tpu_custom_call.1} parent=5 // pred_region
        %s560 = ssub.s32 %s32, 1
        // Predicated region
        $region13: #{tpu_custom_call.1} parent=11 // pred_check
          %p561 = pneg %p79
        $region14: #{tpu_custom_call.1} parent=11 // pred_check_branch
          %563 = sbr.rel (%p561) target = $region16
        $region15: #{tpu_custom_call.1} parent=11 // pred_region
          _
        $region16: #{tpu_custom_call.1} parent=11 // pred_fallthru
          _
        // Predicated region
        $region17: #{tpu_custom_call.1} parent=11 // pred_check
          %p564 = pneg %p100
        $region18: #{tpu_custom_call.1} parent=11 // pred_check_branch
          %566 = sbr.rel (%p564) target = $region20
        $region19: #{tpu_custom_call.1} parent=11 // pred_region
          _
        $region20: #{tpu_custom_call.1} parent=11 // pred_fallthru
          _
        // Predicated region
        $region21: #{tpu_custom_call.1} parent=11 // pred_check
          %p567 = pneg %p121
        $region22: #{tpu_custom_call.1} parent=11 // pred_check_branch
          %569 = sbr.rel (%p567) target = $region24
        $region23: #{tpu_custom_call.1} parent=11 // pred_region
          _
        $region24: #{tpu_custom_call.1} parent=11 // pred_fallthru
          _
        // Predicated region
        $region25: #{tpu_custom_call.1} parent=11 // pred_check
          %p570 = pneg %p142
        $region26: #{tpu_custom_call.1} parent=11 // pred_check_branch
          %572 = sbr.rel (%p570) target = $region28
        $region27: #{tpu_custom_call.1} parent=11 // pred_region
          _
        $region28: #{tpu_custom_call.1} parent=11 // pred_fallthru
          _
        // Predicated region
        $region29: #{tpu_custom_call.1} parent=11 // pred_check
          %p573 = pneg %p163
        $region30: #{tpu_custom_call.1} parent=11 // pred_check_branch
          %575 = sbr.rel (%p573) target = $region32
        $region31: #{tpu_custom_call.1} parent=11 // pred_region
          _
        $region32: #{tpu_custom_call.1} parent=11 // pred_fallthru
          _
        // Predicated region
        $region33: #{tpu_custom_call.1} parent=11 // pred_check
          %p576 = pneg %p184
        $region34: #{tpu_custom_call.1} parent=11 // pred_check_branch
          %578 = sbr.rel (%p576) target = $region36
        $region35: #{tpu_custom_call.1} parent=11 // pred_region
          _
        $region36: #{tpu_custom_call.1} parent=11 // pred_fallthru
          _
        // Predicated region
        $region37: #{tpu_custom_call.1} parent=11 // pred_check
          %p579 = pneg %p205
        $region38: #{tpu_custom_call.1} parent=11 // pred_check_branch
          %581 = sbr.rel (%p579) target = $region40
        $region39: #{tpu_custom_call.1} parent=11 // pred_region
          _
        $region40: #{tpu_custom_call.1} parent=11 // pred_fallthru
          _
        // Predicated region
        $region41: #{tpu_custom_call.1} parent=11 // pred_check
          %p582 = pneg %p226
        $region42: #{tpu_custom_call.1} parent=11 // pred_check_branch
          %584 = sbr.rel (%p582) target = $region44
        $region43: #{tpu_custom_call.1} parent=11 // pred_region
          _
        $region44: #{tpu_custom_call.1} parent=11 // pred_fallthru
          _
        // Predicated region
        $region45: #{tpu_custom_call.1} parent=11 // pred_check
          %p585 = pneg %p247
        $region46: #{tpu_custom_call.1} parent=11 // pred_check_branch
          %587 = sbr.rel (%p585) target = $region48
        $region47: #{tpu_custom_call.1} parent=11 // pred_region
          _
        $region48: #{tpu_custom_call.1} parent=11 // pred_fallthru
          _
        // Predicated region
        $region49: #{tpu_custom_call.1} parent=11 // pred_check
          %p588 = pneg %p268
        $region50: #{tpu_custom_call.1} parent=11 // pred_check_branch
          %590 = sbr.rel (%p588) target = $region52
        $region51: #{tpu_custom_call.1} parent=11 // pred_region
          _
        $region52: #{tpu_custom_call.1} parent=11 // pred_fallthru
          _
        // Predicated region
        $region53: #{tpu_custom_call.1} parent=11 // pred_check
          %p591 = pneg %p289
        $region54: #{tpu_custom_call.1} parent=11 // pred_check_branch
          %593 = sbr.rel (%p591) target = $region56
        $region55: #{tpu_custom_call.1} parent=11 // pred_region
          _
        $region56: #{tpu_custom_call.1} parent=11 // pred_fallthru
          _
        // Predicated region
        $region57: #{tpu_custom_call.1} parent=11 // pred_check
          %p594 = pneg %p310
        $region58: #{tpu_custom_call.1} parent=11 // pred_check_branch
          %596 = sbr.rel (%p594) target = $region60
        $region59: #{tpu_custom_call.1} parent=11 // pred_region
          _
        $region60: #{tpu_custom_call.1} parent=11 // pred_fallthru
          _
        // Predicated region
        $region61: #{tpu_custom_call.1} parent=11 // pred_check
          %p597 = pneg %p331
        $region62: #{tpu_custom_call.1} parent=11 // pred_check_branch
          %599 = sbr.rel (%p597) target = $region64
        $region63: #{tpu_custom_call.1} parent=11 // pred_region
          _
        $region64: #{tpu_custom_call.1} parent=11 // pred_fallthru
          _
        // Predicated region
        $region65: #{tpu_custom_call.1} parent=11 // pred_check
          %p600 = pneg %p352
        $region66: #{tpu_custom_call.1} parent=11 // pred_check_branch
          %602 = sbr.rel (%p600) target = $region68
        $region67: #{tpu_custom_call.1} parent=11 // pred_region
          _
        $region68: #{tpu_custom_call.1} parent=11 // pred_fallthru
          _
        // Predicated region
        $region69: #{tpu_custom_call.1} parent=11 // pred_check
          %p603 = pneg %p373
        $region70: #{tpu_custom_call.1} parent=11 // pred_check_branch
          %605 = sbr.rel (%p603) target = $region72
        $region71: #{tpu_custom_call.1} parent=11 // pred_region
          _
        $region72: #{tpu_custom_call.1} parent=11 // pred_fallthru
          _
        // Predicated region
        $region73: #{tpu_custom_call.1} parent=11 // pred_check
          %p606 = pneg %p394
        $region74: #{tpu_custom_call.1} parent=11 // pred_check_branch
          %608 = sbr.rel (%p606) target = $region76
        $region75: #{tpu_custom_call.1} parent=11 // pred_region
          _
        $region76: #{tpu_custom_call.1} parent=11 // pred_fallthru
          _
        // Predicated region
        $region77: #{tpu_custom_call.1} parent=11 // pred_check
          %p609 = pneg %p415
        $region78: #{tpu_custom_call.1} parent=11 // pred_check_branch
          %611 = sbr.rel (%p609) target = $region80
        $region79: #{tpu_custom_call.1} parent=11 // pred_region
          _
        $region80: #{tpu_custom_call.1} parent=11 // pred_fallthru
          _
        // Predicated region
        $region81: #{tpu_custom_call.1} parent=11 // pred_check
          %p612 = pneg %p436
        $region82: #{tpu_custom_call.1} parent=11 // pred_check_branch
          %614 = sbr.rel (%p612) target = $region84
        $region83: #{tpu_custom_call.1} parent=11 // pred_region
          _
        $region84: #{tpu_custom_call.1} parent=11 // pred_fallthru
          _
        // Predicated region
        $region85: #{tpu_custom_call.1} parent=11 // pred_check
          %p615 = pneg %p457
        $region86: #{tpu_custom_call.1} parent=11 // pred_check_branch
          %617 = sbr.rel (%p615) target = $region88
        $region87: #{tpu_custom_call.1} parent=11 // pred_region
          _
        $region88: #{tpu_custom_call.1} parent=11 // pred_fallthru
          _
        // Predicated region
        $region89: #{tpu_custom_call.1} parent=11 // pred_check
          %p618 = pneg %p478
        $region90: #{tpu_custom_call.1} parent=11 // pred_check_branch
          %620 = sbr.rel (%p618) target = $region92
        $region91: #{tpu_custom_call.1} parent=11 // pred_region
          _
        $region92: #{tpu_custom_call.1} parent=11 // pred_fallthru
          _
        // Predicated region
        $region93: #{tpu_custom_call.1} parent=11 // pred_check
          %p621 = pneg %p499
        $region94: #{tpu_custom_call.1} parent=11 // pred_check_branch
          %623 = sbr.rel (%p621) target = $region96
        $region95: #{tpu_custom_call.1} parent=11 // pred_region
          _
        $region96: #{tpu_custom_call.1} parent=11 // pred_fallthru
          _
        // Predicated region
        $region97: #{tpu_custom_call.1} parent=11 // pred_check
          %p624 = pneg %p520
        $region98: #{tpu_custom_call.1} parent=11 // pred_check_branch
          %626 = sbr.rel (%p624) target = $region100
        $region99: #{tpu_custom_call.1} parent=11 // pred_region
          _
        $region100: #{tpu_custom_call.1} parent=11 // pred_fallthru
          _
      $region12: #{tpu_custom_call.1} parent=5 // pred_fallthru
        _
      %p627 = scmp.lt.s32.totalorder %s32, 2
      // Predicated region
      $region101: #{tpu_custom_call.1} parent=5 // pred_check
        %p628 = pneg %p627
      $region102: #{tpu_custom_call.1} parent=5 // pred_check_branch
        %630 = sbr.rel (%p628) target = $region104
      $region103: #{tpu_custom_call.1} parent=5 // pred_region
        // Predicated region
        $region105: #{tpu_custom_call.1} parent=103 // pred_check
          %p631 = pneg %p52
        $region106: #{tpu_custom_call.1} parent=103 // pred_check_branch
          %633 = sbr.rel (%p631) target = $region108
        $region107: #{tpu_custom_call.1} parent=103 // pred_region
          %p634 = scmp.lt.s32.totalorder %s32, 1
          %s635 = scalar_select %p634, %s32, 1
          %s636 = smul.addr %s635, 32
          %s637 = smul.addr %s636, 8
          %s638 = scalar_lea.vmem %s0, %s637
        $region108: #{tpu_custom_call.1} parent=103 // pred_fallthru
          _
      $region104: #{tpu_custom_call.1} parent=5 // pred_fallthru
        _
      %p639 = scmp.le.s32.totalorder 1, %s32
      %p640 = scmp.lt.s32.totalorder %s32, 3
      %p641 = pnand %p639, %p640
      %p642 = pneg %p641
      // Predicated region
      $region109: #{tpu_custom_call.1} parent=5 // pred_check
        _
      $region110: #{tpu_custom_call.1} parent=5 // pred_check_branch
        %644 = sbr.rel (%p641) target = $region112
      $region111: #{tpu_custom_call.1} parent=5 // pred_region
        %s645 = ssub.s32 %s32, 1
        %p646 = scmp.lt.s32.totalorder %s37, 1
        %s647 = scalar_select %p646, %s37, 1
        %s648 = smul.addr %s647, 32
        %s649 = smul.addr %s648, 8
        %s650 = scalar_lea.vmem %s0, %s649
        %p651 = pneg %p58
        %p652 = pneg %p55
        %p653 = pneg %p79
        %p654 = pneg %p76
        %p655 = pneg %p100
        %p656 = pneg %p97
        %p657 = pneg %p121
        %p658 = pneg %p118
        %p659 = pneg %p142
        %p660 = pneg %p139
        %p661 = pneg %p163
        %p662 = pneg %p160
        %p663 = pneg %p184
        %p664 = pneg %p181
        %p665 = pneg %p205
        %p666 = pneg %p202
        %p667 = pneg %p226
        %p668 = pneg %p223
        %p669 = pneg %p247
        %p670 = pneg %p244
        %p671 = pneg %p268
        %p672 = pneg %p265
        %p673 = pneg %p289
        %p674 = pneg %p286
        %p675 = pneg %p310
        %p676 = pneg %p307
        %p677 = pneg %p331
        %p678 = pneg %p328
        %p679 = pneg %p352
        %p680 = pneg %p349
        %p681 = pneg %p373
        %p682 = pneg %p370
        %p683 = pneg %p394
        %p684 = pneg %p391
        %p685 = pneg %p415
        %p686 = pneg %p412
        %p687 = pneg %p436
        %p688 = pneg %p433
        %p689 = pneg %p457
        %p690 = pneg %p454
        %p691 = pneg %p478
        %p692 = pneg %p475
        %p693 = pneg %p499
        %p694 = pneg %p496
        %p695 = pneg %p520
        %p696 = pneg %p517
        %p697 = pneg %p546
        %p698 = pneg %p543
        %s699 = sand.u32 %s533, 1
        %s700 = scalar_lea.sflag [#allocation6], %s699
        %s701 = sand.u32 %s533, 1
        %s702 = smul.addr %s701, 8
        %s703 = scalar_lea.vmem [#allocation5], %s702
        %p704 = scmp.lt.s32.totalorder %s37, 1
        %s705 = scalar_select %p704, %s37, 1
        %s706 = smul.addr %s705, 32
        %s707 = smul.addr %s706, 8
        %s708 = scalar_lea.vmem %s0, %s707
        %v709 = vld [vmem:[%s708] sm:$0xff]
        %v710 = vld [vmem:[%s708 + $0x8] sm:$0xff]
        %v711 = vld [vmem:[%s708 + $0x10] sm:$0xff]
        %v712 = vld [vmem:[%s708 + $0x18] sm:$0xff]
        %v713 = vld [vmem:[%s708 + $0x20] sm:$0xff]
        %v714 = vld [vmem:[%s708 + $0x28] sm:$0xff]
        %v715 = vld [vmem:[%s708 + $0x30] sm:$0xff]
        %v716 = vld [vmem:[%s708 + $0x38] sm:$0xff]
        %v717 = vld [vmem:[%s708 + $0x40] sm:$0xff]
        %v718 = vld [vmem:[%s708 + $0x48] sm:$0xff]
        %v719 = vld [vmem:[%s708 + $0x50] sm:$0xff]
        %v720 = vld [vmem:[%s708 + $0x58] sm:$0xff]
        %v721 = vld [vmem:[%s708 + $0x60] sm:$0xff]
        %v722 = vld [vmem:[%s708 + $0x68] sm:$0xff]
        %v723 = vld [vmem:[%s708 + $0x70] sm:$0xff]
        %v724 = vld [vmem:[%s708 + $0x78] sm:$0xff]
        %v725 = vld [vmem:[%s708 + $0x80] sm:$0xff]
        %v726 = vld [vmem:[%s708 + $0x88] sm:$0xff]
        %v727 = vld [vmem:[%s708 + $0x90] sm:$0xff]
        %v728 = vld [vmem:[%s708 + $0x98] sm:$0xff]
        %v729 = vld [vmem:[%s708 + $0xa0] sm:$0xff]
        %v730 = vld [vmem:[%s708 + $0xa8] sm:$0xff]
        %v731 = vld [vmem:[%s708 + $0xb0] sm:$0xff]
        %v732 = vld [vmem:[%s708 + $0xb8] sm:$0xff]
        %v733 = vld [vmem:[%s708 + $0xc0] sm:$0xff]
        %v734 = vld [vmem:[%s708 + $0xc8] sm:$0xff]
        %v735 = vld [vmem:[%s708 + $0xd0] sm:$0xff]
        %v736 = vld [vmem:[%s708 + $0xd8] sm:$0xff]
        %v737 = vld [vmem:[%s708 + $0xe0] sm:$0xff]
        %v738 = vld [vmem:[%s708 + $0xe8] sm:$0xff]
        %v739 = vld [vmem:[%s708 + $0xf0] sm:$0xff]
        %v740 = vld [vmem:[%s708 + $0xf8] sm:$0xff]
        %v741 = vmax.f32 %v709, 0.0
        %v742 = vmax.f32 %v710, 0.0
        %v743 = vmax.f32 %v711, 0.0
        %v744 = vmax.f32 %v712, 0.0
        %v745 = vmax.f32 %v713, 0.0
        %v746 = vmax.f32 %v714, 0.0
        %v747 = vmax.f32 %v715, 0.0
        %v748 = vmax.f32 %v716, 0.0
        %v749 = vmax.f32 %v717, 0.0
        %v750 = vmax.f32 %v718, 0.0
        %v751 = vmax.f32 %v719, 0.0
        %v752 = vmax.f32 %v720, 0.0
        %v753 = vmax.f32 %v721, 0.0
        %v754 = vmax.f32 %v722, 0.0
        %v755 = vmax.f32 %v723, 0.0
        %v756 = vmax.f32 %v724, 0.0
        %v757 = vmax.f32 %v725, 0.0
        %v758 = vmax.f32 %v726, 0.0
        %v759 = vmax.f32 %v727, 0.0
        %v760 = vmax.f32 %v728, 0.0
        %v761 = vmax.f32 %v729, 0.0
        %v762 = vmax.f32 %v730, 0.0
        %v763 = vmax.f32 %v731, 0.0
        %v764 = vmax.f32 %v732, 0.0
        %v765 = vmax.f32 %v733, 0.0
        %v766 = vmax.f32 %v734, 0.0
        %v767 = vmax.f32 %v735, 0.0
        %v768 = vmax.f32 %v736, 0.0
        %v769 = vmax.f32 %v737, 0.0
        %v770 = vmax.f32 %v738, 0.0
        %v771 = vmax.f32 %v739, 0.0
        %v772 = vmax.f32 %v740, 0.0
        %v773 = vld [vmem:[%s2] sm:$0x1]
        %v774 = vld [vmem:[%s2 + $0x1] sm:$0x1]
        %v775 = vld [vmem:[%s2 + $0x2] sm:$0x1]
        %v776 = vld [vmem:[%s2 + $0x3] sm:$0x1]
        %v777 = vld [vmem:[%s2 + $0x4] sm:$0x1]
        %v778 = vld [vmem:[%s2 + $0x5] sm:$0x1]
        %v779 = vld [vmem:[%s2 + $0x6] sm:$0x1]
        %v780 = vld [vmem:[%s2 + $0x7] sm:$0x1]
        %v781 = vld [vmem:[%s2 + $0x8] sm:$0x1]
        %vm782 = vcmask 31744
        %783 = vst.msk [vmem:[#allocation2] sm:$0xff] %vm782, 0.0
        %784 = vst.msk [vmem:[#allocation2 + $0x8] sm:$0xff] %vm782, 0.0
        %785 = vst.msk [vmem:[#allocation2 + $0x10] sm:$0xff] %vm782, 0.0
        %786 = vst.msk [vmem:[#allocation2 + $0x18] sm:$0xff] %vm782, 0.0
        %787 = vst.msk [vmem:[#allocation2 + $0x20] sm:$0xff] %vm782, 0.0
        %788 = vst.msk [vmem:[#allocation2 + $0x28] sm:$0xff] %vm782, 0.0
        %789 = vst.msk [vmem:[#allocation2 + $0x30] sm:$0xff] %vm782, 0.0
        %790 = vst.msk [vmem:[#allocation2 + $0x38] sm:$0xff] %vm782, 0.0
        %791 = vst.msk [vmem:[#allocation2 + $0x40] sm:$0xff] %vm782, 0.0
        %792 = vst.msk [vmem:[#allocation2 + $0x48] sm:$0xff] %vm782, 0.0
        %793 = vst.msk [vmem:[#allocation2 + $0x50] sm:$0xff] %vm782, 0.0
        %794 = vst.msk [vmem:[#allocation2 + $0x58] sm:$0xff] %vm782, 0.0
        %795 = vst.msk [vmem:[#allocation2 + $0x60] sm:$0xff] %vm782, 0.0
        %796 = vst.msk [vmem:[#allocation2 + $0x68] sm:$0xff] %vm782, 0.0
        %797 = vst.msk [vmem:[#allocation2 + $0x70] sm:$0xff] %vm782, 0.0
        %798 = vst.msk [vmem:[#allocation2 + $0x78] sm:$0xff] %vm782, 0.0
        %799 = vst.msk [vmem:[#allocation2 + $0x80] sm:$0xff] %vm782, 0.0
        %800 = vst.msk [vmem:[#allocation2 + $0x88] sm:$0xff] %vm782, 0.0
        %801 = vst.msk [vmem:[#allocation2 + $0x90] sm:$0xff] %vm782, 0.0
        %802 = vst.msk [vmem:[#allocation2 + $0x98] sm:$0xff] %vm782, 0.0
        %803 = vst.msk [vmem:[#allocation2 + $0xa0] sm:$0xff] %vm782, 0.0
        %804 = vst.msk [vmem:[#allocation2 + $0xa8] sm:$0xff] %vm782, 0.0
        %805 = vst.msk [vmem:[#allocation2 + $0xb0] sm:$0xff] %vm782, 0.0
        %806 = vst.msk [vmem:[#allocation2 + $0xb8] sm:$0xff] %vm782, 0.0
        %807 = vst.msk [vmem:[#allocation2 + $0xc0] sm:$0xff] %vm782, 0.0
        %808 = vst.msk [vmem:[#allocation2 + $0xc8] sm:$0xff] %vm782, 0.0
        %809 = vst.msk [vmem:[#allocation2 + $0xd0] sm:$0xff] %vm782, 0.0
        %810 = vst.msk [vmem:[#allocation2 + $0xd8] sm:$0xff] %vm782, 0.0
        %811 = vst.msk [vmem:[#allocation2 + $0xe0] sm:$0xff] %vm782, 0.0
        %812 = vst.msk [vmem:[#allocation2 + $0xe8] sm:$0xff] %vm782, 0.0
        %813 = vst.msk [vmem:[#allocation2 + $0xf0] sm:$0xff] %vm782, 0.0
        %814 = vst.msk [vmem:[#allocation2 + $0xf8] sm:$0xff] %vm782, 0.0
        %815 = vst.msk [vmem:[#allocation2 + $0x100] sm:$0xff] %vm782, 0.0
        %816 = vst.msk [vmem:[#allocation2 + $0x108] sm:$0xff] %vm782, 0.0
        %817 = vst.msk [vmem:[#allocation2 + $0x110] sm:$0xff] %vm782, 0.0
        %818 = vst.msk [vmem:[#allocation2 + $0x118] sm:$0xff] %vm782, 0.0
        %819 = vst.msk [vmem:[#allocation2 + $0x120] sm:$0xff] %vm782, 0.0
        %820 = vst.msk [vmem:[#allocation2 + $0x128] sm:$0xff] %vm782, 0.0
        %821 = vst.msk [vmem:[#allocation2 + $0x130] sm:$0xff] %vm782, 0.0
        %822 = vst.msk [vmem:[#allocation2 + $0x138] sm:$0xff] %vm782, 0.0
        %823 = vst.msk [vmem:[#allocation2 + $0x140] sm:$0xff] %vm782, 0.0
        %824 = vst.msk [vmem:[#allocation2 + $0x148] sm:$0xff] %vm782, 0.0
        %825 = vst.msk [vmem:[#allocation2 + $0x150] sm:$0xff] %vm782, 0.0
        %826 = vst.msk [vmem:[#allocation2 + $0x158] sm:$0xff] %vm782, 0.0
        %827 = vst.msk [vmem:[#allocation2 + $0x160] sm:$0xff] %vm782, 0.0
        %828 = vst.msk [vmem:[#allocation2 + $0x168] sm:$0xff] %vm782, 0.0
        %829 = vst.msk [vmem:[#allocation2 + $0x170] sm:$0xff] %vm782, 0.0
        %830 = vst.msk [vmem:[#allocation2 + $0x178] sm:$0xff] %vm782, 0.0
        %831 = vst.msk [vmem:[#allocation2 + $0x180] sm:$0xff] %vm782, 0.0
        %832 = vst.msk [vmem:[#allocation2 + $0x188] sm:$0xff] %vm782, 0.0
        %833 = vst.msk [vmem:[#allocation2 + $0x190] sm:$0xff] %vm782, 0.0
        %834 = vst.msk [vmem:[#allocation2 + $0x198] sm:$0xff] %vm782, 0.0
        %835 = vst.msk [vmem:[#allocation2 + $0x1a0] sm:$0xff] %vm782, 0.0
        %836 = vst.msk [vmem:[#allocation2 + $0x1a8] sm:$0xff] %vm782, 0.0
        %837 = vst.msk [vmem:[#allocation2 + $0x1b0] sm:$0xff] %vm782, 0.0
        %838 = vst.msk [vmem:[#allocation2 + $0x1b8] sm:$0xff] %vm782, 0.0
        %839 = vst.msk [vmem:[#allocation2 + $0x1c0] sm:$0xff] %vm782, 0.0
        %840 = vst.msk [vmem:[#allocation2 + $0x1c8] sm:$0xff] %vm782, 0.0
        %841 = vst.msk [vmem:[#allocation2 + $0x1d0] sm:$0xff] %vm782, 0.0
        %842 = vst.msk [vmem:[#allocation2 + $0x1d8] sm:$0xff] %vm782, 0.0
        %843 = vst.msk [vmem:[#allocation2 + $0x1e0] sm:$0xff] %vm782, 0.0
        %844 = vst.msk [vmem:[#allocation2 + $0x1e8] sm:$0xff] %vm782, 0.0
        %845 = vst.msk [vmem:[#allocation2 + $0x1f0] sm:$0xff] %vm782, 0.0
        %846 = vst.msk [vmem:[#allocation2 + $0x1f8] sm:$0xff] %vm782, 0.0
        %847 = vst.msk [vmem:[#allocation2 + $0x200] sm:$0xff] %vm782, 0.0
        %848 = vst.msk [vmem:[#allocation2 + $0x208] sm:$0xff] %vm782, 0.0
        %849 = vst.msk [vmem:[#allocation2 + $0x210] sm:$0xff] %vm782, 0.0
        %850 = vst.msk [vmem:[#allocation2 + $0x218] sm:$0xff] %vm782, 0.0
        %851 = vst.msk [vmem:[#allocation2 + $0x220] sm:$0xff] %vm782, 0.0
        %852 = vst.msk [vmem:[#allocation2 + $0x228] sm:$0xff] %vm782, 0.0
        %853 = vst.msk [vmem:[#allocation2 + $0x230] sm:$0xff] %vm782, 0.0
        %854 = vst.msk [vmem:[#allocation2 + $0x238] sm:$0xff] %vm782, 0.0
        %s855 = scalar_lea.vmem [#allocation2], 32
        %856 = vst.msk [vmem:[%s855 + $0x8] sm:$0xff] %vm782, %v741
        %857 = vst.msk [vmem:[%s855 + $0x10] sm:$0xff] %vm782, %v742
        %858 = vst.msk [vmem:[%s855 + $0x28] sm:$0xff] %vm782, %v743
        %859 = vst.msk [vmem:[%s855 + $0x30] sm:$0xff] %vm782, %v744
        %860 = vst.msk [vmem:[%s855 + $0x48] sm:$0xff] %vm782, %v745
        %861 = vst.msk [vmem:[%s855 + $0x50] sm:$0xff] %vm782, %v746
        %862 = vst.msk [vmem:[%s855 + $0x68] sm:$0xff] %vm782, %v747
        %863 = vst.msk [vmem:[%s855 + $0x70] sm:$0xff] %vm782, %v748
        %864 = vst.msk [vmem:[%s855 + $0x88] sm:$0xff] %vm782, %v749
        %865 = vst.msk [vmem:[%s855 + $0x90] sm:$0xff] %vm782, %v750
        %866 = vst.msk [vmem:[%s855 + $0xa8] sm:$0xff] %vm782, %v751
        %867 = vst.msk [vmem:[%s855 + $0xb0] sm:$0xff] %vm782, %v752
        %868 = vst.msk [vmem:[%s855 + $0xc8] sm:$0xff] %vm782, %v753
        %869 = vst.msk [vmem:[%s855 + $0xd0] sm:$0xff] %vm782, %v754
        %870 = vst.msk [vmem:[%s855 + $0xe8] sm:$0xff] %vm782, %v755
        %871 = vst.msk [vmem:[%s855 + $0xf0] sm:$0xff] %vm782, %v756
        %872 = vst.msk [vmem:[%s855 + $0x108] sm:$0xff] %vm782, %v757
        %873 = vst.msk [vmem:[%s855 + $0x110] sm:$0xff] %vm782, %v758
        %874 = vst.msk [vmem:[%s855 + $0x128] sm:$0xff] %vm782, %v759
        %875 = vst.msk [vmem:[%s855 + $0x130] sm:$0xff] %vm782, %v760
        %876 = vst.msk [vmem:[%s855 + $0x148] sm:$0xff] %vm782, %v761
        %877 = vst.msk [vmem:[%s855 + $0x150] sm:$0xff] %vm782, %v762
        %878 = vst.msk [vmem:[%s855 + $0x168] sm:$0xff] %vm782, %v763
        %879 = vst.msk [vmem:[%s855 + $0x170] sm:$0xff] %vm782, %v764
        %880 = vst.msk [vmem:[%s855 + $0x188] sm:$0xff] %vm782, %v765
        %881 = vst.msk [vmem:[%s855 + $0x190] sm:$0xff] %vm782, %v766
        %882 = vst.msk [vmem:[%s855 + $0x1a8] sm:$0xff] %vm782, %v767
        %883 = vst.msk [vmem:[%s855 + $0x1b0] sm:$0xff] %vm782, %v768
        %884 = vst.msk [vmem:[%s855 + $0x1c8] sm:$0xff] %vm782, %v769
        %885 = vst.msk [vmem:[%s855 + $0x1d0] sm:$0xff] %vm782, %v770
        %886 = vst.msk [vmem:[%s855 + $0x1e8] sm:$0xff] %vm782, %v771
        %887 = vst.msk [vmem:[%s855 + $0x1f0] sm:$0xff] %vm782, %v772
        %v888 = vld [vmem:[#allocation2] sm:$0xff]
        %v889 = vld [vmem:[#allocation2 + $0x8] sm:$0xff]
        %v890 = vld [vmem:[#allocation2 + $0x10] sm:$0xff]
        %v891 = vld [vmem:[#allocation2 + $0x18] sm:$0xff]
        %v892 = vld [vmem:[#allocation2 + $0x20] sm:$0xff]
        %v893 = vld [vmem:[#allocation2 + $0x28] sm:$0xff]
        %v894 = vld [vmem:[#allocation2 + $0x30] sm:$0xff]
        %v895 = vld [vmem:[#allocation2 + $0x38] sm:$0xff]
        %v896 = vld [vmem:[#allocation2 + $0x40] sm:$0xff]
        %v897 = vld [vmem:[#allocation2 + $0x48] sm:$0xff]
        %v898 = vld [vmem:[#allocation2 + $0x50] sm:$0xff]
        %v899 = vld [vmem:[#allocation2 + $0x58] sm:$0xff]
        %v900 = vld [vmem:[#allocation2 + $0x60] sm:$0xff]
        %v901 = vld [vmem:[#allocation2 + $0x68] sm:$0xff]
        %v902 = vld [vmem:[#allocation2 + $0x70] sm:$0xff]
        %v903 = vld [vmem:[#allocation2 + $0x78] sm:$0xff]
        %v904 = vld [vmem:[#allocation2 + $0x80] sm:$0xff]
        %v905 = vld [vmem:[#allocation2 + $0x88] sm:$0xff]
        %v906 = vld [vmem:[#allocation2 + $0x90] sm:$0xff]
        %v907 = vld [vmem:[#allocation2 + $0x98] sm:$0xff]
        %v908 = vld [vmem:[#allocation2 + $0xa0] sm:$0xff]
        %v909 = vld [vmem:[#allocation2 + $0xa8] sm:$0xff]
        %v910 = vld [vmem:[#allocation2 + $0xb0] sm:$0xff]
        %v911 = vld [vmem:[#allocation2 + $0xb8] sm:$0xff]
        %v912 = vld [vmem:[#allocation2 + $0xc0] sm:$0xff]
        %v913 = vld [vmem:[#allocation2 + $0xc8] sm:$0xff]
        %v914 = vld [vmem:[#allocation2 + $0xd0] sm:$0xff]
        %v915 = vld [vmem:[#allocation2 + $0xd8] sm:$0xff]
        %v916 = vld [vmem:[#allocation2 + $0xe0] sm:$0xff]
        %v917 = vld [vmem:[#allocation2 + $0xe8] sm:$0xff]
        %v918 = vld [vmem:[#allocation2 + $0xf0] sm:$0xff]
        %v919 = vld [vmem:[#allocation2 + $0xf8] sm:$0xff]
        %v920 = vld [vmem:[#allocation2 + $0x100] sm:$0xff]
        %v921 = vld [vmem:[#allocation2 + $0x108] sm:$0xff]
        %v922 = vld [vmem:[#allocation2 + $0x110] sm:$0xff]
        %v923 = vld [vmem:[#allocation2 + $0x118] sm:$0xff]
        %v924 = vld [vmem:[#allocation2 + $0x120] sm:$0xff]
        %v925 = vld [vmem:[#allocation2 + $0x128] sm:$0xff]
        %v926 = vld [vmem:[#allocation2 + $0x130] sm:$0xff]
        %v927 = vld [vmem:[#allocation2 + $0x138] sm:$0xff]
        %v928 = vld [vmem:[#allocation2 + $0x140] sm:$0xff]
        %v929 = vld [vmem:[#allocation2 + $0x148] sm:$0xff]
        %v930 = vld [vmem:[#allocation2 + $0x150] sm:$0xff]
        %v931 = vld [vmem:[#allocation2 + $0x158] sm:$0xff]
        %v932 = vld [vmem:[#allocation2 + $0x160] sm:$0xff]
        %v933 = vld [vmem:[#allocation2 + $0x168] sm:$0xff]
        %v934 = vld [vmem:[#allocation2 + $0x170] sm:$0xff]
        %v935 = vld [vmem:[#allocation2 + $0x178] sm:$0xff]
        %v936 = vld [vmem:[#allocation2 + $0x180] sm:$0xff]
        %v937 = vld [vmem:[#allocation2 + $0x188] sm:$0xff]
        %v938 = vld [vmem:[#allocation2 + $0x190] sm:$0xff]
        %v939 = vld [vmem:[#allocation2 + $0x198] sm:$0xff]
        %v940 = vld [vmem:[#allocation2 + $0x1a0] sm:$0xff]
        %v941 = vld [vmem:[#allocation2 + $0x1a8] sm:$0xff]
        %v942 = vld [vmem:[#allocation2 + $0x1b0] sm:$0xff]
        %v943 = vld [vmem:[#allocation2 + $0x1b8] sm:$0xff]
        %v944 = vld [vmem:[#allocation2 + $0x1c0] sm:$0xff]
        %v945 = vld [vmem:[#allocation2 + $0x1c8] sm:$0xff]
        %v946 = vld [vmem:[#allocation2 + $0x1d0] sm:$0xff]
        %v947 = vld [vmem:[#allocation2 + $0x1d8] sm:$0xff]
        %v948 = vld [vmem:[#allocation2 + $0x1e0] sm:$0xff]
        %v949 = vld [vmem:[#allocation2 + $0x1e8] sm:$0xff]
        %v950 = vld [vmem:[#allocation2 + $0x1f0] sm:$0xff]
        %v951 = vld [vmem:[#allocation2 + $0x1f8] sm:$0xff]
        %v952 = vld [vmem:[#allocation2 + $0x200] sm:$0xff]
        %v953 = vld [vmem:[#allocation2 + $0x208] sm:$0xff]
        %v954 = vld [vmem:[#allocation2 + $0x210] sm:$0xff]
        %v955 = vld [vmem:[#allocation2 + $0x218] sm:$0xff]
        %v956 = vld [vmem:[#allocation2 + $0x220] sm:$0xff]
        %v957 = vld [vmem:[#allocation2 + $0x228] sm:$0xff]
        %v958 = vld [vmem:[#allocation2 + $0x230] sm:$0xff]
        %v959 = vld [vmem:[#allocation2 + $0x238] sm:$0xff]
        %v961 = vlaneseq
        %v962 = vshrl.u32 %v961, 7
        %v963 = vsub.s32 0, %v962
        %v964 = vrot.slane %v773, %v963
        %v966 = vmul.f32 %v888, %v964
        %v967 = vmul.f32 %v889, %v964
        %v968 = vmul.f32 %v890, %v964
        %v969 = vmul.f32 %v892, %v964
        %v970 = vmul.f32 %v893, %v964
        %v971 = vmul.f32 %v894, %v964
        %v972 = vmul.f32 %v896, %v964
        %v973 = vmul.f32 %v897, %v964
        %v974 = vmul.f32 %v898, %v964
        %v975 = vmul.f32 %v900, %v964
        %v976 = vmul.f32 %v901, %v964
        %v977 = vmul.f32 %v902, %v964
        %v978 = vmul.f32 %v904, %v964
        %v979 = vmul.f32 %v905, %v964
        %v980 = vmul.f32 %v906, %v964
        %v981 = vmul.f32 %v908, %v964
        %v982 = vmul.f32 %v909, %v964
        %v983 = vmul.f32 %v910, %v964
        %v984 = vmul.f32 %v912, %v964
        %v985 = vmul.f32 %v913, %v964
        %v986 = vmul.f32 %v914, %v964
        %v987 = vmul.f32 %v916, %v964
        %v988 = vmul.f32 %v917, %v964
        %v989 = vmul.f32 %v918, %v964
        %v990 = vmul.f32 %v920, %v964
        %v991 = vmul.f32 %v921, %v964
        %v992 = vmul.f32 %v922, %v964
        %v993 = vmul.f32 %v924, %v964
        %v994 = vmul.f32 %v925, %v964
        %v995 = vmul.f32 %v926, %v964
        %v996 = vmul.f32 %v928, %v964
        %v997 = vmul.f32 %v929, %v964
        %v998 = vmul.f32 %v930, %v964
        %v999 = vmul.f32 %v932, %v964
        %v1000 = vmul.f32 %v933, %v964
        %v1001 = vmul.f32 %v934, %v964
        %v1002 = vmul.f32 %v936, %v964
        %v1003 = vmul.f32 %v937, %v964
        %v1004 = vmul.f32 %v938, %v964
        %v1005 = vmul.f32 %v940, %v964
        %v1006 = vmul.f32 %v941, %v964
        %v1007 = vmul.f32 %v942, %v964
        %v1008 = vmul.f32 %v944, %v964
        %v1009 = vmul.f32 %v945, %v964
        %v1010 = vmul.f32 %v946, %v964
        %v1011 = vmul.f32 %v948, %v964
        %v1012 = vmul.f32 %v949, %v964
        %v1013 = vmul.f32 %v950, %v964
        %v1015 = vlaneseq
        %v1016 = vshrl.u32 %v1015, 7
        %v1017 = vsub.s32 0, %v1016
        %v1018 = vrot.slane %v776, %v1017
        %v1020 = vmul.f32 %v892, %v1018
        %v1021 = vmul.f32 %v893, %v1018
        %v1022 = vmul.f32 %v894, %v1018
        %v1023 = vmul.f32 %v896, %v1018
        %v1024 = vmul.f32 %v897, %v1018
        %v1025 = vmul.f32 %v898, %v1018
        %v1026 = vmul.f32 %v900, %v1018
        %v1027 = vmul.f32 %v901, %v1018
        %v1028 = vmul.f32 %v902, %v1018
        %v1029 = vmul.f32 %v904, %v1018
        %v1030 = vmul.f32 %v905, %v1018
        %v1031 = vmul.f32 %v906, %v1018
        %v1032 = vmul.f32 %v908, %v1018
        %v1033 = vmul.f32 %v909, %v1018
        %v1034 = vmul.f32 %v910, %v1018
        %v1035 = vmul.f32 %v912, %v1018
        %v1036 = vmul.f32 %v913, %v1018
        %v1037 = vmul.f32 %v914, %v1018
        %v1038 = vmul.f32 %v916, %v1018
        %v1039 = vmul.f32 %v917, %v1018
        %v1040 = vmul.f32 %v918, %v1018
        %v1041 = vmul.f32 %v920, %v1018
        %v1042 = vmul.f32 %v921, %v1018
        %v1043 = vmul.f32 %v922, %v1018
        %v1044 = vmul.f32 %v924, %v1018
        %v1045 = vmul.f32 %v925, %v1018
        %v1046 = vmul.f32 %v926, %v1018
        %v1047 = vmul.f32 %v928, %v1018
        %v1048 = vmul.f32 %v929, %v1018
        %v1049 = vmul.f32 %v930, %v1018
        %v1050 = vmul.f32 %v932, %v1018
        %v1051 = vmul.f32 %v933, %v1018
        %v1052 = vmul.f32 %v934, %v1018
        %v1053 = vmul.f32 %v936, %v1018
        %v1054 = vmul.f32 %v937, %v1018
        %v1055 = vmul.f32 %v938, %v1018
        %v1056 = vmul.f32 %v940, %v1018
        %v1057 = vmul.f32 %v941, %v1018
        %v1058 = vmul.f32 %v942, %v1018
        %v1059 = vmul.f32 %v944, %v1018
        %v1060 = vmul.f32 %v945, %v1018
        %v1061 = vmul.f32 %v946, %v1018
        %v1062 = vmul.f32 %v948, %v1018
        %v1063 = vmul.f32 %v949, %v1018
        %v1064 = vmul.f32 %v950, %v1018
        %v1065 = vmul.f32 %v952, %v1018
        %v1066 = vmul.f32 %v953, %v1018
        %v1067 = vmul.f32 %v954, %v1018
        %v1068 = vadd.f32 %v966, %v1020
        %v1069 = vadd.f32 %v967, %v1021
        %v1070 = vadd.f32 %v968, %v1022
        %v1071 = vadd.f32 %v969, %v1023
        %v1072 = vadd.f32 %v970, %v1024
        %v1073 = vadd.f32 %v971, %v1025
        %v1074 = vadd.f32 %v972, %v1026
        %v1075 = vadd.f32 %v973, %v1027
        %v1076 = vadd.f32 %v974, %v1028
        %v1077 = vadd.f32 %v975, %v1029
        %v1078 = vadd.f32 %v976, %v1030
        %v1079 = vadd.f32 %v977, %v1031
        %v1080 = vadd.f32 %v978, %v1032
        %v1081 = vadd.f32 %v979, %v1033
        %v1082 = vadd.f32 %v980, %v1034
        %v1083 = vadd.f32 %v981, %v1035
        %v1084 = vadd.f32 %v982, %v1036
        %v1085 = vadd.f32 %v983, %v1037
        %v1086 = vadd.f32 %v984, %v1038
        %v1087 = vadd.f32 %v985, %v1039
        %v1088 = vadd.f32 %v986, %v1040
        %v1089 = vadd.f32 %v987, %v1041
        %v1090 = vadd.f32 %v988, %v1042
        %v1091 = vadd.f32 %v989, %v1043
        %v1092 = vadd.f32 %v990, %v1044
        %v1093 = vadd.f32 %v991, %v1045
        %v1094 = vadd.f32 %v992, %v1046
        %v1095 = vadd.f32 %v993, %v1047
        %v1096 = vadd.f32 %v994, %v1048
        %v1097 = vadd.f32 %v995, %v1049
        %v1098 = vadd.f32 %v996, %v1050
        %v1099 = vadd.f32 %v997, %v1051
        %v1100 = vadd.f32 %v998, %v1052
        %v1101 = vadd.f32 %v999, %v1053
        %v1102 = vadd.f32 %v1000, %v1054
        %v1103 = vadd.f32 %v1001, %v1055
        %v1104 = vadd.f32 %v1002, %v1056
        %v1105 = vadd.f32 %v1003, %v1057
        %v1106 = vadd.f32 %v1004, %v1058
        %v1107 = vadd.f32 %v1005, %v1059
        %v1108 = vadd.f32 %v1006, %v1060
        %v1109 = vadd.f32 %v1007, %v1061
        %v1110 = vadd.f32 %v1008, %v1062
        %v1111 = vadd.f32 %v1009, %v1063
        %v1112 = vadd.f32 %v1010, %v1064
        %v1113 = vadd.f32 %v1011, %v1065
        %v1114 = vadd.f32 %v1012, %v1066
        %v1115 = vadd.f32 %v1013, %v1067
        %v1117 = vlaneseq
        %v1118 = vshrl.u32 %v1117, 7
        %v1119 = vsub.s32 0, %v1118
        %v1120 = vrot.slane %v779, %v1119
        %v1122 = vmul.f32 %v896, %v1120
        %v1123 = vmul.f32 %v897, %v1120
        %v1124 = vmul.f32 %v898, %v1120
        %v1125 = vmul.f32 %v900, %v1120
        %v1126 = vmul.f32 %v901, %v1120
        %v1127 = vmul.f32 %v902, %v1120
        %v1128 = vmul.f32 %v904, %v1120
        %v1129 = vmul.f32 %v905, %v1120
        %v1130 = vmul.f32 %v906, %v1120
        %v1131 = vmul.f32 %v908, %v1120
        %v1132 = vmul.f32 %v909, %v1120
        %v1133 = vmul.f32 %v910, %v1120
        %v1134 = vmul.f32 %v912, %v1120
        %v1135 = vmul.f32 %v913, %v1120
        %v1136 = vmul.f32 %v914, %v1120
        %v1137 = vmul.f32 %v916, %v1120
        %v1138 = vmul.f32 %v917, %v1120
        %v1139 = vmul.f32 %v918, %v1120
        %v1140 = vmul.f32 %v920, %v1120
        %v1141 = vmul.f32 %v921, %v1120
        %v1142 = vmul.f32 %v922, %v1120
        %v1143 = vmul.f32 %v924, %v1120
        %v1144 = vmul.f32 %v925, %v1120
        %v1145 = vmul.f32 %v926, %v1120
        %v1146 = vmul.f32 %v928, %v1120
        %v1147 = vmul.f32 %v929, %v1120
        %v1148 = vmul.f32 %v930, %v1120
        %v1149 = vmul.f32 %v932, %v1120
        %v1150 = vmul.f32 %v933, %v1120
        %v1151 = vmul.f32 %v934, %v1120
        %v1152 = vmul.f32 %v936, %v1120
        %v1153 = vmul.f32 %v937, %v1120
        %v1154 = vmul.f32 %v938, %v1120
        %v1155 = vmul.f32 %v940, %v1120
        %v1156 = vmul.f32 %v941, %v1120
        %v1157 = vmul.f32 %v942, %v1120
        %v1158 = vmul.f32 %v944, %v1120
        %v1159 = vmul.f32 %v945, %v1120
        %v1160 = vmul.f32 %v946, %v1120
        %v1161 = vmul.f32 %v948, %v1120
        %v1162 = vmul.f32 %v949, %v1120
        %v1163 = vmul.f32 %v950, %v1120
        %v1164 = vmul.f32 %v952, %v1120
        %v1165 = vmul.f32 %v953, %v1120
        %v1166 = vmul.f32 %v954, %v1120
        %v1167 = vmul.f32 %v956, %v1120
        %v1168 = vmul.f32 %v957, %v1120
        %v1169 = vmul.f32 %v958, %v1120
        %v1170 = vadd.f32 %v1068, %v1122
        %v1171 = vadd.f32 %v1069, %v1123
        %v1172 = vadd.f32 %v1070, %v1124
        %v1173 = vadd.f32 %v1071, %v1125
        %v1174 = vadd.f32 %v1072, %v1126
        %v1175 = vadd.f32 %v1073, %v1127
        %v1176 = vadd.f32 %v1074, %v1128
        %v1177 = vadd.f32 %v1075, %v1129
        %v1178 = vadd.f32 %v1076, %v1130
        %v1179 = vadd.f32 %v1077, %v1131
        %v1180 = vadd.f32 %v1078, %v1132
        %v1181 = vadd.f32 %v1079, %v1133
        %v1182 = vadd.f32 %v1080, %v1134
        %v1183 = vadd.f32 %v1081, %v1135
        %v1184 = vadd.f32 %v1082, %v1136
        %v1185 = vadd.f32 %v1083, %v1137
        %v1186 = vadd.f32 %v1084, %v1138
        %v1187 = vadd.f32 %v1085, %v1139
        %v1188 = vadd.f32 %v1086, %v1140
        %v1189 = vadd.f32 %v1087, %v1141
        %v1190 = vadd.f32 %v1088, %v1142
        %v1191 = vadd.f32 %v1089, %v1143
        %v1192 = vadd.f32 %v1090, %v1144
        %v1193 = vadd.f32 %v1091, %v1145
        %v1194 = vadd.f32 %v1092, %v1146
        %v1195 = vadd.f32 %v1093, %v1147
        %v1196 = vadd.f32 %v1094, %v1148
        %v1197 = vadd.f32 %v1095, %v1149
        %v1198 = vadd.f32 %v1096, %v1150
        %v1199 = vadd.f32 %v1097, %v1151
        %v1200 = vadd.f32 %v1098, %v1152
        %v1201 = vadd.f32 %v1099, %v1153
        %v1202 = vadd.f32 %v1100, %v1154
        %v1203 = vadd.f32 %v1101, %v1155
        %v1204 = vadd.f32 %v1102, %v1156
        %v1205 = vadd.f32 %v1103, %v1157
        %v1206 = vadd.f32 %v1104, %v1158
        %v1207 = vadd.f32 %v1105, %v1159
        %v1208 = vadd.f32 %v1106, %v1160
        %v1209 = vadd.f32 %v1107, %v1161
        %v1210 = vadd.f32 %v1108, %v1162
        %v1211 = vadd.f32 %v1109, %v1163
        %v1212 = vadd.f32 %v1110, %v1164
        %v1213 = vadd.f32 %v1111, %v1165
        %v1214 = vadd.f32 %v1112, %v1166
        %v1215 = vadd.f32 %v1113, %v1167
        %v1216 = vadd.f32 %v1114, %v1168
        %v1217 = vadd.f32 %v1115, %v1169
        %v1219 = vlaneseq
        %v1220 = vshrl.u32 %v1219, 7
        %v1221 = vsub.s32 0, %v1220
        %v1222 = vrot.slane %v774, %v1221
        %v1224 = vmul.f32 %v889, %v1222
        %v1225 = vmul.f32 %v890, %v1222
        %v1226 = vmul.f32 %v893, %v1222
        %v1227 = vmul.f32 %v894, %v1222
        %v1228 = vmul.f32 %v897, %v1222
        %v1229 = vmul.f32 %v898, %v1222
        %v1230 = vmul.f32 %v901, %v1222
        %v1231 = vmul.f32 %v902, %v1222
        %v1232 = vmul.f32 %v905, %v1222
        %v1233 = vmul.f32 %v906, %v1222
        %v1234 = vmul.f32 %v909, %v1222
        %v1235 = vmul.f32 %v910, %v1222
        %v1236 = vmul.f32 %v913, %v1222
        %v1237 = vmul.f32 %v914, %v1222
        %v1238 = vmul.f32 %v917, %v1222
        %v1239 = vmul.f32 %v918, %v1222
        %v1240 = vmul.f32 %v921, %v1222
        %v1241 = vmul.f32 %v922, %v1222
        %v1242 = vmul.f32 %v925, %v1222
        %v1243 = vmul.f32 %v926, %v1222
        %v1244 = vmul.f32 %v929, %v1222
        %v1245 = vmul.f32 %v930, %v1222
        %v1246 = vmul.f32 %v933, %v1222
        %v1247 = vmul.f32 %v934, %v1222
        %v1248 = vmul.f32 %v937, %v1222
        %v1249 = vmul.f32 %v938, %v1222
        %v1250 = vmul.f32 %v941, %v1222
        %v1251 = vmul.f32 %v942, %v1222
        %v1252 = vmul.f32 %v945, %v1222
        %v1253 = vmul.f32 %v946, %v1222
        %v1254 = vmul.f32 %v949, %v1222
        %v1255 = vmul.f32 %v950, %v1222
        %vm1288 = vcmask 1046528
        %v1289 = vrot.slane %v1224, 1
        %v1290 = vrot.slane %v1225, 1
        %v1291 = vsel %vm1288, %v1289, %v1290
        %v1292 = vrot.slane %v1226, 1
        %v1293 = vrot.slane %v1227, 1
        %v1294 = vsel %vm1288, %v1292, %v1293
        %v1295 = vrot.slane %v1228, 1
        %v1296 = vrot.slane %v1229, 1
        %v1297 = vsel %vm1288, %v1295, %v1296
        %v1298 = vrot.slane %v1230, 1
        %v1299 = vrot.slane %v1231, 1
        %v1300 = vsel %vm1288, %v1298, %v1299
        %v1301 = vrot.slane %v1232, 1
        %v1302 = vrot.slane %v1233, 1
        %v1303 = vsel %vm1288, %v1301, %v1302
        %v1304 = vrot.slane %v1234, 1
        %v1305 = vrot.slane %v1235, 1
        %v1306 = vsel %vm1288, %v1304, %v1305
        %v1307 = vrot.slane %v1236, 1
        %v1308 = vrot.slane %v1237, 1
        %v1309 = vsel %vm1288, %v1307, %v1308
        %v1310 = vrot.slane %v1238, 1
        %v1311 = vrot.slane %v1239, 1
        %v1312 = vsel %vm1288, %v1310, %v1311
        %v1313 = vrot.slane %v1240, 1
        %v1314 = vrot.slane %v1241, 1
        %v1315 = vsel %vm1288, %v1313, %v1314
        %v1316 = vrot.slane %v1242, 1
        %v1317 = vrot.slane %v1243, 1
        %v1318 = vsel %vm1288, %v1316, %v1317
        %v1319 = vrot.slane %v1244, 1
        %v1320 = vrot.slane %v1245, 1
        %v1321 = vsel %vm1288, %v1319, %v1320
        %v1322 = vrot.slane %v1246, 1
        %v1323 = vrot.slane %v1247, 1
        %v1324 = vsel %vm1288, %v1322, %v1323
        %v1325 = vrot.slane %v1248, 1
        %v1326 = vrot.slane %v1249, 1
        %v1327 = vsel %vm1288, %v1325, %v1326
        %v1328 = vrot.slane %v1250, 1
        %v1329 = vrot.slane %v1251, 1
        %v1330 = vsel %vm1288, %v1328, %v1329
        %v1331 = vrot.slane %v1252, 1
        %v1332 = vrot.slane %v1253, 1
        %v1333 = vsel %vm1288, %v1331, %v1332
        %v1334 = vrot.slane %v1254, 1
        %v1335 = vrot.slane %v1255, 1
        %v1336 = vsel %vm1288, %v1334, %v1335
        %v1385 = vadd.f32 %v1170, %v1289
        %v1386 = vadd.f32 %v1171, %v1291
        %v1387 = vadd.f32 %v1172, %v1290
        %v1388 = vadd.f32 %v1173, %v1292
        %v1389 = vadd.f32 %v1174, %v1294
        %v1390 = vadd.f32 %v1175, %v1293
        %v1391 = vadd.f32 %v1176, %v1295
        %v1392 = vadd.f32 %v1177, %v1297
        %v1393 = vadd.f32 %v1178, %v1296
        %v1394 = vadd.f32 %v1179, %v1298
        %v1395 = vadd.f32 %v1180, %v1300
        %v1396 = vadd.f32 %v1181, %v1299
        %v1397 = vadd.f32 %v1182, %v1301
        %v1398 = vadd.f32 %v1183, %v1303
        %v1399 = vadd.f32 %v1184, %v1302
        %v1400 = vadd.f32 %v1185, %v1304
        %v1401 = vadd.f32 %v1186, %v1306
        %v1402 = vadd.f32 %v1187, %v1305
        %v1403 = vadd.f32 %v1188, %v1307
        %v1404 = vadd.f32 %v1189, %v1309
        %v1405 = vadd.f32 %v1190, %v1308
        %v1406 = vadd.f32 %v1191, %v1310
        %v1407 = vadd.f32 %v1192, %v1312
        %v1408 = vadd.f32 %v1193, %v1311
        %v1409 = vadd.f32 %v1194, %v1313
        %v1410 = vadd.f32 %v1195, %v1315
        %v1411 = vadd.f32 %v1196, %v1314
        %v1412 = vadd.f32 %v1197, %v1316
        %v1413 = vadd.f32 %v1198, %v1318
        %v1414 = vadd.f32 %v1199, %v1317
        %v1415 = vadd.f32 %v1200, %v1319
        %v1416 = vadd.f32 %v1201, %v1321
        %v1417 = vadd.f32 %v1202, %v1320
        %v1418 = vadd.f32 %v1203, %v1322
        %v1419 = vadd.f32 %v1204, %v1324
        %v1420 = vadd.f32 %v1205, %v1323
        %v1421 = vadd.f32 %v1206, %v1325
        %v1422 = vadd.f32 %v1207, %v1327
        %v1423 = vadd.f32 %v1208, %v1326
        %v1424 = vadd.f32 %v1209, %v1328
        %v1425 = vadd.f32 %v1210, %v1330
        %v1426 = vadd.f32 %v1211, %v1329
        %v1427 = vadd.f32 %v1212, %v1331
        %v1428 = vadd.f32 %v1213, %v1333
        %v1429 = vadd.f32 %v1214, %v1332
        %v1430 = vadd.f32 %v1215, %v1334
        %v1431 = vadd.f32 %v1216, %v1336
        %v1432 = vadd.f32 %v1217, %v1335
        %v1434 = vlaneseq
        %v1435 = vshrl.u32 %v1434, 7
        %v1436 = vsub.s32 0, %v1435
        %v1437 = vrot.slane %v777, %v1436
        %v1439 = vmul.f32 %v893, %v1437
        %v1440 = vmul.f32 %v894, %v1437
        %v1441 = vmul.f32 %v897, %v1437
        %v1442 = vmul.f32 %v898, %v1437
        %v1443 = vmul.f32 %v901, %v1437
        %v1444 = vmul.f32 %v902, %v1437
        %v1445 = vmul.f32 %v905, %v1437
        %v1446 = vmul.f32 %v906, %v1437
        %v1447 = vmul.f32 %v909, %v1437
        %v1448 = vmul.f32 %v910, %v1437
        %v1449 = vmul.f32 %v913, %v1437
        %v1450 = vmul.f32 %v914, %v1437
        %v1451 = vmul.f32 %v917, %v1437
        %v1452 = vmul.f32 %v918, %v1437
        %v1453 = vmul.f32 %v921, %v1437
        %v1454 = vmul.f32 %v922, %v1437
        %v1455 = vmul.f32 %v925, %v1437
        %v1456 = vmul.f32 %v926, %v1437
        %v1457 = vmul.f32 %v929, %v1437
        %v1458 = vmul.f32 %v930, %v1437
        %v1459 = vmul.f32 %v933, %v1437
        %v1460 = vmul.f32 %v934, %v1437
        %v1461 = vmul.f32 %v937, %v1437
        %v1462 = vmul.f32 %v938, %v1437
        %v1463 = vmul.f32 %v941, %v1437
        %v1464 = vmul.f32 %v942, %v1437
        %v1465 = vmul.f32 %v945, %v1437
        %v1466 = vmul.f32 %v946, %v1437
        %v1467 = vmul.f32 %v949, %v1437
        %v1468 = vmul.f32 %v950, %v1437
        %v1469 = vmul.f32 %v953, %v1437
        %v1470 = vmul.f32 %v954, %v1437
        %v1503 = vrot.slane %v1439, 1
        %v1504 = vrot.slane %v1440, 1
        %v1505 = vsel %vm1288, %v1503, %v1504
        %v1506 = vrot.slane %v1441, 1
        %v1507 = vrot.slane %v1442, 1
        %v1508 = vsel %vm1288, %v1506, %v1507
        %v1509 = vrot.slane %v1443, 1
        %v1510 = vrot.slane %v1444, 1
        %v1511 = vsel %vm1288, %v1509, %v1510
        %v1512 = vrot.slane %v1445, 1
        %v1513 = vrot.slane %v1446, 1
        %v1514 = vsel %vm1288, %v1512, %v1513
        %v1515 = vrot.slane %v1447, 1
        %v1516 = vrot.slane %v1448, 1
        %v1517 = vsel %vm1288, %v1515, %v1516
        %v1518 = vrot.slane %v1449, 1
        %v1519 = vrot.slane %v1450, 1
        %v1520 = vsel %vm1288, %v1518, %v1519
        %v1521 = vrot.slane %v1451, 1
        %v1522 = vrot.slane %v1452, 1
        %v1523 = vsel %vm1288, %v1521, %v1522
        %v1524 = vrot.slane %v1453, 1
        %v1525 = vrot.slane %v1454, 1
        %v1526 = vsel %vm1288, %v1524, %v1525
        %v1527 = vrot.slane %v1455, 1
        %v1528 = vrot.slane %v1456, 1
        %v1529 = vsel %vm1288, %v1527, %v1528
        %v1530 = vrot.slane %v1457, 1
        %v1531 = vrot.slane %v1458, 1
        %v1532 = vsel %vm1288, %v1530, %v1531
        %v1533 = vrot.slane %v1459, 1
        %v1534 = vrot.slane %v1460, 1
        %v1535 = vsel %vm1288, %v1533, %v1534
        %v1536 = vrot.slane %v1461, 1
        %v1537 = vrot.slane %v1462, 1
        %v1538 = vsel %vm1288, %v1536, %v1537
        %v1539 = vrot.slane %v1463, 1
        %v1540 = vrot.slane %v1464, 1
        %v1541 = vsel %vm1288, %v1539, %v1540
        %v1542 = vrot.slane %v1465, 1
        %v1543 = vrot.slane %v1466, 1
        %v1544 = vsel %vm1288, %v1542, %v1543
        %v1545 = vrot.slane %v1467, 1
        %v1546 = vrot.slane %v1468, 1
        %v1547 = vsel %vm1288, %v1545, %v1546
        %v1548 = vrot.slane %v1469, 1
        %v1549 = vrot.slane %v1470, 1
        %v1550 = vsel %vm1288, %v1548, %v1549
        %v1599 = vadd.f32 %v1385, %v1503
        %v1600 = vadd.f32 %v1386, %v1505
        %v1601 = vadd.f32 %v1387, %v1504
        %v1602 = vadd.f32 %v1388, %v1506
        %v1603 = vadd.f32 %v1389, %v1508
        %v1604 = vadd.f32 %v1390, %v1507
        %v1605 = vadd.f32 %v1391, %v1509
        %v1606 = vadd.f32 %v1392, %v1511
        %v1607 = vadd.f32 %v1393, %v1510
        %v1608 = vadd.f32 %v1394, %v1512
        %v1609 = vadd.f32 %v1395, %v1514
        %v1610 = vadd.f32 %v1396, %v1513
        %v1611 = vadd.f32 %v1397, %v1515
        %v1612 = vadd.f32 %v1398, %v1517
        %v1613 = vadd.f32 %v1399, %v1516
        %v1614 = vadd.f32 %v1400, %v1518
        %v1615 = vadd.f32 %v1401, %v1520
        %v1616 = vadd.f32 %v1402, %v1519
        %v1617 = vadd.f32 %v1403, %v1521
        %v1618 = vadd.f32 %v1404, %v1523
        %v1619 = vadd.f32 %v1405, %v1522
        %v1620 = vadd.f32 %v1406, %v1524
        %v1621 = vadd.f32 %v1407, %v1526
        %v1622 = vadd.f32 %v1408, %v1525
        %v1623 = vadd.f32 %v1409, %v1527
        %v1624 = vadd.f32 %v1410, %v1529
        %v1625 = vadd.f32 %v1411, %v1528
        %v1626 = vadd.f32 %v1412, %v1530
        %v1627 = vadd.f32 %v1413, %v1532
        %v1628 = vadd.f32 %v1414, %v1531
        %v1629 = vadd.f32 %v1415, %v1533
        %v1630 = vadd.f32 %v1416, %v1535
        %v1631 = vadd.f32 %v1417, %v1534
        %v1632 = vadd.f32 %v1418, %v1536
        %v1633 = vadd.f32 %v1419, %v1538
        %v1634 = vadd.f32 %v1420, %v1537
        %v1635 = vadd.f32 %v1421, %v1539
        %v1636 = vadd.f32 %v1422, %v1541
        %v1637 = vadd.f32 %v1423, %v1540
        %v1638 = vadd.f32 %v1424, %v1542
        %v1639 = vadd.f32 %v1425, %v1544
        %v1640 = vadd.f32 %v1426, %v1543
        %v1641 = vadd.f32 %v1427, %v1545
        %v1642 = vadd.f32 %v1428, %v1547
        %v1643 = vadd.f32 %v1429, %v1546
        %v1644 = vadd.f32 %v1430, %v1548
        %v1645 = vadd.f32 %v1431, %v1550
        %v1646 = vadd.f32 %v1432, %v1549
        %v1648 = vlaneseq
        %v1649 = vshrl.u32 %v1648, 7
        %v1650 = vsub.s32 0, %v1649
        %v1651 = vrot.slane %v780, %v1650
        %v1653 = vmul.f32 %v897, %v1651
        %v1654 = vmul.f32 %v898, %v1651
        %v1655 = vmul.f32 %v901, %v1651
        %v1656 = vmul.f32 %v902, %v1651
        %v1657 = vmul.f32 %v905, %v1651
        %v1658 = vmul.f32 %v906, %v1651
        %v1659 = vmul.f32 %v909, %v1651
        %v1660 = vmul.f32 %v910, %v1651
        %v1661 = vmul.f32 %v913, %v1651
        %v1662 = vmul.f32 %v914, %v1651
        %v1663 = vmul.f32 %v917, %v1651
        %v1664 = vmul.f32 %v918, %v1651
        %v1665 = vmul.f32 %v921, %v1651
        %v1666 = vmul.f32 %v922, %v1651
        %v1667 = vmul.f32 %v925, %v1651
        %v1668 = vmul.f32 %v926, %v1651
        %v1669 = vmul.f32 %v929, %v1651
        %v1670 = vmul.f32 %v930, %v1651
        %v1671 = vmul.f32 %v933, %v1651
        %v1672 = vmul.f32 %v934, %v1651
        %v1673 = vmul.f32 %v937, %v1651
        %v1674 = vmul.f32 %v938, %v1651
        %v1675 = vmul.f32 %v941, %v1651
        %v1676 = vmul.f32 %v942, %v1651
        %v1677 = vmul.f32 %v945, %v1651
        %v1678 = vmul.f32 %v946, %v1651
        %v1679 = vmul.f32 %v949, %v1651
        %v1680 = vmul.f32 %v950, %v1651
        %v1681 = vmul.f32 %v953, %v1651
        %v1682 = vmul.f32 %v954, %v1651
        %v1683 = vmul.f32 %v957, %v1651
        %v1684 = vmul.f32 %v958, %v1651
        %v1717 = vrot.slane %v1653, 1
        %v1718 = vrot.slane %v1654, 1
        %v1719 = vsel %vm1288, %v1717, %v1718
        %v1720 = vrot.slane %v1655, 1
        %v1721 = vrot.slane %v1656, 1
        %v1722 = vsel %vm1288, %v1720, %v1721
        %v1723 = vrot.slane %v1657, 1
        %v1724 = vrot.slane %v1658, 1
        %v1725 = vsel %vm1288, %v1723, %v1724
        %v1726 = vrot.slane %v1659, 1
        %v1727 = vrot.slane %v1660, 1
        %v1728 = vsel %vm1288, %v1726, %v1727
        %v1729 = vrot.slane %v1661, 1
        %v1730 = vrot.slane %v1662, 1
        %v1731 = vsel %vm1288, %v1729, %v1730
        %v1732 = vrot.slane %v1663, 1
        %v1733 = vrot.slane %v1664, 1
        %v1734 = vsel %vm1288, %v1732, %v1733
        %v1735 = vrot.slane %v1665, 1
        %v1736 = vrot.slane %v1666, 1
        %v1737 = vsel %vm1288, %v1735, %v1736
        %v1738 = vrot.slane %v1667, 1
        %v1739 = vrot.slane %v1668, 1
        %v1740 = vsel %vm1288, %v1738, %v1739
        %v1741 = vrot.slane %v1669, 1
        %v1742 = vrot.slane %v1670, 1
        %v1743 = vsel %vm1288, %v1741, %v1742
        %v1744 = vrot.slane %v1671, 1
        %v1745 = vrot.slane %v1672, 1
        %v1746 = vsel %vm1288, %v1744, %v1745
        %v1747 = vrot.slane %v1673, 1
        %v1748 = vrot.slane %v1674, 1
        %v1749 = vsel %vm1288, %v1747, %v1748
        %v1750 = vrot.slane %v1675, 1
        %v1751 = vrot.slane %v1676, 1
        %v1752 = vsel %vm1288, %v1750, %v1751
        %v1753 = vrot.slane %v1677, 1
        %v1754 = vrot.slane %v1678, 1
        %v1755 = vsel %vm1288, %v1753, %v1754
        %v1756 = vrot.slane %v1679, 1
        %v1757 = vrot.slane %v1680, 1
        %v1758 = vsel %vm1288, %v1756, %v1757
        %v1759 = vrot.slane %v1681, 1
        %v1760 = vrot.slane %v1682, 1
        %v1761 = vsel %vm1288, %v1759, %v1760
        %v1762 = vrot.slane %v1683, 1
        %v1763 = vrot.slane %v1684, 1
        %v1764 = vsel %vm1288, %v1762, %v1763
        %v1813 = vadd.f32 %v1599, %v1717
        %v1814 = vadd.f32 %v1600, %v1719
        %v1815 = vadd.f32 %v1601, %v1718
        %v1816 = vadd.f32 %v1602, %v1720
        %v1817 = vadd.f32 %v1603, %v1722
        %v1818 = vadd.f32 %v1604, %v1721
        %v1819 = vadd.f32 %v1605, %v1723
        %v1820 = vadd.f32 %v1606, %v1725
        %v1821 = vadd.f32 %v1607, %v1724
        %v1822 = vadd.f32 %v1608, %v1726
        %v1823 = vadd.f32 %v1609, %v1728
        %v1824 = vadd.f32 %v1610, %v1727
        %v1825 = vadd.f32 %v1611, %v1729
        %v1826 = vadd.f32 %v1612, %v1731
        %v1827 = vadd.f32 %v1613, %v1730
        %v1828 = vadd.f32 %v1614, %v1732
        %v1829 = vadd.f32 %v1615, %v1734
        %v1830 = vadd.f32 %v1616, %v1733
        %v1831 = vadd.f32 %v1617, %v1735
        %v1832 = vadd.f32 %v1618, %v1737
        %v1833 = vadd.f32 %v1619, %v1736
        %v1834 = vadd.f32 %v1620, %v1738
        %v1835 = vadd.f32 %v1621, %v1740
        %v1836 = vadd.f32 %v1622, %v1739
        %v1837 = vadd.f32 %v1623, %v1741
        %v1838 = vadd.f32 %v1624, %v1743
        %v1839 = vadd.f32 %v1625, %v1742
        %v1840 = vadd.f32 %v1626, %v1744
        %v1841 = vadd.f32 %v1627, %v1746
        %v1842 = vadd.f32 %v1628, %v1745
        %v1843 = vadd.f32 %v1629, %v1747
        %v1844 = vadd.f32 %v1630, %v1749
        %v1845 = vadd.f32 %v1631, %v1748
        %v1846 = vadd.f32 %v1632, %v1750
        %v1847 = vadd.f32 %v1633, %v1752
        %v1848 = vadd.f32 %v1634, %v1751
        %v1849 = vadd.f32 %v1635, %v1753
        %v1850 = vadd.f32 %v1636, %v1755
        %v1851 = vadd.f32 %v1637, %v1754
        %v1852 = vadd.f32 %v1638, %v1756
        %v1853 = vadd.f32 %v1639, %v1758
        %v1854 = vadd.f32 %v1640, %v1757
        %v1855 = vadd.f32 %v1641, %v1759
        %v1856 = vadd.f32 %v1642, %v1761
        %v1857 = vadd.f32 %v1643, %v1760
        %v1858 = vadd.f32 %v1644, %v1762
        %v1859 = vadd.f32 %v1645, %v1764
        %v1860 = vadd.f32 %v1646, %v1763
        %v1862 = vlaneseq
        %v1863 = vshrl.u32 %v1862, 7
        %v1864 = vsub.s32 0, %v1863
        %v1865 = vrot.slane %v775, %v1864
        %v1867 = vmul.f32 %v889, %v1865
        %v1868 = vmul.f32 %v890, %v1865
        %v1869 = vmul.f32 %v891, %v1865
        %v1870 = vmul.f32 %v893, %v1865
        %v1871 = vmul.f32 %v894, %v1865
        %v1872 = vmul.f32 %v895, %v1865
        %v1873 = vmul.f32 %v897, %v1865
        %v1874 = vmul.f32 %v898, %v1865
        %v1875 = vmul.f32 %v899, %v1865
        %v1876 = vmul.f32 %v901, %v1865
        %v1877 = vmul.f32 %v902, %v1865
        %v1878 = vmul.f32 %v903, %v1865
        %v1879 = vmul.f32 %v905, %v1865
        %v1880 = vmul.f32 %v906, %v1865
        %v1881 = vmul.f32 %v907, %v1865
        %v1882 = vmul.f32 %v909, %v1865
        %v1883 = vmul.f32 %v910, %v1865
        %v1884 = vmul.f32 %v911, %v1865
        %v1885 = vmul.f32 %v913, %v1865
        %v1886 = vmul.f32 %v914, %v1865
        %v1887 = vmul.f32 %v915, %v1865
        %v1888 = vmul.f32 %v917, %v1865
        %v1889 = vmul.f32 %v918, %v1865
        %v1890 = vmul.f32 %v919, %v1865
        %v1891 = vmul.f32 %v921, %v1865
        %v1892 = vmul.f32 %v922, %v1865
        %v1893 = vmul.f32 %v923, %v1865
        %v1894 = vmul.f32 %v925, %v1865
        %v1895 = vmul.f32 %v926, %v1865
        %v1896 = vmul.f32 %v927, %v1865
        %v1897 = vmul.f32 %v929, %v1865
        %v1898 = vmul.f32 %v930, %v1865
        %v1899 = vmul.f32 %v931, %v1865
        %v1900 = vmul.f32 %v933, %v1865
        %v1901 = vmul.f32 %v934, %v1865
        %v1902 = vmul.f32 %v935, %v1865
        %v1903 = vmul.f32 %v937, %v1865
        %v1904 = vmul.f32 %v938, %v1865
        %v1905 = vmul.f32 %v939, %v1865
        %v1906 = vmul.f32 %v941, %v1865
        %v1907 = vmul.f32 %v942, %v1865
        %v1908 = vmul.f32 %v943, %v1865
        %v1909 = vmul.f32 %v945, %v1865
        %v1910 = vmul.f32 %v946, %v1865
        %v1911 = vmul.f32 %v947, %v1865
        %v1912 = vmul.f32 %v949, %v1865
        %v1913 = vmul.f32 %v950, %v1865
        %v1914 = vmul.f32 %v951, %v1865
        %vm1963 = vcmask 1045504
        %v1964 = vrot.slane %v1867, 2
        %v1965 = vrot.slane %v1868, 2
        %v1966 = vsel %vm1963, %v1964, %v1965
        %v1967 = vrot.slane %v1869, 2
        %v1968 = vsel %vm1963, %v1965, %v1967
        %v1969 = vrot.slane %v1870, 2
        %v1970 = vrot.slane %v1871, 2
        %v1971 = vsel %vm1963, %v1969, %v1970
        %v1972 = vrot.slane %v1872, 2
        %v1973 = vsel %vm1963, %v1970, %v1972
        %v1974 = vrot.slane %v1873, 2
        %v1975 = vrot.slane %v1874, 2
        %v1976 = vsel %vm1963, %v1974, %v1975
        %v1977 = vrot.slane %v1875, 2
        %v1978 = vsel %vm1963, %v1975, %v1977
        %v1979 = vrot.slane %v1876, 2
        %v1980 = vrot.slane %v1877, 2
        %v1981 = vsel %vm1963, %v1979, %v1980
        %v1982 = vrot.slane %v1878, 2
        %v1983 = vsel %vm1963, %v1980, %v1982
        %v1984 = vrot.slane %v1879, 2
        %v1985 = vrot.slane %v1880, 2
        %v1986 = vsel %vm1963, %v1984, %v1985
        %v1987 = vrot.slane %v1881, 2
        %v1988 = vsel %vm1963, %v1985, %v1987
        %v1989 = vrot.slane %v1882, 2
        %v1990 = vrot.slane %v1883, 2
        %v1991 = vsel %vm1963, %v1989, %v1990
        %v1992 = vrot.slane %v1884, 2
        %v1993 = vsel %vm1963, %v1990, %v1992
        %v1994 = vrot.slane %v1885, 2
        %v1995 = vrot.slane %v1886, 2
        %v1996 = vsel %vm1963, %v1994, %v1995
        %v1997 = vrot.slane %v1887, 2
        %v1998 = vsel %vm1963, %v1995, %v1997
        %v1999 = vrot.slane %v1888, 2
        %v2000 = vrot.slane %v1889, 2
        %v2001 = vsel %vm1963, %v1999, %v2000
        %v2002 = vrot.slane %v1890, 2
        %v2003 = vsel %vm1963, %v2000, %v2002
        %v2004 = vrot.slane %v1891, 2
        %v2005 = vrot.slane %v1892, 2
        %v2006 = vsel %vm1963, %v2004, %v2005
        %v2007 = vrot.slane %v1893, 2
        %v2008 = vsel %vm1963, %v2005, %v2007
        %v2009 = vrot.slane %v1894, 2
        %v2010 = vrot.slane %v1895, 2
        %v2011 = vsel %vm1963, %v2009, %v2010
        %v2012 = vrot.slane %v1896, 2
        %v2013 = vsel %vm1963, %v2010, %v2012
        %v2014 = vrot.slane %v1897, 2
        %v2015 = vrot.slane %v1898, 2
        %v2016 = vsel %vm1963, %v2014, %v2015
        %v2017 = vrot.slane %v1899, 2
        %v2018 = vsel %vm1963, %v2015, %v2017
        %v2019 = vrot.slane %v1900, 2
        %v2020 = vrot.slane %v1901, 2
        %v2021 = vsel %vm1963, %v2019, %v2020
        %v2022 = vrot.slane %v1902, 2
        %v2023 = vsel %vm1963, %v2020, %v2022
        %v2024 = vrot.slane %v1903, 2
        %v2025 = vrot.slane %v1904, 2
        %v2026 = vsel %vm1963, %v2024, %v2025
        %v2027 = vrot.slane %v1905, 2
        %v2028 = vsel %vm1963, %v2025, %v2027
        %v2029 = vrot.slane %v1906, 2
        %v2030 = vrot.slane %v1907, 2
        %v2031 = vsel %vm1963, %v2029, %v2030
        %v2032 = vrot.slane %v1908, 2
        %v2033 = vsel %vm1963, %v2030, %v2032
        %v2034 = vrot.slane %v1909, 2
        %v2035 = vrot.slane %v1910, 2
        %v2036 = vsel %vm1963, %v2034, %v2035
        %v2037 = vrot.slane %v1911, 2
        %v2038 = vsel %vm1963, %v2035, %v2037
        %v2039 = vrot.slane %v1912, 2
        %v2040 = vrot.slane %v1913, 2
        %v2041 = vsel %vm1963, %v2039, %v2040
        %v2042 = vrot.slane %v1914, 2
        %v2043 = vsel %vm1963, %v2040, %v2042
        %v2092 = vadd.f32 %v1813, %v1964
        %v2093 = vadd.f32 %v1814, %v1966
        %v2094 = vadd.f32 %v1815, %v1968
        %v2095 = vadd.f32 %v1816, %v1969
        %v2096 = vadd.f32 %v1817, %v1971
        %v2097 = vadd.f32 %v1818, %v1973
        %v2098 = vadd.f32 %v1819, %v1974
        %v2099 = vadd.f32 %v1820, %v1976
        %v2100 = vadd.f32 %v1821, %v1978
        %v2101 = vadd.f32 %v1822, %v1979
        %v2102 = vadd.f32 %v1823, %v1981
        %v2103 = vadd.f32 %v1824, %v1983
        %v2104 = vadd.f32 %v1825, %v1984
        %v2105 = vadd.f32 %v1826, %v1986
        %v2106 = vadd.f32 %v1827, %v1988
        %v2107 = vadd.f32 %v1828, %v1989
        %v2108 = vadd.f32 %v1829, %v1991
        %v2109 = vadd.f32 %v1830, %v1993
        %v2110 = vadd.f32 %v1831, %v1994
        %v2111 = vadd.f32 %v1832, %v1996
        %v2112 = vadd.f32 %v1833, %v1998
        %v2113 = vadd.f32 %v1834, %v1999
        %v2114 = vadd.f32 %v1835, %v2001
        %v2115 = vadd.f32 %v1836, %v2003
        %v2116 = vadd.f32 %v1837, %v2004
        %v2117 = vadd.f32 %v1838, %v2006
        %v2118 = vadd.f32 %v1839, %v2008
        %v2119 = vadd.f32 %v1840, %v2009
        %v2120 = vadd.f32 %v1841, %v2011
        %v2121 = vadd.f32 %v1842, %v2013
        %v2122 = vadd.f32 %v1843, %v2014
        %v2123 = vadd.f32 %v1844, %v2016
        %v2124 = vadd.f32 %v1845, %v2018
        %v2125 = vadd.f32 %v1846, %v2019
        %v2126 = vadd.f32 %v1847, %v2021
        %v2127 = vadd.f32 %v1848, %v2023
        %v2128 = vadd.f32 %v1849, %v2024
        %v2129 = vadd.f32 %v1850, %v2026
        %v2130 = vadd.f32 %v1851, %v2028
        %v2131 = vadd.f32 %v1852, %v2029
        %v2132 = vadd.f32 %v1853, %v2031
        %v2133 = vadd.f32 %v1854, %v2033
        %v2134 = vadd.f32 %v1855, %v2034
        %v2135 = vadd.f32 %v1856, %v2036
        %v2136 = vadd.f32 %v1857, %v2038
        %v2137 = vadd.f32 %v1858, %v2039
        %v2138 = vadd.f32 %v1859, %v2041
        %v2139 = vadd.f32 %v1860, %v2043
        %v2141 = vlaneseq
        %v2142 = vshrl.u32 %v2141, 7
        %v2143 = vsub.s32 0, %v2142
        %v2144 = vrot.slane %v778, %v2143
        %v2146 = vmul.f32 %v893, %v2144
        %v2147 = vmul.f32 %v894, %v2144
        %v2148 = vmul.f32 %v895, %v2144
        %v2149 = vmul.f32 %v897, %v2144
        %v2150 = vmul.f32 %v898, %v2144
        %v2151 = vmul.f32 %v899, %v2144
        %v2152 = vmul.f32 %v901, %v2144
        %v2153 = vmul.f32 %v902, %v2144
        %v2154 = vmul.f32 %v903, %v2144
        %v2155 = vmul.f32 %v905, %v2144
        %v2156 = vmul.f32 %v906, %v2144
        %v2157 = vmul.f32 %v907, %v2144
        %v2158 = vmul.f32 %v909, %v2144
        %v2159 = vmul.f32 %v910, %v2144
        %v2160 = vmul.f32 %v911, %v2144
        %v2161 = vmul.f32 %v913, %v2144
        %v2162 = vmul.f32 %v914, %v2144
        %v2163 = vmul.f32 %v915, %v2144
        %v2164 = vmul.f32 %v917, %v2144
        %v2165 = vmul.f32 %v918, %v2144
        %v2166 = vmul.f32 %v919, %v2144
        %v2167 = vmul.f32 %v921, %v2144
        %v2168 = vmul.f32 %v922, %v2144
        %v2169 = vmul.f32 %v923, %v2144
        %v2170 = vmul.f32 %v925, %v2144
        %v2171 = vmul.f32 %v926, %v2144
        %v2172 = vmul.f32 %v927, %v2144
        %v2173 = vmul.f32 %v929, %v2144
        %v2174 = vmul.f32 %v930, %v2144
        %v2175 = vmul.f32 %v931, %v2144
        %v2176 = vmul.f32 %v933, %v2144
        %v2177 = vmul.f32 %v934, %v2144
        %v2178 = vmul.f32 %v935, %v2144
        %v2179 = vmul.f32 %v937, %v2144
        %v2180 = vmul.f32 %v938, %v2144
        %v2181 = vmul.f32 %v939, %v2144
        %v2182 = vmul.f32 %v941, %v2144
        %v2183 = vmul.f32 %v942, %v2144
        %v2184 = vmul.f32 %v943, %v2144
        %v2185 = vmul.f32 %v945, %v2144
        %v2186 = vmul.f32 %v946, %v2144
        %v2187 = vmul.f32 %v947, %v2144
        %v2188 = vmul.f32 %v949, %v2144
        %v2189 = vmul.f32 %v950, %v2144
        %v2190 = vmul.f32 %v951, %v2144
        %v2191 = vmul.f32 %v953, %v2144
        %v2192 = vmul.f32 %v954, %v2144
        %v2193 = vmul.f32 %v955, %v2144
        %v2242 = vrot.slane %v2146, 2
        %v2243 = vrot.slane %v2147, 2
        %v2244 = vsel %vm1963, %v2242, %v2243
        %v2245 = vrot.slane %v2148, 2
        %v2246 = vsel %vm1963, %v2243, %v2245
        %v2247 = vrot.slane %v2149, 2
        %v2248 = vrot.slane %v2150, 2
        %v2249 = vsel %vm1963, %v2247, %v2248
        %v2250 = vrot.slane %v2151, 2
        %v2251 = vsel %vm1963, %v2248, %v2250
        %v2252 = vrot.slane %v2152, 2
        %v2253 = vrot.slane %v2153, 2
        %v2254 = vsel %vm1963, %v2252, %v2253
        %v2255 = vrot.slane %v2154, 2
        %v2256 = vsel %vm1963, %v2253, %v2255
        %v2257 = vrot.slane %v2155, 2
        %v2258 = vrot.slane %v2156, 2
        %v2259 = vsel %vm1963, %v2257, %v2258
        %v2260 = vrot.slane %v2157, 2
        %v2261 = vsel %vm1963, %v2258, %v2260
        %v2262 = vrot.slane %v2158, 2
        %v2263 = vrot.slane %v2159, 2
        %v2264 = vsel %vm1963, %v2262, %v2263
        %v2265 = vrot.slane %v2160, 2
        %v2266 = vsel %vm1963, %v2263, %v2265
        %v2267 = vrot.slane %v2161, 2
        %v2268 = vrot.slane %v2162, 2
        %v2269 = vsel %vm1963, %v2267, %v2268
        %v2270 = vrot.slane %v2163, 2
        %v2271 = vsel %vm1963, %v2268, %v2270
        %v2272 = vrot.slane %v2164, 2
        %v2273 = vrot.slane %v2165, 2
        %v2274 = vsel %vm1963, %v2272, %v2273
        %v2275 = vrot.slane %v2166, 2
        %v2276 = vsel %vm1963, %v2273, %v2275
        %v2277 = vrot.slane %v2167, 2
        %v2278 = vrot.slane %v2168, 2
        %v2279 = vsel %vm1963, %v2277, %v2278
        %v2280 = vrot.slane %v2169, 2
        %v2281 = vsel %vm1963, %v2278, %v2280
        %v2282 = vrot.slane %v2170, 2
        %v2283 = vrot.slane %v2171, 2
        %v2284 = vsel %vm1963, %v2282, %v2283
        %v2285 = vrot.slane %v2172, 2
        %v2286 = vsel %vm1963, %v2283, %v2285
        %v2287 = vrot.slane %v2173, 2
        %v2288 = vrot.slane %v2174, 2
        %v2289 = vsel %vm1963, %v2287, %v2288
        %v2290 = vrot.slane %v2175, 2
        %v2291 = vsel %vm1963, %v2288, %v2290
        %v2292 = vrot.slane %v2176, 2
        %v2293 = vrot.slane %v2177, 2
        %v2294 = vsel %vm1963, %v2292, %v2293
        %v2295 = vrot.slane %v2178, 2
        %v2296 = vsel %vm1963, %v2293, %v2295
        %v2297 = vrot.slane %v2179, 2
        %v2298 = vrot.slane %v2180, 2
        %v2299 = vsel %vm1963, %v2297, %v2298
        %v2300 = vrot.slane %v2181, 2
        %v2301 = vsel %vm1963, %v2298, %v2300
        %v2302 = vrot.slane %v2182, 2
        %v2303 = vrot.slane %v2183, 2
        %v2304 = vsel %vm1963, %v2302, %v2303
        %v2305 = vrot.slane %v2184, 2
        %v2306 = vsel %vm1963, %v2303, %v2305
        %v2307 = vrot.slane %v2185, 2
        %v2308 = vrot.slane %v2186, 2
        %v2309 = vsel %vm1963, %v2307, %v2308
        %v2310 = vrot.slane %v2187, 2
        %v2311 = vsel %vm1963, %v2308, %v2310
        %v2312 = vrot.slane %v2188, 2
        %v2313 = vrot.slane %v2189, 2
        %v2314 = vsel %vm1963, %v2312, %v2313
        %v2315 = vrot.slane %v2190, 2
        %v2316 = vsel %vm1963, %v2313, %v2315
        %v2317 = vrot.slane %v2191, 2
        %v2318 = vrot.slane %v2192, 2
        %v2319 = vsel %vm1963, %v2317, %v2318
        %v2320 = vrot.slane %v2193, 2
        %v2321 = vsel %vm1963, %v2318, %v2320
        %v2370 = vadd.f32 %v2092, %v2242
        %v2371 = vadd.f32 %v2093, %v2244
        %v2372 = vadd.f32 %v2094, %v2246
        %v2373 = vadd.f32 %v2095, %v2247
        %v2374 = vadd.f32 %v2096, %v2249
        %v2375 = vadd.f32 %v2097, %v2251
        %v2376 = vadd.f32 %v2098, %v2252
        %v2377 = vadd.f32 %v2099, %v2254
        %v2378 = vadd.f32 %v2100, %v2256
        %v2379 = vadd.f32 %v2101, %v2257
        %v2380 = vadd.f32 %v2102, %v2259
        %v2381 = vadd.f32 %v2103, %v2261
        %v2382 = vadd.f32 %v2104, %v2262
        %v2383 = vadd.f32 %v2105, %v2264
        %v2384 = vadd.f32 %v2106, %v2266
        %v2385 = vadd.f32 %v2107, %v2267
        %v2386 = vadd.f32 %v2108, %v2269
        %v2387 = vadd.f32 %v2109, %v2271
        %v2388 = vadd.f32 %v2110, %v2272
        %v2389 = vadd.f32 %v2111, %v2274
        %v2390 = vadd.f32 %v2112, %v2276
        %v2391 = vadd.f32 %v2113, %v2277
        %v2392 = vadd.f32 %v2114, %v2279
        %v2393 = vadd.f32 %v2115, %v2281
        %v2394 = vadd.f32 %v2116, %v2282
        %v2395 = vadd.f32 %v2117, %v2284
        %v2396 = vadd.f32 %v2118, %v2286
        %v2397 = vadd.f32 %v2119, %v2287
        %v2398 = vadd.f32 %v2120, %v2289
        %v2399 = vadd.f32 %v2121, %v2291
        %v2400 = vadd.f32 %v2122, %v2292
        %v2401 = vadd.f32 %v2123, %v2294
        %v2402 = vadd.f32 %v2124, %v2296
        %v2403 = vadd.f32 %v2125, %v2297
        %v2404 = vadd.f32 %v2126, %v2299
        %v2405 = vadd.f32 %v2127, %v2301
        %v2406 = vadd.f32 %v2128, %v2302
        %v2407 = vadd.f32 %v2129, %v2304
        %v2408 = vadd.f32 %v2130, %v2306
        %v2409 = vadd.f32 %v2131, %v2307
        %v2410 = vadd.f32 %v2132, %v2309
        %v2411 = vadd.f32 %v2133, %v2311
        %v2412 = vadd.f32 %v2134, %v2312
        %v2413 = vadd.f32 %v2135, %v2314
        %v2414 = vadd.f32 %v2136, %v2316
        %v2415 = vadd.f32 %v2137, %v2317
        %v2416 = vadd.f32 %v2138, %v2319
        %v2417 = vadd.f32 %v2139, %v2321
        %v2419 = vlaneseq
        %v2420 = vshrl.u32 %v2419, 7
        %v2421 = vsub.s32 0, %v2420
        %v2422 = vrot.slane %v781, %v2421
        %v2424 = vmul.f32 %v897, %v2422
        %v2425 = vmul.f32 %v898, %v2422
        %v2426 = vmul.f32 %v899, %v2422
        %v2427 = vmul.f32 %v901, %v2422
        %v2428 = vmul.f32 %v902, %v2422
        %v2429 = vmul.f32 %v903, %v2422
        %v2430 = vmul.f32 %v905, %v2422
        %v2431 = vmul.f32 %v906, %v2422
        %v2432 = vmul.f32 %v907, %v2422
        %v2433 = vmul.f32 %v909, %v2422
        %v2434 = vmul.f32 %v910, %v2422
        %v2435 = vmul.f32 %v911, %v2422
        %v2436 = vmul.f32 %v913, %v2422
        %v2437 = vmul.f32 %v914, %v2422
        %v2438 = vmul.f32 %v915, %v2422
        %v2439 = vmul.f32 %v917, %v2422
        %v2440 = vmul.f32 %v918, %v2422
        %v2441 = vmul.f32 %v919, %v2422
        %v2442 = vmul.f32 %v921, %v2422
        %v2443 = vmul.f32 %v922, %v2422
        %v2444 = vmul.f32 %v923, %v2422
        %v2445 = vmul.f32 %v925, %v2422
        %v2446 = vmul.f32 %v926, %v2422
        %v2447 = vmul.f32 %v927, %v2422
        %v2448 = vmul.f32 %v929, %v2422
        %v2449 = vmul.f32 %v930, %v2422
        %v2450 = vmul.f32 %v931, %v2422
        %v2451 = vmul.f32 %v933, %v2422
        %v2452 = vmul.f32 %v934, %v2422
        %v2453 = vmul.f32 %v935, %v2422
        %v2454 = vmul.f32 %v937, %v2422
        %v2455 = vmul.f32 %v938, %v2422
        %v2456 = vmul.f32 %v939, %v2422
        %v2457 = vmul.f32 %v941, %v2422
        %v2458 = vmul.f32 %v942, %v2422
        %v2459 = vmul.f32 %v943, %v2422
        %v2460 = vmul.f32 %v945, %v2422
        %v2461 = vmul.f32 %v946, %v2422
        %v2462 = vmul.f32 %v947, %v2422
        %v2463 = vmul.f32 %v949, %v2422
        %v2464 = vmul.f32 %v950, %v2422
        %v2465 = vmul.f32 %v951, %v2422
        %v2466 = vmul.f32 %v953, %v2422
        %v2467 = vmul.f32 %v954, %v2422
        %v2468 = vmul.f32 %v955, %v2422
        %v2469 = vmul.f32 %v957, %v2422
        %v2470 = vmul.f32 %v958, %v2422
        %v2471 = vmul.f32 %v959, %v2422
        %v2520 = vrot.slane %v2424, 2
        %v2521 = vrot.slane %v2425, 2
        %v2522 = vsel %vm1963, %v2520, %v2521
        %v2523 = vrot.slane %v2426, 2
        %v2524 = vsel %vm1963, %v2521, %v2523
        %v2525 = vrot.slane %v2427, 2
        %v2526 = vrot.slane %v2428, 2
        %v2527 = vsel %vm1963, %v2525, %v2526
        %v2528 = vrot.slane %v2429, 2
        %v2529 = vsel %vm1963, %v2526, %v2528
        %v2530 = vrot.slane %v2430, 2
        %v2531 = vrot.slane %v2431, 2
        %v2532 = vsel %vm1963, %v2530, %v2531
        %v2533 = vrot.slane %v2432, 2
        %v2534 = vsel %vm1963, %v2531, %v2533
        %v2535 = vrot.slane %v2433, 2
        %v2536 = vrot.slane %v2434, 2
        %v2537 = vsel %vm1963, %v2535, %v2536
        %v2538 = vrot.slane %v2435, 2
        %v2539 = vsel %vm1963, %v2536, %v2538
        %v2540 = vrot.slane %v2436, 2
        %v2541 = vrot.slane %v2437, 2
        %v2542 = vsel %vm1963, %v2540, %v2541
        %v2543 = vrot.slane %v2438, 2
        %v2544 = vsel %vm1963, %v2541, %v2543
        %v2545 = vrot.slane %v2439, 2
        %v2546 = vrot.slane %v2440, 2
        %v2547 = vsel %vm1963, %v2545, %v2546
        %v2548 = vrot.slane %v2441, 2
        %v2549 = vsel %vm1963, %v2546, %v2548
        %v2550 = vrot.slane %v2442, 2
        %v2551 = vrot.slane %v2443, 2
        %v2552 = vsel %vm1963, %v2550, %v2551
        %v2553 = vrot.slane %v2444, 2
        %v2554 = vsel %vm1963, %v2551, %v2553
        %v2555 = vrot.slane %v2445, 2
        %v2556 = vrot.slane %v2446, 2
        %v2557 = vsel %vm1963, %v2555, %v2556
        %v2558 = vrot.slane %v2447, 2
        %v2559 = vsel %vm1963, %v2556, %v2558
        %v2560 = vrot.slane %v2448, 2
        %v2561 = vrot.slane %v2449, 2
        %v2562 = vsel %vm1963, %v2560, %v2561
        %v2563 = vrot.slane %v2450, 2
        %v2564 = vsel %vm1963, %v2561, %v2563
        %v2565 = vrot.slane %v2451, 2
        %v2566 = vrot.slane %v2452, 2
        %v2567 = vsel %vm1963, %v2565, %v2566
        %v2568 = vrot.slane %v2453, 2
        %v2569 = vsel %vm1963, %v2566, %v2568
        %v2570 = vrot.slane %v2454, 2
        %v2571 = vrot.slane %v2455, 2
        %v2572 = vsel %vm1963, %v2570, %v2571
        %v2573 = vrot.slane %v2456, 2
        %v2574 = vsel %vm1963, %v2571, %v2573
        %v2575 = vrot.slane %v2457, 2
        %v2576 = vrot.slane %v2458, 2
        %v2577 = vsel %vm1963, %v2575, %v2576
        %v2578 = vrot.slane %v2459, 2
        %v2579 = vsel %vm1963, %v2576, %v2578
        %v2580 = vrot.slane %v2460, 2
        %v2581 = vrot.slane %v2461, 2
        %v2582 = vsel %vm1963, %v2580, %v2581
        %v2583 = vrot.slane %v2462, 2
        %v2584 = vsel %vm1963, %v2581, %v2583
        %v2585 = vrot.slane %v2463, 2
        %v2586 = vrot.slane %v2464, 2
        %v2587 = vsel %vm1963, %v2585, %v2586
        %v2588 = vrot.slane %v2465, 2
        %v2589 = vsel %vm1963, %v2586, %v2588
        %v2590 = vrot.slane %v2466, 2
        %v2591 = vrot.slane %v2467, 2
        %v2592 = vsel %vm1963, %v2590, %v2591
        %v2593 = vrot.slane %v2468, 2
        %v2594 = vsel %vm1963, %v2591, %v2593
        %v2595 = vrot.slane %v2469, 2
        %v2596 = vrot.slane %v2470, 2
        %v2597 = vsel %vm1963, %v2595, %v2596
        %v2598 = vrot.slane %v2471, 2
        %v2599 = vsel %vm1963, %v2596, %v2598
        %v2648 = vadd.f32 %v2370, %v2520
        %v2649 = vadd.f32 %v2371, %v2522
        %v2650 = vadd.f32 %v2372, %v2524
        %v2651 = vadd.f32 %v2373, %v2525
        %v2652 = vadd.f32 %v2374, %v2527
        %v2653 = vadd.f32 %v2375, %v2529
        %v2654 = vadd.f32 %v2376, %v2530
        %v2655 = vadd.f32 %v2377, %v2532
        %v2656 = vadd.f32 %v2378, %v2534
        %v2657 = vadd.f32 %v2379, %v2535
        %v2658 = vadd.f32 %v2380, %v2537
        %v2659 = vadd.f32 %v2381, %v2539
        %v2660 = vadd.f32 %v2382, %v2540
        %v2661 = vadd.f32 %v2383, %v2542
        %v2662 = vadd.f32 %v2384, %v2544
        %v2663 = vadd.f32 %v2385, %v2545
        %v2664 = vadd.f32 %v2386, %v2547
        %v2665 = vadd.f32 %v2387, %v2549
        %v2666 = vadd.f32 %v2388, %v2550
        %v2667 = vadd.f32 %v2389, %v2552
        %v2668 = vadd.f32 %v2390, %v2554
        %v2669 = vadd.f32 %v2391, %v2555
        %v2670 = vadd.f32 %v2392, %v2557
        %v2671 = vadd.f32 %v2393, %v2559
        %v2672 = vadd.f32 %v2394, %v2560
        %v2673 = vadd.f32 %v2395, %v2562
        %v2674 = vadd.f32 %v2396, %v2564
        %v2675 = vadd.f32 %v2397, %v2565
        %v2676 = vadd.f32 %v2398, %v2567
        %v2677 = vadd.f32 %v2399, %v2569
        %v2678 = vadd.f32 %v2400, %v2570
        %v2679 = vadd.f32 %v2401, %v2572
        %v2680 = vadd.f32 %v2402, %v2574
        %v2681 = vadd.f32 %v2403, %v2575
        %v2682 = vadd.f32 %v2404, %v2577
        %v2683 = vadd.f32 %v2405, %v2579
        %v2684 = vadd.f32 %v2406, %v2580
        %v2685 = vadd.f32 %v2407, %v2582
        %v2686 = vadd.f32 %v2408, %v2584
        %v2687 = vadd.f32 %v2409, %v2585
        %v2688 = vadd.f32 %v2410, %v2587
        %v2689 = vadd.f32 %v2411, %v2589
        %v2690 = vadd.f32 %v2412, %v2590
        %v2691 = vadd.f32 %v2413, %v2592
        %v2692 = vadd.f32 %v2414, %v2594
        %v2693 = vadd.f32 %v2415, %v2595
        %v2694 = vadd.f32 %v2416, %v2597
        %v2695 = vadd.f32 %v2417, %v2599
        %v2696 = vld [vmem:[%s3] sm:$0x1]
        %v2698 = vlaneseq
        %v2699 = vshrl.u32 %v2698, 7
        %v2700 = vsub.s32 0, %v2699
        %v2701 = vrot.slane %v2696, %v2700
        %v2703 = vmul.f32 %v2648, %v2701
        %v2704 = vmul.f32 %v2649, %v2701
        %v2705 = vmul.f32 %v2650, %v2701
        %v2706 = vmul.f32 %v2651, %v2701
        %v2707 = vmul.f32 %v2652, %v2701
        %v2708 = vmul.f32 %v2653, %v2701
        %v2709 = vmul.f32 %v2654, %v2701
        %v2710 = vmul.f32 %v2655, %v2701
        %v2711 = vmul.f32 %v2656, %v2701
        %v2712 = vmul.f32 %v2657, %v2701
        %v2713 = vmul.f32 %v2658, %v2701
        %v2714 = vmul.f32 %v2659, %v2701
        %v2715 = vmul.f32 %v2660, %v2701
        %v2716 = vmul.f32 %v2661, %v2701
        %v2717 = vmul.f32 %v2662, %v2701
        %v2718 = vmul.f32 %v2663, %v2701
        %v2719 = vmul.f32 %v2664, %v2701
        %v2720 = vmul.f32 %v2665, %v2701
        %v2721 = vmul.f32 %v2666, %v2701
        %v2722 = vmul.f32 %v2667, %v2701
        %v2723 = vmul.f32 %v2668, %v2701
        %v2724 = vmul.f32 %v2669, %v2701
        %v2725 = vmul.f32 %v2670, %v2701
        %v2726 = vmul.f32 %v2671, %v2701
        %v2727 = vmul.f32 %v2672, %v2701
        %v2728 = vmul.f32 %v2673, %v2701
        %v2729 = vmul.f32 %v2674, %v2701
        %v2730 = vmul.f32 %v2675, %v2701
        %v2731 = vmul.f32 %v2676, %v2701
        %v2732 = vmul.f32 %v2677, %v2701
        %v2733 = vmul.f32 %v2678, %v2701
        %v2734 = vmul.f32 %v2679, %v2701
        %v2735 = vmul.f32 %v2680, %v2701
        %v2736 = vmul.f32 %v2681, %v2701
        %v2737 = vmul.f32 %v2682, %v2701
        %v2738 = vmul.f32 %v2683, %v2701
        %v2739 = vmul.f32 %v2684, %v2701
        %v2740 = vmul.f32 %v2685, %v2701
        %v2741 = vmul.f32 %v2686, %v2701
        %v2742 = vmul.f32 %v2687, %v2701
        %v2743 = vmul.f32 %v2688, %v2701
        %v2744 = vmul.f32 %v2689, %v2701
        %v2745 = vmul.f32 %v2690, %v2701
        %v2746 = vmul.f32 %v2691, %v2701
        %v2747 = vmul.f32 %v2692, %v2701
        %v2748 = vmul.f32 %v2693, %v2701
        %v2749 = vmul.f32 %v2694, %v2701
        %v2750 = vmul.f32 %v2695, %v2701
        %v2751 = vld [vmem:[%s4] sm:$0x1]
        %v2753 = vlaneseq
        %v2754 = vshrl.u32 %v2753, 7
        %v2755 = vsub.s32 0, %v2754
        %v2756 = vrot.slane %v2751, %v2755
        %v2758 = vadd.f32 %v2703, %v2756
        %v2759 = vadd.f32 %v2704, %v2756
        %v2760 = vadd.f32 %v2705, %v2756
        %v2761 = vadd.f32 %v2706, %v2756
        %v2762 = vadd.f32 %v2707, %v2756
        %v2763 = vadd.f32 %v2708, %v2756
        %v2764 = vadd.f32 %v2709, %v2756
        %v2765 = vadd.f32 %v2710, %v2756
        %v2766 = vadd.f32 %v2711, %v2756
        %v2767 = vadd.f32 %v2712, %v2756
        %v2768 = vadd.f32 %v2713, %v2756
        %v2769 = vadd.f32 %v2714, %v2756
        %v2770 = vadd.f32 %v2715, %v2756
        %v2771 = vadd.f32 %v2716, %v2756
        %v2772 = vadd.f32 %v2717, %v2756
        %v2773 = vadd.f32 %v2718, %v2756
        %v2774 = vadd.f32 %v2719, %v2756
        %v2775 = vadd.f32 %v2720, %v2756
        %v2776 = vadd.f32 %v2721, %v2756
        %v2777 = vadd.f32 %v2722, %v2756
        %v2778 = vadd.f32 %v2723, %v2756
        %v2779 = vadd.f32 %v2724, %v2756
        %v2780 = vadd.f32 %v2725, %v2756
        %v2781 = vadd.f32 %v2726, %v2756
        %v2782 = vadd.f32 %v2727, %v2756
        %v2783 = vadd.f32 %v2728, %v2756
        %v2784 = vadd.f32 %v2729, %v2756
        %v2785 = vadd.f32 %v2730, %v2756
        %v2786 = vadd.f32 %v2731, %v2756
        %v2787 = vadd.f32 %v2732, %v2756
        %v2788 = vadd.f32 %v2733, %v2756
        %v2789 = vadd.f32 %v2734, %v2756
        %v2790 = vadd.f32 %v2735, %v2756
        %v2791 = vadd.f32 %v2736, %v2756
        %v2792 = vadd.f32 %v2737, %v2756
        %v2793 = vadd.f32 %v2738, %v2756
        %v2794 = vadd.f32 %v2739, %v2756
        %v2795 = vadd.f32 %v2740, %v2756
        %v2796 = vadd.f32 %v2741, %v2756
        %v2797 = vadd.f32 %v2742, %v2756
        %v2798 = vadd.f32 %v2743, %v2756
        %v2799 = vadd.f32 %v2744, %v2756
        %v2800 = vadd.f32 %v2745, %v2756
        %v2801 = vadd.f32 %v2746, %v2756
        %v2802 = vadd.f32 %v2747, %v2756
        %v2803 = vadd.f32 %v2748, %v2756
        %v2804 = vadd.f32 %v2749, %v2756
        %v2805 = vadd.f32 %v2750, %v2756
        %v2806 = vmax.f32 %v2758, 0.0
        %v2807 = vmax.f32 %v2759, 0.0
        %v2808 = vmax.f32 %v2760, 0.0
        %v2809 = vmax.f32 %v2761, 0.0
        %v2810 = vmax.f32 %v2762, 0.0
        %v2811 = vmax.f32 %v2763, 0.0
        %v2812 = vmax.f32 %v2764, 0.0
        %v2813 = vmax.f32 %v2765, 0.0
        %v2814 = vmax.f32 %v2766, 0.0
        %v2815 = vmax.f32 %v2767, 0.0
        %v2816 = vmax.f32 %v2768, 0.0
        %v2817 = vmax.f32 %v2769, 0.0
        %v2818 = vmax.f32 %v2770, 0.0
        %v2819 = vmax.f32 %v2771, 0.0
        %v2820 = vmax.f32 %v2772, 0.0
        %v2821 = vmax.f32 %v2773, 0.0
        %v2822 = vmax.f32 %v2774, 0.0
        %v2823 = vmax.f32 %v2775, 0.0
        %v2824 = vmax.f32 %v2776, 0.0
        %v2825 = vmax.f32 %v2777, 0.0
        %v2826 = vmax.f32 %v2778, 0.0
        %v2827 = vmax.f32 %v2779, 0.0
        %v2828 = vmax.f32 %v2780, 0.0
        %v2829 = vmax.f32 %v2781, 0.0
        %v2830 = vmax.f32 %v2782, 0.0
        %v2831 = vmax.f32 %v2783, 0.0
        %v2832 = vmax.f32 %v2784, 0.0
        %v2833 = vmax.f32 %v2785, 0.0
        %v2834 = vmax.f32 %v2786, 0.0
        %v2835 = vmax.f32 %v2787, 0.0
        %v2836 = vmax.f32 %v2788, 0.0
        %v2837 = vmax.f32 %v2789, 0.0
        %v2838 = vmax.f32 %v2790, 0.0
        %v2839 = vmax.f32 %v2791, 0.0
        %v2840 = vmax.f32 %v2792, 0.0
        %v2841 = vmax.f32 %v2793, 0.0
        %v2842 = vmax.f32 %v2794, 0.0
        %v2843 = vmax.f32 %v2795, 0.0
        %v2844 = vmax.f32 %v2796, 0.0
        %v2845 = vmax.f32 %v2797, 0.0
        %v2846 = vmax.f32 %v2798, 0.0
        %v2847 = vmax.f32 %v2799, 0.0
        %v2848 = vmax.f32 %v2800, 0.0
        %v2849 = vmax.f32 %v2801, 0.0
        %v2850 = vmax.f32 %v2802, 0.0
        %v2851 = vmax.f32 %v2803, 0.0
        %v2852 = vmax.f32 %v2804, 0.0
        %v2853 = vmax.f32 %v2805, 0.0
        %vm2902 = vcmask 1040384
        %v2903 = vrot.slane %v2806, 7
        %v2904 = vrot.slane %v2807, 7
        %v2905 = vsel %vm2902, %v2903, %v2904
        %v2906 = vrot.slane %v2808, 7
        %v2907 = vsel %vm2902, %v2904, %v2906
        %v2908 = vrot.slane %v2809, 7
        %v2909 = vrot.slane %v2810, 7
        %v2910 = vsel %vm2902, %v2908, %v2909
        %v2911 = vrot.slane %v2811, 7
        %v2912 = vsel %vm2902, %v2909, %v2911
        %v2913 = vrot.slane %v2812, 7
        %v2914 = vrot.slane %v2813, 7
        %v2915 = vsel %vm2902, %v2913, %v2914
        %v2916 = vrot.slane %v2814, 7
        %v2917 = vsel %vm2902, %v2914, %v2916
        %v2918 = vrot.slane %v2815, 7
        %v2919 = vrot.slane %v2816, 7
        %v2920 = vsel %vm2902, %v2918, %v2919
        %v2921 = vrot.slane %v2817, 7
        %v2922 = vsel %vm2902, %v2919, %v2921
        %v2923 = vrot.slane %v2818, 7
        %v2924 = vrot.slane %v2819, 7
        %v2925 = vsel %vm2902, %v2923, %v2924
        %v2926 = vrot.slane %v2820, 7
        %v2927 = vsel %vm2902, %v2924, %v2926
        %v2928 = vrot.slane %v2821, 7
        %v2929 = vrot.slane %v2822, 7
        %v2930 = vsel %vm2902, %v2928, %v2929
        %v2931 = vrot.slane %v2823, 7
        %v2932 = vsel %vm2902, %v2929, %v2931
        %v2933 = vrot.slane %v2824, 7
        %v2934 = vrot.slane %v2825, 7
        %v2935 = vsel %vm2902, %v2933, %v2934
        %v2936 = vrot.slane %v2826, 7
        %v2937 = vsel %vm2902, %v2934, %v2936
        %v2938 = vrot.slane %v2827, 7
        %v2939 = vrot.slane %v2828, 7
        %v2940 = vsel %vm2902, %v2938, %v2939
        %v2941 = vrot.slane %v2829, 7
        %v2942 = vsel %vm2902, %v2939, %v2941
        %v2943 = vrot.slane %v2830, 7
        %v2944 = vrot.slane %v2831, 7
        %v2945 = vsel %vm2902, %v2943, %v2944
        %v2946 = vrot.slane %v2832, 7
        %v2947 = vsel %vm2902, %v2944, %v2946
        %v2948 = vrot.slane %v2833, 7
        %v2949 = vrot.slane %v2834, 7
        %v2950 = vsel %vm2902, %v2948, %v2949
        %v2951 = vrot.slane %v2835, 7
        %v2952 = vsel %vm2902, %v2949, %v2951
        %v2953 = vrot.slane %v2836, 7
        %v2954 = vrot.slane %v2837, 7
        %v2955 = vsel %vm2902, %v2953, %v2954
        %v2956 = vrot.slane %v2838, 7
        %v2957 = vsel %vm2902, %v2954, %v2956
        %v2958 = vrot.slane %v2839, 7
        %v2959 = vrot.slane %v2840, 7
        %v2960 = vsel %vm2902, %v2958, %v2959
        %v2961 = vrot.slane %v2841, 7
        %v2962 = vsel %vm2902, %v2959, %v2961
        %v2963 = vrot.slane %v2842, 7
        %v2964 = vrot.slane %v2843, 7
        %v2965 = vsel %vm2902, %v2963, %v2964
        %v2966 = vrot.slane %v2844, 7
        %v2967 = vsel %vm2902, %v2964, %v2966
        %v2968 = vrot.slane %v2845, 7
        %v2969 = vrot.slane %v2846, 7
        %v2970 = vsel %vm2902, %v2968, %v2969
        %v2971 = vrot.slane %v2847, 7
        %v2972 = vsel %vm2902, %v2969, %v2971
        %v2973 = vrot.slane %v2848, 7
        %v2974 = vrot.slane %v2849, 7
        %v2975 = vsel %vm2902, %v2973, %v2974
        %v2976 = vrot.slane %v2850, 7
        %v2977 = vsel %vm2902, %v2974, %v2976
        %v2978 = vrot.slane %v2851, 7
        %v2979 = vrot.slane %v2852, 7
        %v2980 = vsel %vm2902, %v2978, %v2979
        %v2981 = vrot.slane %v2853, 7
        %v2982 = vsel %vm2902, %v2979, %v2981
        %v2983 = vld [vmem:[%s5] sm:$0xf]
        %v2984 = vsel %vm782, %v2905, 0
        %v2986 = vsel %vm782, %v2907, 0
        %v2988 = vsel %vm782, %v2910, 0
        %v2990 = vsel %vm782, %v2912, 0
        %v2992 = vsel %vm782, %v2915, 0
        %v2994 = vsel %vm782, %v2917, 0
        %v2996 = vsel %vm782, %v2920, 0
        %v2998 = vsel %vm782, %v2922, 0
        %v3000 = vsel %vm782, %v2925, 0
        %v3002 = vsel %vm782, %v2927, 0
        %v3004 = vsel %vm782, %v2930, 0
        %v3006 = vsel %vm782, %v2932, 0
        %v3008 = vsel %vm782, %v2935, 0
        %v3010 = vsel %vm782, %v2937, 0
        %v3012 = vsel %vm782, %v2940, 0
        %v3014 = vsel %vm782, %v2942, 0
        %v3016 = vsel %vm782, %v2945, 0
        %v3018 = vsel %vm782, %v2947, 0
        %v3020 = vsel %vm782, %v2950, 0
        %v3022 = vsel %vm782, %v2952, 0
        %v3024 = vsel %vm782, %v2955, 0
        %v3026 = vsel %vm782, %v2957, 0
        %v3028 = vsel %vm782, %v2960, 0
        %v3030 = vsel %vm782, %v2962, 0
        %v3032 = vsel %vm782, %v2965, 0
        %v3034 = vsel %vm782, %v2967, 0
        %v3036 = vsel %vm782, %v2970, 0
        %v3038 = vsel %vm782, %v2972, 0
        %v3040 = vsel %vm782, %v2975, 0
        %v3042 = vsel %vm782, %v2977, 0
        %v3044 = vsel %vm782, %v2980, 0
        %v3046 = vsel %vm782, %v2982, 0
        %vm3048 = vcmask 1043456
        %v3050 = vsel %vm3048, %v2983, 0
        %3052 = vmatprep.subr.mxu0 0.0
        %3053 = vmatpush1.msra.mxu0 0.0
        %3054 = vmatprep.subr.mxu0 0.0
        %3055 = vmatpush1.msra.mxu0 0.0
        %3056 = vmatprep.subr.mxu0 0.0
        %3057 = vmatpush1.msra.mxu0 0.0
        %3058 = vmatprep.subr.mxu0 0.0
        %3059 = vmatpush1.msra.mxu0 0.0
        %3060 = vmatprep.subr.mxu0 0.0
        %3061 = vmatpush1.msra.mxu0 0.0
        %3062 = vmatprep.subr.mxu0 0.0
        %3063 = vmatpush1.msra.mxu0 0.0
        %3064 = vmatprep.subr.mxu0 0.0
        %3065 = vmatpush1.msra.mxu0 0.0
        %3066 = vmatprep.subr.mxu0 0.0
        %3067 = vmatpush1.msra.mxu0 0.0
        %3068 = vmatprep.subr.mxu0 0.0
        %3069 = vmatpush1.msra.mxu0 0.0
        %3070 = vmatprep.subr.mxu0 0.0
        %3071 = vmatpush1.msra.mxu0 0.0
        %3072 = vmatprep.subr.mxu0 0.0
        %3073 = vmatpush1.msra.mxu0 0.0
        %3074 = vmatprep.subr.mxu0 0.0
        %3075 = vmatpush1.msra.mxu0 0.0
        %3076 = vmatprep.subr.mxu0 0.0
        %3077 = vmatpush1.msra.mxu0 0.0
        %3078 = vmatprep.subr.mxu0 0.0
        %3079 = vmatpush1.msra.mxu0 0.0
        %3080 = vmatprep.subr.mxu0 0.0
        %3081 = vmatpush1.msra.mxu0 0.0
        %3082 = vmatprep.subr.mxu0 0.0
        %3083 = vmatpush1.msra.mxu0 %v3050
        %3084 = vmatprep.subr.mxu0 0.0
        %3085 = vmatpush2.msra.mxu0 0.0
        %3086 = vmatprep.subr.mxu0 0.0
        %3087 = vmatpush2.msra.mxu0 0.0
        %3088 = vmatprep.subr.mxu0 0.0
        %3089 = vmatpush2.msra.mxu0 0.0
        %3090 = vmatprep.subr.mxu0 0.0
        %3091 = vmatpush2.msra.mxu0 0.0
        %3092 = vmatprep.subr.mxu0 0.0
        %3093 = vmatpush2.msra.mxu0 0.0
        %3094 = vmatprep.subr.mxu0 0.0
        %3095 = vmatpush2.msra.mxu0 0.0
        %3096 = vmatprep.subr.mxu0 0.0
        %3097 = vmatpush2.msra.mxu0 0.0
        %3098 = vmatprep.subr.mxu0 0.0
        %3099 = vmatpush2.msra.mxu0 0.0
        %3100 = vmatprep.subr.mxu0 0.0
        %3101 = vmatpush2.msra.mxu0 0.0
        %3102 = vmatprep.subr.mxu0 0.0
        %3103 = vmatpush2.msra.mxu0 0.0
        %3104 = vmatprep.subr.mxu0 0.0
        %3105 = vmatpush2.msra.mxu0 0.0
        %3106 = vmatprep.subr.mxu0 0.0
        %3107 = vmatpush2.msra.mxu0 0.0
        %3108 = vmatprep.subr.mxu0 0.0
        %3109 = vmatpush2.msra.mxu0 0.0
        %3110 = vmatprep.subr.mxu0 0.0
        %3111 = vmatpush2.msra.mxu0 0.0
        %3112 = vmatprep.subr.mxu0 0.0
        %3113 = vmatpush2.msra.mxu0 0.0
        %3114 = vmatprep.subr.mxu0 0.0
        %3115 = vmatpush2.msra.mxu0 0.0
        %3116 = vmatprep.mubr.f32.mxu0 0.0
        %3117 = vmatmul.mubr.f32.gmra.mxu0 %v2984
        %v3118 = vpop.f32.mrf.mxu0
        %v3119 = vadd.f32 0.0, %v3118
        %v3120 = vpop.f32.mrf.mxu0
        %3121 = vmatprep.mubr.f32.mxu0 0.0
        %3122 = vmatmul.mubr.f32.gmra.mxu0 %v2986
        %v3123 = vpop.f32.mrf.mxu0
        %v3124 = vadd.f32 0.0, %v3123
        %v3125 = vpop.f32.mrf.mxu0
        %3126 = vmatprep.mubr.f32.mxu0 0.0
        %3127 = vmatmul.mubr.f32.gmra.mxu0 %v2988
        %v3128 = vpop.f32.mrf.mxu0
        %v3129 = vadd.f32 0.0, %v3128
        %v3130 = vpop.f32.mrf.mxu0
        %3131 = vmatprep.mubr.f32.mxu0 0.0
        %3132 = vmatmul.mubr.f32.gmra.mxu0 %v2990
        %v3133 = vpop.f32.mrf.mxu0
        %v3134 = vadd.f32 0.0, %v3133
        %v3135 = vpop.f32.mrf.mxu0
        %3136 = vmatprep.mubr.f32.mxu0 0.0
        %3137 = vmatmul.mubr.f32.gmra.mxu0 %v2992
        %v3138 = vpop.f32.mrf.mxu0
        %v3139 = vadd.f32 0.0, %v3138
        %v3140 = vpop.f32.mrf.mxu0
        %3141 = vmatprep.mubr.f32.mxu0 0.0
        %3142 = vmatmul.mubr.f32.gmra.mxu0 %v2994
        %v3143 = vpop.f32.mrf.mxu0
        %v3144 = vadd.f32 0.0, %v3143
        %v3145 = vpop.f32.mrf.mxu0
        %3146 = vmatprep.mubr.f32.mxu0 0.0
        %3147 = vmatmul.mubr.f32.gmra.mxu0 %v2996
        %v3148 = vpop.f32.mrf.mxu0
        %v3149 = vadd.f32 0.0, %v3148
        %v3150 = vpop.f32.mrf.mxu0
        %3151 = vmatprep.mubr.f32.mxu0 0.0
        %3152 = vmatmul.mubr.f32.gmra.mxu0 %v2998
        %v3153 = vpop.f32.mrf.mxu0
        %v3154 = vadd.f32 0.0, %v3153
        %v3155 = vpop.f32.mrf.mxu0
        %3156 = vmatprep.mubr.f32.mxu0 0.0
        %3157 = vmatmul.mubr.f32.gmra.mxu0 %v3000
        %v3158 = vpop.f32.mrf.mxu0
        %v3159 = vadd.f32 0.0, %v3158
        %v3160 = vpop.f32.mrf.mxu0
        %3161 = vmatprep.mubr.f32.mxu0 0.0
        %3162 = vmatmul.mubr.f32.gmra.mxu0 %v3002
        %v3163 = vpop.f32.mrf.mxu0
        %v3164 = vadd.f32 0.0, %v3163
        %v3165 = vpop.f32.mrf.mxu0
        %3166 = vmatprep.mubr.f32.mxu0 0.0
        %3167 = vmatmul.mubr.f32.gmra.mxu0 %v3004
        %v3168 = vpop.f32.mrf.mxu0
        %v3169 = vadd.f32 0.0, %v3168
        %v3170 = vpop.f32.mrf.mxu0
        %3171 = vmatprep.mubr.f32.mxu0 0.0
        %3172 = vmatmul.mubr.f32.gmra.mxu0 %v3006
        %v3173 = vpop.f32.mrf.mxu0
        %v3174 = vadd.f32 0.0, %v3173
        %v3175 = vpop.f32.mrf.mxu0
        %3176 = vmatprep.mubr.f32.mxu0 0.0
        %3177 = vmatmul.mubr.f32.gmra.mxu0 %v3008
        %v3178 = vpop.f32.mrf.mxu0
        %v3179 = vadd.f32 0.0, %v3178
        %v3180 = vpop.f32.mrf.mxu0
        %3181 = vmatprep.mubr.f32.mxu0 0.0
        %3182 = vmatmul.mubr.f32.gmra.mxu0 %v3010
        %v3183 = vpop.f32.mrf.mxu0
        %v3184 = vadd.f32 0.0, %v3183
        %v3185 = vpop.f32.mrf.mxu0
        %3186 = vmatprep.mubr.f32.mxu0 0.0
        %3187 = vmatmul.mubr.f32.gmra.mxu0 %v3012
        %v3188 = vpop.f32.mrf.mxu0
        %v3189 = vadd.f32 0.0, %v3188
        %v3190 = vpop.f32.mrf.mxu0
        %3191 = vmatprep.mubr.f32.mxu0 0.0
        %3192 = vmatmul.mubr.f32.gmra.mxu0 %v3014
        %v3193 = vpop.f32.mrf.mxu0
        %v3194 = vadd.f32 0.0, %v3193
        %v3195 = vpop.f32.mrf.mxu0
        %3196 = vmatprep.mubr.f32.mxu0 0.0
        %3197 = vmatmul.mubr.f32.gmra.mxu0 %v3016
        %v3198 = vpop.f32.mrf.mxu0
        %v3199 = vadd.f32 0.0, %v3198
        %v3200 = vpop.f32.mrf.mxu0
        %3201 = vmatprep.mubr.f32.mxu0 0.0
        %3202 = vmatmul.mubr.f32.gmra.mxu0 %v3018
        %v3203 = vpop.f32.mrf.mxu0
        %v3204 = vadd.f32 0.0, %v3203
        %v3205 = vpop.f32.mrf.mxu0
        %3206 = vmatprep.mubr.f32.mxu0 0.0
        %3207 = vmatmul.mubr.f32.gmra.mxu0 %v3020
        %v3208 = vpop.f32.mrf.mxu0
        %v3209 = vadd.f32 0.0, %v3208
        %v3210 = vpop.f32.mrf.mxu0
        %3211 = vmatprep.mubr.f32.mxu0 0.0
        %3212 = vmatmul.mubr.f32.gmra.mxu0 %v3022
        %v3213 = vpop.f32.mrf.mxu0
        %v3214 = vadd.f32 0.0, %v3213
        %v3215 = vpop.f32.mrf.mxu0
        %3216 = vmatprep.mubr.f32.mxu0 0.0
        %3217 = vmatmul.mubr.f32.gmra.mxu0 %v3024
        %v3218 = vpop.f32.mrf.mxu0
        %v3219 = vadd.f32 0.0, %v3218
        %v3220 = vpop.f32.mrf.mxu0
        %3221 = vmatprep.mubr.f32.mxu0 0.0
        %3222 = vmatmul.mubr.f32.gmra.mxu0 %v3026
        %v3223 = vpop.f32.mrf.mxu0
        %v3224 = vadd.f32 0.0, %v3223
        %v3225 = vpop.f32.mrf.mxu0
        %3226 = vmatprep.mubr.f32.mxu0 0.0
        %3227 = vmatmul.mubr.f32.gmra.mxu0 %v3028
        %v3228 = vpop.f32.mrf.mxu0
        %v3229 = vadd.f32 0.0, %v3228
        %v3230 = vpop.f32.mrf.mxu0
        %3231 = vmatprep.mubr.f32.mxu0 0.0
        %3232 = vmatmul.mubr.f32.gmra.mxu0 %v3030
        %v3233 = vpop.f32.mrf.mxu0
        %v3234 = vadd.f32 0.0, %v3233
        %v3235 = vpop.f32.mrf.mxu0
        %3236 = vmatprep.mubr.f32.mxu0 0.0
        %3237 = vmatmul.mubr.f32.gmra.mxu0 %v3032
        %v3238 = vpop.f32.mrf.mxu0
        %v3239 = vadd.f32 0.0, %v3238
        %v3240 = vpop.f32.mrf.mxu0
        %3241 = vmatprep.mubr.f32.mxu0 0.0
        %3242 = vmatmul.mubr.f32.gmra.mxu0 %v3034
        %v3243 = vpop.f32.mrf.mxu0
        %v3244 = vadd.f32 0.0, %v3243
        %v3245 = vpop.f32.mrf.mxu0
        %3246 = vmatprep.mubr.f32.mxu0 0.0
        %3247 = vmatmul.mubr.f32.gmra.mxu0 %v3036
        %v3248 = vpop.f32.mrf.mxu0
        %v3249 = vadd.f32 0.0, %v3248
        %v3250 = vpop.f32.mrf.mxu0
        %3251 = vmatprep.mubr.f32.mxu0 0.0
        %3252 = vmatmul.mubr.f32.gmra.mxu0 %v3038
        %v3253 = vpop.f32.mrf.mxu0
        %v3254 = vadd.f32 0.0, %v3253
        %v3255 = vpop.f32.mrf.mxu0
        %3256 = vmatprep.mubr.f32.mxu0 0.0
        %3257 = vmatmul.mubr.f32.gmra.mxu0 %v3040
        %v3258 = vpop.f32.mrf.mxu0
        %v3259 = vadd.f32 0.0, %v3258
        %v3260 = vpop.f32.mrf.mxu0
        %3261 = vmatprep.mubr.f32.mxu0 0.0
        %3262 = vmatmul.mubr.f32.gmra.mxu0 %v3042
        %v3263 = vpop.f32.mrf.mxu0
        %v3264 = vadd.f32 0.0, %v3263
        %v3265 = vpop.f32.mrf.mxu0
        %3266 = vmatprep.mubr.f32.mxu0 0.0
        %3267 = vmatmul.mubr.f32.gmra.mxu0 %v3044
        %v3268 = vpop.f32.mrf.mxu0
        %v3269 = vadd.f32 0.0, %v3268
        %v3270 = vpop.f32.mrf.mxu0
        %3271 = vmatprep.mubr.f32.mxu0 0.0
        %3272 = vmatmul.mubr.f32.gmra.mxu0 %v3046
        %v3273 = vpop.f32.mrf.mxu0
        %v3274 = vadd.f32 0.0, %v3273
        %v3275 = vpop.f32.mrf.mxu0
        %3276 = vdwg.mxu0
        %v3277 = vld [vmem:[%s6] sm:$0x1]
        %v3279 = vlaneseq
        %v3280 = vshrl.u32 %v3279, 7
        %v3281 = vsub.s32 0, %v3280
        %v3282 = vrot.slane %v3277, %v3281
        %v3284 = vmul.f32 %v3119, %v3282
        %v3285 = vmul.f32 %v3124, %v3282
        %v3286 = vmul.f32 %v3129, %v3282
        %v3287 = vmul.f32 %v3134, %v3282
        %v3288 = vmul.f32 %v3139, %v3282
        %v3289 = vmul.f32 %v3144, %v3282
        %v3290 = vmul.f32 %v3149, %v3282
        %v3291 = vmul.f32 %v3154, %v3282
        %v3292 = vmul.f32 %v3159, %v3282
        %v3293 = vmul.f32 %v3164, %v3282
        %v3294 = vmul.f32 %v3169, %v3282
        %v3295 = vmul.f32 %v3174, %v3282
        %v3296 = vmul.f32 %v3179, %v3282
        %v3297 = vmul.f32 %v3184, %v3282
        %v3298 = vmul.f32 %v3189, %v3282
        %v3299 = vmul.f32 %v3194, %v3282
        %v3300 = vmul.f32 %v3199, %v3282
        %v3301 = vmul.f32 %v3204, %v3282
        %v3302 = vmul.f32 %v3209, %v3282
        %v3303 = vmul.f32 %v3214, %v3282
        %v3304 = vmul.f32 %v3219, %v3282
        %v3305 = vmul.f32 %v3224, %v3282
        %v3306 = vmul.f32 %v3229, %v3282
        %v3307 = vmul.f32 %v3234, %v3282
        %v3308 = vmul.f32 %v3239, %v3282
        %v3309 = vmul.f32 %v3244, %v3282
        %v3310 = vmul.f32 %v3249, %v3282
        %v3311 = vmul.f32 %v3254, %v3282
        %v3312 = vmul.f32 %v3259, %v3282
        %v3313 = vmul.f32 %v3264, %v3282
        %v3314 = vmul.f32 %v3269, %v3282
        %v3315 = vmul.f32 %v3274, %v3282
        %v3316 = vld [vmem:[%s7] sm:$0x1]
        %v3318 = vlaneseq
        %v3319 = vshrl.u32 %v3318, 7
        %v3320 = vsub.s32 0, %v3319
        %v3321 = vrot.slane %v3316, %v3320
        %v3323 = vadd.f32 %v3284, %v3321
        %v3324 = vadd.f32 %v3285, %v3321
        %v3325 = vadd.f32 %v3286, %v3321
        %v3326 = vadd.f32 %v3287, %v3321
        %v3327 = vadd.f32 %v3288, %v3321
        %v3328 = vadd.f32 %v3289, %v3321
        %v3329 = vadd.f32 %v3290, %v3321
        %v3330 = vadd.f32 %v3291, %v3321
        %v3331 = vadd.f32 %v3292, %v3321
        %v3332 = vadd.f32 %v3293, %v3321
        %v3333 = vadd.f32 %v3294, %v3321
        %v3334 = vadd.f32 %v3295, %v3321
        %v3335 = vadd.f32 %v3296, %v3321
        %v3336 = vadd.f32 %v3297, %v3321
        %v3337 = vadd.f32 %v3298, %v3321
        %v3338 = vadd.f32 %v3299, %v3321
        %v3339 = vadd.f32 %v3300, %v3321
        %v3340 = vadd.f32 %v3301, %v3321
        %v3341 = vadd.f32 %v3302, %v3321
        %v3342 = vadd.f32 %v3303, %v3321
        %v3343 = vadd.f32 %v3304, %v3321
        %v3344 = vadd.f32 %v3305, %v3321
        %v3345 = vadd.f32 %v3306, %v3321
        %v3346 = vadd.f32 %v3307, %v3321
        %v3347 = vadd.f32 %v3308, %v3321
        %v3348 = vadd.f32 %v3309, %v3321
        %v3349 = vadd.f32 %v3310, %v3321
        %v3350 = vadd.f32 %v3311, %v3321
        %v3351 = vadd.f32 %v3312, %v3321
        %v3352 = vadd.f32 %v3313, %v3321
        %v3353 = vadd.f32 %v3314, %v3321
        %v3354 = vadd.f32 %v3315, %v3321
        %v3355 = vmax.f32 %v3323, 0.0
        %v3356 = vmax.f32 %v3324, 0.0
        %v3357 = vmax.f32 %v3325, 0.0
        %v3358 = vmax.f32 %v3326, 0.0
        %v3359 = vmax.f32 %v3327, 0.0
        %v3360 = vmax.f32 %v3328, 0.0
        %v3361 = vmax.f32 %v3329, 0.0
        %v3362 = vmax.f32 %v3330, 0.0
        %v3363 = vmax.f32 %v3331, 0.0
        %v3364 = vmax.f32 %v3332, 0.0
        %v3365 = vmax.f32 %v3333, 0.0
        %v3366 = vmax.f32 %v3334, 0.0
        %v3367 = vmax.f32 %v3335, 0.0
        %v3368 = vmax.f32 %v3336, 0.0
        %v3369 = vmax.f32 %v3337, 0.0
        %v3370 = vmax.f32 %v3338, 0.0
        %v3371 = vmax.f32 %v3339, 0.0
        %v3372 = vmax.f32 %v3340, 0.0
        %v3373 = vmax.f32 %v3341, 0.0
        %v3374 = vmax.f32 %v3342, 0.0
        %v3375 = vmax.f32 %v3343, 0.0
        %v3376 = vmax.f32 %v3344, 0.0
        %v3377 = vmax.f32 %v3345, 0.0
        %v3378 = vmax.f32 %v3346, 0.0
        %v3379 = vmax.f32 %v3347, 0.0
        %v3380 = vmax.f32 %v3348, 0.0
        %v3381 = vmax.f32 %v3349, 0.0
        %v3382 = vmax.f32 %v3350, 0.0
        %v3383 = vmax.f32 %v3351, 0.0
        %v3384 = vmax.f32 %v3352, 0.0
        %v3385 = vmax.f32 %v3353, 0.0
        %v3386 = vmax.f32 %v3354, 0.0
        %v3387 = vld [vmem:[%s8] sm:$0x1]
        %v3388 = vld [vmem:[%s8 + $0x1] sm:$0x1]
        %v3389 = vld [vmem:[%s8 + $0x2] sm:$0x1]
        %v3390 = vld [vmem:[%s8 + $0x3] sm:$0x1]
        %v3391 = vld [vmem:[%s8 + $0x4] sm:$0x1]
        %v3392 = vld [vmem:[%s8 + $0x5] sm:$0x1]
        %v3393 = vld [vmem:[%s8 + $0x6] sm:$0x1]
        %v3394 = vld [vmem:[%s8 + $0x7] sm:$0x1]
        %v3395 = vld [vmem:[%s8 + $0x8] sm:$0x1]
        %vm3396 = vcmask 64512
        %3397 = vst.msk [vmem:[#allocation3] sm:$0xff] %vm3396, 0.0
        %3398 = vst.msk [vmem:[#allocation3 + $0x8] sm:$0xff] %vm3396, 0.0
        %3399 = vst.msk [vmem:[#allocation3 + $0x10] sm:$0xff] %vm3396, 0.0
        %3400 = vst.msk [vmem:[#allocation3 + $0x18] sm:$0xff] %vm3396, 0.0
        %3401 = vst.msk [vmem:[#allocation3 + $0x20] sm:$0xff] %vm3396, 0.0
        %3402 = vst.msk [vmem:[#allocation3 + $0x28] sm:$0xff] %vm3396, 0.0
        %3403 = vst.msk [vmem:[#allocation3 + $0x30] sm:$0xff] %vm3396, 0.0
        %3404 = vst.msk [vmem:[#allocation3 + $0x38] sm:$0xff] %vm3396, 0.0
        %3405 = vst.msk [vmem:[#allocation3 + $0x40] sm:$0xff] %vm3396, 0.0
        %3406 = vst.msk [vmem:[#allocation3 + $0x48] sm:$0xff] %vm3396, 0.0
        %3407 = vst.msk [vmem:[#allocation3 + $0x50] sm:$0xff] %vm3396, 0.0
        %3408 = vst.msk [vmem:[#allocation3 + $0x58] sm:$0xff] %vm3396, 0.0
        %3409 = vst.msk [vmem:[#allocation3 + $0x60] sm:$0xff] %vm3396, 0.0
        %3410 = vst.msk [vmem:[#allocation3 + $0x68] sm:$0xff] %vm3396, 0.0
        %3411 = vst.msk [vmem:[#allocation3 + $0x70] sm:$0xff] %vm3396, 0.0
        %3412 = vst.msk [vmem:[#allocation3 + $0x78] sm:$0xff] %vm3396, 0.0
        %3413 = vst.msk [vmem:[#allocation3 + $0x80] sm:$0xff] %vm3396, 0.0
        %3414 = vst.msk [vmem:[#allocation3 + $0x88] sm:$0xff] %vm3396, 0.0
        %3415 = vst.msk [vmem:[#allocation3 + $0x90] sm:$0xff] %vm3396, 0.0
        %3416 = vst.msk [vmem:[#allocation3 + $0x98] sm:$0xff] %vm3396, 0.0
        %3417 = vst.msk [vmem:[#allocation3 + $0xa0] sm:$0xff] %vm3396, 0.0
        %3418 = vst.msk [vmem:[#allocation3 + $0xa8] sm:$0xff] %vm3396, 0.0
        %3419 = vst.msk [vmem:[#allocation3 + $0xb0] sm:$0xff] %vm3396, 0.0
        %3420 = vst.msk [vmem:[#allocation3 + $0xb8] sm:$0xff] %vm3396, 0.0
        %3421 = vst.msk [vmem:[#allocation3 + $0xc0] sm:$0xff] %vm3396, 0.0
        %3422 = vst.msk [vmem:[#allocation3 + $0xc8] sm:$0xff] %vm3396, 0.0
        %3423 = vst.msk [vmem:[#allocation3 + $0xd0] sm:$0xff] %vm3396, 0.0
        %3424 = vst.msk [vmem:[#allocation3 + $0xd8] sm:$0xff] %vm3396, 0.0
        %3425 = vst.msk [vmem:[#allocation3 + $0xe0] sm:$0xff] %vm3396, 0.0
        %3426 = vst.msk [vmem:[#allocation3 + $0xe8] sm:$0xff] %vm3396, 0.0
        %3427 = vst.msk [vmem:[#allocation3 + $0xf0] sm:$0xff] %vm3396, 0.0
        %3428 = vst.msk [vmem:[#allocation3 + $0xf8] sm:$0xff] %vm3396, 0.0
        %3429 = vst.msk [vmem:[#allocation3 + $0x100] sm:$0xff] %vm3396, 0.0
        %3430 = vst.msk [vmem:[#allocation3 + $0x108] sm:$0xff] %vm3396, 0.0
        %3431 = vst.msk [vmem:[#allocation3 + $0x110] sm:$0xff] %vm3396, 0.0
        %3432 = vst.msk [vmem:[#allocation3 + $0x118] sm:$0xff] %vm3396, 0.0
        %3433 = vst.msk [vmem:[#allocation3 + $0x120] sm:$0xff] %vm3396, 0.0
        %3434 = vst.msk [vmem:[#allocation3 + $0x128] sm:$0xff] %vm3396, 0.0
        %3435 = vst.msk [vmem:[#allocation3 + $0x130] sm:$0xff] %vm3396, 0.0
        %3436 = vst.msk [vmem:[#allocation3 + $0x138] sm:$0xff] %vm3396, 0.0
        %3437 = vst.msk [vmem:[#allocation3 + $0x140] sm:$0xff] %vm3396, 0.0
        %3438 = vst.msk [vmem:[#allocation3 + $0x148] sm:$0xff] %vm3396, 0.0
        %3439 = vst.msk [vmem:[#allocation3 + $0x150] sm:$0xff] %vm3396, 0.0
        %3440 = vst.msk [vmem:[#allocation3 + $0x158] sm:$0xff] %vm3396, 0.0
        %3441 = vst.msk [vmem:[#allocation3 + $0x160] sm:$0xff] %vm3396, 0.0
        %3442 = vst.msk [vmem:[#allocation3 + $0x168] sm:$0xff] %vm3396, 0.0
        %3443 = vst.msk [vmem:[#allocation3 + $0x170] sm:$0xff] %vm3396, 0.0
        %3444 = vst.msk [vmem:[#allocation3 + $0x178] sm:$0xff] %vm3396, 0.0
        %3445 = vst.msk [vmem:[#allocation3 + $0x180] sm:$0xff] %vm3396, 0.0
        %3446 = vst.msk [vmem:[#allocation3 + $0x188] sm:$0xff] %vm3396, 0.0
        %3447 = vst.msk [vmem:[#allocation3 + $0x190] sm:$0xff] %vm3396, 0.0
        %3448 = vst.msk [vmem:[#allocation3 + $0x198] sm:$0xff] %vm3396, 0.0
        %3449 = vst.msk [vmem:[#allocation3 + $0x1a0] sm:$0xff] %vm3396, 0.0
        %3450 = vst.msk [vmem:[#allocation3 + $0x1a8] sm:$0xff] %vm3396, 0.0
        %3451 = vst.msk [vmem:[#allocation3 + $0x1b0] sm:$0xff] %vm3396, 0.0
        %3452 = vst.msk [vmem:[#allocation3 + $0x1b8] sm:$0xff] %vm3396, 0.0
        %3453 = vst.msk [vmem:[#allocation3 + $0x1c0] sm:$0xff] %vm3396, 0.0
        %3454 = vst.msk [vmem:[#allocation3 + $0x1c8] sm:$0xff] %vm3396, 0.0
        %3455 = vst.msk [vmem:[#allocation3 + $0x1d0] sm:$0xff] %vm3396, 0.0
        %3456 = vst.msk [vmem:[#allocation3 + $0x1d8] sm:$0xff] %vm3396, 0.0
        %3457 = vst.msk [vmem:[#allocation3 + $0x1e0] sm:$0xff] %vm3396, 0.0
        %3458 = vst.msk [vmem:[#allocation3 + $0x1e8] sm:$0xff] %vm3396, 0.0
        %3459 = vst.msk [vmem:[#allocation3 + $0x1f0] sm:$0xff] %vm3396, 0.0
        %3460 = vst.msk [vmem:[#allocation3 + $0x1f8] sm:$0xff] %vm3396, 0.0
        %3461 = vst.msk [vmem:[#allocation3 + $0x200] sm:$0xff] %vm3396, 0.0
        %3462 = vst.msk [vmem:[#allocation3 + $0x208] sm:$0xff] %vm3396, 0.0
        %3463 = vst.msk [vmem:[#allocation3 + $0x210] sm:$0xff] %vm3396, 0.0
        %3464 = vst.msk [vmem:[#allocation3 + $0x218] sm:$0xff] %vm3396, 0.0
        %3465 = vst.msk [vmem:[#allocation3 + $0x220] sm:$0xff] %vm3396, 0.0
        %3466 = vst.msk [vmem:[#allocation3 + $0x228] sm:$0xff] %vm3396, 0.0
        %3467 = vst.msk [vmem:[#allocation3 + $0x230] sm:$0xff] %vm3396, 0.0
        %3468 = vst.msk [vmem:[#allocation3 + $0x238] sm:$0xff] %vm3396, 0.0
        %s3469 = scalar_lea.vmem [#allocation3], 32
        %3470 = vst.msk [vmem:[%s3469 + $0x8] sm:$0xff] %vm3396, %v3355
        %3471 = vst.msk [vmem:[%s3469 + $0x10] sm:$0xff] %vm3396, %v3356
        %3472 = vst.msk [vmem:[%s3469 + $0x28] sm:$0xff] %vm3396, %v3357
        %3473 = vst.msk [vmem:[%s3469 + $0x30] sm:$0xff] %vm3396, %v3358
        %3474 = vst.msk [vmem:[%s3469 + $0x48] sm:$0xff] %vm3396, %v3359
        %3475 = vst.msk [vmem:[%s3469 + $0x50] sm:$0xff] %vm3396, %v3360
        %3476 = vst.msk [vmem:[%s3469 + $0x68] sm:$0xff] %vm3396, %v3361
        %3477 = vst.msk [vmem:[%s3469 + $0x70] sm:$0xff] %vm3396, %v3362
        %3478 = vst.msk [vmem:[%s3469 + $0x88] sm:$0xff] %vm3396, %v3363
        %3479 = vst.msk [vmem:[%s3469 + $0x90] sm:$0xff] %vm3396, %v3364
        %3480 = vst.msk [vmem:[%s3469 + $0xa8] sm:$0xff] %vm3396, %v3365
        %3481 = vst.msk [vmem:[%s3469 + $0xb0] sm:$0xff] %vm3396, %v3366
        %3482 = vst.msk [vmem:[%s3469 + $0xc8] sm:$0xff] %vm3396, %v3367
        %3483 = vst.msk [vmem:[%s3469 + $0xd0] sm:$0xff] %vm3396, %v3368
        %3484 = vst.msk [vmem:[%s3469 + $0xe8] sm:$0xff] %vm3396, %v3369
        %3485 = vst.msk [vmem:[%s3469 + $0xf0] sm:$0xff] %vm3396, %v3370
        %3486 = vst.msk [vmem:[%s3469 + $0x108] sm:$0xff] %vm3396, %v3371
        %3487 = vst.msk [vmem:[%s3469 + $0x110] sm:$0xff] %vm3396, %v3372
        %3488 = vst.msk [vmem:[%s3469 + $0x128] sm:$0xff] %vm3396, %v3373
        %3489 = vst.msk [vmem:[%s3469 + $0x130] sm:$0xff] %vm3396, %v3374
        %3490 = vst.msk [vmem:[%s3469 + $0x148] sm:$0xff] %vm3396, %v3375
        %3491 = vst.msk [vmem:[%s3469 + $0x150] sm:$0xff] %vm3396, %v3376
        %3492 = vst.msk [vmem:[%s3469 + $0x168] sm:$0xff] %vm3396, %v3377
        %3493 = vst.msk [vmem:[%s3469 + $0x170] sm:$0xff] %vm3396, %v3378
        %3494 = vst.msk [vmem:[%s3469 + $0x188] sm:$0xff] %vm3396, %v3379
        %3495 = vst.msk [vmem:[%s3469 + $0x190] sm:$0xff] %vm3396, %v3380
        %3496 = vst.msk [vmem:[%s3469 + $0x1a8] sm:$0xff] %vm3396, %v3381
        %3497 = vst.msk [vmem:[%s3469 + $0x1b0] sm:$0xff] %vm3396, %v3382
        %3498 = vst.msk [vmem:[%s3469 + $0x1c8] sm:$0xff] %vm3396, %v3383
        %3499 = vst.msk [vmem:[%s3469 + $0x1d0] sm:$0xff] %vm3396, %v3384
        %3500 = vst.msk [vmem:[%s3469 + $0x1e8] sm:$0xff] %vm3396, %v3385
        %3501 = vst.msk [vmem:[%s3469 + $0x1f0] sm:$0xff] %vm3396, %v3386
        %v3502 = vld [vmem:[#allocation3] sm:$0xff]
        %v3503 = vld [vmem:[#allocation3 + $0x8] sm:$0xff]
        %v3504 = vld [vmem:[#allocation3 + $0x10] sm:$0xff]
        %v3505 = vld [vmem:[#allocation3 + $0x18] sm:$0xff]
        %v3506 = vld [vmem:[#allocation3 + $0x20] sm:$0xff]
        %v3507 = vld [vmem:[#allocation3 + $0x28] sm:$0xff]
        %v3508 = vld [vmem:[#allocation3 + $0x30] sm:$0xff]
        %v3509 = vld [vmem:[#allocation3 + $0x38] sm:$0xff]
        %v3510 = vld [vmem:[#allocation3 + $0x40] sm:$0xff]
        %v3511 = vld [vmem:[#allocation3 + $0x48] sm:$0xff]
        %v3512 = vld [vmem:[#allocation3 + $0x50] sm:$0xff]
        %v3513 = vld [vmem:[#allocation3 + $0x58] sm:$0xff]
        %v3514 = vld [vmem:[#allocation3 + $0x60] sm:$0xff]
        %v3515 = vld [vmem:[#allocation3 + $0x68] sm:$0xff]
        %v3516 = vld [vmem:[#allocation3 + $0x70] sm:$0xff]
        %v3517 = vld [vmem:[#allocation3 + $0x78] sm:$0xff]
        %v3518 = vld [vmem:[#allocation3 + $0x80] sm:$0xff]
        %v3519 = vld [vmem:[#allocation3 + $0x88] sm:$0xff]
        %v3520 = vld [vmem:[#allocation3 + $0x90] sm:$0xff]
        %v3521 = vld [vmem:[#allocation3 + $0x98] sm:$0xff]
        %v3522 = vld [vmem:[#allocation3 + $0xa0] sm:$0xff]
        %v3523 = vld [vmem:[#allocation3 + $0xa8] sm:$0xff]
        %v3524 = vld [vmem:[#allocation3 + $0xb0] sm:$0xff]
        %v3525 = vld [vmem:[#allocation3 + $0xb8] sm:$0xff]
        %v3526 = vld [vmem:[#allocation3 + $0xc0] sm:$0xff]
        %v3527 = vld [vmem:[#allocation3 + $0xc8] sm:$0xff]
        %v3528 = vld [vmem:[#allocation3 + $0xd0] sm:$0xff]
        %v3529 = vld [vmem:[#allocation3 + $0xd8] sm:$0xff]
        %v3530 = vld [vmem:[#allocation3 + $0xe0] sm:$0xff]
        %v3531 = vld [vmem:[#allocation3 + $0xe8] sm:$0xff]
        %v3532 = vld [vmem:[#allocation3 + $0xf0] sm:$0xff]
        %v3533 = vld [vmem:[#allocation3 + $0xf8] sm:$0xff]
        %v3534 = vld [vmem:[#allocation3 + $0x100] sm:$0xff]
        %v3535 = vld [vmem:[#allocation3 + $0x108] sm:$0xff]
        %v3536 = vld [vmem:[#allocation3 + $0x110] sm:$0xff]
        %v3537 = vld [vmem:[#allocation3 + $0x118] sm:$0xff]
        %v3538 = vld [vmem:[#allocation3 + $0x120] sm:$0xff]
        %v3539 = vld [vmem:[#allocation3 + $0x128] sm:$0xff]
        %v3540 = vld [vmem:[#allocation3 + $0x130] sm:$0xff]
        %v3541 = vld [vmem:[#allocation3 + $0x138] sm:$0xff]
        %v3542 = vld [vmem:[#allocation3 + $0x140] sm:$0xff]
        %v3543 = vld [vmem:[#allocation3 + $0x148] sm:$0xff]
        %v3544 = vld [vmem:[#allocation3 + $0x150] sm:$0xff]
        %v3545 = vld [vmem:[#allocation3 + $0x158] sm:$0xff]
        %v3546 = vld [vmem:[#allocation3 + $0x160] sm:$0xff]
        %v3547 = vld [vmem:[#allocation3 + $0x168] sm:$0xff]
        %v3548 = vld [vmem:[#allocation3 + $0x170] sm:$0xff]
        %v3549 = vld [vmem:[#allocation3 + $0x178] sm:$0xff]
        %v3550 = vld [vmem:[#allocation3 + $0x180] sm:$0xff]
        %v3551 = vld [vmem:[#allocation3 + $0x188] sm:$0xff]
        %v3552 = vld [vmem:[#allocation3 + $0x190] sm:$0xff]
        %v3553 = vld [vmem:[#allocation3 + $0x198] sm:$0xff]
        %v3554 = vld [vmem:[#allocation3 + $0x1a0] sm:$0xff]
        %v3555 = vld [vmem:[#allocation3 + $0x1a8] sm:$0xff]
        %v3556 = vld [vmem:[#allocation3 + $0x1b0] sm:$0xff]
        %v3557 = vld [vmem:[#allocation3 + $0x1b8] sm:$0xff]
        %v3558 = vld [vmem:[#allocation3 + $0x1c0] sm:$0xff]
        %v3559 = vld [vmem:[#allocation3 + $0x1c8] sm:$0xff]
        %v3560 = vld [vmem:[#allocation3 + $0x1d0] sm:$0xff]
        %v3561 = vld [vmem:[#allocation3 + $0x1d8] sm:$0xff]
        %v3562 = vld [vmem:[#allocation3 + $0x1e0] sm:$0xff]
        %v3563 = vld [vmem:[#allocation3 + $0x1e8] sm:$0xff]
        %v3564 = vld [vmem:[#allocation3 + $0x1f0] sm:$0xff]
        %v3565 = vld [vmem:[#allocation3 + $0x1f8] sm:$0xff]
        %v3566 = vld [vmem:[#allocation3 + $0x200] sm:$0xff]
        %v3567 = vld [vmem:[#allocation3 + $0x208] sm:$0xff]
        %v3568 = vld [vmem:[#allocation3 + $0x210] sm:$0xff]
        %v3569 = vld [vmem:[#allocation3 + $0x218] sm:$0xff]
        %v3570 = vld [vmem:[#allocation3 + $0x220] sm:$0xff]
        %v3571 = vld [vmem:[#allocation3 + $0x228] sm:$0xff]
        %v3572 = vld [vmem:[#allocation3 + $0x230] sm:$0xff]
        %v3573 = vld [vmem:[#allocation3 + $0x238] sm:$0xff]
        %v3575 = vlaneseq
        %v3576 = vshrl.u32 %v3575, 7
        %v3577 = vsub.s32 0, %v3576
        %v3578 = vrot.slane %v3387, %v3577
        %v3580 = vmul.f32 %v3502, %v3578
        %v3581 = vmul.f32 %v3503, %v3578
        %v3582 = vmul.f32 %v3504, %v3578
        %v3583 = vmul.f32 %v3506, %v3578
        %v3584 = vmul.f32 %v3507, %v3578
        %v3585 = vmul.f32 %v3508, %v3578
        %v3586 = vmul.f32 %v3510, %v3578
        %v3587 = vmul.f32 %v3511, %v3578
        %v3588 = vmul.f32 %v3512, %v3578
        %v3589 = vmul.f32 %v3514, %v3578
        %v3590 = vmul.f32 %v3515, %v3578
        %v3591 = vmul.f32 %v3516, %v3578
        %v3592 = vmul.f32 %v3518, %v3578
        %v3593 = vmul.f32 %v3519, %v3578
        %v3594 = vmul.f32 %v3520, %v3578
        %v3595 = vmul.f32 %v3522, %v3578
        %v3596 = vmul.f32 %v3523, %v3578
        %v3597 = vmul.f32 %v3524, %v3578
        %v3598 = vmul.f32 %v3526, %v3578
        %v3599 = vmul.f32 %v3527, %v3578
        %v3600 = vmul.f32 %v3528, %v3578
        %v3601 = vmul.f32 %v3530, %v3578
        %v3602 = vmul.f32 %v3531, %v3578
        %v3603 = vmul.f32 %v3532, %v3578
        %v3604 = vmul.f32 %v3534, %v3578
        %v3605 = vmul.f32 %v3535, %v3578
        %v3606 = vmul.f32 %v3536, %v3578
        %v3607 = vmul.f32 %v3538, %v3578
        %v3608 = vmul.f32 %v3539, %v3578
        %v3609 = vmul.f32 %v3540, %v3578
        %v3610 = vmul.f32 %v3542, %v3578
        %v3611 = vmul.f32 %v3543, %v3578
        %v3612 = vmul.f32 %v3544, %v3578
        %v3613 = vmul.f32 %v3546, %v3578
        %v3614 = vmul.f32 %v3547, %v3578
        %v3615 = vmul.f32 %v3548, %v3578
        %v3616 = vmul.f32 %v3550, %v3578
        %v3617 = vmul.f32 %v3551, %v3578
        %v3618 = vmul.f32 %v3552, %v3578
        %v3619 = vmul.f32 %v3554, %v3578
        %v3620 = vmul.f32 %v3555, %v3578
        %v3621 = vmul.f32 %v3556, %v3578
        %v3622 = vmul.f32 %v3558, %v3578
        %v3623 = vmul.f32 %v3559, %v3578
        %v3624 = vmul.f32 %v3560, %v3578
        %v3625 = vmul.f32 %v3562, %v3578
        %v3626 = vmul.f32 %v3563, %v3578
        %v3627 = vmul.f32 %v3564, %v3578
        %v3629 = vlaneseq
        %v3630 = vshrl.u32 %v3629, 7
        %v3631 = vsub.s32 0, %v3630
        %v3632 = vrot.slane %v3390, %v3631
        %v3634 = vmul.f32 %v3506, %v3632
        %v3635 = vmul.f32 %v3507, %v3632
        %v3636 = vmul.f32 %v3508, %v3632
        %v3637 = vmul.f32 %v3510, %v3632
        %v3638 = vmul.f32 %v3511, %v3632
        %v3639 = vmul.f32 %v3512, %v3632
        %v3640 = vmul.f32 %v3514, %v3632
        %v3641 = vmul.f32 %v3515, %v3632
        %v3642 = vmul.f32 %v3516, %v3632
        %v3643 = vmul.f32 %v3518, %v3632
        %v3644 = vmul.f32 %v3519, %v3632
        %v3645 = vmul.f32 %v3520, %v3632
        %v3646 = vmul.f32 %v3522, %v3632
        %v3647 = vmul.f32 %v3523, %v3632
        %v3648 = vmul.f32 %v3524, %v3632
        %v3649 = vmul.f32 %v3526, %v3632
        %v3650 = vmul.f32 %v3527, %v3632
        %v3651 = vmul.f32 %v3528, %v3632
        %v3652 = vmul.f32 %v3530, %v3632
        %v3653 = vmul.f32 %v3531, %v3632
        %v3654 = vmul.f32 %v3532, %v3632
        %v3655 = vmul.f32 %v3534, %v3632
        %v3656 = vmul.f32 %v3535, %v3632
        %v3657 = vmul.f32 %v3536, %v3632
        %v3658 = vmul.f32 %v3538, %v3632
        %v3659 = vmul.f32 %v3539, %v3632
        %v3660 = vmul.f32 %v3540, %v3632
        %v3661 = vmul.f32 %v3542, %v3632
        %v3662 = vmul.f32 %v3543, %v3632
        %v3663 = vmul.f32 %v3544, %v3632
        %v3664 = vmul.f32 %v3546, %v3632
        %v3665 = vmul.f32 %v3547, %v3632
        %v3666 = vmul.f32 %v3548, %v3632
        %v3667 = vmul.f32 %v3550, %v3632
        %v3668 = vmul.f32 %v3551, %v3632
        %v3669 = vmul.f32 %v3552, %v3632
        %v3670 = vmul.f32 %v3554, %v3632
        %v3671 = vmul.f32 %v3555, %v3632
        %v3672 = vmul.f32 %v3556, %v3632
        %v3673 = vmul.f32 %v3558, %v3632
        %v3674 = vmul.f32 %v3559, %v3632
        %v3675 = vmul.f32 %v3560, %v3632
        %v3676 = vmul.f32 %v3562, %v3632
        %v3677 = vmul.f32 %v3563, %v3632
        %v3678 = vmul.f32 %v3564, %v3632
        %v3679 = vmul.f32 %v3566, %v3632
        %v3680 = vmul.f32 %v3567, %v3632
        %v3681 = vmul.f32 %v3568, %v3632
        %v3682 = vadd.f32 %v3580, %v3634
        %v3683 = vadd.f32 %v3581, %v3635
        %v3684 = vadd.f32 %v3582, %v3636
        %v3685 = vadd.f32 %v3583, %v3637
        %v3686 = vadd.f32 %v3584, %v3638
        %v3687 = vadd.f32 %v3585, %v3639
        %v3688 = vadd.f32 %v3586, %v3640
        %v3689 = vadd.f32 %v3587, %v3641
        %v3690 = vadd.f32 %v3588, %v3642
        %v3691 = vadd.f32 %v3589, %v3643
        %v3692 = vadd.f32 %v3590, %v3644
        %v3693 = vadd.f32 %v3591, %v3645
        %v3694 = vadd.f32 %v3592, %v3646
        %v3695 = vadd.f32 %v3593, %v3647
        %v3696 = vadd.f32 %v3594, %v3648
        %v3697 = vadd.f32 %v3595, %v3649
        %v3698 = vadd.f32 %v3596, %v3650
        %v3699 = vadd.f32 %v3597, %v3651
        %v3700 = vadd.f32 %v3598, %v3652
        %v3701 = vadd.f32 %v3599, %v3653
        %v3702 = vadd.f32 %v3600, %v3654
        %v3703 = vadd.f32 %v3601, %v3655
        %v3704 = vadd.f32 %v3602, %v3656
        %v3705 = vadd.f32 %v3603, %v3657
        %v3706 = vadd.f32 %v3604, %v3658
        %v3707 = vadd.f32 %v3605, %v3659
        %v3708 = vadd.f32 %v3606, %v3660
        %v3709 = vadd.f32 %v3607, %v3661
        %v3710 = vadd.f32 %v3608, %v3662
        %v3711 = vadd.f32 %v3609, %v3663
        %v3712 = vadd.f32 %v3610, %v3664
        %v3713 = vadd.f32 %v3611, %v3665
        %v3714 = vadd.f32 %v3612, %v3666
        %v3715 = vadd.f32 %v3613, %v3667
        %v3716 = vadd.f32 %v3614, %v3668
        %v3717 = vadd.f32 %v3615, %v3669
        %v3718 = vadd.f32 %v3616, %v3670
        %v3719 = vadd.f32 %v3617, %v3671
        %v3720 = vadd.f32 %v3618, %v3672
        %v3721 = vadd.f32 %v3619, %v3673
        %v3722 = vadd.f32 %v3620, %v3674
        %v3723 = vadd.f32 %v3621, %v3675
        %v3724 = vadd.f32 %v3622, %v3676
        %v3725 = vadd.f32 %v3623, %v3677
        %v3726 = vadd.f32 %v3624, %v3678
        %v3727 = vadd.f32 %v3625, %v3679
        %v3728 = vadd.f32 %v3626, %v3680
        %v3729 = vadd.f32 %v3627, %v3681
        %v3731 = vlaneseq
        %v3732 = vshrl.u32 %v3731, 7
        %v3733 = vsub.s32 0, %v3732
        %v3734 = vrot.slane %v3393, %v3733
        %v3736 = vmul.f32 %v3510, %v3734
        %v3737 = vmul.f32 %v3511, %v3734
        %v3738 = vmul.f32 %v3512, %v3734
        %v3739 = vmul.f32 %v3514, %v3734
        %v3740 = vmul.f32 %v3515, %v3734
        %v3741 = vmul.f32 %v3516, %v3734
        %v3742 = vmul.f32 %v3518, %v3734
        %v3743 = vmul.f32 %v3519, %v3734
        %v3744 = vmul.f32 %v3520, %v3734
        %v3745 = vmul.f32 %v3522, %v3734
        %v3746 = vmul.f32 %v3523, %v3734
        %v3747 = vmul.f32 %v3524, %v3734
        %v3748 = vmul.f32 %v3526, %v3734
        %v3749 = vmul.f32 %v3527, %v3734
        %v3750 = vmul.f32 %v3528, %v3734
        %v3751 = vmul.f32 %v3530, %v3734
        %v3752 = vmul.f32 %v3531, %v3734
        %v3753 = vmul.f32 %v3532, %v3734
        %v3754 = vmul.f32 %v3534, %v3734
        %v3755 = vmul.f32 %v3535, %v3734
        %v3756 = vmul.f32 %v3536, %v3734
        %v3757 = vmul.f32 %v3538, %v3734
        %v3758 = vmul.f32 %v3539, %v3734
        %v3759 = vmul.f32 %v3540, %v3734
        %v3760 = vmul.f32 %v3542, %v3734
        %v3761 = vmul.f32 %v3543, %v3734
        %v3762 = vmul.f32 %v3544, %v3734
        %v3763 = vmul.f32 %v3546, %v3734
        %v3764 = vmul.f32 %v3547, %v3734
        %v3765 = vmul.f32 %v3548, %v3734
        %v3766 = vmul.f32 %v3550, %v3734
        %v3767 = vmul.f32 %v3551, %v3734
        %v3768 = vmul.f32 %v3552, %v3734
        %v3769 = vmul.f32 %v3554, %v3734
        %v3770 = vmul.f32 %v3555, %v3734
        %v3771 = vmul.f32 %v3556, %v3734
        %v3772 = vmul.f32 %v3558, %v3734
        %v3773 = vmul.f32 %v3559, %v3734
        %v3774 = vmul.f32 %v3560, %v3734
        %v3775 = vmul.f32 %v3562, %v3734
        %v3776 = vmul.f32 %v3563, %v3734
        %v3777 = vmul.f32 %v3564, %v3734
        %v3778 = vmul.f32 %v3566, %v3734
        %v3779 = vmul.f32 %v3567, %v3734
        %v3780 = vmul.f32 %v3568, %v3734
        %v3781 = vmul.f32 %v3570, %v3734
        %v3782 = vmul.f32 %v3571, %v3734
        %v3783 = vmul.f32 %v3572, %v3734
        %v3784 = vadd.f32 %v3682, %v3736
        %v3785 = vadd.f32 %v3683, %v3737
        %v3786 = vadd.f32 %v3684, %v3738
        %v3787 = vadd.f32 %v3685, %v3739
        %v3788 = vadd.f32 %v3686, %v3740
        %v3789 = vadd.f32 %v3687, %v3741
        %v3790 = vadd.f32 %v3688, %v3742
        %v3791 = vadd.f32 %v3689, %v3743
        %v3792 = vadd.f32 %v3690, %v3744
        %v3793 = vadd.f32 %v3691, %v3745
        %v3794 = vadd.f32 %v3692, %v3746
        %v3795 = vadd.f32 %v3693, %v3747
        %v3796 = vadd.f32 %v3694, %v3748
        %v3797 = vadd.f32 %v3695, %v3749
        %v3798 = vadd.f32 %v3696, %v3750
        %v3799 = vadd.f32 %v3697, %v3751
        %v3800 = vadd.f32 %v3698, %v3752
        %v3801 = vadd.f32 %v3699, %v3753
        %v3802 = vadd.f32 %v3700, %v3754
        %v3803 = vadd.f32 %v3701, %v3755
        %v3804 = vadd.f32 %v3702, %v3756
        %v3805 = vadd.f32 %v3703, %v3757
        %v3806 = vadd.f32 %v3704, %v3758
        %v3807 = vadd.f32 %v3705, %v3759
        %v3808 = vadd.f32 %v3706, %v3760
        %v3809 = vadd.f32 %v3707, %v3761
        %v3810 = vadd.f32 %v3708, %v3762
        %v3811 = vadd.f32 %v3709, %v3763
        %v3812 = vadd.f32 %v3710, %v3764
        %v3813 = vadd.f32 %v3711, %v3765
        %v3814 = vadd.f32 %v3712, %v3766
        %v3815 = vadd.f32 %v3713, %v3767
        %v3816 = vadd.f32 %v3714, %v3768
        %v3817 = vadd.f32 %v3715, %v3769
        %v3818 = vadd.f32 %v3716, %v3770
        %v3819 = vadd.f32 %v3717, %v3771
        %v3820 = vadd.f32 %v3718, %v3772
        %v3821 = vadd.f32 %v3719, %v3773
        %v3822 = vadd.f32 %v3720, %v3774
        %v3823 = vadd.f32 %v3721, %v3775
        %v3824 = vadd.f32 %v3722, %v3776
        %v3825 = vadd.f32 %v3723, %v3777
        %v3826 = vadd.f32 %v3724, %v3778
        %v3827 = vadd.f32 %v3725, %v3779
        %v3828 = vadd.f32 %v3726, %v3780
        %v3829 = vadd.f32 %v3727, %v3781
        %v3830 = vadd.f32 %v3728, %v3782
        %v3831 = vadd.f32 %v3729, %v3783
        %v3833 = vlaneseq
        %v3834 = vshrl.u32 %v3833, 7
        %v3835 = vsub.s32 0, %v3834
        %v3836 = vrot.slane %v3388, %v3835
        %v3838 = vmul.f32 %v3503, %v3836
        %v3839 = vmul.f32 %v3504, %v3836
        %v3840 = vmul.f32 %v3507, %v3836
        %v3841 = vmul.f32 %v3508, %v3836
        %v3842 = vmul.f32 %v3511, %v3836
        %v3843 = vmul.f32 %v3512, %v3836
        %v3844 = vmul.f32 %v3515, %v3836
        %v3845 = vmul.f32 %v3516, %v3836
        %v3846 = vmul.f32 %v3519, %v3836
        %v3847 = vmul.f32 %v3520, %v3836
        %v3848 = vmul.f32 %v3523, %v3836
        %v3849 = vmul.f32 %v3524, %v3836
        %v3850 = vmul.f32 %v3527, %v3836
        %v3851 = vmul.f32 %v3528, %v3836
        %v3852 = vmul.f32 %v3531, %v3836
        %v3853 = vmul.f32 %v3532, %v3836
        %v3854 = vmul.f32 %v3535, %v3836
        %v3855 = vmul.f32 %v3536, %v3836
        %v3856 = vmul.f32 %v3539, %v3836
        %v3857 = vmul.f32 %v3540, %v3836
        %v3858 = vmul.f32 %v3543, %v3836
        %v3859 = vmul.f32 %v3544, %v3836
        %v3860 = vmul.f32 %v3547, %v3836
        %v3861 = vmul.f32 %v3548, %v3836
        %v3862 = vmul.f32 %v3551, %v3836
        %v3863 = vmul.f32 %v3552, %v3836
        %v3864 = vmul.f32 %v3555, %v3836
        %v3865 = vmul.f32 %v3556, %v3836
        %v3866 = vmul.f32 %v3559, %v3836
        %v3867 = vmul.f32 %v3560, %v3836
        %v3868 = vmul.f32 %v3563, %v3836
        %v3869 = vmul.f32 %v3564, %v3836
        %v3902 = vrot.slane %v3838, 1
        %v3903 = vrot.slane %v3839, 1
        %v3904 = vsel %vm1288, %v3902, %v3903
        %v3905 = vrot.slane %v3840, 1
        %v3906 = vrot.slane %v3841, 1
        %v3907 = vsel %vm1288, %v3905, %v3906
        %v3908 = vrot.slane %v3842, 1
        %v3909 = vrot.slane %v3843, 1
        %v3910 = vsel %vm1288, %v3908, %v3909
        %v3911 = vrot.slane %v3844, 1
        %v3912 = vrot.slane %v3845, 1
        %v3913 = vsel %vm1288, %v3911, %v3912
        %v3914 = vrot.slane %v3846, 1
        %v3915 = vrot.slane %v3847, 1
        %v3916 = vsel %vm1288, %v3914, %v3915
        %v3917 = vrot.slane %v3848, 1
        %v3918 = vrot.slane %v3849, 1
        %v3919 = vsel %vm1288, %v3917, %v3918
        %v3920 = vrot.slane %v3850, 1
        %v3921 = vrot.slane %v3851, 1
        %v3922 = vsel %vm1288, %v3920, %v3921
        %v3923 = vrot.slane %v3852, 1
        %v3924 = vrot.slane %v3853, 1
        %v3925 = vsel %vm1288, %v3923, %v3924
        %v3926 = vrot.slane %v3854, 1
        %v3927 = vrot.slane %v3855, 1
        %v3928 = vsel %vm1288, %v3926, %v3927
        %v3929 = vrot.slane %v3856, 1
        %v3930 = vrot.slane %v3857, 1
        %v3931 = vsel %vm1288, %v3929, %v3930
        %v3932 = vrot.slane %v3858, 1
        %v3933 = vrot.slane %v3859, 1
        %v3934 = vsel %vm1288, %v3932, %v3933
        %v3935 = vrot.slane %v3860, 1
        %v3936 = vrot.slane %v3861, 1
        %v3937 = vsel %vm1288, %v3935, %v3936
        %v3938 = vrot.slane %v3862, 1
        %v3939 = vrot.slane %v3863, 1
        %v3940 = vsel %vm1288, %v3938, %v3939
        %v3941 = vrot.slane %v3864, 1
        %v3942 = vrot.slane %v3865, 1
        %v3943 = vsel %vm1288, %v3941, %v3942
        %v3944 = vrot.slane %v3866, 1
        %v3945 = vrot.slane %v3867, 1
        %v3946 = vsel %vm1288, %v3944, %v3945
        %v3947 = vrot.slane %v3868, 1
        %v3948 = vrot.slane %v3869, 1
        %v3949 = vsel %vm1288, %v3947, %v3948
        %v3998 = vadd.f32 %v3784, %v3902
        %v3999 = vadd.f32 %v3785, %v3904
        %v4000 = vadd.f32 %v3786, %v3903
        %v4001 = vadd.f32 %v3787, %v3905
        %v4002 = vadd.f32 %v3788, %v3907
        %v4003 = vadd.f32 %v3789, %v3906
        %v4004 = vadd.f32 %v3790, %v3908
        %v4005 = vadd.f32 %v3791, %v3910
        %v4006 = vadd.f32 %v3792, %v3909
        %v4007 = vadd.f32 %v3793, %v3911
        %v4008 = vadd.f32 %v3794, %v3913
        %v4009 = vadd.f32 %v3795, %v3912
        %v4010 = vadd.f32 %v3796, %v3914
        %v4011 = vadd.f32 %v3797, %v3916
        %v4012 = vadd.f32 %v3798, %v3915
        %v4013 = vadd.f32 %v3799, %v3917
        %v4014 = vadd.f32 %v3800, %v3919
        %v4015 = vadd.f32 %v3801, %v3918
        %v4016 = vadd.f32 %v3802, %v3920
        %v4017 = vadd.f32 %v3803, %v3922
        %v4018 = vadd.f32 %v3804, %v3921
        %v4019 = vadd.f32 %v3805, %v3923
        %v4020 = vadd.f32 %v3806, %v3925
        %v4021 = vadd.f32 %v3807, %v3924
        %v4022 = vadd.f32 %v3808, %v3926
        %v4023 = vadd.f32 %v3809, %v3928
        %v4024 = vadd.f32 %v3810, %v3927
        %v4025 = vadd.f32 %v3811, %v3929
        %v4026 = vadd.f32 %v3812, %v3931
        %v4027 = vadd.f32 %v3813, %v3930
        %v4028 = vadd.f32 %v3814, %v3932
        %v4029 = vadd.f32 %v3815, %v3934
        %v4030 = vadd.f32 %v3816, %v3933
        %v4031 = vadd.f32 %v3817, %v3935
        %v4032 = vadd.f32 %v3818, %v3937
        %v4033 = vadd.f32 %v3819, %v3936
        %v4034 = vadd.f32 %v3820, %v3938
        %v4035 = vadd.f32 %v3821, %v3940
        %v4036 = vadd.f32 %v3822, %v3939
        %v4037 = vadd.f32 %v3823, %v3941
        %v4038 = vadd.f32 %v3824, %v3943
        %v4039 = vadd.f32 %v3825, %v3942
        %v4040 = vadd.f32 %v3826, %v3944
        %v4041 = vadd.f32 %v3827, %v3946
        %v4042 = vadd.f32 %v3828, %v3945
        %v4043 = vadd.f32 %v3829, %v3947
        %v4044 = vadd.f32 %v3830, %v3949
        %v4045 = vadd.f32 %v3831, %v3948
        %v4047 = vlaneseq
        %v4048 = vshrl.u32 %v4047, 7
        %v4049 = vsub.s32 0, %v4048
        %v4050 = vrot.slane %v3391, %v4049
        %v4052 = vmul.f32 %v3507, %v4050
        %v4053 = vmul.f32 %v3508, %v4050
        %v4054 = vmul.f32 %v3511, %v4050
        %v4055 = vmul.f32 %v3512, %v4050
        %v4056 = vmul.f32 %v3515, %v4050
        %v4057 = vmul.f32 %v3516, %v4050
        %v4058 = vmul.f32 %v3519, %v4050
        %v4059 = vmul.f32 %v3520, %v4050
        %v4060 = vmul.f32 %v3523, %v4050
        %v4061 = vmul.f32 %v3524, %v4050
        %v4062 = vmul.f32 %v3527, %v4050
        %v4063 = vmul.f32 %v3528, %v4050
        %v4064 = vmul.f32 %v3531, %v4050
        %v4065 = vmul.f32 %v3532, %v4050
        %v4066 = vmul.f32 %v3535, %v4050
        %v4067 = vmul.f32 %v3536, %v4050
        %v4068 = vmul.f32 %v3539, %v4050
        %v4069 = vmul.f32 %v3540, %v4050
        %v4070 = vmul.f32 %v3543, %v4050
        %v4071 = vmul.f32 %v3544, %v4050
        %v4072 = vmul.f32 %v3547, %v4050
        %v4073 = vmul.f32 %v3548, %v4050
        %v4074 = vmul.f32 %v3551, %v4050
        %v4075 = vmul.f32 %v3552, %v4050
        %v4076 = vmul.f32 %v3555, %v4050
        %v4077 = vmul.f32 %v3556, %v4050
        %v4078 = vmul.f32 %v3559, %v4050
        %v4079 = vmul.f32 %v3560, %v4050
        %v4080 = vmul.f32 %v3563, %v4050
        %v4081 = vmul.f32 %v3564, %v4050
        %v4082 = vmul.f32 %v3567, %v4050
        %v4083 = vmul.f32 %v3568, %v4050
        %v4116 = vrot.slane %v4052, 1
        %v4117 = vrot.slane %v4053, 1
        %v4118 = vsel %vm1288, %v4116, %v4117
        %v4119 = vrot.slane %v4054, 1
        %v4120 = vrot.slane %v4055, 1
        %v4121 = vsel %vm1288, %v4119, %v4120
        %v4122 = vrot.slane %v4056, 1
        %v4123 = vrot.slane %v4057, 1
        %v4124 = vsel %vm1288, %v4122, %v4123
        %v4125 = vrot.slane %v4058, 1
        %v4126 = vrot.slane %v4059, 1
        %v4127 = vsel %vm1288, %v4125, %v4126
        %v4128 = vrot.slane %v4060, 1
        %v4129 = vrot.slane %v4061, 1
        %v4130 = vsel %vm1288, %v4128, %v4129
        %v4131 = vrot.slane %v4062, 1
        %v4132 = vrot.slane %v4063, 1
        %v4133 = vsel %vm1288, %v4131, %v4132
        %v4134 = vrot.slane %v4064, 1
        %v4135 = vrot.slane %v4065, 1
        %v4136 = vsel %vm1288, %v4134, %v4135
        %v4137 = vrot.slane %v4066, 1
        %v4138 = vrot.slane %v4067, 1
        %v4139 = vsel %vm1288, %v4137, %v4138
        %v4140 = vrot.slane %v4068, 1
        %v4141 = vrot.slane %v4069, 1
        %v4142 = vsel %vm1288, %v4140, %v4141
        %v4143 = vrot.slane %v4070, 1
        %v4144 = vrot.slane %v4071, 1
        %v4145 = vsel %vm1288, %v4143, %v4144
        %v4146 = vrot.slane %v4072, 1
        %v4147 = vrot.slane %v4073, 1
        %v4148 = vsel %vm1288, %v4146, %v4147
        %v4149 = vrot.slane %v4074, 1
        %v4150 = vrot.slane %v4075, 1
        %v4151 = vsel %vm1288, %v4149, %v4150
        %v4152 = vrot.slane %v4076, 1
        %v4153 = vrot.slane %v4077, 1
        %v4154 = vsel %vm1288, %v4152, %v4153
        %v4155 = vrot.slane %v4078, 1
        %v4156 = vrot.slane %v4079, 1
        %v4157 = vsel %vm1288, %v4155, %v4156
        %v4158 = vrot.slane %v4080, 1
        %v4159 = vrot.slane %v4081, 1
        %v4160 = vsel %vm1288, %v4158, %v4159
        %v4161 = vrot.slane %v4082, 1
        %v4162 = vrot.slane %v4083, 1
        %v4163 = vsel %vm1288, %v4161, %v4162
        %v4212 = vadd.f32 %v3998, %v4116
        %v4213 = vadd.f32 %v3999, %v4118
        %v4214 = vadd.f32 %v4000, %v4117
        %v4215 = vadd.f32 %v4001, %v4119
        %v4216 = vadd.f32 %v4002, %v4121
        %v4217 = vadd.f32 %v4003, %v4120
        %v4218 = vadd.f32 %v4004, %v4122
        %v4219 = vadd.f32 %v4005, %v4124
        %v4220 = vadd.f32 %v4006, %v4123
        %v4221 = vadd.f32 %v4007, %v4125
        %v4222 = vadd.f32 %v4008, %v4127
        %v4223 = vadd.f32 %v4009, %v4126
        %v4224 = vadd.f32 %v4010, %v4128
        %v4225 = vadd.f32 %v4011, %v4130
        %v4226 = vadd.f32 %v4012, %v4129
        %v4227 = vadd.f32 %v4013, %v4131
        %v4228 = vadd.f32 %v4014, %v4133
        %v4229 = vadd.f32 %v4015, %v4132
        %v4230 = vadd.f32 %v4016, %v4134
        %v4231 = vadd.f32 %v4017, %v4136
        %v4232 = vadd.f32 %v4018, %v4135
        %v4233 = vadd.f32 %v4019, %v4137
        %v4234 = vadd.f32 %v4020, %v4139
        %v4235 = vadd.f32 %v4021, %v4138
        %v4236 = vadd.f32 %v4022, %v4140
        %v4237 = vadd.f32 %v4023, %v4142
        %v4238 = vadd.f32 %v4024, %v4141
        %v4239 = vadd.f32 %v4025, %v4143
        %v4240 = vadd.f32 %v4026, %v4145
        %v4241 = vadd.f32 %v4027, %v4144
        %v4242 = vadd.f32 %v4028, %v4146
        %v4243 = vadd.f32 %v4029, %v4148
        %v4244 = vadd.f32 %v4030, %v4147
        %v4245 = vadd.f32 %v4031, %v4149
        %v4246 = vadd.f32 %v4032, %v4151
        %v4247 = vadd.f32 %v4033, %v4150
        %v4248 = vadd.f32 %v4034, %v4152
        %v4249 = vadd.f32 %v4035, %v4154
        %v4250 = vadd.f32 %v4036, %v4153
        %v4251 = vadd.f32 %v4037, %v4155
        %v4252 = vadd.f32 %v4038, %v4157
        %v4253 = vadd.f32 %v4039, %v4156
        %v4254 = vadd.f32 %v4040, %v4158
        %v4255 = vadd.f32 %v4041, %v4160
        %v4256 = vadd.f32 %v4042, %v4159
        %v4257 = vadd.f32 %v4043, %v4161
        %v4258 = vadd.f32 %v4044, %v4163
        %v4259 = vadd.f32 %v4045, %v4162
        %v4261 = vlaneseq
        %v4262 = vshrl.u32 %v4261, 7
        %v4263 = vsub.s32 0, %v4262
        %v4264 = vrot.slane %v3394, %v4263
        %v4266 = vmul.f32 %v3511, %v4264
        %v4267 = vmul.f32 %v3512, %v4264
        %v4268 = vmul.f32 %v3515, %v4264
        %v4269 = vmul.f32 %v3516, %v4264
        %v4270 = vmul.f32 %v3519, %v4264
        %v4271 = vmul.f32 %v3520, %v4264
        %v4272 = vmul.f32 %v3523, %v4264
        %v4273 = vmul.f32 %v3524, %v4264
        %v4274 = vmul.f32 %v3527, %v4264
        %v4275 = vmul.f32 %v3528, %v4264
        %v4276 = vmul.f32 %v3531, %v4264
        %v4277 = vmul.f32 %v3532, %v4264
        %v4278 = vmul.f32 %v3535, %v4264
        %v4279 = vmul.f32 %v3536, %v4264
        %v4280 = vmul.f32 %v3539, %v4264
        %v4281 = vmul.f32 %v3540, %v4264
        %v4282 = vmul.f32 %v3543, %v4264
        %v4283 = vmul.f32 %v3544, %v4264
        %v4284 = vmul.f32 %v3547, %v4264
        %v4285 = vmul.f32 %v3548, %v4264
        %v4286 = vmul.f32 %v3551, %v4264
        %v4287 = vmul.f32 %v3552, %v4264
        %v4288 = vmul.f32 %v3555, %v4264
        %v4289 = vmul.f32 %v3556, %v4264
        %v4290 = vmul.f32 %v3559, %v4264
        %v4291 = vmul.f32 %v3560, %v4264
        %v4292 = vmul.f32 %v3563, %v4264
        %v4293 = vmul.f32 %v3564, %v4264
        %v4294 = vmul.f32 %v3567, %v4264
        %v4295 = vmul.f32 %v3568, %v4264
        %v4296 = vmul.f32 %v3571, %v4264
        %v4297 = vmul.f32 %v3572, %v4264
        %v4330 = vrot.slane %v4266, 1
        %v4331 = vrot.slane %v4267, 1
        %v4332 = vsel %vm1288, %v4330, %v4331
        %v4333 = vrot.slane %v4268, 1
        %v4334 = vrot.slane %v4269, 1
        %v4335 = vsel %vm1288, %v4333, %v4334
        %v4336 = vrot.slane %v4270, 1
        %v4337 = vrot.slane %v4271, 1
        %v4338 = vsel %vm1288, %v4336, %v4337
        %v4339 = vrot.slane %v4272, 1
        %v4340 = vrot.slane %v4273, 1
        %v4341 = vsel %vm1288, %v4339, %v4340
        %v4342 = vrot.slane %v4274, 1
        %v4343 = vrot.slane %v4275, 1
        %v4344 = vsel %vm1288, %v4342, %v4343
        %v4345 = vrot.slane %v4276, 1
        %v4346 = vrot.slane %v4277, 1
        %v4347 = vsel %vm1288, %v4345, %v4346
        %v4348 = vrot.slane %v4278, 1
        %v4349 = vrot.slane %v4279, 1
        %v4350 = vsel %vm1288, %v4348, %v4349
        %v4351 = vrot.slane %v4280, 1
        %v4352 = vrot.slane %v4281, 1
        %v4353 = vsel %vm1288, %v4351, %v4352
        %v4354 = vrot.slane %v4282, 1
        %v4355 = vrot.slane %v4283, 1
        %v4356 = vsel %vm1288, %v4354, %v4355
        %v4357 = vrot.slane %v4284, 1
        %v4358 = vrot.slane %v4285, 1
        %v4359 = vsel %vm1288, %v4357, %v4358
        %v4360 = vrot.slane %v4286, 1
        %v4361 = vrot.slane %v4287, 1
        %v4362 = vsel %vm1288, %v4360, %v4361
        %v4363 = vrot.slane %v4288, 1
        %v4364 = vrot.slane %v4289, 1
        %v4365 = vsel %vm1288, %v4363, %v4364
        %v4366 = vrot.slane %v4290, 1
        %v4367 = vrot.slane %v4291, 1
        %v4368 = vsel %vm1288, %v4366, %v4367
        %v4369 = vrot.slane %v4292, 1
        %v4370 = vrot.slane %v4293, 1
        %v4371 = vsel %vm1288, %v4369, %v4370
        %v4372 = vrot.slane %v4294, 1
        %v4373 = vrot.slane %v4295, 1
        %v4374 = vsel %vm1288, %v4372, %v4373
        %v4375 = vrot.slane %v4296, 1
        %v4376 = vrot.slane %v4297, 1
        %v4377 = vsel %vm1288, %v4375, %v4376
        %v4426 = vadd.f32 %v4212, %v4330
        %v4427 = vadd.f32 %v4213, %v4332
        %v4428 = vadd.f32 %v4214, %v4331
        %v4429 = vadd.f32 %v4215, %v4333
        %v4430 = vadd.f32 %v4216, %v4335
        %v4431 = vadd.f32 %v4217, %v4334
        %v4432 = vadd.f32 %v4218, %v4336
        %v4433 = vadd.f32 %v4219, %v4338
        %v4434 = vadd.f32 %v4220, %v4337
        %v4435 = vadd.f32 %v4221, %v4339
        %v4436 = vadd.f32 %v4222, %v4341
        %v4437 = vadd.f32 %v4223, %v4340
        %v4438 = vadd.f32 %v4224, %v4342
        %v4439 = vadd.f32 %v4225, %v4344
        %v4440 = vadd.f32 %v4226, %v4343
        %v4441 = vadd.f32 %v4227, %v4345
        %v4442 = vadd.f32 %v4228, %v4347
        %v4443 = vadd.f32 %v4229, %v4346
        %v4444 = vadd.f32 %v4230, %v4348
        %v4445 = vadd.f32 %v4231, %v4350
        %v4446 = vadd.f32 %v4232, %v4349
        %v4447 = vadd.f32 %v4233, %v4351
        %v4448 = vadd.f32 %v4234, %v4353
        %v4449 = vadd.f32 %v4235, %v4352
        %v4450 = vadd.f32 %v4236, %v4354
        %v4451 = vadd.f32 %v4237, %v4356
        %v4452 = vadd.f32 %v4238, %v4355
        %v4453 = vadd.f32 %v4239, %v4357
        %v4454 = vadd.f32 %v4240, %v4359
        %v4455 = vadd.f32 %v4241, %v4358
        %v4456 = vadd.f32 %v4242, %v4360
        %v4457 = vadd.f32 %v4243, %v4362
        %v4458 = vadd.f32 %v4244, %v4361
        %v4459 = vadd.f32 %v4245, %v4363
        %v4460 = vadd.f32 %v4246, %v4365
        %v4461 = vadd.f32 %v4247, %v4364
        %v4462 = vadd.f32 %v4248, %v4366
        %v4463 = vadd.f32 %v4249, %v4368
        %v4464 = vadd.f32 %v4250, %v4367
        %v4465 = vadd.f32 %v4251, %v4369
        %v4466 = vadd.f32 %v4252, %v4371
        %v4467 = vadd.f32 %v4253, %v4370
        %v4468 = vadd.f32 %v4254, %v4372
        %v4469 = vadd.f32 %v4255, %v4374
        %v4470 = vadd.f32 %v4256, %v4373
        %v4471 = vadd.f32 %v4257, %v4375
        %v4472 = vadd.f32 %v4258, %v4377
        %v4473 = vadd.f32 %v4259, %v4376
        %v4475 = vlaneseq
        %v4476 = vshrl.u32 %v4475, 7
        %v4477 = vsub.s32 0, %v4476
        %v4478 = vrot.slane %v3389, %v4477
        %v4480 = vmul.f32 %v3503, %v4478
        %v4481 = vmul.f32 %v3504, %v4478
        %v4482 = vmul.f32 %v3505, %v4478
        %v4483 = vmul.f32 %v3507, %v4478
        %v4484 = vmul.f32 %v3508, %v4478
        %v4485 = vmul.f32 %v3509, %v4478
        %v4486 = vmul.f32 %v3511, %v4478
        %v4487 = vmul.f32 %v3512, %v4478
        %v4488 = vmul.f32 %v3513, %v4478
        %v4489 = vmul.f32 %v3515, %v4478
        %v4490 = vmul.f32 %v3516, %v4478
        %v4491 = vmul.f32 %v3517, %v4478
        %v4492 = vmul.f32 %v3519, %v4478
        %v4493 = vmul.f32 %v3520, %v4478
        %v4494 = vmul.f32 %v3521, %v4478
        %v4495 = vmul.f32 %v3523, %v4478
        %v4496 = vmul.f32 %v3524, %v4478
        %v4497 = vmul.f32 %v3525, %v4478
        %v4498 = vmul.f32 %v3527, %v4478
        %v4499 = vmul.f32 %v3528, %v4478
        %v4500 = vmul.f32 %v3529, %v4478
        %v4501 = vmul.f32 %v3531, %v4478
        %v4502 = vmul.f32 %v3532, %v4478
        %v4503 = vmul.f32 %v3533, %v4478
        %v4504 = vmul.f32 %v3535, %v4478
        %v4505 = vmul.f32 %v3536, %v4478
        %v4506 = vmul.f32 %v3537, %v4478
        %v4507 = vmul.f32 %v3539, %v4478
        %v4508 = vmul.f32 %v3540, %v4478
        %v4509 = vmul.f32 %v3541, %v4478
        %v4510 = vmul.f32 %v3543, %v4478
        %v4511 = vmul.f32 %v3544, %v4478
        %v4512 = vmul.f32 %v3545, %v4478
        %v4513 = vmul.f32 %v3547, %v4478
        %v4514 = vmul.f32 %v3548, %v4478
        %v4515 = vmul.f32 %v3549, %v4478
        %v4516 = vmul.f32 %v3551, %v4478
        %v4517 = vmul.f32 %v3552, %v4478
        %v4518 = vmul.f32 %v3553, %v4478
        %v4519 = vmul.f32 %v3555, %v4478
        %v4520 = vmul.f32 %v3556, %v4478
        %v4521 = vmul.f32 %v3557, %v4478
        %v4522 = vmul.f32 %v3559, %v4478
        %v4523 = vmul.f32 %v3560, %v4478
        %v4524 = vmul.f32 %v3561, %v4478
        %v4525 = vmul.f32 %v3563, %v4478
        %v4526 = vmul.f32 %v3564, %v4478
        %v4527 = vmul.f32 %v3565, %v4478
        %v4576 = vrot.slane %v4480, 2
        %v4577 = vrot.slane %v4481, 2
        %v4578 = vsel %vm1963, %v4576, %v4577
        %v4579 = vrot.slane %v4482, 2
        %v4580 = vsel %vm1963, %v4577, %v4579
        %v4581 = vrot.slane %v4483, 2
        %v4582 = vrot.slane %v4484, 2
        %v4583 = vsel %vm1963, %v4581, %v4582
        %v4584 = vrot.slane %v4485, 2
        %v4585 = vsel %vm1963, %v4582, %v4584
        %v4586 = vrot.slane %v4486, 2
        %v4587 = vrot.slane %v4487, 2
        %v4588 = vsel %vm1963, %v4586, %v4587
        %v4589 = vrot.slane %v4488, 2
        %v4590 = vsel %vm1963, %v4587, %v4589
        %v4591 = vrot.slane %v4489, 2
        %v4592 = vrot.slane %v4490, 2
        %v4593 = vsel %vm1963, %v4591, %v4592
        %v4594 = vrot.slane %v4491, 2
        %v4595 = vsel %vm1963, %v4592, %v4594
        %v4596 = vrot.slane %v4492, 2
        %v4597 = vrot.slane %v4493, 2
        %v4598 = vsel %vm1963, %v4596, %v4597
        %v4599 = vrot.slane %v4494, 2
        %v4600 = vsel %vm1963, %v4597, %v4599
        %v4601 = vrot.slane %v4495, 2
        %v4602 = vrot.slane %v4496, 2
        %v4603 = vsel %vm1963, %v4601, %v4602
        %v4604 = vrot.slane %v4497, 2
        %v4605 = vsel %vm1963, %v4602, %v4604
        %v4606 = vrot.slane %v4498, 2
        %v4607 = vrot.slane %v4499, 2
        %v4608 = vsel %vm1963, %v4606, %v4607
        %v4609 = vrot.slane %v4500, 2
        %v4610 = vsel %vm1963, %v4607, %v4609
        %v4611 = vrot.slane %v4501, 2
        %v4612 = vrot.slane %v4502, 2
        %v4613 = vsel %vm1963, %v4611, %v4612
        %v4614 = vrot.slane %v4503, 2
        %v4615 = vsel %vm1963, %v4612, %v4614
        %v4616 = vrot.slane %v4504, 2
        %v4617 = vrot.slane %v4505, 2
        %v4618 = vsel %vm1963, %v4616, %v4617
        %v4619 = vrot.slane %v4506, 2
        %v4620 = vsel %vm1963, %v4617, %v4619
        %v4621 = vrot.slane %v4507, 2
        %v4622 = vrot.slane %v4508, 2
        %v4623 = vsel %vm1963, %v4621, %v4622
        %v4624 = vrot.slane %v4509, 2
        %v4625 = vsel %vm1963, %v4622, %v4624
        %v4626 = vrot.slane %v4510, 2
        %v4627 = vrot.slane %v4511, 2
        %v4628 = vsel %vm1963, %v4626, %v4627
        %v4629 = vrot.slane %v4512, 2
        %v4630 = vsel %vm1963, %v4627, %v4629
        %v4631 = vrot.slane %v4513, 2
        %v4632 = vrot.slane %v4514, 2
        %v4633 = vsel %vm1963, %v4631, %v4632
        %v4634 = vrot.slane %v4515, 2
        %v4635 = vsel %vm1963, %v4632, %v4634
        %v4636 = vrot.slane %v4516, 2
        %v4637 = vrot.slane %v4517, 2
        %v4638 = vsel %vm1963, %v4636, %v4637
        %v4639 = vrot.slane %v4518, 2
        %v4640 = vsel %vm1963, %v4637, %v4639
        %v4641 = vrot.slane %v4519, 2
        %v4642 = vrot.slane %v4520, 2
        %v4643 = vsel %vm1963, %v4641, %v4642
        %v4644 = vrot.slane %v4521, 2
        %v4645 = vsel %vm1963, %v4642, %v4644
        %v4646 = vrot.slane %v4522, 2
        %v4647 = vrot.slane %v4523, 2
        %v4648 = vsel %vm1963, %v4646, %v4647
        %v4649 = vrot.slane %v4524, 2
        %v4650 = vsel %vm1963, %v4647, %v4649
        %v4651 = vrot.slane %v4525, 2
        %v4652 = vrot.slane %v4526, 2
        %v4653 = vsel %vm1963, %v4651, %v4652
        %v4654 = vrot.slane %v4527, 2
        %v4655 = vsel %vm1963, %v4652, %v4654
        %v4704 = vadd.f32 %v4426, %v4576
        %v4705 = vadd.f32 %v4427, %v4578
        %v4706 = vadd.f32 %v4428, %v4580
        %v4707 = vadd.f32 %v4429, %v4581
        %v4708 = vadd.f32 %v4430, %v4583
        %v4709 = vadd.f32 %v4431, %v4585
        %v4710 = vadd.f32 %v4432, %v4586
        %v4711 = vadd.f32 %v4433, %v4588
        %v4712 = vadd.f32 %v4434, %v4590
        %v4713 = vadd.f32 %v4435, %v4591
        %v4714 = vadd.f32 %v4436, %v4593
        %v4715 = vadd.f32 %v4437, %v4595
        %v4716 = vadd.f32 %v4438, %v4596
        %v4717 = vadd.f32 %v4439, %v4598
        %v4718 = vadd.f32 %v4440, %v4600
        %v4719 = vadd.f32 %v4441, %v4601
        %v4720 = vadd.f32 %v4442, %v4603
        %v4721 = vadd.f32 %v4443, %v4605
        %v4722 = vadd.f32 %v4444, %v4606
        %v4723 = vadd.f32 %v4445, %v4608
        %v4724 = vadd.f32 %v4446, %v4610
        %v4725 = vadd.f32 %v4447, %v4611
        %v4726 = vadd.f32 %v4448, %v4613
        %v4727 = vadd.f32 %v4449, %v4615
        %v4728 = vadd.f32 %v4450, %v4616
        %v4729 = vadd.f32 %v4451, %v4618
        %v4730 = vadd.f32 %v4452, %v4620
        %v4731 = vadd.f32 %v4453, %v4621
        %v4732 = vadd.f32 %v4454, %v4623
        %v4733 = vadd.f32 %v4455, %v4625
        %v4734 = vadd.f32 %v4456, %v4626
        %v4735 = vadd.f32 %v4457, %v4628
        %v4736 = vadd.f32 %v4458, %v4630
        %v4737 = vadd.f32 %v4459, %v4631
        %v4738 = vadd.f32 %v4460, %v4633
        %v4739 = vadd.f32 %v4461, %v4635
        %v4740 = vadd.f32 %v4462, %v4636
        %v4741 = vadd.f32 %v4463, %v4638
        %v4742 = vadd.f32 %v4464, %v4640
        %v4743 = vadd.f32 %v4465, %v4641
        %v4744 = vadd.f32 %v4466, %v4643
        %v4745 = vadd.f32 %v4467, %v4645
        %v4746 = vadd.f32 %v4468, %v4646
        %v4747 = vadd.f32 %v4469, %v4648
        %v4748 = vadd.f32 %v4470, %v4650
        %v4749 = vadd.f32 %v4471, %v4651
        %v4750 = vadd.f32 %v4472, %v4653
        %v4751 = vadd.f32 %v4473, %v4655
        %v4753 = vlaneseq
        %v4754 = vshrl.u32 %v4753, 7
        %v4755 = vsub.s32 0, %v4754
        %v4756 = vrot.slane %v3392, %v4755
        %v4758 = vmul.f32 %v3507, %v4756
        %v4759 = vmul.f32 %v3508, %v4756
        %v4760 = vmul.f32 %v3509, %v4756
        %v4761 = vmul.f32 %v3511, %v4756
        %v4762 = vmul.f32 %v3512, %v4756
        %v4763 = vmul.f32 %v3513, %v4756
        %v4764 = vmul.f32 %v3515, %v4756
        %v4765 = vmul.f32 %v3516, %v4756
        %v4766 = vmul.f32 %v3517, %v4756
        %v4767 = vmul.f32 %v3519, %v4756
        %v4768 = vmul.f32 %v3520, %v4756
        %v4769 = vmul.f32 %v3521, %v4756
        %v4770 = vmul.f32 %v3523, %v4756
        %v4771 = vmul.f32 %v3524, %v4756
        %v4772 = vmul.f32 %v3525, %v4756
        %v4773 = vmul.f32 %v3527, %v4756
        %v4774 = vmul.f32 %v3528, %v4756
        %v4775 = vmul.f32 %v3529, %v4756
        %v4776 = vmul.f32 %v3531, %v4756
        %v4777 = vmul.f32 %v3532, %v4756
        %v4778 = vmul.f32 %v3533, %v4756
        %v4779 = vmul.f32 %v3535, %v4756
        %v4780 = vmul.f32 %v3536, %v4756
        %v4781 = vmul.f32 %v3537, %v4756
        %v4782 = vmul.f32 %v3539, %v4756
        %v4783 = vmul.f32 %v3540, %v4756
        %v4784 = vmul.f32 %v3541, %v4756
        %v4785 = vmul.f32 %v3543, %v4756
        %v4786 = vmul.f32 %v3544, %v4756
        %v4787 = vmul.f32 %v3545, %v4756
        %v4788 = vmul.f32 %v3547, %v4756
        %v4789 = vmul.f32 %v3548, %v4756
        %v4790 = vmul.f32 %v3549, %v4756
        %v4791 = vmul.f32 %v3551, %v4756
        %v4792 = vmul.f32 %v3552, %v4756
        %v4793 = vmul.f32 %v3553, %v4756
        %v4794 = vmul.f32 %v3555, %v4756
        %v4795 = vmul.f32 %v3556, %v4756
        %v4796 = vmul.f32 %v3557, %v4756
        %v4797 = vmul.f32 %v3559, %v4756
        %v4798 = vmul.f32 %v3560, %v4756
        %v4799 = vmul.f32 %v3561, %v4756
        %v4800 = vmul.f32 %v3563, %v4756
        %v4801 = vmul.f32 %v3564, %v4756
        %v4802 = vmul.f32 %v3565, %v4756
        %v4803 = vmul.f32 %v3567, %v4756
        %v4804 = vmul.f32 %v3568, %v4756
        %v4805 = vmul.f32 %v3569, %v4756
        %v4854 = vrot.slane %v4758, 2
        %v4855 = vrot.slane %v4759, 2
        %v4856 = vsel %vm1963, %v4854, %v4855
        %v4857 = vrot.slane %v4760, 2
        %v4858 = vsel %vm1963, %v4855, %v4857
        %v4859 = vrot.slane %v4761, 2
        %v4860 = vrot.slane %v4762, 2
        %v4861 = vsel %vm1963, %v4859, %v4860
        %v4862 = vrot.slane %v4763, 2
        %v4863 = vsel %vm1963, %v4860, %v4862
        %v4864 = vrot.slane %v4764, 2
        %v4865 = vrot.slane %v4765, 2
        %v4866 = vsel %vm1963, %v4864, %v4865
        %v4867 = vrot.slane %v4766, 2
        %v4868 = vsel %vm1963, %v4865, %v4867
        %v4869 = vrot.slane %v4767, 2
        %v4870 = vrot.slane %v4768, 2
        %v4871 = vsel %vm1963, %v4869, %v4870
        %v4872 = vrot.slane %v4769, 2
        %v4873 = vsel %vm1963, %v4870, %v4872
        %v4874 = vrot.slane %v4770, 2
        %v4875 = vrot.slane %v4771, 2
        %v4876 = vsel %vm1963, %v4874, %v4875
        %v4877 = vrot.slane %v4772, 2
        %v4878 = vsel %vm1963, %v4875, %v4877
        %v4879 = vrot.slane %v4773, 2
        %v4880 = vrot.slane %v4774, 2
        %v4881 = vsel %vm1963, %v4879, %v4880
        %v4882 = vrot.slane %v4775, 2
        %v4883 = vsel %vm1963, %v4880, %v4882
        %v4884 = vrot.slane %v4776, 2
        %v4885 = vrot.slane %v4777, 2
        %v4886 = vsel %vm1963, %v4884, %v4885
        %v4887 = vrot.slane %v4778, 2
        %v4888 = vsel %vm1963, %v4885, %v4887
        %v4889 = vrot.slane %v4779, 2
        %v4890 = vrot.slane %v4780, 2
        %v4891 = vsel %vm1963, %v4889, %v4890
        %v4892 = vrot.slane %v4781, 2
        %v4893 = vsel %vm1963, %v4890, %v4892
        %v4894 = vrot.slane %v4782, 2
        %v4895 = vrot.slane %v4783, 2
        %v4896 = vsel %vm1963, %v4894, %v4895
        %v4897 = vrot.slane %v4784, 2
        %v4898 = vsel %vm1963, %v4895, %v4897
        %v4899 = vrot.slane %v4785, 2
        %v4900 = vrot.slane %v4786, 2
        %v4901 = vsel %vm1963, %v4899, %v4900
        %v4902 = vrot.slane %v4787, 2
        %v4903 = vsel %vm1963, %v4900, %v4902
        %v4904 = vrot.slane %v4788, 2
        %v4905 = vrot.slane %v4789, 2
        %v4906 = vsel %vm1963, %v4904, %v4905
        %v4907 = vrot.slane %v4790, 2
        %v4908 = vsel %vm1963, %v4905, %v4907
        %v4909 = vrot.slane %v4791, 2
        %v4910 = vrot.slane %v4792, 2
        %v4911 = vsel %vm1963, %v4909, %v4910
        %v4912 = vrot.slane %v4793, 2
        %v4913 = vsel %vm1963, %v4910, %v4912
        %v4914 = vrot.slane %v4794, 2
        %v4915 = vrot.slane %v4795, 2
        %v4916 = vsel %vm1963, %v4914, %v4915
        %v4917 = vrot.slane %v4796, 2
        %v4918 = vsel %vm1963, %v4915, %v4917
        %v4919 = vrot.slane %v4797, 2
        %v4920 = vrot.slane %v4798, 2
        %v4921 = vsel %vm1963, %v4919, %v4920
        %v4922 = vrot.slane %v4799, 2
        %v4923 = vsel %vm1963, %v4920, %v4922
        %v4924 = vrot.slane %v4800, 2
        %v4925 = vrot.slane %v4801, 2
        %v4926 = vsel %vm1963, %v4924, %v4925
        %v4927 = vrot.slane %v4802, 2
        %v4928 = vsel %vm1963, %v4925, %v4927
        %v4929 = vrot.slane %v4803, 2
        %v4930 = vrot.slane %v4804, 2
        %v4931 = vsel %vm1963, %v4929, %v4930
        %v4932 = vrot.slane %v4805, 2
        %v4933 = vsel %vm1963, %v4930, %v4932
        %v4982 = vadd.f32 %v4704, %v4854
        %v4983 = vadd.f32 %v4705, %v4856
        %v4984 = vadd.f32 %v4706, %v4858
        %v4985 = vadd.f32 %v4707, %v4859
        %v4986 = vadd.f32 %v4708, %v4861
        %v4987 = vadd.f32 %v4709, %v4863
        %v4988 = vadd.f32 %v4710, %v4864
        %v4989 = vadd.f32 %v4711, %v4866
        %v4990 = vadd.f32 %v4712, %v4868
        %v4991 = vadd.f32 %v4713, %v4869
        %v4992 = vadd.f32 %v4714, %v4871
        %v4993 = vadd.f32 %v4715, %v4873
        %v4994 = vadd.f32 %v4716, %v4874
        %v4995 = vadd.f32 %v4717, %v4876
        %v4996 = vadd.f32 %v4718, %v4878
        %v4997 = vadd.f32 %v4719, %v4879
        %v4998 = vadd.f32 %v4720, %v4881
        %v4999 = vadd.f32 %v4721, %v4883
        %v5000 = vadd.f32 %v4722, %v4884
        %v5001 = vadd.f32 %v4723, %v4886
        %v5002 = vadd.f32 %v4724, %v4888
        %v5003 = vadd.f32 %v4725, %v4889
        %v5004 = vadd.f32 %v4726, %v4891
        %v5005 = vadd.f32 %v4727, %v4893
        %v5006 = vadd.f32 %v4728, %v4894
        %v5007 = vadd.f32 %v4729, %v4896
        %v5008 = vadd.f32 %v4730, %v4898
        %v5009 = vadd.f32 %v4731, %v4899
        %v5010 = vadd.f32 %v4732, %v4901
        %v5011 = vadd.f32 %v4733, %v4903
        %v5012 = vadd.f32 %v4734, %v4904
        %v5013 = vadd.f32 %v4735, %v4906
        %v5014 = vadd.f32 %v4736, %v4908
        %v5015 = vadd.f32 %v4737, %v4909
        %v5016 = vadd.f32 %v4738, %v4911
        %v5017 = vadd.f32 %v4739, %v4913
        %v5018 = vadd.f32 %v4740, %v4914
        %v5019 = vadd.f32 %v4741, %v4916
        %v5020 = vadd.f32 %v4742, %v4918
        %v5021 = vadd.f32 %v4743, %v4919
        %v5022 = vadd.f32 %v4744, %v4921
        %v5023 = vadd.f32 %v4745, %v4923
        %v5024 = vadd.f32 %v4746, %v4924
        %v5025 = vadd.f32 %v4747, %v4926
        %v5026 = vadd.f32 %v4748, %v4928
        %v5027 = vadd.f32 %v4749, %v4929
        %v5028 = vadd.f32 %v4750, %v4931
        %v5029 = vadd.f32 %v4751, %v4933
        %v5031 = vlaneseq
        %v5032 = vshrl.u32 %v5031, 7
        %v5033 = vsub.s32 0, %v5032
        %v5034 = vrot.slane %v3395, %v5033
        %v5036 = vmul.f32 %v3511, %v5034
        %v5037 = vmul.f32 %v3512, %v5034
        %v5038 = vmul.f32 %v3513, %v5034
        %v5039 = vmul.f32 %v3515, %v5034
        %v5040 = vmul.f32 %v3516, %v5034
        %v5041 = vmul.f32 %v3517, %v5034
        %v5042 = vmul.f32 %v3519, %v5034
        %v5043 = vmul.f32 %v3520, %v5034
        %v5044 = vmul.f32 %v3521, %v5034
        %v5045 = vmul.f32 %v3523, %v5034
        %v5046 = vmul.f32 %v3524, %v5034
        %v5047 = vmul.f32 %v3525, %v5034
        %v5048 = vmul.f32 %v3527, %v5034
        %v5049 = vmul.f32 %v3528, %v5034
        %v5050 = vmul.f32 %v3529, %v5034
        %v5051 = vmul.f32 %v3531, %v5034
        %v5052 = vmul.f32 %v3532, %v5034
        %v5053 = vmul.f32 %v3533, %v5034
        %v5054 = vmul.f32 %v3535, %v5034
        %v5055 = vmul.f32 %v3536, %v5034
        %v5056 = vmul.f32 %v3537, %v5034
        %v5057 = vmul.f32 %v3539, %v5034
        %v5058 = vmul.f32 %v3540, %v5034
        %v5059 = vmul.f32 %v3541, %v5034
        %v5060 = vmul.f32 %v3543, %v5034
        %v5061 = vmul.f32 %v3544, %v5034
        %v5062 = vmul.f32 %v3545, %v5034
        %v5063 = vmul.f32 %v3547, %v5034
        %v5064 = vmul.f32 %v3548, %v5034
        %v5065 = vmul.f32 %v3549, %v5034
        %v5066 = vmul.f32 %v3551, %v5034
        %v5067 = vmul.f32 %v3552, %v5034
        %v5068 = vmul.f32 %v3553, %v5034
        %v5069 = vmul.f32 %v3555, %v5034
        %v5070 = vmul.f32 %v3556, %v5034
        %v5071 = vmul.f32 %v3557, %v5034
        %v5072 = vmul.f32 %v3559, %v5034
        %v5073 = vmul.f32 %v3560, %v5034
        %v5074 = vmul.f32 %v3561, %v5034
        %v5075 = vmul.f32 %v3563, %v5034
        %v5076 = vmul.f32 %v3564, %v5034
        %v5077 = vmul.f32 %v3565, %v5034
        %v5078 = vmul.f32 %v3567, %v5034
        %v5079 = vmul.f32 %v3568, %v5034
        %v5080 = vmul.f32 %v3569, %v5034
        %v5081 = vmul.f32 %v3571, %v5034
        %v5082 = vmul.f32 %v3572, %v5034
        %v5083 = vmul.f32 %v3573, %v5034
        %v5132 = vrot.slane %v5036, 2
        %v5133 = vrot.slane %v5037, 2
        %v5134 = vsel %vm1963, %v5132, %v5133
        %v5135 = vrot.slane %v5038, 2
        %v5136 = vsel %vm1963, %v5133, %v5135
        %v5137 = vrot.slane %v5039, 2
        %v5138 = vrot.slane %v5040, 2
        %v5139 = vsel %vm1963, %v5137, %v5138
        %v5140 = vrot.slane %v5041, 2
        %v5141 = vsel %vm1963, %v5138, %v5140
        %v5142 = vrot.slane %v5042, 2
        %v5143 = vrot.slane %v5043, 2
        %v5144 = vsel %vm1963, %v5142, %v5143
        %v5145 = vrot.slane %v5044, 2
        %v5146 = vsel %vm1963, %v5143, %v5145
        %v5147 = vrot.slane %v5045, 2
        %v5148 = vrot.slane %v5046, 2
        %v5149 = vsel %vm1963, %v5147, %v5148
        %v5150 = vrot.slane %v5047, 2
        %v5151 = vsel %vm1963, %v5148, %v5150
        %v5152 = vrot.slane %v5048, 2
        %v5153 = vrot.slane %v5049, 2
        %v5154 = vsel %vm1963, %v5152, %v5153
        %v5155 = vrot.slane %v5050, 2
        %v5156 = vsel %vm1963, %v5153, %v5155
        %v5157 = vrot.slane %v5051, 2
        %v5158 = vrot.slane %v5052, 2
        %v5159 = vsel %vm1963, %v5157, %v5158
        %v5160 = vrot.slane %v5053, 2
        %v5161 = vsel %vm1963, %v5158, %v5160
        %v5162 = vrot.slane %v5054, 2
        %v5163 = vrot.slane %v5055, 2
        %v5164 = vsel %vm1963, %v5162, %v5163
        %v5165 = vrot.slane %v5056, 2
        %v5166 = vsel %vm1963, %v5163, %v5165
        %v5167 = vrot.slane %v5057, 2
        %v5168 = vrot.slane %v5058, 2
        %v5169 = vsel %vm1963, %v5167, %v5168
        %v5170 = vrot.slane %v5059, 2
        %v5171 = vsel %vm1963, %v5168, %v5170
        %v5172 = vrot.slane %v5060, 2
        %v5173 = vrot.slane %v5061, 2
        %v5174 = vsel %vm1963, %v5172, %v5173
        %v5175 = vrot.slane %v5062, 2
        %v5176 = vsel %vm1963, %v5173, %v5175
        %v5177 = vrot.slane %v5063, 2
        %v5178 = vrot.slane %v5064, 2
        %v5179 = vsel %vm1963, %v5177, %v5178
        %v5180 = vrot.slane %v5065, 2
        %v5181 = vsel %vm1963, %v5178, %v5180
        %v5182 = vrot.slane %v5066, 2
        %v5183 = vrot.slane %v5067, 2
        %v5184 = vsel %vm1963, %v5182, %v5183
        %v5185 = vrot.slane %v5068, 2
        %v5186 = vsel %vm1963, %v5183, %v5185
        %v5187 = vrot.slane %v5069, 2
        %v5188 = vrot.slane %v5070, 2
        %v5189 = vsel %vm1963, %v5187, %v5188
        %v5190 = vrot.slane %v5071, 2
        %v5191 = vsel %vm1963, %v5188, %v5190
        %v5192 = vrot.slane %v5072, 2
        %v5193 = vrot.slane %v5073, 2
        %v5194 = vsel %vm1963, %v5192, %v5193
        %v5195 = vrot.slane %v5074, 2
        %v5196 = vsel %vm1963, %v5193, %v5195
        %v5197 = vrot.slane %v5075, 2
        %v5198 = vrot.slane %v5076, 2
        %v5199 = vsel %vm1963, %v5197, %v5198
        %v5200 = vrot.slane %v5077, 2
        %v5201 = vsel %vm1963, %v5198, %v5200
        %v5202 = vrot.slane %v5078, 2
        %v5203 = vrot.slane %v5079, 2
        %v5204 = vsel %vm1963, %v5202, %v5203
        %v5205 = vrot.slane %v5080, 2
        %v5206 = vsel %vm1963, %v5203, %v5205
        %v5207 = vrot.slane %v5081, 2
        %v5208 = vrot.slane %v5082, 2
        %v5209 = vsel %vm1963, %v5207, %v5208
        %v5210 = vrot.slane %v5083, 2
        %v5211 = vsel %vm1963, %v5208, %v5210
        %v5260 = vadd.f32 %v4982, %v5132
        %v5261 = vadd.f32 %v4983, %v5134
        %v5262 = vadd.f32 %v4984, %v5136
        %v5263 = vadd.f32 %v4985, %v5137
        %v5264 = vadd.f32 %v4986, %v5139
        %v5265 = vadd.f32 %v4987, %v5141
        %v5266 = vadd.f32 %v4988, %v5142
        %v5267 = vadd.f32 %v4989, %v5144
        %v5268 = vadd.f32 %v4990, %v5146
        %v5269 = vadd.f32 %v4991, %v5147
        %v5270 = vadd.f32 %v4992, %v5149
        %v5271 = vadd.f32 %v4993, %v5151
        %v5272 = vadd.f32 %v4994, %v5152
        %v5273 = vadd.f32 %v4995, %v5154
        %v5274 = vadd.f32 %v4996, %v5156
        %v5275 = vadd.f32 %v4997, %v5157
        %v5276 = vadd.f32 %v4998, %v5159
        %v5277 = vadd.f32 %v4999, %v5161
        %v5278 = vadd.f32 %v5000, %v5162
        %v5279 = vadd.f32 %v5001, %v5164
        %v5280 = vadd.f32 %v5002, %v5166
        %v5281 = vadd.f32 %v5003, %v5167
        %v5282 = vadd.f32 %v5004, %v5169
        %v5283 = vadd.f32 %v5005, %v5171
        %v5284 = vadd.f32 %v5006, %v5172
        %v5285 = vadd.f32 %v5007, %v5174
        %v5286 = vadd.f32 %v5008, %v5176
        %v5287 = vadd.f32 %v5009, %v5177
        %v5288 = vadd.f32 %v5010, %v5179
        %v5289 = vadd.f32 %v5011, %v5181
        %v5290 = vadd.f32 %v5012, %v5182
        %v5291 = vadd.f32 %v5013, %v5184
        %v5292 = vadd.f32 %v5014, %v5186
        %v5293 = vadd.f32 %v5015, %v5187
        %v5294 = vadd.f32 %v5016, %v5189
        %v5295 = vadd.f32 %v5017, %v5191
        %v5296 = vadd.f32 %v5018, %v5192
        %v5297 = vadd.f32 %v5019, %v5194
        %v5298 = vadd.f32 %v5020, %v5196
        %v5299 = vadd.f32 %v5021, %v5197
        %v5300 = vadd.f32 %v5022, %v5199
        %v5301 = vadd.f32 %v5023, %v5201
        %v5302 = vadd.f32 %v5024, %v5202
        %v5303 = vadd.f32 %v5025, %v5204
        %v5304 = vadd.f32 %v5026, %v5206
        %v5305 = vadd.f32 %v5027, %v5207
        %v5306 = vadd.f32 %v5028, %v5209
        %v5307 = vadd.f32 %v5029, %v5211
        %v5308 = vld [vmem:[%s9] sm:$0x1]
        %v5310 = vlaneseq
        %v5311 = vshrl.u32 %v5310, 7
        %v5312 = vsub.s32 0, %v5311
        %v5313 = vrot.slane %v5308, %v5312
        %v5315 = vmul.f32 %v5260, %v5313
        %v5316 = vmul.f32 %v5261, %v5313
        %v5317 = vmul.f32 %v5262, %v5313
        %v5318 = vmul.f32 %v5263, %v5313
        %v5319 = vmul.f32 %v5264, %v5313
        %v5320 = vmul.f32 %v5265, %v5313
        %v5321 = vmul.f32 %v5266, %v5313
        %v5322 = vmul.f32 %v5267, %v5313
        %v5323 = vmul.f32 %v5268, %v5313
        %v5324 = vmul.f32 %v5269, %v5313
        %v5325 = vmul.f32 %v5270, %v5313
        %v5326 = vmul.f32 %v5271, %v5313
        %v5327 = vmul.f32 %v5272, %v5313
        %v5328 = vmul.f32 %v5273, %v5313
        %v5329 = vmul.f32 %v5274, %v5313
        %v5330 = vmul.f32 %v5275, %v5313
        %v5331 = vmul.f32 %v5276, %v5313
        %v5332 = vmul.f32 %v5277, %v5313
        %v5333 = vmul.f32 %v5278, %v5313
        %v5334 = vmul.f32 %v5279, %v5313
        %v5335 = vmul.f32 %v5280, %v5313
        %v5336 = vmul.f32 %v5281, %v5313
        %v5337 = vmul.f32 %v5282, %v5313
        %v5338 = vmul.f32 %v5283, %v5313
        %v5339 = vmul.f32 %v5284, %v5313
        %v5340 = vmul.f32 %v5285, %v5313
        %v5341 = vmul.f32 %v5286, %v5313
        %v5342 = vmul.f32 %v5287, %v5313
        %v5343 = vmul.f32 %v5288, %v5313
        %v5344 = vmul.f32 %v5289, %v5313
        %v5345 = vmul.f32 %v5290, %v5313
        %v5346 = vmul.f32 %v5291, %v5313
        %v5347 = vmul.f32 %v5292, %v5313
        %v5348 = vmul.f32 %v5293, %v5313
        %v5349 = vmul.f32 %v5294, %v5313
        %v5350 = vmul.f32 %v5295, %v5313
        %v5351 = vmul.f32 %v5296, %v5313
        %v5352 = vmul.f32 %v5297, %v5313
        %v5353 = vmul.f32 %v5298, %v5313
        %v5354 = vmul.f32 %v5299, %v5313
        %v5355 = vmul.f32 %v5300, %v5313
        %v5356 = vmul.f32 %v5301, %v5313
        %v5357 = vmul.f32 %v5302, %v5313
        %v5358 = vmul.f32 %v5303, %v5313
        %v5359 = vmul.f32 %v5304, %v5313
        %v5360 = vmul.f32 %v5305, %v5313
        %v5361 = vmul.f32 %v5306, %v5313
        %v5362 = vmul.f32 %v5307, %v5313
        %v5363 = vld [vmem:[%s10] sm:$0x1]
        %v5365 = vlaneseq
        %v5366 = vshrl.u32 %v5365, 7
        %v5367 = vsub.s32 0, %v5366
        %v5368 = vrot.slane %v5363, %v5367
        %v5370 = vadd.f32 %v5315, %v5368
        %v5371 = vadd.f32 %v5316, %v5368
        %v5372 = vadd.f32 %v5317, %v5368
        %v5373 = vadd.f32 %v5318, %v5368
        %v5374 = vadd.f32 %v5319, %v5368
        %v5375 = vadd.f32 %v5320, %v5368
        %v5376 = vadd.f32 %v5321, %v5368
        %v5377 = vadd.f32 %v5322, %v5368
        %v5378 = vadd.f32 %v5323, %v5368
        %v5379 = vadd.f32 %v5324, %v5368
        %v5380 = vadd.f32 %v5325, %v5368
        %v5381 = vadd.f32 %v5326, %v5368
        %v5382 = vadd.f32 %v5327, %v5368
        %v5383 = vadd.f32 %v5328, %v5368
        %v5384 = vadd.f32 %v5329, %v5368
        %v5385 = vadd.f32 %v5330, %v5368
        %v5386 = vadd.f32 %v5331, %v5368
        %v5387 = vadd.f32 %v5332, %v5368
        %v5388 = vadd.f32 %v5333, %v5368
        %v5389 = vadd.f32 %v5334, %v5368
        %v5390 = vadd.f32 %v5335, %v5368
        %v5391 = vadd.f32 %v5336, %v5368
        %v5392 = vadd.f32 %v5337, %v5368
        %v5393 = vadd.f32 %v5338, %v5368
        %v5394 = vadd.f32 %v5339, %v5368
        %v5395 = vadd.f32 %v5340, %v5368
        %v5396 = vadd.f32 %v5341, %v5368
        %v5397 = vadd.f32 %v5342, %v5368
        %v5398 = vadd.f32 %v5343, %v5368
        %v5399 = vadd.f32 %v5344, %v5368
        %v5400 = vadd.f32 %v5345, %v5368
        %v5401 = vadd.f32 %v5346, %v5368
        %v5402 = vadd.f32 %v5347, %v5368
        %v5403 = vadd.f32 %v5348, %v5368
        %v5404 = vadd.f32 %v5349, %v5368
        %v5405 = vadd.f32 %v5350, %v5368
        %v5406 = vadd.f32 %v5351, %v5368
        %v5407 = vadd.f32 %v5352, %v5368
        %v5408 = vadd.f32 %v5353, %v5368
        %v5409 = vadd.f32 %v5354, %v5368
        %v5410 = vadd.f32 %v5355, %v5368
        %v5411 = vadd.f32 %v5356, %v5368
        %v5412 = vadd.f32 %v5357, %v5368
        %v5413 = vadd.f32 %v5358, %v5368
        %v5414 = vadd.f32 %v5359, %v5368
        %v5415 = vadd.f32 %v5360, %v5368
        %v5416 = vadd.f32 %v5361, %v5368
        %v5417 = vadd.f32 %v5362, %v5368
        %v5418 = vmax.f32 %v5370, 0.0
        %v5419 = vmax.f32 %v5371, 0.0
        %v5420 = vmax.f32 %v5372, 0.0
        %v5421 = vmax.f32 %v5373, 0.0
        %v5422 = vmax.f32 %v5374, 0.0
        %v5423 = vmax.f32 %v5375, 0.0
        %v5424 = vmax.f32 %v5376, 0.0
        %v5425 = vmax.f32 %v5377, 0.0
        %v5426 = vmax.f32 %v5378, 0.0
        %v5427 = vmax.f32 %v5379, 0.0
        %v5428 = vmax.f32 %v5380, 0.0
        %v5429 = vmax.f32 %v5381, 0.0
        %v5430 = vmax.f32 %v5382, 0.0
        %v5431 = vmax.f32 %v5383, 0.0
        %v5432 = vmax.f32 %v5384, 0.0
        %v5433 = vmax.f32 %v5385, 0.0
        %v5434 = vmax.f32 %v5386, 0.0
        %v5435 = vmax.f32 %v5387, 0.0
        %v5436 = vmax.f32 %v5388, 0.0
        %v5437 = vmax.f32 %v5389, 0.0
        %v5438 = vmax.f32 %v5390, 0.0
        %v5439 = vmax.f32 %v5391, 0.0
        %v5440 = vmax.f32 %v5392, 0.0
        %v5441 = vmax.f32 %v5393, 0.0
        %v5442 = vmax.f32 %v5394, 0.0
        %v5443 = vmax.f32 %v5395, 0.0
        %v5444 = vmax.f32 %v5396, 0.0
        %v5445 = vmax.f32 %v5397, 0.0
        %v5446 = vmax.f32 %v5398, 0.0
        %v5447 = vmax.f32 %v5399, 0.0
        %v5448 = vmax.f32 %v5400, 0.0
        %v5449 = vmax.f32 %v5401, 0.0
        %v5450 = vmax.f32 %v5402, 0.0
        %v5451 = vmax.f32 %v5403, 0.0
        %v5452 = vmax.f32 %v5404, 0.0
        %v5453 = vmax.f32 %v5405, 0.0
        %v5454 = vmax.f32 %v5406, 0.0
        %v5455 = vmax.f32 %v5407, 0.0
        %v5456 = vmax.f32 %v5408, 0.0
        %v5457 = vmax.f32 %v5409, 0.0
        %v5458 = vmax.f32 %v5410, 0.0
        %v5459 = vmax.f32 %v5411, 0.0
        %v5460 = vmax.f32 %v5412, 0.0
        %v5461 = vmax.f32 %v5413, 0.0
        %v5462 = vmax.f32 %v5414, 0.0
        %v5463 = vmax.f32 %v5415, 0.0
        %v5464 = vmax.f32 %v5416, 0.0
        %v5465 = vmax.f32 %v5417, 0.0
        %v5514 = vrot.slane %v5418, 7
        %v5515 = vrot.slane %v5419, 7
        %v5516 = vsel %vm2902, %v5514, %v5515
        %v5517 = vrot.slane %v5420, 7
        %v5518 = vsel %vm2902, %v5515, %v5517
        %v5519 = vrot.slane %v5421, 7
        %v5520 = vrot.slane %v5422, 7
        %v5521 = vsel %vm2902, %v5519, %v5520
        %v5522 = vrot.slane %v5423, 7
        %v5523 = vsel %vm2902, %v5520, %v5522
        %v5524 = vrot.slane %v5424, 7
        %v5525 = vrot.slane %v5425, 7
        %v5526 = vsel %vm2902, %v5524, %v5525
        %v5527 = vrot.slane %v5426, 7
        %v5528 = vsel %vm2902, %v5525, %v5527
        %v5529 = vrot.slane %v5427, 7
        %v5530 = vrot.slane %v5428, 7
        %v5531 = vsel %vm2902, %v5529, %v5530
        %v5532 = vrot.slane %v5429, 7
        %v5533 = vsel %vm2902, %v5530, %v5532
        %v5534 = vrot.slane %v5430, 7
        %v5535 = vrot.slane %v5431, 7
        %v5536 = vsel %vm2902, %v5534, %v5535
        %v5537 = vrot.slane %v5432, 7
        %v5538 = vsel %vm2902, %v5535, %v5537
        %v5539 = vrot.slane %v5433, 7
        %v5540 = vrot.slane %v5434, 7
        %v5541 = vsel %vm2902, %v5539, %v5540
        %v5542 = vrot.slane %v5435, 7
        %v5543 = vsel %vm2902, %v5540, %v5542
        %v5544 = vrot.slane %v5436, 7
        %v5545 = vrot.slane %v5437, 7
        %v5546 = vsel %vm2902, %v5544, %v5545
        %v5547 = vrot.slane %v5438, 7
        %v5548 = vsel %vm2902, %v5545, %v5547
        %v5549 = vrot.slane %v5439, 7
        %v5550 = vrot.slane %v5440, 7
        %v5551 = vsel %vm2902, %v5549, %v5550
        %v5552 = vrot.slane %v5441, 7
        %v5553 = vsel %vm2902, %v5550, %v5552
        %v5554 = vrot.slane %v5442, 7
        %v5555 = vrot.slane %v5443, 7
        %v5556 = vsel %vm2902, %v5554, %v5555
        %v5557 = vrot.slane %v5444, 7
        %v5558 = vsel %vm2902, %v5555, %v5557
        %v5559 = vrot.slane %v5445, 7
        %v5560 = vrot.slane %v5446, 7
        %v5561 = vsel %vm2902, %v5559, %v5560
        %v5562 = vrot.slane %v5447, 7
        %v5563 = vsel %vm2902, %v5560, %v5562
        %v5564 = vrot.slane %v5448, 7
        %v5565 = vrot.slane %v5449, 7
        %v5566 = vsel %vm2902, %v5564, %v5565
        %v5567 = vrot.slane %v5450, 7
        %v5568 = vsel %vm2902, %v5565, %v5567
        %v5569 = vrot.slane %v5451, 7
        %v5570 = vrot.slane %v5452, 7
        %v5571 = vsel %vm2902, %v5569, %v5570
        %v5572 = vrot.slane %v5453, 7
        %v5573 = vsel %vm2902, %v5570, %v5572
        %v5574 = vrot.slane %v5454, 7
        %v5575 = vrot.slane %v5455, 7
        %v5576 = vsel %vm2902, %v5574, %v5575
        %v5577 = vrot.slane %v5456, 7
        %v5578 = vsel %vm2902, %v5575, %v5577
        %v5579 = vrot.slane %v5457, 7
        %v5580 = vrot.slane %v5458, 7
        %v5581 = vsel %vm2902, %v5579, %v5580
        %v5582 = vrot.slane %v5459, 7
        %v5583 = vsel %vm2902, %v5580, %v5582
        %v5584 = vrot.slane %v5460, 7
        %v5585 = vrot.slane %v5461, 7
        %v5586 = vsel %vm2902, %v5584, %v5585
        %v5587 = vrot.slane %v5462, 7
        %v5588 = vsel %vm2902, %v5585, %v5587
        %v5589 = vrot.slane %v5463, 7
        %v5590 = vrot.slane %v5464, 7
        %v5591 = vsel %vm2902, %v5589, %v5590
        %v5592 = vrot.slane %v5465, 7
        %v5593 = vsel %vm2902, %v5590, %v5592
        %v5594 = vld [vmem:[%s11] sm:$0xff]
        %v5595 = vsel %vm3396, %v5516, 0
        %v5597 = vsel %vm3396, %v5518, 0
        %v5599 = vsel %vm3396, %v5521, 0
        %v5601 = vsel %vm3396, %v5523, 0
        %v5603 = vsel %vm3396, %v5526, 0
        %v5605 = vsel %vm3396, %v5528, 0
        %v5607 = vsel %vm3396, %v5531, 0
        %v5609 = vsel %vm3396, %v5533, 0
        %v5611 = vsel %vm3396, %v5536, 0
        %v5613 = vsel %vm3396, %v5538, 0
        %v5615 = vsel %vm3396, %v5541, 0
        %v5617 = vsel %vm3396, %v5543, 0
        %v5619 = vsel %vm3396, %v5546, 0
        %v5621 = vsel %vm3396, %v5548, 0
        %v5623 = vsel %vm3396, %v5551, 0
        %v5625 = vsel %vm3396, %v5553, 0
        %v5627 = vsel %vm3396, %v5556, 0
        %v5629 = vsel %vm3396, %v5558, 0
        %v5631 = vsel %vm3396, %v5561, 0
        %v5633 = vsel %vm3396, %v5563, 0
        %v5635 = vsel %vm3396, %v5566, 0
        %v5637 = vsel %vm3396, %v5568, 0
        %v5639 = vsel %vm3396, %v5571, 0
        %v5641 = vsel %vm3396, %v5573, 0
        %v5643 = vsel %vm3396, %v5576, 0
        %v5645 = vsel %vm3396, %v5578, 0
        %v5647 = vsel %vm3396, %v5581, 0
        %v5649 = vsel %vm3396, %v5583, 0
        %v5651 = vsel %vm3396, %v5586, 0
        %v5653 = vsel %vm3396, %v5588, 0
        %v5655 = vsel %vm3396, %v5591, 0
        %v5657 = vsel %vm3396, %v5593, 0
        %5659 = vmatprep.subr.mxu0 0.0
        %5660 = vmatpush1.msra.mxu0 0.0
        %5661 = vmatprep.subr.mxu0 0.0
        %5662 = vmatpush1.msra.mxu0 0.0
        %5663 = vmatprep.subr.mxu0 0.0
        %5664 = vmatpush1.msra.mxu0 0.0
        %5665 = vmatprep.subr.mxu0 0.0
        %5666 = vmatpush1.msra.mxu0 0.0
        %5667 = vmatprep.subr.mxu0 0.0
        %5668 = vmatpush1.msra.mxu0 0.0
        %5669 = vmatprep.subr.mxu0 0.0
        %5670 = vmatpush1.msra.mxu0 0.0
        %5671 = vmatprep.subr.mxu0 0.0
        %5672 = vmatpush1.msra.mxu0 0.0
        %5673 = vmatprep.subr.mxu0 0.0
        %5674 = vmatpush1.msra.mxu0 0.0
        %5675 = vmatprep.subr.mxu0 0.0
        %5676 = vmatpush1.msra.mxu0 0.0
        %5677 = vmatprep.subr.mxu0 0.0
        %5678 = vmatpush1.msra.mxu0 0.0
        %5679 = vmatprep.subr.mxu0 0.0
        %5680 = vmatpush1.msra.mxu0 0.0
        %5681 = vmatprep.subr.mxu0 0.0
        %5682 = vmatpush1.msra.mxu0 0.0
        %5683 = vmatprep.subr.mxu0 0.0
        %5684 = vmatpush1.msra.mxu0 0.0
        %5685 = vmatprep.subr.mxu0 0.0
        %5686 = vmatpush1.msra.mxu0 0.0
        %5687 = vmatprep.subr.mxu0 0.0
        %5688 = vmatpush1.msra.mxu0 0.0
        %5689 = vmatprep.subr.mxu0 0.0
        %5690 = vmatpush1.msra.mxu0 %v5594
        %5691 = vmatprep.subr.mxu0 0.0
        %5692 = vmatpush2.msra.mxu0 0.0
        %5693 = vmatprep.subr.mxu0 0.0
        %5694 = vmatpush2.msra.mxu0 0.0
        %5695 = vmatprep.subr.mxu0 0.0
        %5696 = vmatpush2.msra.mxu0 0.0
        %5697 = vmatprep.subr.mxu0 0.0
        %5698 = vmatpush2.msra.mxu0 0.0
        %5699 = vmatprep.subr.mxu0 0.0
        %5700 = vmatpush2.msra.mxu0 0.0
        %5701 = vmatprep.subr.mxu0 0.0
        %5702 = vmatpush2.msra.mxu0 0.0
        %5703 = vmatprep.subr.mxu0 0.0
        %5704 = vmatpush2.msra.mxu0 0.0
        %5705 = vmatprep.subr.mxu0 0.0
        %5706 = vmatpush2.msra.mxu0 0.0
        %5707 = vmatprep.subr.mxu0 0.0
        %5708 = vmatpush2.msra.mxu0 0.0
        %5709 = vmatprep.subr.mxu0 0.0
        %5710 = vmatpush2.msra.mxu0 0.0
        %5711 = vmatprep.subr.mxu0 0.0
        %5712 = vmatpush2.msra.mxu0 0.0
        %5713 = vmatprep.subr.mxu0 0.0
        %5714 = vmatpush2.msra.mxu0 0.0
        %5715 = vmatprep.subr.mxu0 0.0
        %5716 = vmatpush2.msra.mxu0 0.0
        %5717 = vmatprep.subr.mxu0 0.0
        %5718 = vmatpush2.msra.mxu0 0.0
        %5719 = vmatprep.subr.mxu0 0.0
        %5720 = vmatpush2.msra.mxu0 0.0
        %5721 = vmatprep.subr.mxu0 0.0
        %5722 = vmatpush2.msra.mxu0 0.0
        %5723 = vmatprep.mubr.f32.mxu0 0.0
        %5724 = vmatmul.mubr.f32.gmra.mxu0 %v5595
        %v5725 = vpop.f32.mrf.mxu0
        %v5726 = vadd.f32 0.0, %v5725
        %v5727 = vpop.f32.mrf.mxu0
        %5728 = vmatprep.mubr.f32.mxu0 0.0
        %5729 = vmatmul.mubr.f32.gmra.mxu0 %v5597
        %v5730 = vpop.f32.mrf.mxu0
        %v5731 = vadd.f32 0.0, %v5730
        %v5732 = vpop.f32.mrf.mxu0
        %5733 = vmatprep.mubr.f32.mxu0 0.0
        %5734 = vmatmul.mubr.f32.gmra.mxu0 %v5599
        %v5735 = vpop.f32.mrf.mxu0
        %v5736 = vadd.f32 0.0, %v5735
        %v5737 = vpop.f32.mrf.mxu0
        %5738 = vmatprep.mubr.f32.mxu0 0.0
        %5739 = vmatmul.mubr.f32.gmra.mxu0 %v5601
        %v5740 = vpop.f32.mrf.mxu0
        %v5741 = vadd.f32 0.0, %v5740
        %v5742 = vpop.f32.mrf.mxu0
        %5743 = vmatprep.mubr.f32.mxu0 0.0
        %5744 = vmatmul.mubr.f32.gmra.mxu0 %v5603
        %v5745 = vpop.f32.mrf.mxu0
        %v5746 = vadd.f32 0.0, %v5745
        %v5747 = vpop.f32.mrf.mxu0
        %5748 = vmatprep.mubr.f32.mxu0 0.0
        %5749 = vmatmul.mubr.f32.gmra.mxu0 %v5605
        %v5750 = vpop.f32.mrf.mxu0
        %v5751 = vadd.f32 0.0, %v5750
        %v5752 = vpop.f32.mrf.mxu0
        %5753 = vmatprep.mubr.f32.mxu0 0.0
        %5754 = vmatmul.mubr.f32.gmra.mxu0 %v5607
        %v5755 = vpop.f32.mrf.mxu0
        %v5756 = vadd.f32 0.0, %v5755
        %v5757 = vpop.f32.mrf.mxu0
        %5758 = vmatprep.mubr.f32.mxu0 0.0
        %5759 = vmatmul.mubr.f32.gmra.mxu0 %v5609
        %v5760 = vpop.f32.mrf.mxu0
        %v5761 = vadd.f32 0.0, %v5760
        %v5762 = vpop.f32.mrf.mxu0
        %5763 = vmatprep.mubr.f32.mxu0 0.0
        %5764 = vmatmul.mubr.f32.gmra.mxu0 %v5611
        %v5765 = vpop.f32.mrf.mxu0
        %v5766 = vadd.f32 0.0, %v5765
        %v5767 = vpop.f32.mrf.mxu0
        %5768 = vmatprep.mubr.f32.mxu0 0.0
        %5769 = vmatmul.mubr.f32.gmra.mxu0 %v5613
        %v5770 = vpop.f32.mrf.mxu0
        %v5771 = vadd.f32 0.0, %v5770
        %v5772 = vpop.f32.mrf.mxu0
        %5773 = vmatprep.mubr.f32.mxu0 0.0
        %5774 = vmatmul.mubr.f32.gmra.mxu0 %v5615
        %v5775 = vpop.f32.mrf.mxu0
        %v5776 = vadd.f32 0.0, %v5775
        %v5777 = vpop.f32.mrf.mxu0
        %5778 = vmatprep.mubr.f32.mxu0 0.0
        %5779 = vmatmul.mubr.f32.gmra.mxu0 %v5617
        %v5780 = vpop.f32.mrf.mxu0
        %v5781 = vadd.f32 0.0, %v5780
        %v5782 = vpop.f32.mrf.mxu0
        %5783 = vmatprep.mubr.f32.mxu0 0.0
        %5784 = vmatmul.mubr.f32.gmra.mxu0 %v5619
        %v5785 = vpop.f32.mrf.mxu0
        %v5786 = vadd.f32 0.0, %v5785
        %v5787 = vpop.f32.mrf.mxu0
        %5788 = vmatprep.mubr.f32.mxu0 0.0
        %5789 = vmatmul.mubr.f32.gmra.mxu0 %v5621
        %v5790 = vpop.f32.mrf.mxu0
        %v5791 = vadd.f32 0.0, %v5790
        %v5792 = vpop.f32.mrf.mxu0
        %5793 = vmatprep.mubr.f32.mxu0 0.0
        %5794 = vmatmul.mubr.f32.gmra.mxu0 %v5623
        %v5795 = vpop.f32.mrf.mxu0
        %v5796 = vadd.f32 0.0, %v5795
        %v5797 = vpop.f32.mrf.mxu0
        %5798 = vmatprep.mubr.f32.mxu0 0.0
        %5799 = vmatmul.mubr.f32.gmra.mxu0 %v5625
        %v5800 = vpop.f32.mrf.mxu0
        %v5801 = vadd.f32 0.0, %v5800
        %v5802 = vpop.f32.mrf.mxu0
        %5803 = vmatprep.mubr.f32.mxu0 0.0
        %5804 = vmatmul.mubr.f32.gmra.mxu0 %v5627
        %v5805 = vpop.f32.mrf.mxu0
        %v5806 = vadd.f32 0.0, %v5805
        %v5807 = vpop.f32.mrf.mxu0
        %5808 = vmatprep.mubr.f32.mxu0 0.0
        %5809 = vmatmul.mubr.f32.gmra.mxu0 %v5629
        %v5810 = vpop.f32.mrf.mxu0
        %v5811 = vadd.f32 0.0, %v5810
        %v5812 = vpop.f32.mrf.mxu0
        %5813 = vmatprep.mubr.f32.mxu0 0.0
        %5814 = vmatmul.mubr.f32.gmra.mxu0 %v5631
        %v5815 = vpop.f32.mrf.mxu0
        %v5816 = vadd.f32 0.0, %v5815
        %v5817 = vpop.f32.mrf.mxu0
        %5818 = vmatprep.mubr.f32.mxu0 0.0
        %5819 = vmatmul.mubr.f32.gmra.mxu0 %v5633
        %v5820 = vpop.f32.mrf.mxu0
        %v5821 = vadd.f32 0.0, %v5820
        %v5822 = vpop.f32.mrf.mxu0
        %5823 = vmatprep.mubr.f32.mxu0 0.0
        %5824 = vmatmul.mubr.f32.gmra.mxu0 %v5635
        %v5825 = vpop.f32.mrf.mxu0
        %v5826 = vadd.f32 0.0, %v5825
        %v5827 = vpop.f32.mrf.mxu0
        %5828 = vmatprep.mubr.f32.mxu0 0.0
        %5829 = vmatmul.mubr.f32.gmra.mxu0 %v5637
        %v5830 = vpop.f32.mrf.mxu0
        %v5831 = vadd.f32 0.0, %v5830
        %v5832 = vpop.f32.mrf.mxu0
        %5833 = vmatprep.mubr.f32.mxu0 0.0
        %5834 = vmatmul.mubr.f32.gmra.mxu0 %v5639
        %v5835 = vpop.f32.mrf.mxu0
        %v5836 = vadd.f32 0.0, %v5835
        %v5837 = vpop.f32.mrf.mxu0
        %5838 = vmatprep.mubr.f32.mxu0 0.0
        %5839 = vmatmul.mubr.f32.gmra.mxu0 %v5641
        %v5840 = vpop.f32.mrf.mxu0
        %v5841 = vadd.f32 0.0, %v5840
        %v5842 = vpop.f32.mrf.mxu0
        %5843 = vmatprep.mubr.f32.mxu0 0.0
        %5844 = vmatmul.mubr.f32.gmra.mxu0 %v5643
        %v5845 = vpop.f32.mrf.mxu0
        %v5846 = vadd.f32 0.0, %v5845
        %v5847 = vpop.f32.mrf.mxu0
        %5848 = vmatprep.mubr.f32.mxu0 0.0
        %5849 = vmatmul.mubr.f32.gmra.mxu0 %v5645
        %v5850 = vpop.f32.mrf.mxu0
        %v5851 = vadd.f32 0.0, %v5850
        %v5852 = vpop.f32.mrf.mxu0
        %5853 = vmatprep.mubr.f32.mxu0 0.0
        %5854 = vmatmul.mubr.f32.gmra.mxu0 %v5647
        %v5855 = vpop.f32.mrf.mxu0
        %v5856 = vadd.f32 0.0, %v5855
        %v5857 = vpop.f32.mrf.mxu0
        %5858 = vmatprep.mubr.f32.mxu0 0.0
        %5859 = vmatmul.mubr.f32.gmra.mxu0 %v5649
        %v5860 = vpop.f32.mrf.mxu0
        %v5861 = vadd.f32 0.0, %v5860
        %v5862 = vpop.f32.mrf.mxu0
        %5863 = vmatprep.mubr.f32.mxu0 0.0
        %5864 = vmatmul.mubr.f32.gmra.mxu0 %v5651
        %v5865 = vpop.f32.mrf.mxu0
        %v5866 = vadd.f32 0.0, %v5865
        %v5867 = vpop.f32.mrf.mxu0
        %5868 = vmatprep.mubr.f32.mxu0 0.0
        %5869 = vmatmul.mubr.f32.gmra.mxu0 %v5653
        %v5870 = vpop.f32.mrf.mxu0
        %v5871 = vadd.f32 0.0, %v5870
        %v5872 = vpop.f32.mrf.mxu0
        %5873 = vmatprep.mubr.f32.mxu0 0.0
        %5874 = vmatmul.mubr.f32.gmra.mxu0 %v5655
        %v5875 = vpop.f32.mrf.mxu0
        %v5876 = vadd.f32 0.0, %v5875
        %v5877 = vpop.f32.mrf.mxu0
        %5878 = vmatprep.mubr.f32.mxu0 0.0
        %5879 = vmatmul.mubr.f32.gmra.mxu0 %v5657
        %v5880 = vpop.f32.mrf.mxu0
        %v5881 = vadd.f32 0.0, %v5880
        %v5882 = vpop.f32.mrf.mxu0
        %5883 = vdwg.mxu0
        %v5884 = vld [vmem:[%s12] sm:$0x1]
        %v5886 = vlaneseq
        %v5887 = vshrl.u32 %v5886, 7
        %v5888 = vsub.s32 0, %v5887
        %v5889 = vrot.slane %v5884, %v5888
        %v5891 = vmul.f32 %v5726, %v5889
        %v5892 = vmul.f32 %v5731, %v5889
        %v5893 = vmul.f32 %v5736, %v5889
        %v5894 = vmul.f32 %v5741, %v5889
        %v5895 = vmul.f32 %v5746, %v5889
        %v5896 = vmul.f32 %v5751, %v5889
        %v5897 = vmul.f32 %v5756, %v5889
        %v5898 = vmul.f32 %v5761, %v5889
        %v5899 = vmul.f32 %v5766, %v5889
        %v5900 = vmul.f32 %v5771, %v5889
        %v5901 = vmul.f32 %v5776, %v5889
        %v5902 = vmul.f32 %v5781, %v5889
        %v5903 = vmul.f32 %v5786, %v5889
        %v5904 = vmul.f32 %v5791, %v5889
        %v5905 = vmul.f32 %v5796, %v5889
        %v5906 = vmul.f32 %v5801, %v5889
        %v5907 = vmul.f32 %v5806, %v5889
        %v5908 = vmul.f32 %v5811, %v5889
        %v5909 = vmul.f32 %v5816, %v5889
        %v5910 = vmul.f32 %v5821, %v5889
        %v5911 = vmul.f32 %v5826, %v5889
        %v5912 = vmul.f32 %v5831, %v5889
        %v5913 = vmul.f32 %v5836, %v5889
        %v5914 = vmul.f32 %v5841, %v5889
        %v5915 = vmul.f32 %v5846, %v5889
        %v5916 = vmul.f32 %v5851, %v5889
        %v5917 = vmul.f32 %v5856, %v5889
        %v5918 = vmul.f32 %v5861, %v5889
        %v5919 = vmul.f32 %v5866, %v5889
        %v5920 = vmul.f32 %v5871, %v5889
        %v5921 = vmul.f32 %v5876, %v5889
        %v5922 = vmul.f32 %v5881, %v5889
        %v5923 = vld [vmem:[%s13] sm:$0x1]
        %v5925 = vlaneseq
        %v5926 = vshrl.u32 %v5925, 7
        %v5927 = vsub.s32 0, %v5926
        %v5928 = vrot.slane %v5923, %v5927
        %v5930 = vadd.f32 %v5891, %v5928
        %v5931 = vadd.f32 %v5892, %v5928
        %v5932 = vadd.f32 %v5893, %v5928
        %v5933 = vadd.f32 %v5894, %v5928
        %v5934 = vadd.f32 %v5895, %v5928
        %v5935 = vadd.f32 %v5896, %v5928
        %v5936 = vadd.f32 %v5897, %v5928
        %v5937 = vadd.f32 %v5898, %v5928
        %v5938 = vadd.f32 %v5899, %v5928
        %v5939 = vadd.f32 %v5900, %v5928
        %v5940 = vadd.f32 %v5901, %v5928
        %v5941 = vadd.f32 %v5902, %v5928
        %v5942 = vadd.f32 %v5903, %v5928
        %v5943 = vadd.f32 %v5904, %v5928
        %v5944 = vadd.f32 %v5905, %v5928
        %v5945 = vadd.f32 %v5906, %v5928
        %v5946 = vadd.f32 %v5907, %v5928
        %v5947 = vadd.f32 %v5908, %v5928
        %v5948 = vadd.f32 %v5909, %v5928
        %v5949 = vadd.f32 %v5910, %v5928
        %v5950 = vadd.f32 %v5911, %v5928
        %v5951 = vadd.f32 %v5912, %v5928
        %v5952 = vadd.f32 %v5913, %v5928
        %v5953 = vadd.f32 %v5914, %v5928
        %v5954 = vadd.f32 %v5915, %v5928
        %v5955 = vadd.f32 %v5916, %v5928
        %v5956 = vadd.f32 %v5917, %v5928
        %v5957 = vadd.f32 %v5918, %v5928
        %v5958 = vadd.f32 %v5919, %v5928
        %v5959 = vadd.f32 %v5920, %v5928
        %v5960 = vadd.f32 %v5921, %v5928
        %v5961 = vadd.f32 %v5922, %v5928
        %v5962 = vmax.f32 %v5930, 0.0
        %v5963 = vmax.f32 %v5931, 0.0
        %v5964 = vmax.f32 %v5932, 0.0
        %v5965 = vmax.f32 %v5933, 0.0
        %v5966 = vmax.f32 %v5934, 0.0
        %v5967 = vmax.f32 %v5935, 0.0
        %v5968 = vmax.f32 %v5936, 0.0
        %v5969 = vmax.f32 %v5937, 0.0
        %v5970 = vmax.f32 %v5938, 0.0
        %v5971 = vmax.f32 %v5939, 0.0
        %v5972 = vmax.f32 %v5940, 0.0
        %v5973 = vmax.f32 %v5941, 0.0
        %v5974 = vmax.f32 %v5942, 0.0
        %v5975 = vmax.f32 %v5943, 0.0
        %v5976 = vmax.f32 %v5944, 0.0
        %v5977 = vmax.f32 %v5945, 0.0
        %v5978 = vmax.f32 %v5946, 0.0
        %v5979 = vmax.f32 %v5947, 0.0
        %v5980 = vmax.f32 %v5948, 0.0
        %v5981 = vmax.f32 %v5949, 0.0
        %v5982 = vmax.f32 %v5950, 0.0
        %v5983 = vmax.f32 %v5951, 0.0
        %v5984 = vmax.f32 %v5952, 0.0
        %v5985 = vmax.f32 %v5953, 0.0
        %v5986 = vmax.f32 %v5954, 0.0
        %v5987 = vmax.f32 %v5955, 0.0
        %v5988 = vmax.f32 %v5956, 0.0
        %v5989 = vmax.f32 %v5957, 0.0
        %v5990 = vmax.f32 %v5958, 0.0
        %v5991 = vmax.f32 %v5959, 0.0
        %v5992 = vmax.f32 %v5960, 0.0
        %v5993 = vmax.f32 %v5961, 0.0
        %v5994 = vld [vmem:[%s14] sm:$0x1]
        %v5995 = vld [vmem:[%s14 + $0x1] sm:$0x1]
        %v5996 = vld [vmem:[%s14 + $0x2] sm:$0x1]
        %v5997 = vld [vmem:[%s14 + $0x3] sm:$0x1]
        %v5998 = vld [vmem:[%s14 + $0x4] sm:$0x1]
        %v5999 = vld [vmem:[%s14 + $0x5] sm:$0x1]
        %v6000 = vld [vmem:[%s14 + $0x6] sm:$0x1]
        %v6001 = vld [vmem:[%s14 + $0x7] sm:$0x1]
        %v6002 = vld [vmem:[%s14 + $0x8] sm:$0x1]
        %6003 = vst.msk [vmem:[#allocation4] sm:$0xff] %vm3396, 0.0
        %6004 = vst.msk [vmem:[#allocation4 + $0x8] sm:$0xff] %vm3396, 0.0
        %6005 = vst.msk [vmem:[#allocation4 + $0x10] sm:$0xff] %vm3396, 0.0
        %6006 = vst.msk [vmem:[#allocation4 + $0x18] sm:$0xff] %vm3396, 0.0
        %6007 = vst.msk [vmem:[#allocation4 + $0x20] sm:$0xff] %vm3396, 0.0
        %6008 = vst.msk [vmem:[#allocation4 + $0x28] sm:$0xff] %vm3396, 0.0
        %6009 = vst.msk [vmem:[#allocation4 + $0x30] sm:$0xff] %vm3396, 0.0
        %6010 = vst.msk [vmem:[#allocation4 + $0x38] sm:$0xff] %vm3396, 0.0
        %6011 = vst.msk [vmem:[#allocation4 + $0x40] sm:$0xff] %vm3396, 0.0
        %6012 = vst.msk [vmem:[#allocation4 + $0x48] sm:$0xff] %vm3396, 0.0
        %6013 = vst.msk [vmem:[#allocation4 + $0x50] sm:$0xff] %vm3396, 0.0
        %6014 = vst.msk [vmem:[#allocation4 + $0x58] sm:$0xff] %vm3396, 0.0
        %6015 = vst.msk [vmem:[#allocation4 + $0x60] sm:$0xff] %vm3396, 0.0
        %6016 = vst.msk [vmem:[#allocation4 + $0x68] sm:$0xff] %vm3396, 0.0
        %6017 = vst.msk [vmem:[#allocation4 + $0x70] sm:$0xff] %vm3396, 0.0
        %6018 = vst.msk [vmem:[#allocation4 + $0x78] sm:$0xff] %vm3396, 0.0
        %6019 = vst.msk [vmem:[#allocation4 + $0x80] sm:$0xff] %vm3396, 0.0
        %6020 = vst.msk [vmem:[#allocation4 + $0x88] sm:$0xff] %vm3396, 0.0
        %6021 = vst.msk [vmem:[#allocation4 + $0x90] sm:$0xff] %vm3396, 0.0
        %6022 = vst.msk [vmem:[#allocation4 + $0x98] sm:$0xff] %vm3396, 0.0
        %6023 = vst.msk [vmem:[#allocation4 + $0xa0] sm:$0xff] %vm3396, 0.0
        %6024 = vst.msk [vmem:[#allocation4 + $0xa8] sm:$0xff] %vm3396, 0.0
        %6025 = vst.msk [vmem:[#allocation4 + $0xb0] sm:$0xff] %vm3396, 0.0
        %6026 = vst.msk [vmem:[#allocation4 + $0xb8] sm:$0xff] %vm3396, 0.0
        %6027 = vst.msk [vmem:[#allocation4 + $0xc0] sm:$0xff] %vm3396, 0.0
        %6028 = vst.msk [vmem:[#allocation4 + $0xc8] sm:$0xff] %vm3396, 0.0
        %6029 = vst.msk [vmem:[#allocation4 + $0xd0] sm:$0xff] %vm3396, 0.0
        %6030 = vst.msk [vmem:[#allocation4 + $0xd8] sm:$0xff] %vm3396, 0.0
        %6031 = vst.msk [vmem:[#allocation4 + $0xe0] sm:$0xff] %vm3396, 0.0
        %6032 = vst.msk [vmem:[#allocation4 + $0xe8] sm:$0xff] %vm3396, 0.0
        %6033 = vst.msk [vmem:[#allocation4 + $0xf0] sm:$0xff] %vm3396, 0.0
        %6034 = vst.msk [vmem:[#allocation4 + $0xf8] sm:$0xff] %vm3396, 0.0
        %6035 = vst.msk [vmem:[#allocation4 + $0x100] sm:$0xff] %vm3396, 0.0
        %6036 = vst.msk [vmem:[#allocation4 + $0x108] sm:$0xff] %vm3396, 0.0
        %6037 = vst.msk [vmem:[#allocation4 + $0x110] sm:$0xff] %vm3396, 0.0
        %6038 = vst.msk [vmem:[#allocation4 + $0x118] sm:$0xff] %vm3396, 0.0
        %6039 = vst.msk [vmem:[#allocation4 + $0x120] sm:$0xff] %vm3396, 0.0
        %6040 = vst.msk [vmem:[#allocation4 + $0x128] sm:$0xff] %vm3396, 0.0
        %6041 = vst.msk [vmem:[#allocation4 + $0x130] sm:$0xff] %vm3396, 0.0
        %6042 = vst.msk [vmem:[#allocation4 + $0x138] sm:$0xff] %vm3396, 0.0
        %6043 = vst.msk [vmem:[#allocation4 + $0x140] sm:$0xff] %vm3396, 0.0
        %6044 = vst.msk [vmem:[#allocation4 + $0x148] sm:$0xff] %vm3396, 0.0
        %6045 = vst.msk [vmem:[#allocation4 + $0x150] sm:$0xff] %vm3396, 0.0
        %6046 = vst.msk [vmem:[#allocation4 + $0x158] sm:$0xff] %vm3396, 0.0
        %6047 = vst.msk [vmem:[#allocation4 + $0x160] sm:$0xff] %vm3396, 0.0
        %6048 = vst.msk [vmem:[#allocation4 + $0x168] sm:$0xff] %vm3396, 0.0
        %6049 = vst.msk [vmem:[#allocation4 + $0x170] sm:$0xff] %vm3396, 0.0
        %6050 = vst.msk [vmem:[#allocation4 + $0x178] sm:$0xff] %vm3396, 0.0
        %6051 = vst.msk [vmem:[#allocation4 + $0x180] sm:$0xff] %vm3396, 0.0
        %6052 = vst.msk [vmem:[#allocation4 + $0x188] sm:$0xff] %vm3396, 0.0
        %6053 = vst.msk [vmem:[#allocation4 + $0x190] sm:$0xff] %vm3396, 0.0
        %6054 = vst.msk [vmem:[#allocation4 + $0x198] sm:$0xff] %vm3396, 0.0
        %6055 = vst.msk [vmem:[#allocation4 + $0x1a0] sm:$0xff] %vm3396, 0.0
        %6056 = vst.msk [vmem:[#allocation4 + $0x1a8] sm:$0xff] %vm3396, 0.0
        %6057 = vst.msk [vmem:[#allocation4 + $0x1b0] sm:$0xff] %vm3396, 0.0
        %6058 = vst.msk [vmem:[#allocation4 + $0x1b8] sm:$0xff] %vm3396, 0.0
        %6059 = vst.msk [vmem:[#allocation4 + $0x1c0] sm:$0xff] %vm3396, 0.0
        %6060 = vst.msk [vmem:[#allocation4 + $0x1c8] sm:$0xff] %vm3396, 0.0
        %6061 = vst.msk [vmem:[#allocation4 + $0x1d0] sm:$0xff] %vm3396, 0.0
        %6062 = vst.msk [vmem:[#allocation4 + $0x1d8] sm:$0xff] %vm3396, 0.0
        %6063 = vst.msk [vmem:[#allocation4 + $0x1e0] sm:$0xff] %vm3396, 0.0
        %6064 = vst.msk [vmem:[#allocation4 + $0x1e8] sm:$0xff] %vm3396, 0.0
        %6065 = vst.msk [vmem:[#allocation4 + $0x1f0] sm:$0xff] %vm3396, 0.0
        %6066 = vst.msk [vmem:[#allocation4 + $0x1f8] sm:$0xff] %vm3396, 0.0
        %6067 = vst.msk [vmem:[#allocation4 + $0x200] sm:$0xff] %vm3396, 0.0
        %6068 = vst.msk [vmem:[#allocation4 + $0x208] sm:$0xff] %vm3396, 0.0
        %6069 = vst.msk [vmem:[#allocation4 + $0x210] sm:$0xff] %vm3396, 0.0
        %6070 = vst.msk [vmem:[#allocation4 + $0x218] sm:$0xff] %vm3396, 0.0
        %6071 = vst.msk [vmem:[#allocation4 + $0x220] sm:$0xff] %vm3396, 0.0
        %6072 = vst.msk [vmem:[#allocation4 + $0x228] sm:$0xff] %vm3396, 0.0
        %6073 = vst.msk [vmem:[#allocation4 + $0x230] sm:$0xff] %vm3396, 0.0
        %6074 = vst.msk [vmem:[#allocation4 + $0x238] sm:$0xff] %vm3396, 0.0
        %s6075 = scalar_lea.vmem [#allocation4], 32
        %6076 = vst.msk [vmem:[%s6075 + $0x8] sm:$0xff] %vm3396, %v5962
        %6077 = vst.msk [vmem:[%s6075 + $0x10] sm:$0xff] %vm3396, %v5963
        %6078 = vst.msk [vmem:[%s6075 + $0x28] sm:$0xff] %vm3396, %v5964
        %6079 = vst.msk [vmem:[%s6075 + $0x30] sm:$0xff] %vm3396, %v5965
        %6080 = vst.msk [vmem:[%s6075 + $0x48] sm:$0xff] %vm3396, %v5966
        %6081 = vst.msk [vmem:[%s6075 + $0x50] sm:$0xff] %vm3396, %v5967
        %6082 = vst.msk [vmem:[%s6075 + $0x68] sm:$0xff] %vm3396, %v5968
        %6083 = vst.msk [vmem:[%s6075 + $0x70] sm:$0xff] %vm3396, %v5969
        %6084 = vst.msk [vmem:[%s6075 + $0x88] sm:$0xff] %vm3396, %v5970
        %6085 = vst.msk [vmem:[%s6075 + $0x90] sm:$0xff] %vm3396, %v5971
        %6086 = vst.msk [vmem:[%s6075 + $0xa8] sm:$0xff] %vm3396, %v5972
        %6087 = vst.msk [vmem:[%s6075 + $0xb0] sm:$0xff] %vm3396, %v5973
        %6088 = vst.msk [vmem:[%s6075 + $0xc8] sm:$0xff] %vm3396, %v5974
        %6089 = vst.msk [vmem:[%s6075 + $0xd0] sm:$0xff] %vm3396, %v5975
        %6090 = vst.msk [vmem:[%s6075 + $0xe8] sm:$0xff] %vm3396, %v5976
        %6091 = vst.msk [vmem:[%s6075 + $0xf0] sm:$0xff] %vm3396, %v5977
        %6092 = vst.msk [vmem:[%s6075 + $0x108] sm:$0xff] %vm3396, %v5978
        %6093 = vst.msk [vmem:[%s6075 + $0x110] sm:$0xff] %vm3396, %v5979
        %6094 = vst.msk [vmem:[%s6075 + $0x128] sm:$0xff] %vm3396, %v5980
        %6095 = vst.msk [vmem:[%s6075 + $0x130] sm:$0xff] %vm3396, %v5981
        %6096 = vst.msk [vmem:[%s6075 + $0x148] sm:$0xff] %vm3396, %v5982
        %6097 = vst.msk [vmem:[%s6075 + $0x150] sm:$0xff] %vm3396, %v5983
        %6098 = vst.msk [vmem:[%s6075 + $0x168] sm:$0xff] %vm3396, %v5984
        %6099 = vst.msk [vmem:[%s6075 + $0x170] sm:$0xff] %vm3396, %v5985
        %6100 = vst.msk [vmem:[%s6075 + $0x188] sm:$0xff] %vm3396, %v5986
        %6101 = vst.msk [vmem:[%s6075 + $0x190] sm:$0xff] %vm3396, %v5987
        %6102 = vst.msk [vmem:[%s6075 + $0x1a8] sm:$0xff] %vm3396, %v5988
        %6103 = vst.msk [vmem:[%s6075 + $0x1b0] sm:$0xff] %vm3396, %v5989
        %6104 = vst.msk [vmem:[%s6075 + $0x1c8] sm:$0xff] %vm3396, %v5990
        %6105 = vst.msk [vmem:[%s6075 + $0x1d0] sm:$0xff] %vm3396, %v5991
        %6106 = vst.msk [vmem:[%s6075 + $0x1e8] sm:$0xff] %vm3396, %v5992
        %6107 = vst.msk [vmem:[%s6075 + $0x1f0] sm:$0xff] %vm3396, %v5993
        %v6108 = vld [vmem:[#allocation4] sm:$0xff]
        %v6109 = vld [vmem:[#allocation4 + $0x8] sm:$0xff]
        %v6110 = vld [vmem:[#allocation4 + $0x10] sm:$0xff]
        %v6111 = vld [vmem:[#allocation4 + $0x18] sm:$0xff]
        %v6112 = vld [vmem:[#allocation4 + $0x20] sm:$0xff]
        %v6113 = vld [vmem:[#allocation4 + $0x28] sm:$0xff]
        %v6114 = vld [vmem:[#allocation4 + $0x30] sm:$0xff]
        %v6115 = vld [vmem:[#allocation4 + $0x38] sm:$0xff]
        %v6116 = vld [vmem:[#allocation4 + $0x40] sm:$0xff]
        %v6117 = vld [vmem:[#allocation4 + $0x48] sm:$0xff]
        %v6118 = vld [vmem:[#allocation4 + $0x50] sm:$0xff]
        %v6119 = vld [vmem:[#allocation4 + $0x58] sm:$0xff]
        %v6120 = vld [vmem:[#allocation4 + $0x60] sm:$0xff]
        %v6121 = vld [vmem:[#allocation4 + $0x68] sm:$0xff]
        %v6122 = vld [vmem:[#allocation4 + $0x70] sm:$0xff]
        %v6123 = vld [vmem:[#allocation4 + $0x78] sm:$0xff]
        %v6124 = vld [vmem:[#allocation4 + $0x80] sm:$0xff]
        %v6125 = vld [vmem:[#allocation4 + $0x88] sm:$0xff]
        %v6126 = vld [vmem:[#allocation4 + $0x90] sm:$0xff]
        %v6127 = vld [vmem:[#allocation4 + $0x98] sm:$0xff]
        %v6128 = vld [vmem:[#allocation4 + $0xa0] sm:$0xff]
        %v6129 = vld [vmem:[#allocation4 + $0xa8] sm:$0xff]
        %v6130 = vld [vmem:[#allocation4 + $0xb0] sm:$0xff]
        %v6131 = vld [vmem:[#allocation4 + $0xb8] sm:$0xff]
        %v6132 = vld [vmem:[#allocation4 + $0xc0] sm:$0xff]
        %v6133 = vld [vmem:[#allocation4 + $0xc8] sm:$0xff]
        %v6134 = vld [vmem:[#allocation4 + $0xd0] sm:$0xff]
        %v6135 = vld [vmem:[#allocation4 + $0xd8] sm:$0xff]
        %v6136 = vld [vmem:[#allocation4 + $0xe0] sm:$0xff]
        %v6137 = vld [vmem:[#allocation4 + $0xe8] sm:$0xff]
        %v6138 = vld [vmem:[#allocation4 + $0xf0] sm:$0xff]
        %v6139 = vld [vmem:[#allocation4 + $0xf8] sm:$0xff]
        %v6140 = vld [vmem:[#allocation4 + $0x100] sm:$0xff]
        %v6141 = vld [vmem:[#allocation4 + $0x108] sm:$0xff]
        %v6142 = vld [vmem:[#allocation4 + $0x110] sm:$0xff]
        %v6143 = vld [vmem:[#allocation4 + $0x118] sm:$0xff]
        %v6144 = vld [vmem:[#allocation4 + $0x120] sm:$0xff]
        %v6145 = vld [vmem:[#allocation4 + $0x128] sm:$0xff]
        %v6146 = vld [vmem:[#allocation4 + $0x130] sm:$0xff]
        %v6147 = vld [vmem:[#allocation4 + $0x138] sm:$0xff]
        %v6148 = vld [vmem:[#allocation4 + $0x140] sm:$0xff]
        %v6149 = vld [vmem:[#allocation4 + $0x148] sm:$0xff]
        %v6150 = vld [vmem:[#allocation4 + $0x150] sm:$0xff]
        %v6151 = vld [vmem:[#allocation4 + $0x158] sm:$0xff]
        %v6152 = vld [vmem:[#allocation4 + $0x160] sm:$0xff]
        %v6153 = vld [vmem:[#allocation4 + $0x168] sm:$0xff]
        %v6154 = vld [vmem:[#allocation4 + $0x170] sm:$0xff]
        %v6155 = vld [vmem:[#allocation4 + $0x178] sm:$0xff]
        %v6156 = vld [vmem:[#allocation4 + $0x180] sm:$0xff]
        %v6157 = vld [vmem:[#allocation4 + $0x188] sm:$0xff]
        %v6158 = vld [vmem:[#allocation4 + $0x190] sm:$0xff]
        %v6159 = vld [vmem:[#allocation4 + $0x198] sm:$0xff]
        %v6160 = vld [vmem:[#allocation4 + $0x1a0] sm:$0xff]
        %v6161 = vld [vmem:[#allocation4 + $0x1a8] sm:$0xff]
        %v6162 = vld [vmem:[#allocation4 + $0x1b0] sm:$0xff]
        %v6163 = vld [vmem:[#allocation4 + $0x1b8] sm:$0xff]
        %v6164 = vld [vmem:[#allocation4 + $0x1c0] sm:$0xff]
        %v6165 = vld [vmem:[#allocation4 + $0x1c8] sm:$0xff]
        %v6166 = vld [vmem:[#allocation4 + $0x1d0] sm:$0xff]
        %v6167 = vld [vmem:[#allocation4 + $0x1d8] sm:$0xff]
        %v6168 = vld [vmem:[#allocation4 + $0x1e0] sm:$0xff]
        %v6169 = vld [vmem:[#allocation4 + $0x1e8] sm:$0xff]
        %v6170 = vld [vmem:[#allocation4 + $0x1f0] sm:$0xff]
        %v6171 = vld [vmem:[#allocation4 + $0x1f8] sm:$0xff]
        %v6172 = vld [vmem:[#allocation4 + $0x200] sm:$0xff]
        %v6173 = vld [vmem:[#allocation4 + $0x208] sm:$0xff]
        %v6174 = vld [vmem:[#allocation4 + $0x210] sm:$0xff]
        %v6175 = vld [vmem:[#allocation4 + $0x218] sm:$0xff]
        %v6176 = vld [vmem:[#allocation4 + $0x220] sm:$0xff]
        %v6177 = vld [vmem:[#allocation4 + $0x228] sm:$0xff]
        %v6178 = vld [vmem:[#allocation4 + $0x230] sm:$0xff]
        %v6179 = vld [vmem:[#allocation4 + $0x238] sm:$0xff]
        %v6181 = vlaneseq
        %v6182 = vshrl.u32 %v6181, 7
        %v6183 = vsub.s32 0, %v6182
        %v6184 = vrot.slane %v5994, %v6183
        %v6186 = vmul.f32 %v6108, %v6184
        %v6187 = vmul.f32 %v6109, %v6184
        %v6188 = vmul.f32 %v6110, %v6184
        %v6189 = vmul.f32 %v6112, %v6184
        %v6190 = vmul.f32 %v6113, %v6184
        %v6191 = vmul.f32 %v6114, %v6184
        %v6192 = vmul.f32 %v6116, %v6184
        %v6193 = vmul.f32 %v6117, %v6184
        %v6194 = vmul.f32 %v6118, %v6184
        %v6195 = vmul.f32 %v6120, %v6184
        %v6196 = vmul.f32 %v6121, %v6184
        %v6197 = vmul.f32 %v6122, %v6184
        %v6198 = vmul.f32 %v6124, %v6184
        %v6199 = vmul.f32 %v6125, %v6184
        %v6200 = vmul.f32 %v6126, %v6184
        %v6201 = vmul.f32 %v6128, %v6184
        %v6202 = vmul.f32 %v6129, %v6184
        %v6203 = vmul.f32 %v6130, %v6184
        %v6204 = vmul.f32 %v6132, %v6184
        %v6205 = vmul.f32 %v6133, %v6184
        %v6206 = vmul.f32 %v6134, %v6184
        %v6207 = vmul.f32 %v6136, %v6184
        %v6208 = vmul.f32 %v6137, %v6184
        %v6209 = vmul.f32 %v6138, %v6184
        %v6210 = vmul.f32 %v6140, %v6184
        %v6211 = vmul.f32 %v6141, %v6184
        %v6212 = vmul.f32 %v6142, %v6184
        %v6213 = vmul.f32 %v6144, %v6184
        %v6214 = vmul.f32 %v6145, %v6184
        %v6215 = vmul.f32 %v6146, %v6184
        %v6216 = vmul.f32 %v6148, %v6184
        %v6217 = vmul.f32 %v6149, %v6184
        %v6218 = vmul.f32 %v6150, %v6184
        %v6219 = vmul.f32 %v6152, %v6184
        %v6220 = vmul.f32 %v6153, %v6184
        %v6221 = vmul.f32 %v6154, %v6184
        %v6222 = vmul.f32 %v6156, %v6184
        %v6223 = vmul.f32 %v6157, %v6184
        %v6224 = vmul.f32 %v6158, %v6184
        %v6225 = vmul.f32 %v6160, %v6184
        %v6226 = vmul.f32 %v6161, %v6184
        %v6227 = vmul.f32 %v6162, %v6184
        %v6228 = vmul.f32 %v6164, %v6184
        %v6229 = vmul.f32 %v6165, %v6184
        %v6230 = vmul.f32 %v6166, %v6184
        %v6231 = vmul.f32 %v6168, %v6184
        %v6232 = vmul.f32 %v6169, %v6184
        %v6233 = vmul.f32 %v6170, %v6184
        %v6235 = vlaneseq
        %v6236 = vshrl.u32 %v6235, 7
        %v6237 = vsub.s32 0, %v6236
        %v6238 = vrot.slane %v5997, %v6237
        %v6240 = vmul.f32 %v6112, %v6238
        %v6241 = vmul.f32 %v6113, %v6238
        %v6242 = vmul.f32 %v6114, %v6238
        %v6243 = vmul.f32 %v6116, %v6238
        %v6244 = vmul.f32 %v6117, %v6238
        %v6245 = vmul.f32 %v6118, %v6238
        %v6246 = vmul.f32 %v6120, %v6238
        %v6247 = vmul.f32 %v6121, %v6238
        %v6248 = vmul.f32 %v6122, %v6238
        %v6249 = vmul.f32 %v6124, %v6238
        %v6250 = vmul.f32 %v6125, %v6238
        %v6251 = vmul.f32 %v6126, %v6238
        %v6252 = vmul.f32 %v6128, %v6238
        %v6253 = vmul.f32 %v6129, %v6238
        %v6254 = vmul.f32 %v6130, %v6238
        %v6255 = vmul.f32 %v6132, %v6238
        %v6256 = vmul.f32 %v6133, %v6238
        %v6257 = vmul.f32 %v6134, %v6238
        %v6258 = vmul.f32 %v6136, %v6238
        %v6259 = vmul.f32 %v6137, %v6238
        %v6260 = vmul.f32 %v6138, %v6238
        %v6261 = vmul.f32 %v6140, %v6238
        %v6262 = vmul.f32 %v6141, %v6238
        %v6263 = vmul.f32 %v6142, %v6238
        %v6264 = vmul.f32 %v6144, %v6238
        %v6265 = vmul.f32 %v6145, %v6238
        %v6266 = vmul.f32 %v6146, %v6238
        %v6267 = vmul.f32 %v6148, %v6238
        %v6268 = vmul.f32 %v6149, %v6238
        %v6269 = vmul.f32 %v6150, %v6238
        %v6270 = vmul.f32 %v6152, %v6238
        %v6271 = vmul.f32 %v6153, %v6238
        %v6272 = vmul.f32 %v6154, %v6238
        %v6273 = vmul.f32 %v6156, %v6238
        %v6274 = vmul.f32 %v6157, %v6238
        %v6275 = vmul.f32 %v6158, %v6238
        %v6276 = vmul.f32 %v6160, %v6238
        %v6277 = vmul.f32 %v6161, %v6238
        %v6278 = vmul.f32 %v6162, %v6238
        %v6279 = vmul.f32 %v6164, %v6238
        %v6280 = vmul.f32 %v6165, %v6238
        %v6281 = vmul.f32 %v6166, %v6238
        %v6282 = vmul.f32 %v6168, %v6238
        %v6283 = vmul.f32 %v6169, %v6238
        %v6284 = vmul.f32 %v6170, %v6238
        %v6285 = vmul.f32 %v6172, %v6238
        %v6286 = vmul.f32 %v6173, %v6238
        %v6287 = vmul.f32 %v6174, %v6238
        %v6288 = vadd.f32 %v6186, %v6240
        %v6289 = vadd.f32 %v6187, %v6241
        %v6290 = vadd.f32 %v6188, %v6242
        %v6291 = vadd.f32 %v6189, %v6243
        %v6292 = vadd.f32 %v6190, %v6244
        %v6293 = vadd.f32 %v6191, %v6245
        %v6294 = vadd.f32 %v6192, %v6246
        %v6295 = vadd.f32 %v6193, %v6247
        %v6296 = vadd.f32 %v6194, %v6248
        %v6297 = vadd.f32 %v6195, %v6249
        %v6298 = vadd.f32 %v6196, %v6250
        %v6299 = vadd.f32 %v6197, %v6251
        %v6300 = vadd.f32 %v6198, %v6252
        %v6301 = vadd.f32 %v6199, %v6253
        %v6302 = vadd.f32 %v6200, %v6254
        %v6303 = vadd.f32 %v6201, %v6255
        %v6304 = vadd.f32 %v6202, %v6256
        %v6305 = vadd.f32 %v6203, %v6257
        %v6306 = vadd.f32 %v6204, %v6258
        %v6307 = vadd.f32 %v6205, %v6259
        %v6308 = vadd.f32 %v6206, %v6260
        %v6309 = vadd.f32 %v6207, %v6261
        %v6310 = vadd.f32 %v6208, %v6262
        %v6311 = vadd.f32 %v6209, %v6263
        %v6312 = vadd.f32 %v6210, %v6264
        %v6313 = vadd.f32 %v6211, %v6265
        %v6314 = vadd.f32 %v6212, %v6266
        %v6315 = vadd.f32 %v6213, %v6267
        %v6316 = vadd.f32 %v6214, %v6268
        %v6317 = vadd.f32 %v6215, %v6269
        %v6318 = vadd.f32 %v6216, %v6270
        %v6319 = vadd.f32 %v6217, %v6271
        %v6320 = vadd.f32 %v6218, %v6272
        %v6321 = vadd.f32 %v6219, %v6273
        %v6322 = vadd.f32 %v6220, %v6274
        %v6323 = vadd.f32 %v6221, %v6275
        %v6324 = vadd.f32 %v6222, %v6276
        %v6325 = vadd.f32 %v6223, %v6277
        %v6326 = vadd.f32 %v6224, %v6278
        %v6327 = vadd.f32 %v6225, %v6279
        %v6328 = vadd.f32 %v6226, %v6280
        %v6329 = vadd.f32 %v6227, %v6281
        %v6330 = vadd.f32 %v6228, %v6282
        %v6331 = vadd.f32 %v6229, %v6283
        %v6332 = vadd.f32 %v6230, %v6284
        %v6333 = vadd.f32 %v6231, %v6285
        %v6334 = vadd.f32 %v6232, %v6286
        %v6335 = vadd.f32 %v6233, %v6287
        %v6337 = vlaneseq
        %v6338 = vshrl.u32 %v6337, 7
        %v6339 = vsub.s32 0, %v6338
        %v6340 = vrot.slane %v6000, %v6339
        %v6342 = vmul.f32 %v6116, %v6340
        %v6343 = vmul.f32 %v6117, %v6340
        %v6344 = vmul.f32 %v6118, %v6340
        %v6345 = vmul.f32 %v6120, %v6340
        %v6346 = vmul.f32 %v6121, %v6340
        %v6347 = vmul.f32 %v6122, %v6340
        %v6348 = vmul.f32 %v6124, %v6340
        %v6349 = vmul.f32 %v6125, %v6340
        %v6350 = vmul.f32 %v6126, %v6340
        %v6351 = vmul.f32 %v6128, %v6340
        %v6352 = vmul.f32 %v6129, %v6340
        %v6353 = vmul.f32 %v6130, %v6340
        %v6354 = vmul.f32 %v6132, %v6340
        %v6355 = vmul.f32 %v6133, %v6340
        %v6356 = vmul.f32 %v6134, %v6340
        %v6357 = vmul.f32 %v6136, %v6340
        %v6358 = vmul.f32 %v6137, %v6340
        %v6359 = vmul.f32 %v6138, %v6340
        %v6360 = vmul.f32 %v6140, %v6340
        %v6361 = vmul.f32 %v6141, %v6340
        %v6362 = vmul.f32 %v6142, %v6340
        %v6363 = vmul.f32 %v6144, %v6340
        %v6364 = vmul.f32 %v6145, %v6340
        %v6365 = vmul.f32 %v6146, %v6340
        %v6366 = vmul.f32 %v6148, %v6340
        %v6367 = vmul.f32 %v6149, %v6340
        %v6368 = vmul.f32 %v6150, %v6340
        %v6369 = vmul.f32 %v6152, %v6340
        %v6370 = vmul.f32 %v6153, %v6340
        %v6371 = vmul.f32 %v6154, %v6340
        %v6372 = vmul.f32 %v6156, %v6340
        %v6373 = vmul.f32 %v6157, %v6340
        %v6374 = vmul.f32 %v6158, %v6340
        %v6375 = vmul.f32 %v6160, %v6340
        %v6376 = vmul.f32 %v6161, %v6340
        %v6377 = vmul.f32 %v6162, %v6340
        %v6378 = vmul.f32 %v6164, %v6340
        %v6379 = vmul.f32 %v6165, %v6340
        %v6380 = vmul.f32 %v6166, %v6340
        %v6381 = vmul.f32 %v6168, %v6340
        %v6382 = vmul.f32 %v6169, %v6340
        %v6383 = vmul.f32 %v6170, %v6340
        %v6384 = vmul.f32 %v6172, %v6340
        %v6385 = vmul.f32 %v6173, %v6340
        %v6386 = vmul.f32 %v6174, %v6340
        %v6387 = vmul.f32 %v6176, %v6340
        %v6388 = vmul.f32 %v6177, %v6340
        %v6389 = vmul.f32 %v6178, %v6340
        %v6390 = vadd.f32 %v6288, %v6342
        %v6391 = vadd.f32 %v6289, %v6343
        %v6392 = vadd.f32 %v6290, %v6344
        %v6393 = vadd.f32 %v6291, %v6345
        %v6394 = vadd.f32 %v6292, %v6346
        %v6395 = vadd.f32 %v6293, %v6347
        %v6396 = vadd.f32 %v6294, %v6348
        %v6397 = vadd.f32 %v6295, %v6349
        %v6398 = vadd.f32 %v6296, %v6350
        %v6399 = vadd.f32 %v6297, %v6351
        %v6400 = vadd.f32 %v6298, %v6352
        %v6401 = vadd.f32 %v6299, %v6353
        %v6402 = vadd.f32 %v6300, %v6354
        %v6403 = vadd.f32 %v6301, %v6355
        %v6404 = vadd.f32 %v6302, %v6356
        %v6405 = vadd.f32 %v6303, %v6357
        %v6406 = vadd.f32 %v6304, %v6358
        %v6407 = vadd.f32 %v6305, %v6359
        %v6408 = vadd.f32 %v6306, %v6360
        %v6409 = vadd.f32 %v6307, %v6361
        %v6410 = vadd.f32 %v6308, %v6362
        %v6411 = vadd.f32 %v6309, %v6363
        %v6412 = vadd.f32 %v6310, %v6364
        %v6413 = vadd.f32 %v6311, %v6365
        %v6414 = vadd.f32 %v6312, %v6366
        %v6415 = vadd.f32 %v6313, %v6367
        %v6416 = vadd.f32 %v6314, %v6368
        %v6417 = vadd.f32 %v6315, %v6369
        %v6418 = vadd.f32 %v6316, %v6370
        %v6419 = vadd.f32 %v6317, %v6371
        %v6420 = vadd.f32 %v6318, %v6372
        %v6421 = vadd.f32 %v6319, %v6373
        %v6422 = vadd.f32 %v6320, %v6374
        %v6423 = vadd.f32 %v6321, %v6375
        %v6424 = vadd.f32 %v6322, %v6376
        %v6425 = vadd.f32 %v6323, %v6377
        %v6426 = vadd.f32 %v6324, %v6378
        %v6427 = vadd.f32 %v6325, %v6379
        %v6428 = vadd.f32 %v6326, %v6380
        %v6429 = vadd.f32 %v6327, %v6381
        %v6430 = vadd.f32 %v6328, %v6382
        %v6431 = vadd.f32 %v6329, %v6383
        %v6432 = vadd.f32 %v6330, %v6384
        %v6433 = vadd.f32 %v6331, %v6385
        %v6434 = vadd.f32 %v6332, %v6386
        %v6435 = vadd.f32 %v6333, %v6387
        %v6436 = vadd.f32 %v6334, %v6388
        %v6437 = vadd.f32 %v6335, %v6389
        %v6439 = vlaneseq
        %v6440 = vshrl.u32 %v6439, 7
        %v6441 = vsub.s32 0, %v6440
        %v6442 = vrot.slane %v5995, %v6441
        %v6444 = vmul.f32 %v6109, %v6442
        %v6445 = vmul.f32 %v6110, %v6442
        %v6446 = vmul.f32 %v6113, %v6442
        %v6447 = vmul.f32 %v6114, %v6442
        %v6448 = vmul.f32 %v6117, %v6442
        %v6449 = vmul.f32 %v6118, %v6442
        %v6450 = vmul.f32 %v6121, %v6442
        %v6451 = vmul.f32 %v6122, %v6442
        %v6452 = vmul.f32 %v6125, %v6442
        %v6453 = vmul.f32 %v6126, %v6442
        %v6454 = vmul.f32 %v6129, %v6442
        %v6455 = vmul.f32 %v6130, %v6442
        %v6456 = vmul.f32 %v6133, %v6442
        %v6457 = vmul.f32 %v6134, %v6442
        %v6458 = vmul.f32 %v6137, %v6442
        %v6459 = vmul.f32 %v6138, %v6442
        %v6460 = vmul.f32 %v6141, %v6442
        %v6461 = vmul.f32 %v6142, %v6442
        %v6462 = vmul.f32 %v6145, %v6442
        %v6463 = vmul.f32 %v6146, %v6442
        %v6464 = vmul.f32 %v6149, %v6442
        %v6465 = vmul.f32 %v6150, %v6442
        %v6466 = vmul.f32 %v6153, %v6442
        %v6467 = vmul.f32 %v6154, %v6442
        %v6468 = vmul.f32 %v6157, %v6442
        %v6469 = vmul.f32 %v6158, %v6442
        %v6470 = vmul.f32 %v6161, %v6442
        %v6471 = vmul.f32 %v6162, %v6442
        %v6472 = vmul.f32 %v6165, %v6442
        %v6473 = vmul.f32 %v6166, %v6442
        %v6474 = vmul.f32 %v6169, %v6442
        %v6475 = vmul.f32 %v6170, %v6442
        %v6508 = vrot.slane %v6444, 1
        %v6509 = vrot.slane %v6445, 1
        %v6510 = vsel %vm1288, %v6508, %v6509
        %v6511 = vrot.slane %v6446, 1
        %v6512 = vrot.slane %v6447, 1
        %v6513 = vsel %vm1288, %v6511, %v6512
        %v6514 = vrot.slane %v6448, 1
        %v6515 = vrot.slane %v6449, 1
        %v6516 = vsel %vm1288, %v6514, %v6515
        %v6517 = vrot.slane %v6450, 1
        %v6518 = vrot.slane %v6451, 1
        %v6519 = vsel %vm1288, %v6517, %v6518
        %v6520 = vrot.slane %v6452, 1
        %v6521 = vrot.slane %v6453, 1
        %v6522 = vsel %vm1288, %v6520, %v6521
        %v6523 = vrot.slane %v6454, 1
        %v6524 = vrot.slane %v6455, 1
        %v6525 = vsel %vm1288, %v6523, %v6524
        %v6526 = vrot.slane %v6456, 1
        %v6527 = vrot.slane %v6457, 1
        %v6528 = vsel %vm1288, %v6526, %v6527
        %v6529 = vrot.slane %v6458, 1
        %v6530 = vrot.slane %v6459, 1
        %v6531 = vsel %vm1288, %v6529, %v6530
        %v6532 = vrot.slane %v6460, 1
        %v6533 = vrot.slane %v6461, 1
        %v6534 = vsel %vm1288, %v6532, %v6533
        %v6535 = vrot.slane %v6462, 1
        %v6536 = vrot.slane %v6463, 1
        %v6537 = vsel %vm1288, %v6535, %v6536
        %v6538 = vrot.slane %v6464, 1
        %v6539 = vrot.slane %v6465, 1
        %v6540 = vsel %vm1288, %v6538, %v6539
        %v6541 = vrot.slane %v6466, 1
        %v6542 = vrot.slane %v6467, 1
        %v6543 = vsel %vm1288, %v6541, %v6542
        %v6544 = vrot.slane %v6468, 1
        %v6545 = vrot.slane %v6469, 1
        %v6546 = vsel %vm1288, %v6544, %v6545
        %v6547 = vrot.slane %v6470, 1
        %v6548 = vrot.slane %v6471, 1
        %v6549 = vsel %vm1288, %v6547, %v6548
        %v6550 = vrot.slane %v6472, 1
        %v6551 = vrot.slane %v6473, 1
        %v6552 = vsel %vm1288, %v6550, %v6551
        %v6553 = vrot.slane %v6474, 1
        %v6554 = vrot.slane %v6475, 1
        %v6555 = vsel %vm1288, %v6553, %v6554
        %v6604 = vadd.f32 %v6390, %v6508
        %v6605 = vadd.f32 %v6391, %v6510
        %v6606 = vadd.f32 %v6392, %v6509
        %v6607 = vadd.f32 %v6393, %v6511
        %v6608 = vadd.f32 %v6394, %v6513
        %v6609 = vadd.f32 %v6395, %v6512
        %v6610 = vadd.f32 %v6396, %v6514
        %v6611 = vadd.f32 %v6397, %v6516
        %v6612 = vadd.f32 %v6398, %v6515
        %v6613 = vadd.f32 %v6399, %v6517
        %v6614 = vadd.f32 %v6400, %v6519
        %v6615 = vadd.f32 %v6401, %v6518
        %v6616 = vadd.f32 %v6402, %v6520
        %v6617 = vadd.f32 %v6403, %v6522
        %v6618 = vadd.f32 %v6404, %v6521
        %v6619 = vadd.f32 %v6405, %v6523
        %v6620 = vadd.f32 %v6406, %v6525
        %v6621 = vadd.f32 %v6407, %v6524
        %v6622 = vadd.f32 %v6408, %v6526
        %v6623 = vadd.f32 %v6409, %v6528
        %v6624 = vadd.f32 %v6410, %v6527
        %v6625 = vadd.f32 %v6411, %v6529
        %v6626 = vadd.f32 %v6412, %v6531
        %v6627 = vadd.f32 %v6413, %v6530
        %v6628 = vadd.f32 %v6414, %v6532
        %v6629 = vadd.f32 %v6415, %v6534
        %v6630 = vadd.f32 %v6416, %v6533
        %v6631 = vadd.f32 %v6417, %v6535
        %v6632 = vadd.f32 %v6418, %v6537
        %v6633 = vadd.f32 %v6419, %v6536
        %v6634 = vadd.f32 %v6420, %v6538
        %v6635 = vadd.f32 %v6421, %v6540
        %v6636 = vadd.f32 %v6422, %v6539
        %v6637 = vadd.f32 %v6423, %v6541
        %v6638 = vadd.f32 %v6424, %v6543
        %v6639 = vadd.f32 %v6425, %v6542
        %v6640 = vadd.f32 %v6426, %v6544
        %v6641 = vadd.f32 %v6427, %v6546
        %v6642 = vadd.f32 %v6428, %v6545
        %v6643 = vadd.f32 %v6429, %v6547
        %v6644 = vadd.f32 %v6430, %v6549
        %v6645 = vadd.f32 %v6431, %v6548
        %v6646 = vadd.f32 %v6432, %v6550
        %v6647 = vadd.f32 %v6433, %v6552
        %v6648 = vadd.f32 %v6434, %v6551
        %v6649 = vadd.f32 %v6435, %v6553
        %v6650 = vadd.f32 %v6436, %v6555
        %v6651 = vadd.f32 %v6437, %v6554
        %v6653 = vlaneseq
        %v6654 = vshrl.u32 %v6653, 7
        %v6655 = vsub.s32 0, %v6654
        %v6656 = vrot.slane %v5998, %v6655
        %v6658 = vmul.f32 %v6113, %v6656
        %v6659 = vmul.f32 %v6114, %v6656
        %v6660 = vmul.f32 %v6117, %v6656
        %v6661 = vmul.f32 %v6118, %v6656
        %v6662 = vmul.f32 %v6121, %v6656
        %v6663 = vmul.f32 %v6122, %v6656
        %v6664 = vmul.f32 %v6125, %v6656
        %v6665 = vmul.f32 %v6126, %v6656
        %v6666 = vmul.f32 %v6129, %v6656
        %v6667 = vmul.f32 %v6130, %v6656
        %v6668 = vmul.f32 %v6133, %v6656
        %v6669 = vmul.f32 %v6134, %v6656
        %v6670 = vmul.f32 %v6137, %v6656
        %v6671 = vmul.f32 %v6138, %v6656
        %v6672 = vmul.f32 %v6141, %v6656
        %v6673 = vmul.f32 %v6142, %v6656
        %v6674 = vmul.f32 %v6145, %v6656
        %v6675 = vmul.f32 %v6146, %v6656
        %v6676 = vmul.f32 %v6149, %v6656
        %v6677 = vmul.f32 %v6150, %v6656
        %v6678 = vmul.f32 %v6153, %v6656
        %v6679 = vmul.f32 %v6154, %v6656
        %v6680 = vmul.f32 %v6157, %v6656
        %v6681 = vmul.f32 %v6158, %v6656
        %v6682 = vmul.f32 %v6161, %v6656
        %v6683 = vmul.f32 %v6162, %v6656
        %v6684 = vmul.f32 %v6165, %v6656
        %v6685 = vmul.f32 %v6166, %v6656
        %v6686 = vmul.f32 %v6169, %v6656
        %v6687 = vmul.f32 %v6170, %v6656
        %v6688 = vmul.f32 %v6173, %v6656
        %v6689 = vmul.f32 %v6174, %v6656
        %v6722 = vrot.slane %v6658, 1
        %v6723 = vrot.slane %v6659, 1
        %v6724 = vsel %vm1288, %v6722, %v6723
        %v6725 = vrot.slane %v6660, 1
        %v6726 = vrot.slane %v6661, 1
        %v6727 = vsel %vm1288, %v6725, %v6726
        %v6728 = vrot.slane %v6662, 1
        %v6729 = vrot.slane %v6663, 1
        %v6730 = vsel %vm1288, %v6728, %v6729
        %v6731 = vrot.slane %v6664, 1
        %v6732 = vrot.slane %v6665, 1
        %v6733 = vsel %vm1288, %v6731, %v6732
        %v6734 = vrot.slane %v6666, 1
        %v6735 = vrot.slane %v6667, 1
        %v6736 = vsel %vm1288, %v6734, %v6735
        %v6737 = vrot.slane %v6668, 1
        %v6738 = vrot.slane %v6669, 1
        %v6739 = vsel %vm1288, %v6737, %v6738
        %v6740 = vrot.slane %v6670, 1
        %v6741 = vrot.slane %v6671, 1
        %v6742 = vsel %vm1288, %v6740, %v6741
        %v6743 = vrot.slane %v6672, 1
        %v6744 = vrot.slane %v6673, 1
        %v6745 = vsel %vm1288, %v6743, %v6744
        %v6746 = vrot.slane %v6674, 1
        %v6747 = vrot.slane %v6675, 1
        %v6748 = vsel %vm1288, %v6746, %v6747
        %v6749 = vrot.slane %v6676, 1
        %v6750 = vrot.slane %v6677, 1
        %v6751 = vsel %vm1288, %v6749, %v6750
        %v6752 = vrot.slane %v6678, 1
        %v6753 = vrot.slane %v6679, 1
        %v6754 = vsel %vm1288, %v6752, %v6753
        %v6755 = vrot.slane %v6680, 1
        %v6756 = vrot.slane %v6681, 1
        %v6757 = vsel %vm1288, %v6755, %v6756
        %v6758 = vrot.slane %v6682, 1
        %v6759 = vrot.slane %v6683, 1
        %v6760 = vsel %vm1288, %v6758, %v6759
        %v6761 = vrot.slane %v6684, 1
        %v6762 = vrot.slane %v6685, 1
        %v6763 = vsel %vm1288, %v6761, %v6762
        %v6764 = vrot.slane %v6686, 1
        %v6765 = vrot.slane %v6687, 1
        %v6766 = vsel %vm1288, %v6764, %v6765
        %v6767 = vrot.slane %v6688, 1
        %v6768 = vrot.slane %v6689, 1
        %v6769 = vsel %vm1288, %v6767, %v6768
        %v6818 = vadd.f32 %v6604, %v6722
        %v6819 = vadd.f32 %v6605, %v6724
        %v6820 = vadd.f32 %v6606, %v6723
        %v6821 = vadd.f32 %v6607, %v6725
        %v6822 = vadd.f32 %v6608, %v6727
        %v6823 = vadd.f32 %v6609, %v6726
        %v6824 = vadd.f32 %v6610, %v6728
        %v6825 = vadd.f32 %v6611, %v6730
        %v6826 = vadd.f32 %v6612, %v6729
        %v6827 = vadd.f32 %v6613, %v6731
        %v6828 = vadd.f32 %v6614, %v6733
        %v6829 = vadd.f32 %v6615, %v6732
        %v6830 = vadd.f32 %v6616, %v6734
        %v6831 = vadd.f32 %v6617, %v6736
        %v6832 = vadd.f32 %v6618, %v6735
        %v6833 = vadd.f32 %v6619, %v6737
        %v6834 = vadd.f32 %v6620, %v6739
        %v6835 = vadd.f32 %v6621, %v6738
        %v6836 = vadd.f32 %v6622, %v6740
        %v6837 = vadd.f32 %v6623, %v6742
        %v6838 = vadd.f32 %v6624, %v6741
        %v6839 = vadd.f32 %v6625, %v6743
        %v6840 = vadd.f32 %v6626, %v6745
        %v6841 = vadd.f32 %v6627, %v6744
        %v6842 = vadd.f32 %v6628, %v6746
        %v6843 = vadd.f32 %v6629, %v6748
        %v6844 = vadd.f32 %v6630, %v6747
        %v6845 = vadd.f32 %v6631, %v6749
        %v6846 = vadd.f32 %v6632, %v6751
        %v6847 = vadd.f32 %v6633, %v6750
        %v6848 = vadd.f32 %v6634, %v6752
        %v6849 = vadd.f32 %v6635, %v6754
        %v6850 = vadd.f32 %v6636, %v6753
        %v6851 = vadd.f32 %v6637, %v6755
        %v6852 = vadd.f32 %v6638, %v6757
        %v6853 = vadd.f32 %v6639, %v6756
        %v6854 = vadd.f32 %v6640, %v6758
        %v6855 = vadd.f32 %v6641, %v6760
        %v6856 = vadd.f32 %v6642, %v6759
        %v6857 = vadd.f32 %v6643, %v6761
        %v6858 = vadd.f32 %v6644, %v6763
        %v6859 = vadd.f32 %v6645, %v6762
        %v6860 = vadd.f32 %v6646, %v6764
        %v6861 = vadd.f32 %v6647, %v6766
        %v6862 = vadd.f32 %v6648, %v6765
        %v6863 = vadd.f32 %v6649, %v6767
        %v6864 = vadd.f32 %v6650, %v6769
        %v6865 = vadd.f32 %v6651, %v6768
        %v6867 = vlaneseq
        %v6868 = vshrl.u32 %v6867, 7
        %v6869 = vsub.s32 0, %v6868
        %v6870 = vrot.slane %v6001, %v6869
        %v6872 = vmul.f32 %v6117, %v6870
        %v6873 = vmul.f32 %v6118, %v6870
        %v6874 = vmul.f32 %v6121, %v6870
        %v6875 = vmul.f32 %v6122, %v6870
        %v6876 = vmul.f32 %v6125, %v6870
        %v6877 = vmul.f32 %v6126, %v6870
        %v6878 = vmul.f32 %v6129, %v6870
        %v6879 = vmul.f32 %v6130, %v6870
        %v6880 = vmul.f32 %v6133, %v6870
        %v6881 = vmul.f32 %v6134, %v6870
        %v6882 = vmul.f32 %v6137, %v6870
        %v6883 = vmul.f32 %v6138, %v6870
        %v6884 = vmul.f32 %v6141, %v6870
        %v6885 = vmul.f32 %v6142, %v6870
        %v6886 = vmul.f32 %v6145, %v6870
        %v6887 = vmul.f32 %v6146, %v6870
        %v6888 = vmul.f32 %v6149, %v6870
        %v6889 = vmul.f32 %v6150, %v6870
        %v6890 = vmul.f32 %v6153, %v6870
        %v6891 = vmul.f32 %v6154, %v6870
        %v6892 = vmul.f32 %v6157, %v6870
        %v6893 = vmul.f32 %v6158, %v6870
        %v6894 = vmul.f32 %v6161, %v6870
        %v6895 = vmul.f32 %v6162, %v6870
        %v6896 = vmul.f32 %v6165, %v6870
        %v6897 = vmul.f32 %v6166, %v6870
        %v6898 = vmul.f32 %v6169, %v6870
        %v6899 = vmul.f32 %v6170, %v6870
        %v6900 = vmul.f32 %v6173, %v6870
        %v6901 = vmul.f32 %v6174, %v6870
        %v6902 = vmul.f32 %v6177, %v6870
        %v6903 = vmul.f32 %v6178, %v6870
        %v6936 = vrot.slane %v6872, 1
        %v6937 = vrot.slane %v6873, 1
        %v6938 = vsel %vm1288, %v6936, %v6937
        %v6939 = vrot.slane %v6874, 1
        %v6940 = vrot.slane %v6875, 1
        %v6941 = vsel %vm1288, %v6939, %v6940
        %v6942 = vrot.slane %v6876, 1
        %v6943 = vrot.slane %v6877, 1
        %v6944 = vsel %vm1288, %v6942, %v6943
        %v6945 = vrot.slane %v6878, 1
        %v6946 = vrot.slane %v6879, 1
        %v6947 = vsel %vm1288, %v6945, %v6946
        %v6948 = vrot.slane %v6880, 1
        %v6949 = vrot.slane %v6881, 1
        %v6950 = vsel %vm1288, %v6948, %v6949
        %v6951 = vrot.slane %v6882, 1
        %v6952 = vrot.slane %v6883, 1
        %v6953 = vsel %vm1288, %v6951, %v6952
        %v6954 = vrot.slane %v6884, 1
        %v6955 = vrot.slane %v6885, 1
        %v6956 = vsel %vm1288, %v6954, %v6955
        %v6957 = vrot.slane %v6886, 1
        %v6958 = vrot.slane %v6887, 1
        %v6959 = vsel %vm1288, %v6957, %v6958
        %v6960 = vrot.slane %v6888, 1
        %v6961 = vrot.slane %v6889, 1
        %v6962 = vsel %vm1288, %v6960, %v6961
        %v6963 = vrot.slane %v6890, 1
        %v6964 = vrot.slane %v6891, 1
        %v6965 = vsel %vm1288, %v6963, %v6964
        %v6966 = vrot.slane %v6892, 1
        %v6967 = vrot.slane %v6893, 1
        %v6968 = vsel %vm1288, %v6966, %v6967
        %v6969 = vrot.slane %v6894, 1
        %v6970 = vrot.slane %v6895, 1
        %v6971 = vsel %vm1288, %v6969, %v6970
        %v6972 = vrot.slane %v6896, 1
        %v6973 = vrot.slane %v6897, 1
        %v6974 = vsel %vm1288, %v6972, %v6973
        %v6975 = vrot.slane %v6898, 1
        %v6976 = vrot.slane %v6899, 1
        %v6977 = vsel %vm1288, %v6975, %v6976
        %v6978 = vrot.slane %v6900, 1
        %v6979 = vrot.slane %v6901, 1
        %v6980 = vsel %vm1288, %v6978, %v6979
        %v6981 = vrot.slane %v6902, 1
        %v6982 = vrot.slane %v6903, 1
        %v6983 = vsel %vm1288, %v6981, %v6982
        %v7032 = vadd.f32 %v6818, %v6936
        %v7033 = vadd.f32 %v6819, %v6938
        %v7034 = vadd.f32 %v6820, %v6937
        %v7035 = vadd.f32 %v6821, %v6939
        %v7036 = vadd.f32 %v6822, %v6941
        %v7037 = vadd.f32 %v6823, %v6940
        %v7038 = vadd.f32 %v6824, %v6942
        %v7039 = vadd.f32 %v6825, %v6944
        %v7040 = vadd.f32 %v6826, %v6943
        %v7041 = vadd.f32 %v6827, %v6945
        %v7042 = vadd.f32 %v6828, %v6947
        %v7043 = vadd.f32 %v6829, %v6946
        %v7044 = vadd.f32 %v6830, %v6948
        %v7045 = vadd.f32 %v6831, %v6950
        %v7046 = vadd.f32 %v6832, %v6949
        %v7047 = vadd.f32 %v6833, %v6951
        %v7048 = vadd.f32 %v6834, %v6953
        %v7049 = vadd.f32 %v6835, %v6952
        %v7050 = vadd.f32 %v6836, %v6954
        %v7051 = vadd.f32 %v6837, %v6956
        %v7052 = vadd.f32 %v6838, %v6955
        %v7053 = vadd.f32 %v6839, %v6957
        %v7054 = vadd.f32 %v6840, %v6959
        %v7055 = vadd.f32 %v6841, %v6958
        %v7056 = vadd.f32 %v6842, %v6960
        %v7057 = vadd.f32 %v6843, %v6962
        %v7058 = vadd.f32 %v6844, %v6961
        %v7059 = vadd.f32 %v6845, %v6963
        %v7060 = vadd.f32 %v6846, %v6965
        %v7061 = vadd.f32 %v6847, %v6964
        %v7062 = vadd.f32 %v6848, %v6966
        %v7063 = vadd.f32 %v6849, %v6968
        %v7064 = vadd.f32 %v6850, %v6967
        %v7065 = vadd.f32 %v6851, %v6969
        %v7066 = vadd.f32 %v6852, %v6971
        %v7067 = vadd.f32 %v6853, %v6970
        %v7068 = vadd.f32 %v6854, %v6972
        %v7069 = vadd.f32 %v6855, %v6974
        %v7070 = vadd.f32 %v6856, %v6973
        %v7071 = vadd.f32 %v6857, %v6975
        %v7072 = vadd.f32 %v6858, %v6977
        %v7073 = vadd.f32 %v6859, %v6976
        %v7074 = vadd.f32 %v6860, %v6978
        %v7075 = vadd.f32 %v6861, %v6980
        %v7076 = vadd.f32 %v6862, %v6979
        %v7077 = vadd.f32 %v6863, %v6981
        %v7078 = vadd.f32 %v6864, %v6983
        %v7079 = vadd.f32 %v6865, %v6982
        %v7081 = vlaneseq
        %v7082 = vshrl.u32 %v7081, 7
        %v7083 = vsub.s32 0, %v7082
        %v7084 = vrot.slane %v5996, %v7083
        %v7086 = vmul.f32 %v6109, %v7084
        %v7087 = vmul.f32 %v6110, %v7084
        %v7088 = vmul.f32 %v6111, %v7084
        %v7089 = vmul.f32 %v6113, %v7084
        %v7090 = vmul.f32 %v6114, %v7084
        %v7091 = vmul.f32 %v6115, %v7084
        %v7092 = vmul.f32 %v6117, %v7084
        %v7093 = vmul.f32 %v6118, %v7084
        %v7094 = vmul.f32 %v6119, %v7084
        %v7095 = vmul.f32 %v6121, %v7084
        %v7096 = vmul.f32 %v6122, %v7084
        %v7097 = vmul.f32 %v6123, %v7084
        %v7098 = vmul.f32 %v6125, %v7084
        %v7099 = vmul.f32 %v6126, %v7084
        %v7100 = vmul.f32 %v6127, %v7084
        %v7101 = vmul.f32 %v6129, %v7084
        %v7102 = vmul.f32 %v6130, %v7084
        %v7103 = vmul.f32 %v6131, %v7084
        %v7104 = vmul.f32 %v6133, %v7084
        %v7105 = vmul.f32 %v6134, %v7084
        %v7106 = vmul.f32 %v6135, %v7084
        %v7107 = vmul.f32 %v6137, %v7084
        %v7108 = vmul.f32 %v6138, %v7084
        %v7109 = vmul.f32 %v6139, %v7084
        %v7110 = vmul.f32 %v6141, %v7084
        %v7111 = vmul.f32 %v6142, %v7084
        %v7112 = vmul.f32 %v6143, %v7084
        %v7113 = vmul.f32 %v6145, %v7084
        %v7114 = vmul.f32 %v6146, %v7084
        %v7115 = vmul.f32 %v6147, %v7084
        %v7116 = vmul.f32 %v6149, %v7084
        %v7117 = vmul.f32 %v6150, %v7084
        %v7118 = vmul.f32 %v6151, %v7084
        %v7119 = vmul.f32 %v6153, %v7084
        %v7120 = vmul.f32 %v6154, %v7084
        %v7121 = vmul.f32 %v6155, %v7084
        %v7122 = vmul.f32 %v6157, %v7084
        %v7123 = vmul.f32 %v6158, %v7084
        %v7124 = vmul.f32 %v6159, %v7084
        %v7125 = vmul.f32 %v6161, %v7084
        %v7126 = vmul.f32 %v6162, %v7084
        %v7127 = vmul.f32 %v6163, %v7084
        %v7128 = vmul.f32 %v6165, %v7084
        %v7129 = vmul.f32 %v6166, %v7084
        %v7130 = vmul.f32 %v6167, %v7084
        %v7131 = vmul.f32 %v6169, %v7084
        %v7132 = vmul.f32 %v6170, %v7084
        %v7133 = vmul.f32 %v6171, %v7084
        %v7182 = vrot.slane %v7086, 2
        %v7183 = vrot.slane %v7087, 2
        %v7184 = vsel %vm1963, %v7182, %v7183
        %v7185 = vrot.slane %v7088, 2
        %v7186 = vsel %vm1963, %v7183, %v7185
        %v7187 = vrot.slane %v7089, 2
        %v7188 = vrot.slane %v7090, 2
        %v7189 = vsel %vm1963, %v7187, %v7188
        %v7190 = vrot.slane %v7091, 2
        %v7191 = vsel %vm1963, %v7188, %v7190
        %v7192 = vrot.slane %v7092, 2
        %v7193 = vrot.slane %v7093, 2
        %v7194 = vsel %vm1963, %v7192, %v7193
        %v7195 = vrot.slane %v7094, 2
        %v7196 = vsel %vm1963, %v7193, %v7195
        %v7197 = vrot.slane %v7095, 2
        %v7198 = vrot.slane %v7096, 2
        %v7199 = vsel %vm1963, %v7197, %v7198
        %v7200 = vrot.slane %v7097, 2
        %v7201 = vsel %vm1963, %v7198, %v7200
        %v7202 = vrot.slane %v7098, 2
        %v7203 = vrot.slane %v7099, 2
        %v7204 = vsel %vm1963, %v7202, %v7203
        %v7205 = vrot.slane %v7100, 2
        %v7206 = vsel %vm1963, %v7203, %v7205
        %v7207 = vrot.slane %v7101, 2
        %v7208 = vrot.slane %v7102, 2
        %v7209 = vsel %vm1963, %v7207, %v7208
        %v7210 = vrot.slane %v7103, 2
        %v7211 = vsel %vm1963, %v7208, %v7210
        %v7212 = vrot.slane %v7104, 2
        %v7213 = vrot.slane %v7105, 2
        %v7214 = vsel %vm1963, %v7212, %v7213
        %v7215 = vrot.slane %v7106, 2
        %v7216 = vsel %vm1963, %v7213, %v7215
        %v7217 = vrot.slane %v7107, 2
        %v7218 = vrot.slane %v7108, 2
        %v7219 = vsel %vm1963, %v7217, %v7218
        %v7220 = vrot.slane %v7109, 2
        %v7221 = vsel %vm1963, %v7218, %v7220
        %v7222 = vrot.slane %v7110, 2
        %v7223 = vrot.slane %v7111, 2
        %v7224 = vsel %vm1963, %v7222, %v7223
        %v7225 = vrot.slane %v7112, 2
        %v7226 = vsel %vm1963, %v7223, %v7225
        %v7227 = vrot.slane %v7113, 2
        %v7228 = vrot.slane %v7114, 2
        %v7229 = vsel %vm1963, %v7227, %v7228
        %v7230 = vrot.slane %v7115, 2
        %v7231 = vsel %vm1963, %v7228, %v7230
        %v7232 = vrot.slane %v7116, 2
        %v7233 = vrot.slane %v7117, 2
        %v7234 = vsel %vm1963, %v7232, %v7233
        %v7235 = vrot.slane %v7118, 2
        %v7236 = vsel %vm1963, %v7233, %v7235
        %v7237 = vrot.slane %v7119, 2
        %v7238 = vrot.slane %v7120, 2
        %v7239 = vsel %vm1963, %v7237, %v7238
        %v7240 = vrot.slane %v7121, 2
        %v7241 = vsel %vm1963, %v7238, %v7240
        %v7242 = vrot.slane %v7122, 2
        %v7243 = vrot.slane %v7123, 2
        %v7244 = vsel %vm1963, %v7242, %v7243
        %v7245 = vrot.slane %v7124, 2
        %v7246 = vsel %vm1963, %v7243, %v7245
        %v7247 = vrot.slane %v7125, 2
        %v7248 = vrot.slane %v7126, 2
        %v7249 = vsel %vm1963, %v7247, %v7248
        %v7250 = vrot.slane %v7127, 2
        %v7251 = vsel %vm1963, %v7248, %v7250
        %v7252 = vrot.slane %v7128, 2
        %v7253 = vrot.slane %v7129, 2
        %v7254 = vsel %vm1963, %v7252, %v7253
        %v7255 = vrot.slane %v7130, 2
        %v7256 = vsel %vm1963, %v7253, %v7255
        %v7257 = vrot.slane %v7131, 2
        %v7258 = vrot.slane %v7132, 2
        %v7259 = vsel %vm1963, %v7257, %v7258
        %v7260 = vrot.slane %v7133, 2
        %v7261 = vsel %vm1963, %v7258, %v7260
        %v7310 = vadd.f32 %v7032, %v7182
        %v7311 = vadd.f32 %v7033, %v7184
        %v7312 = vadd.f32 %v7034, %v7186
        %v7313 = vadd.f32 %v7035, %v7187
        %v7314 = vadd.f32 %v7036, %v7189
        %v7315 = vadd.f32 %v7037, %v7191
        %v7316 = vadd.f32 %v7038, %v7192
        %v7317 = vadd.f32 %v7039, %v7194
        %v7318 = vadd.f32 %v7040, %v7196
        %v7319 = vadd.f32 %v7041, %v7197
        %v7320 = vadd.f32 %v7042, %v7199
        %v7321 = vadd.f32 %v7043, %v7201
        %v7322 = vadd.f32 %v7044, %v7202
        %v7323 = vadd.f32 %v7045, %v7204
        %v7324 = vadd.f32 %v7046, %v7206
        %v7325 = vadd.f32 %v7047, %v7207
        %v7326 = vadd.f32 %v7048, %v7209
        %v7327 = vadd.f32 %v7049, %v7211
        %v7328 = vadd.f32 %v7050, %v7212
        %v7329 = vadd.f32 %v7051, %v7214
        %v7330 = vadd.f32 %v7052, %v7216
        %v7331 = vadd.f32 %v7053, %v7217
        %v7332 = vadd.f32 %v7054, %v7219
        %v7333 = vadd.f32 %v7055, %v7221
        %v7334 = vadd.f32 %v7056, %v7222
        %v7335 = vadd.f32 %v7057, %v7224
        %v7336 = vadd.f32 %v7058, %v7226
        %v7337 = vadd.f32 %v7059, %v7227
        %v7338 = vadd.f32 %v7060, %v7229
        %v7339 = vadd.f32 %v7061, %v7231
        %v7340 = vadd.f32 %v7062, %v7232
        %v7341 = vadd.f32 %v7063, %v7234
        %v7342 = vadd.f32 %v7064, %v7236
        %v7343 = vadd.f32 %v7065, %v7237
        %v7344 = vadd.f32 %v7066, %v7239
        %v7345 = vadd.f32 %v7067, %v7241
        %v7346 = vadd.f32 %v7068, %v7242
        %v7347 = vadd.f32 %v7069, %v7244
        %v7348 = vadd.f32 %v7070, %v7246
        %v7349 = vadd.f32 %v7071, %v7247
        %v7350 = vadd.f32 %v7072, %v7249
        %v7351 = vadd.f32 %v7073, %v7251
        %v7352 = vadd.f32 %v7074, %v7252
        %v7353 = vadd.f32 %v7075, %v7254
        %v7354 = vadd.f32 %v7076, %v7256
        %v7355 = vadd.f32 %v7077, %v7257
        %v7356 = vadd.f32 %v7078, %v7259
        %v7357 = vadd.f32 %v7079, %v7261
        %v7359 = vlaneseq
        %v7360 = vshrl.u32 %v7359, 7
        %v7361 = vsub.s32 0, %v7360
        %v7362 = vrot.slane %v5999, %v7361
        %v7364 = vmul.f32 %v6113, %v7362
        %v7365 = vmul.f32 %v6114, %v7362
        %v7366 = vmul.f32 %v6115, %v7362
        %v7367 = vmul.f32 %v6117, %v7362
        %v7368 = vmul.f32 %v6118, %v7362
        %v7369 = vmul.f32 %v6119, %v7362
        %v7370 = vmul.f32 %v6121, %v7362
        %v7371 = vmul.f32 %v6122, %v7362
        %v7372 = vmul.f32 %v6123, %v7362
        %v7373 = vmul.f32 %v6125, %v7362
        %v7374 = vmul.f32 %v6126, %v7362
        %v7375 = vmul.f32 %v6127, %v7362
        %v7376 = vmul.f32 %v6129, %v7362
        %v7377 = vmul.f32 %v6130, %v7362
        %v7378 = vmul.f32 %v6131, %v7362
        %v7379 = vmul.f32 %v6133, %v7362
        %v7380 = vmul.f32 %v6134, %v7362
        %v7381 = vmul.f32 %v6135, %v7362
        %v7382 = vmul.f32 %v6137, %v7362
        %v7383 = vmul.f32 %v6138, %v7362
        %v7384 = vmul.f32 %v6139, %v7362
        %v7385 = vmul.f32 %v6141, %v7362
        %v7386 = vmul.f32 %v6142, %v7362
        %v7387 = vmul.f32 %v6143, %v7362
        %v7388 = vmul.f32 %v6145, %v7362
        %v7389 = vmul.f32 %v6146, %v7362
        %v7390 = vmul.f32 %v6147, %v7362
        %v7391 = vmul.f32 %v6149, %v7362
        %v7392 = vmul.f32 %v6150, %v7362
        %v7393 = vmul.f32 %v6151, %v7362
        %v7394 = vmul.f32 %v6153, %v7362
        %v7395 = vmul.f32 %v6154, %v7362
        %v7396 = vmul.f32 %v6155, %v7362
        %v7397 = vmul.f32 %v6157, %v7362
        %v7398 = vmul.f32 %v6158, %v7362
        %v7399 = vmul.f32 %v6159, %v7362
        %v7400 = vmul.f32 %v6161, %v7362
        %v7401 = vmul.f32 %v6162, %v7362
        %v7402 = vmul.f32 %v6163, %v7362
        %v7403 = vmul.f32 %v6165, %v7362
        %v7404 = vmul.f32 %v6166, %v7362
        %v7405 = vmul.f32 %v6167, %v7362
        %v7406 = vmul.f32 %v6169, %v7362
        %v7407 = vmul.f32 %v6170, %v7362
        %v7408 = vmul.f32 %v6171, %v7362
        %v7409 = vmul.f32 %v6173, %v7362
        %v7410 = vmul.f32 %v6174, %v7362
        %v7411 = vmul.f32 %v6175, %v7362
        %v7460 = vrot.slane %v7364, 2
        %v7461 = vrot.slane %v7365, 2
        %v7462 = vsel %vm1963, %v7460, %v7461
        %v7463 = vrot.slane %v7366, 2
        %v7464 = vsel %vm1963, %v7461, %v7463
        %v7465 = vrot.slane %v7367, 2
        %v7466 = vrot.slane %v7368, 2
        %v7467 = vsel %vm1963, %v7465, %v7466
        %v7468 = vrot.slane %v7369, 2
        %v7469 = vsel %vm1963, %v7466, %v7468
        %v7470 = vrot.slane %v7370, 2
        %v7471 = vrot.slane %v7371, 2
        %v7472 = vsel %vm1963, %v7470, %v7471
        %v7473 = vrot.slane %v7372, 2
        %v7474 = vsel %vm1963, %v7471, %v7473
        %v7475 = vrot.slane %v7373, 2
        %v7476 = vrot.slane %v7374, 2
        %v7477 = vsel %vm1963, %v7475, %v7476
        %v7478 = vrot.slane %v7375, 2
        %v7479 = vsel %vm1963, %v7476, %v7478
        %v7480 = vrot.slane %v7376, 2
        %v7481 = vrot.slane %v7377, 2
        %v7482 = vsel %vm1963, %v7480, %v7481
        %v7483 = vrot.slane %v7378, 2
        %v7484 = vsel %vm1963, %v7481, %v7483
        %v7485 = vrot.slane %v7379, 2
        %v7486 = vrot.slane %v7380, 2
        %v7487 = vsel %vm1963, %v7485, %v7486
        %v7488 = vrot.slane %v7381, 2
        %v7489 = vsel %vm1963, %v7486, %v7488
        %v7490 = vrot.slane %v7382, 2
        %v7491 = vrot.slane %v7383, 2
        %v7492 = vsel %vm1963, %v7490, %v7491
        %v7493 = vrot.slane %v7384, 2
        %v7494 = vsel %vm1963, %v7491, %v7493
        %v7495 = vrot.slane %v7385, 2
        %v7496 = vrot.slane %v7386, 2
        %v7497 = vsel %vm1963, %v7495, %v7496
        %v7498 = vrot.slane %v7387, 2
        %v7499 = vsel %vm1963, %v7496, %v7498
        %v7500 = vrot.slane %v7388, 2
        %v7501 = vrot.slane %v7389, 2
        %v7502 = vsel %vm1963, %v7500, %v7501
        %v7503 = vrot.slane %v7390, 2
        %v7504 = vsel %vm1963, %v7501, %v7503
        %v7505 = vrot.slane %v7391, 2
        %v7506 = vrot.slane %v7392, 2
        %v7507 = vsel %vm1963, %v7505, %v7506
        %v7508 = vrot.slane %v7393, 2
        %v7509 = vsel %vm1963, %v7506, %v7508
        %v7510 = vrot.slane %v7394, 2
        %v7511 = vrot.slane %v7395, 2
        %v7512 = vsel %vm1963, %v7510, %v7511
        %v7513 = vrot.slane %v7396, 2
        %v7514 = vsel %vm1963, %v7511, %v7513
        %v7515 = vrot.slane %v7397, 2
        %v7516 = vrot.slane %v7398, 2
        %v7517 = vsel %vm1963, %v7515, %v7516
        %v7518 = vrot.slane %v7399, 2
        %v7519 = vsel %vm1963, %v7516, %v7518
        %v7520 = vrot.slane %v7400, 2
        %v7521 = vrot.slane %v7401, 2
        %v7522 = vsel %vm1963, %v7520, %v7521
        %v7523 = vrot.slane %v7402, 2
        %v7524 = vsel %vm1963, %v7521, %v7523
        %v7525 = vrot.slane %v7403, 2
        %v7526 = vrot.slane %v7404, 2
        %v7527 = vsel %vm1963, %v7525, %v7526
        %v7528 = vrot.slane %v7405, 2
        %v7529 = vsel %vm1963, %v7526, %v7528
        %v7530 = vrot.slane %v7406, 2
        %v7531 = vrot.slane %v7407, 2
        %v7532 = vsel %vm1963, %v7530, %v7531
        %v7533 = vrot.slane %v7408, 2
        %v7534 = vsel %vm1963, %v7531, %v7533
        %v7535 = vrot.slane %v7409, 2
        %v7536 = vrot.slane %v7410, 2
        %v7537 = vsel %vm1963, %v7535, %v7536
        %v7538 = vrot.slane %v7411, 2
        %v7539 = vsel %vm1963, %v7536, %v7538
        %v7588 = vadd.f32 %v7310, %v7460
        %v7589 = vadd.f32 %v7311, %v7462
        %v7590 = vadd.f32 %v7312, %v7464
        %v7591 = vadd.f32 %v7313, %v7465
        %v7592 = vadd.f32 %v7314, %v7467
        %v7593 = vadd.f32 %v7315, %v7469
        %v7594 = vadd.f32 %v7316, %v7470
        %v7595 = vadd.f32 %v7317, %v7472
        %v7596 = vadd.f32 %v7318, %v7474
        %v7597 = vadd.f32 %v7319, %v7475
        %v7598 = vadd.f32 %v7320, %v7477
        %v7599 = vadd.f32 %v7321, %v7479
        %v7600 = vadd.f32 %v7322, %v7480
        %v7601 = vadd.f32 %v7323, %v7482
        %v7602 = vadd.f32 %v7324, %v7484
        %v7603 = vadd.f32 %v7325, %v7485
        %v7604 = vadd.f32 %v7326, %v7487
        %v7605 = vadd.f32 %v7327, %v7489
        %v7606 = vadd.f32 %v7328, %v7490
        %v7607 = vadd.f32 %v7329, %v7492
        %v7608 = vadd.f32 %v7330, %v7494
        %v7609 = vadd.f32 %v7331, %v7495
        %v7610 = vadd.f32 %v7332, %v7497
        %v7611 = vadd.f32 %v7333, %v7499
        %v7612 = vadd.f32 %v7334, %v7500
        %v7613 = vadd.f32 %v7335, %v7502
        %v7614 = vadd.f32 %v7336, %v7504
        %v7615 = vadd.f32 %v7337, %v7505
        %v7616 = vadd.f32 %v7338, %v7507
        %v7617 = vadd.f32 %v7339, %v7509
        %v7618 = vadd.f32 %v7340, %v7510
        %v7619 = vadd.f32 %v7341, %v7512
        %v7620 = vadd.f32 %v7342, %v7514
        %v7621 = vadd.f32 %v7343, %v7515
        %v7622 = vadd.f32 %v7344, %v7517
        %v7623 = vadd.f32 %v7345, %v7519
        %v7624 = vadd.f32 %v7346, %v7520
        %v7625 = vadd.f32 %v7347, %v7522
        %v7626 = vadd.f32 %v7348, %v7524
        %v7627 = vadd.f32 %v7349, %v7525
        %v7628 = vadd.f32 %v7350, %v7527
        %v7629 = vadd.f32 %v7351, %v7529
        %v7630 = vadd.f32 %v7352, %v7530
        %v7631 = vadd.f32 %v7353, %v7532
        %v7632 = vadd.f32 %v7354, %v7534
        %v7633 = vadd.f32 %v7355, %v7535
        %v7634 = vadd.f32 %v7356, %v7537
        %v7635 = vadd.f32 %v7357, %v7539
        %v7637 = vlaneseq
        %v7638 = vshrl.u32 %v7637, 7
        %v7639 = vsub.s32 0, %v7638
        %v7640 = vrot.slane %v6002, %v7639
        %v7642 = vmul.f32 %v6117, %v7640
        %v7643 = vmul.f32 %v6118, %v7640
        %v7644 = vmul.f32 %v6119, %v7640
        %v7645 = vmul.f32 %v6121, %v7640
        %v7646 = vmul.f32 %v6122, %v7640
        %v7647 = vmul.f32 %v6123, %v7640
        %v7648 = vmul.f32 %v6125, %v7640
        %v7649 = vmul.f32 %v6126, %v7640
        %v7650 = vmul.f32 %v6127, %v7640
        %v7651 = vmul.f32 %v6129, %v7640
        %v7652 = vmul.f32 %v6130, %v7640
        %v7653 = vmul.f32 %v6131, %v7640
        %v7654 = vmul.f32 %v6133, %v7640
        %v7655 = vmul.f32 %v6134, %v7640
        %v7656 = vmul.f32 %v6135, %v7640
        %v7657 = vmul.f32 %v6137, %v7640
        %v7658 = vmul.f32 %v6138, %v7640
        %v7659 = vmul.f32 %v6139, %v7640
        %v7660 = vmul.f32 %v6141, %v7640
        %v7661 = vmul.f32 %v6142, %v7640
        %v7662 = vmul.f32 %v6143, %v7640
        %v7663 = vmul.f32 %v6145, %v7640
        %v7664 = vmul.f32 %v6146, %v7640
        %v7665 = vmul.f32 %v6147, %v7640
        %v7666 = vmul.f32 %v6149, %v7640
        %v7667 = vmul.f32 %v6150, %v7640
        %v7668 = vmul.f32 %v6151, %v7640
        %v7669 = vmul.f32 %v6153, %v7640
        %v7670 = vmul.f32 %v6154, %v7640
        %v7671 = vmul.f32 %v6155, %v7640
        %v7672 = vmul.f32 %v6157, %v7640
        %v7673 = vmul.f32 %v6158, %v7640
        %v7674 = vmul.f32 %v6159, %v7640
        %v7675 = vmul.f32 %v6161, %v7640
        %v7676 = vmul.f32 %v6162, %v7640
        %v7677 = vmul.f32 %v6163, %v7640
        %v7678 = vmul.f32 %v6165, %v7640
        %v7679 = vmul.f32 %v6166, %v7640
        %v7680 = vmul.f32 %v6167, %v7640
        %v7681 = vmul.f32 %v6169, %v7640
        %v7682 = vmul.f32 %v6170, %v7640
        %v7683 = vmul.f32 %v6171, %v7640
        %v7684 = vmul.f32 %v6173, %v7640
        %v7685 = vmul.f32 %v6174, %v7640
        %v7686 = vmul.f32 %v6175, %v7640
        %v7687 = vmul.f32 %v6177, %v7640
        %v7688 = vmul.f32 %v6178, %v7640
        %v7689 = vmul.f32 %v6179, %v7640
        %v7738 = vrot.slane %v7642, 2
        %v7739 = vrot.slane %v7643, 2
        %v7740 = vsel %vm1963, %v7738, %v7739
        %v7741 = vrot.slane %v7644, 2
        %v7742 = vsel %vm1963, %v7739, %v7741
        %v7743 = vrot.slane %v7645, 2
        %v7744 = vrot.slane %v7646, 2
        %v7745 = vsel %vm1963, %v7743, %v7744
        %v7746 = vrot.slane %v7647, 2
        %v7747 = vsel %vm1963, %v7744, %v7746
        %v7748 = vrot.slane %v7648, 2
        %v7749 = vrot.slane %v7649, 2
        %v7750 = vsel %vm1963, %v7748, %v7749
        %v7751 = vrot.slane %v7650, 2
        %v7752 = vsel %vm1963, %v7749, %v7751
        %v7753 = vrot.slane %v7651, 2
        %v7754 = vrot.slane %v7652, 2
        %v7755 = vsel %vm1963, %v7753, %v7754
        %v7756 = vrot.slane %v7653, 2
        %v7757 = vsel %vm1963, %v7754, %v7756
        %v7758 = vrot.slane %v7654, 2
        %v7759 = vrot.slane %v7655, 2
        %v7760 = vsel %vm1963, %v7758, %v7759
        %v7761 = vrot.slane %v7656, 2
        %v7762 = vsel %vm1963, %v7759, %v7761
        %v7763 = vrot.slane %v7657, 2
        %v7764 = vrot.slane %v7658, 2
        %v7765 = vsel %vm1963, %v7763, %v7764
        %v7766 = vrot.slane %v7659, 2
        %v7767 = vsel %vm1963, %v7764, %v7766
        %v7768 = vrot.slane %v7660, 2
        %v7769 = vrot.slane %v7661, 2
        %v7770 = vsel %vm1963, %v7768, %v7769
        %v7771 = vrot.slane %v7662, 2
        %v7772 = vsel %vm1963, %v7769, %v7771
        %v7773 = vrot.slane %v7663, 2
        %v7774 = vrot.slane %v7664, 2
        %v7775 = vsel %vm1963, %v7773, %v7774
        %v7776 = vrot.slane %v7665, 2
        %v7777 = vsel %vm1963, %v7774, %v7776
        %v7778 = vrot.slane %v7666, 2
        %v7779 = vrot.slane %v7667, 2
        %v7780 = vsel %vm1963, %v7778, %v7779
        %v7781 = vrot.slane %v7668, 2
        %v7782 = vsel %vm1963, %v7779, %v7781
        %v7783 = vrot.slane %v7669, 2
        %v7784 = vrot.slane %v7670, 2
        %v7785 = vsel %vm1963, %v7783, %v7784
        %v7786 = vrot.slane %v7671, 2
        %v7787 = vsel %vm1963, %v7784, %v7786
        %v7788 = vrot.slane %v7672, 2
        %v7789 = vrot.slane %v7673, 2
        %v7790 = vsel %vm1963, %v7788, %v7789
        %v7791 = vrot.slane %v7674, 2
        %v7792 = vsel %vm1963, %v7789, %v7791
        %v7793 = vrot.slane %v7675, 2
        %v7794 = vrot.slane %v7676, 2
        %v7795 = vsel %vm1963, %v7793, %v7794
        %v7796 = vrot.slane %v7677, 2
        %v7797 = vsel %vm1963, %v7794, %v7796
        %v7798 = vrot.slane %v7678, 2
        %v7799 = vrot.slane %v7679, 2
        %v7800 = vsel %vm1963, %v7798, %v7799
        %v7801 = vrot.slane %v7680, 2
        %v7802 = vsel %vm1963, %v7799, %v7801
        %v7803 = vrot.slane %v7681, 2
        %v7804 = vrot.slane %v7682, 2
        %v7805 = vsel %vm1963, %v7803, %v7804
        %v7806 = vrot.slane %v7683, 2
        %v7807 = vsel %vm1963, %v7804, %v7806
        %v7808 = vrot.slane %v7684, 2
        %v7809 = vrot.slane %v7685, 2
        %v7810 = vsel %vm1963, %v7808, %v7809
        %v7811 = vrot.slane %v7686, 2
        %v7812 = vsel %vm1963, %v7809, %v7811
        %v7813 = vrot.slane %v7687, 2
        %v7814 = vrot.slane %v7688, 2
        %v7815 = vsel %vm1963, %v7813, %v7814
        %v7816 = vrot.slane %v7689, 2
        %v7817 = vsel %vm1963, %v7814, %v7816
        %v7866 = vadd.f32 %v7588, %v7738
        %v7867 = vadd.f32 %v7589, %v7740
        %v7868 = vadd.f32 %v7590, %v7742
        %v7869 = vadd.f32 %v7591, %v7743
        %v7870 = vadd.f32 %v7592, %v7745
        %v7871 = vadd.f32 %v7593, %v7747
        %v7872 = vadd.f32 %v7594, %v7748
        %v7873 = vadd.f32 %v7595, %v7750
        %v7874 = vadd.f32 %v7596, %v7752
        %v7875 = vadd.f32 %v7597, %v7753
        %v7876 = vadd.f32 %v7598, %v7755
        %v7877 = vadd.f32 %v7599, %v7757
        %v7878 = vadd.f32 %v7600, %v7758
        %v7879 = vadd.f32 %v7601, %v7760
        %v7880 = vadd.f32 %v7602, %v7762
        %v7881 = vadd.f32 %v7603, %v7763
        %v7882 = vadd.f32 %v7604, %v7765
        %v7883 = vadd.f32 %v7605, %v7767
        %v7884 = vadd.f32 %v7606, %v7768
        %v7885 = vadd.f32 %v7607, %v7770
        %v7886 = vadd.f32 %v7608, %v7772
        %v7887 = vadd.f32 %v7609, %v7773
        %v7888 = vadd.f32 %v7610, %v7775
        %v7889 = vadd.f32 %v7611, %v7777
        %v7890 = vadd.f32 %v7612, %v7778
        %v7891 = vadd.f32 %v7613, %v7780
        %v7892 = vadd.f32 %v7614, %v7782
        %v7893 = vadd.f32 %v7615, %v7783
        %v7894 = vadd.f32 %v7616, %v7785
        %v7895 = vadd.f32 %v7617, %v7787
        %v7896 = vadd.f32 %v7618, %v7788
        %v7897 = vadd.f32 %v7619, %v7790
        %v7898 = vadd.f32 %v7620, %v7792
        %v7899 = vadd.f32 %v7621, %v7793
        %v7900 = vadd.f32 %v7622, %v7795
        %v7901 = vadd.f32 %v7623, %v7797
        %v7902 = vadd.f32 %v7624, %v7798
        %v7903 = vadd.f32 %v7625, %v7800
        %v7904 = vadd.f32 %v7626, %v7802
        %v7905 = vadd.f32 %v7627, %v7803
        %v7906 = vadd.f32 %v7628, %v7805
        %v7907 = vadd.f32 %v7629, %v7807
        %v7908 = vadd.f32 %v7630, %v7808
        %v7909 = vadd.f32 %v7631, %v7810
        %v7910 = vadd.f32 %v7632, %v7812
        %v7911 = vadd.f32 %v7633, %v7813
        %v7912 = vadd.f32 %v7634, %v7815
        %v7913 = vadd.f32 %v7635, %v7817
        %v7914 = vld [vmem:[%s15] sm:$0x1]
        %v7916 = vlaneseq
        %v7917 = vshrl.u32 %v7916, 7
        %v7918 = vsub.s32 0, %v7917
        %v7919 = vrot.slane %v7914, %v7918
        %v7921 = vmul.f32 %v7866, %v7919
        %v7922 = vmul.f32 %v7867, %v7919
        %v7923 = vmul.f32 %v7868, %v7919
        %v7924 = vmul.f32 %v7869, %v7919
        %v7925 = vmul.f32 %v7870, %v7919
        %v7926 = vmul.f32 %v7871, %v7919
        %v7927 = vmul.f32 %v7872, %v7919
        %v7928 = vmul.f32 %v7873, %v7919
        %v7929 = vmul.f32 %v7874, %v7919
        %v7930 = vmul.f32 %v7875, %v7919
        %v7931 = vmul.f32 %v7876, %v7919
        %v7932 = vmul.f32 %v7877, %v7919
        %v7933 = vmul.f32 %v7878, %v7919
        %v7934 = vmul.f32 %v7879, %v7919
        %v7935 = vmul.f32 %v7880, %v7919
        %v7936 = vmul.f32 %v7881, %v7919
        %v7937 = vmul.f32 %v7882, %v7919
        %v7938 = vmul.f32 %v7883, %v7919
        %v7939 = vmul.f32 %v7884, %v7919
        %v7940 = vmul.f32 %v7885, %v7919
        %v7941 = vmul.f32 %v7886, %v7919
        %v7942 = vmul.f32 %v7887, %v7919
        %v7943 = vmul.f32 %v7888, %v7919
        %v7944 = vmul.f32 %v7889, %v7919
        %v7945 = vmul.f32 %v7890, %v7919
        %v7946 = vmul.f32 %v7891, %v7919
        %v7947 = vmul.f32 %v7892, %v7919
        %v7948 = vmul.f32 %v7893, %v7919
        %v7949 = vmul.f32 %v7894, %v7919
        %v7950 = vmul.f32 %v7895, %v7919
        %v7951 = vmul.f32 %v7896, %v7919
        %v7952 = vmul.f32 %v7897, %v7919
        %v7953 = vmul.f32 %v7898, %v7919
        %v7954 = vmul.f32 %v7899, %v7919
        %v7955 = vmul.f32 %v7900, %v7919
        %v7956 = vmul.f32 %v7901, %v7919
        %v7957 = vmul.f32 %v7902, %v7919
        %v7958 = vmul.f32 %v7903, %v7919
        %v7959 = vmul.f32 %v7904, %v7919
        %v7960 = vmul.f32 %v7905, %v7919
        %v7961 = vmul.f32 %v7906, %v7919
        %v7962 = vmul.f32 %v7907, %v7919
        %v7963 = vmul.f32 %v7908, %v7919
        %v7964 = vmul.f32 %v7909, %v7919
        %v7965 = vmul.f32 %v7910, %v7919
        %v7966 = vmul.f32 %v7911, %v7919
        %v7967 = vmul.f32 %v7912, %v7919
        %v7968 = vmul.f32 %v7913, %v7919
        %v7969 = vld [vmem:[%s16] sm:$0x1]
        %v7971 = vlaneseq
        %v7972 = vshrl.u32 %v7971, 7
        %v7973 = vsub.s32 0, %v7972
        %v7974 = vrot.slane %v7969, %v7973
        %v7976 = vadd.f32 %v7921, %v7974
        %v7977 = vadd.f32 %v7922, %v7974
        %v7978 = vadd.f32 %v7923, %v7974
        %v7979 = vadd.f32 %v7924, %v7974
        %v7980 = vadd.f32 %v7925, %v7974
        %v7981 = vadd.f32 %v7926, %v7974
        %v7982 = vadd.f32 %v7927, %v7974
        %v7983 = vadd.f32 %v7928, %v7974
        %v7984 = vadd.f32 %v7929, %v7974
        %v7985 = vadd.f32 %v7930, %v7974
        %v7986 = vadd.f32 %v7931, %v7974
        %v7987 = vadd.f32 %v7932, %v7974
        %v7988 = vadd.f32 %v7933, %v7974
        %v7989 = vadd.f32 %v7934, %v7974
        %v7990 = vadd.f32 %v7935, %v7974
        %v7991 = vadd.f32 %v7936, %v7974
        %v7992 = vadd.f32 %v7937, %v7974
        %v7993 = vadd.f32 %v7938, %v7974
        %v7994 = vadd.f32 %v7939, %v7974
        %v7995 = vadd.f32 %v7940, %v7974
        %v7996 = vadd.f32 %v7941, %v7974
        %v7997 = vadd.f32 %v7942, %v7974
        %v7998 = vadd.f32 %v7943, %v7974
        %v7999 = vadd.f32 %v7944, %v7974
        %v8000 = vadd.f32 %v7945, %v7974
        %v8001 = vadd.f32 %v7946, %v7974
        %v8002 = vadd.f32 %v7947, %v7974
        %v8003 = vadd.f32 %v7948, %v7974
        %v8004 = vadd.f32 %v7949, %v7974
        %v8005 = vadd.f32 %v7950, %v7974
        %v8006 = vadd.f32 %v7951, %v7974
        %v8007 = vadd.f32 %v7952, %v7974
        %v8008 = vadd.f32 %v7953, %v7974
        %v8009 = vadd.f32 %v7954, %v7974
        %v8010 = vadd.f32 %v7955, %v7974
        %v8011 = vadd.f32 %v7956, %v7974
        %v8012 = vadd.f32 %v7957, %v7974
        %v8013 = vadd.f32 %v7958, %v7974
        %v8014 = vadd.f32 %v7959, %v7974
        %v8015 = vadd.f32 %v7960, %v7974
        %v8016 = vadd.f32 %v7961, %v7974
        %v8017 = vadd.f32 %v7962, %v7974
        %v8018 = vadd.f32 %v7963, %v7974
        %v8019 = vadd.f32 %v7964, %v7974
        %v8020 = vadd.f32 %v7965, %v7974
        %v8021 = vadd.f32 %v7966, %v7974
        %v8022 = vadd.f32 %v7967, %v7974
        %v8023 = vadd.f32 %v7968, %v7974
        %v8024 = vmax.f32 %v7976, 0.0
        %v8025 = vmax.f32 %v7977, 0.0
        %v8026 = vmax.f32 %v7978, 0.0
        %v8027 = vmax.f32 %v7979, 0.0
        %v8028 = vmax.f32 %v7980, 0.0
        %v8029 = vmax.f32 %v7981, 0.0
        %v8030 = vmax.f32 %v7982, 0.0
        %v8031 = vmax.f32 %v7983, 0.0
        %v8032 = vmax.f32 %v7984, 0.0
        %v8033 = vmax.f32 %v7985, 0.0
        %v8034 = vmax.f32 %v7986, 0.0
        %v8035 = vmax.f32 %v7987, 0.0
        %v8036 = vmax.f32 %v7988, 0.0
        %v8037 = vmax.f32 %v7989, 0.0
        %v8038 = vmax.f32 %v7990, 0.0
        %v8039 = vmax.f32 %v7991, 0.0
        %v8040 = vmax.f32 %v7992, 0.0
        %v8041 = vmax.f32 %v7993, 0.0
        %v8042 = vmax.f32 %v7994, 0.0
        %v8043 = vmax.f32 %v7995, 0.0
        %v8044 = vmax.f32 %v7996, 0.0
        %v8045 = vmax.f32 %v7997, 0.0
        %v8046 = vmax.f32 %v7998, 0.0
        %v8047 = vmax.f32 %v7999, 0.0
        %v8048 = vmax.f32 %v8000, 0.0
        %v8049 = vmax.f32 %v8001, 0.0
        %v8050 = vmax.f32 %v8002, 0.0
        %v8051 = vmax.f32 %v8003, 0.0
        %v8052 = vmax.f32 %v8004, 0.0
        %v8053 = vmax.f32 %v8005, 0.0
        %v8054 = vmax.f32 %v8006, 0.0
        %v8055 = vmax.f32 %v8007, 0.0
        %v8056 = vmax.f32 %v8008, 0.0
        %v8057 = vmax.f32 %v8009, 0.0
        %v8058 = vmax.f32 %v8010, 0.0
        %v8059 = vmax.f32 %v8011, 0.0
        %v8060 = vmax.f32 %v8012, 0.0
        %v8061 = vmax.f32 %v8013, 0.0
        %v8062 = vmax.f32 %v8014, 0.0
        %v8063 = vmax.f32 %v8015, 0.0
        %v8064 = vmax.f32 %v8016, 0.0
        %v8065 = vmax.f32 %v8017, 0.0
        %v8066 = vmax.f32 %v8018, 0.0
        %v8067 = vmax.f32 %v8019, 0.0
        %v8068 = vmax.f32 %v8020, 0.0
        %v8069 = vmax.f32 %v8021, 0.0
        %v8070 = vmax.f32 %v8022, 0.0
        %v8071 = vmax.f32 %v8023, 0.0
        %v8120 = vrot.slane %v8024, 7
        %v8121 = vrot.slane %v8025, 7
        %v8122 = vsel %vm2902, %v8120, %v8121
        %v8123 = vrot.slane %v8026, 7
        %v8124 = vsel %vm2902, %v8121, %v8123
        %v8125 = vrot.slane %v8027, 7
        %v8126 = vrot.slane %v8028, 7
        %v8127 = vsel %vm2902, %v8125, %v8126
        %v8128 = vrot.slane %v8029, 7
        %v8129 = vsel %vm2902, %v8126, %v8128
        %v8130 = vrot.slane %v8030, 7
        %v8131 = vrot.slane %v8031, 7
        %v8132 = vsel %vm2902, %v8130, %v8131
        %v8133 = vrot.slane %v8032, 7
        %v8134 = vsel %vm2902, %v8131, %v8133
        %v8135 = vrot.slane %v8033, 7
        %v8136 = vrot.slane %v8034, 7
        %v8137 = vsel %vm2902, %v8135, %v8136
        %v8138 = vrot.slane %v8035, 7
        %v8139 = vsel %vm2902, %v8136, %v8138
        %v8140 = vrot.slane %v8036, 7
        %v8141 = vrot.slane %v8037, 7
        %v8142 = vsel %vm2902, %v8140, %v8141
        %v8143 = vrot.slane %v8038, 7
        %v8144 = vsel %vm2902, %v8141, %v8143
        %v8145 = vrot.slane %v8039, 7
        %v8146 = vrot.slane %v8040, 7
        %v8147 = vsel %vm2902, %v8145, %v8146
        %v8148 = vrot.slane %v8041, 7
        %v8149 = vsel %vm2902, %v8146, %v8148
        %v8150 = vrot.slane %v8042, 7
        %v8151 = vrot.slane %v8043, 7
        %v8152 = vsel %vm2902, %v8150, %v8151
        %v8153 = vrot.slane %v8044, 7
        %v8154 = vsel %vm2902, %v8151, %v8153
        %v8155 = vrot.slane %v8045, 7
        %v8156 = vrot.slane %v8046, 7
        %v8157 = vsel %vm2902, %v8155, %v8156
        %v8158 = vrot.slane %v8047, 7
        %v8159 = vsel %vm2902, %v8156, %v8158
        %v8160 = vrot.slane %v8048, 7
        %v8161 = vrot.slane %v8049, 7
        %v8162 = vsel %vm2902, %v8160, %v8161
        %v8163 = vrot.slane %v8050, 7
        %v8164 = vsel %vm2902, %v8161, %v8163
        %v8165 = vrot.slane %v8051, 7
        %v8166 = vrot.slane %v8052, 7
        %v8167 = vsel %vm2902, %v8165, %v8166
        %v8168 = vrot.slane %v8053, 7
        %v8169 = vsel %vm2902, %v8166, %v8168
        %v8170 = vrot.slane %v8054, 7
        %v8171 = vrot.slane %v8055, 7
        %v8172 = vsel %vm2902, %v8170, %v8171
        %v8173 = vrot.slane %v8056, 7
        %v8174 = vsel %vm2902, %v8171, %v8173
        %v8175 = vrot.slane %v8057, 7
        %v8176 = vrot.slane %v8058, 7
        %v8177 = vsel %vm2902, %v8175, %v8176
        %v8178 = vrot.slane %v8059, 7
        %v8179 = vsel %vm2902, %v8176, %v8178
        %v8180 = vrot.slane %v8060, 7
        %v8181 = vrot.slane %v8061, 7
        %v8182 = vsel %vm2902, %v8180, %v8181
        %v8183 = vrot.slane %v8062, 7
        %v8184 = vsel %vm2902, %v8181, %v8183
        %v8185 = vrot.slane %v8063, 7
        %v8186 = vrot.slane %v8064, 7
        %v8187 = vsel %vm2902, %v8185, %v8186
        %v8188 = vrot.slane %v8065, 7
        %v8189 = vsel %vm2902, %v8186, %v8188
        %v8190 = vrot.slane %v8066, 7
        %v8191 = vrot.slane %v8067, 7
        %v8192 = vsel %vm2902, %v8190, %v8191
        %v8193 = vrot.slane %v8068, 7
        %v8194 = vsel %vm2902, %v8191, %v8193
        %v8195 = vrot.slane %v8069, 7
        %v8196 = vrot.slane %v8070, 7
        %v8197 = vsel %vm2902, %v8195, %v8196
        %v8198 = vrot.slane %v8071, 7
        %v8199 = vsel %vm2902, %v8196, %v8198
        %v8232 = vld [vmem:[%s1] sm:$0xff]
        %v8233 = vld [vmem:[%s1 + $0x8] sm:$0xff]
        %v8234 = vld [vmem:[%s1 + $0x10] sm:$0xff]
        %v8235 = vld [vmem:[%s1 + $0x18] sm:$0xff]
        %v8236 = vld [vmem:[%s1 + $0x20] sm:$0xff]
        %v8237 = vld [vmem:[%s1 + $0x28] sm:$0xff]
        %v8238 = vld [vmem:[%s1 + $0x30] sm:$0xff]
        %v8239 = vld [vmem:[%s1 + $0x38] sm:$0xff]
        %v8240 = vld [vmem:[%s1 + $0x40] sm:$0xff]
        %v8241 = vld [vmem:[%s1 + $0x48] sm:$0xff]
        %v8242 = vld [vmem:[%s1 + $0x50] sm:$0xff]
        %v8243 = vld [vmem:[%s1 + $0x58] sm:$0xff]
        %v8244 = vld [vmem:[%s1 + $0x60] sm:$0xff]
        %v8245 = vld [vmem:[%s1 + $0x68] sm:$0xff]
        %v8246 = vld [vmem:[%s1 + $0x70] sm:$0xff]
        %v8247 = vld [vmem:[%s1 + $0x78] sm:$0xff]
        %8248 = vmatprep.subr.mxu0 0.0
        %8249 = vmatpush1.msra.mxu0 %v8159
        %8250 = vmatprep.subr.mxu0 0.0
        %8251 = vmatpush1.msra.mxu0 %v8157
        %8252 = vmatprep.subr.mxu0 0.0
        %8253 = vmatpush1.msra.mxu0 %v8154
        %8254 = vmatprep.subr.mxu0 0.0
        %8255 = vmatpush1.msra.mxu0 %v8152
        %8256 = vmatprep.subr.mxu0 0.0
        %8257 = vmatpush1.msra.mxu0 %v8149
        %8258 = vmatprep.subr.mxu0 0.0
        %8259 = vmatpush1.msra.mxu0 %v8147
        %8260 = vmatprep.subr.mxu0 0.0
        %8261 = vmatpush1.msra.mxu0 %v8144
        %8262 = vmatprep.subr.mxu0 0.0
        %8263 = vmatpush1.msra.mxu0 %v8142
        %8264 = vmatprep.subr.mxu0 0.0
        %8265 = vmatpush1.msra.mxu0 %v8139
        %8266 = vmatprep.subr.mxu0 0.0
        %8267 = vmatpush1.msra.mxu0 %v8137
        %8268 = vmatprep.subr.mxu0 0.0
        %8269 = vmatpush1.msra.mxu0 %v8134
        %8270 = vmatprep.subr.mxu0 0.0
        %8271 = vmatpush1.msra.mxu0 %v8132
        %8272 = vmatprep.subr.mxu0 0.0
        %8273 = vmatpush1.msra.mxu0 %v8129
        %8274 = vmatprep.subr.mxu0 0.0
        %8275 = vmatpush1.msra.mxu0 %v8127
        %8276 = vmatprep.subr.mxu0 0.0
        %8277 = vmatpush1.msra.mxu0 %v8124
        %8278 = vmatprep.subr.mxu0 0.0
        %8279 = vmatpush1.msra.mxu0 %v8122
        %8280 = vmatprep.subr.mxu0 0.0
        %8281 = vmatpush2.msra.mxu0 %v8199
        %8282 = vmatprep.subr.mxu0 0.0
        %8283 = vmatpush2.msra.mxu0 %v8197
        %8284 = vmatprep.subr.mxu0 0.0
        %8285 = vmatpush2.msra.mxu0 %v8194
        %8286 = vmatprep.subr.mxu0 0.0
        %8287 = vmatpush2.msra.mxu0 %v8192
        %8288 = vmatprep.subr.mxu0 0.0
        %8289 = vmatpush2.msra.mxu0 %v8189
        %8290 = vmatprep.subr.mxu0 0.0
        %8291 = vmatpush2.msra.mxu0 %v8187
        %8292 = vmatprep.subr.mxu0 0.0
        %8293 = vmatpush2.msra.mxu0 %v8184
        %8294 = vmatprep.subr.mxu0 0.0
        %8295 = vmatpush2.msra.mxu0 %v8182
        %8296 = vmatprep.subr.mxu0 0.0
        %8297 = vmatpush2.msra.mxu0 %v8179
        %8298 = vmatprep.subr.mxu0 0.0
        %8299 = vmatpush2.msra.mxu0 %v8177
        %8300 = vmatprep.subr.mxu0 0.0
        %8301 = vmatpush2.msra.mxu0 %v8174
        %8302 = vmatprep.subr.mxu0 0.0
        %8303 = vmatpush2.msra.mxu0 %v8172
        %8304 = vmatprep.subr.mxu0 0.0
        %8305 = vmatpush2.msra.mxu0 %v8169
        %8306 = vmatprep.subr.mxu0 0.0
        %8307 = vmatpush2.msra.mxu0 %v8167
        %8308 = vmatprep.subr.mxu0 0.0
        %8309 = vmatpush2.msra.mxu0 %v8164
        %8310 = vmatprep.subr.mxu0 0.0
        %8311 = vmatpush2.msra.mxu0 %v8162
        %8312 = vmatprep.mubr.f32.mxu0 %v8233
        %8313 = vmatmul.mubr.f32.gmra.mxu0 %v8232
        %v8314 = vpop.f32.mrf.mxu0
        %v8315 = vadd.f32 0.0, %v8314
        %v8316 = vpop.f32.mrf.mxu0
        %8317 = vmatprep.mubr.f32.mxu0 %v8235
        %8318 = vmatmul.mubr.f32.gmra.mxu0 %v8234
        %v8319 = vpop.f32.mrf.mxu0
        %v8320 = vadd.f32 0.0, %v8319
        %v8321 = vpop.f32.mrf.mxu0
        %8322 = vmatprep.mubr.f32.mxu0 %v8237
        %8323 = vmatmul.mubr.f32.gmra.mxu0 %v8236
        %v8324 = vpop.f32.mrf.mxu0
        %v8325 = vadd.f32 0.0, %v8324
        %v8326 = vpop.f32.mrf.mxu0
        %8327 = vmatprep.mubr.f32.mxu0 %v8239
        %8328 = vmatmul.mubr.f32.gmra.mxu0 %v8238
        %v8329 = vpop.f32.mrf.mxu0
        %v8330 = vadd.f32 0.0, %v8329
        %v8331 = vpop.f32.mrf.mxu0
        %8332 = vmatprep.mubr.f32.mxu0 %v8241
        %8333 = vmatmul.mubr.f32.gmra.mxu0 %v8240
        %v8334 = vpop.f32.mrf.mxu0
        %v8335 = vadd.f32 0.0, %v8334
        %v8336 = vpop.f32.mrf.mxu0
        %8337 = vmatprep.mubr.f32.mxu0 %v8243
        %8338 = vmatmul.mubr.f32.gmra.mxu0 %v8242
        %v8339 = vpop.f32.mrf.mxu0
        %v8340 = vadd.f32 0.0, %v8339
        %v8341 = vpop.f32.mrf.mxu0
        %8342 = vmatprep.mubr.f32.mxu0 %v8245
        %8343 = vmatmul.mubr.f32.gmra.mxu0 %v8244
        %v8344 = vpop.f32.mrf.mxu0
        %v8345 = vadd.f32 0.0, %v8344
        %v8346 = vpop.f32.mrf.mxu0
        %8347 = vmatprep.mubr.f32.mxu0 %v8247
        %8348 = vmatmul.mubr.f32.gmra.mxu0 %v8246
        %v8349 = vpop.f32.mrf.mxu0
        %v8350 = vadd.f32 0.0, %v8349
        %v8351 = vpop.f32.mrf.mxu0
        %8352 = vdwg.mxu0
        %v8353 = vld [vmem:[%s17] sm:$0xff]
        %v8355 = vsel %vm3396, %v8353, 0
        %v8358 = vsel %vm3396, %v8315, 0
        %v8361 = vsel %vm3396, %v8320, 0
        %v8364 = vsel %vm3396, %v8325, 0
        %v8367 = vsel %vm3396, %v8330, 0
        %v8370 = vsel %vm3396, %v8335, 0
        %v8373 = vsel %vm3396, %v8340, 0
        %v8376 = vsel %vm3396, %v8345, 0
        %v8379 = vsel %vm3396, %v8350, 0
        %8381 = vmatprep.subr.mxu0 0.0
        %8382 = vmatpush1.xpose.msra.mxu0 0.0
        %8383 = vmatprep.subr.mxu0 0.0
        %8384 = vmatpush1.xpose.msra.mxu0 0.0
        %8385 = vmatprep.subr.mxu0 0.0
        %8386 = vmatpush1.xpose.msra.mxu0 0.0
        %8387 = vmatprep.subr.mxu0 0.0
        %8388 = vmatpush1.xpose.msra.mxu0 0.0
        %8389 = vmatprep.subr.mxu0 0.0
        %8390 = vmatpush1.xpose.msra.mxu0 0.0
        %8391 = vmatprep.subr.mxu0 0.0
        %8392 = vmatpush1.xpose.msra.mxu0 0.0
        %8393 = vmatprep.subr.mxu0 0.0
        %8394 = vmatpush1.xpose.msra.mxu0 0.0
        %8395 = vmatprep.subr.mxu0 0.0
        %8396 = vmatpush1.xpose.msra.mxu0 0.0
        %8397 = vmatprep.subr.mxu0 0.0
        %8398 = vmatpush1.xpose.msra.mxu0 %v8379
        %8399 = vmatprep.subr.mxu0 0.0
        %8400 = vmatpush1.xpose.msra.mxu0 %v8376
        %8401 = vmatprep.subr.mxu0 0.0
        %8402 = vmatpush1.xpose.msra.mxu0 %v8373
        %8403 = vmatprep.subr.mxu0 0.0
        %8404 = vmatpush1.xpose.msra.mxu0 %v8370
        %8405 = vmatprep.subr.mxu0 0.0
        %8406 = vmatpush1.xpose.msra.mxu0 %v8367
        %8407 = vmatprep.subr.mxu0 0.0
        %8408 = vmatpush1.xpose.msra.mxu0 %v8364
        %8409 = vmatprep.subr.mxu0 0.0
        %8410 = vmatpush1.xpose.msra.mxu0 %v8361
        %8411 = vmatprep.subr.mxu0 0.0
        %8412 = vmatpush1.xpose.msra.mxu0 %v8358
        %8413 = vmatprep.subr.mxu0 0.0
        %8414 = vmatpush2.xpose.msra.mxu0 0.0
        %8415 = vmatprep.subr.mxu0 0.0
        %8416 = vmatpush2.xpose.msra.mxu0 0.0
        %8417 = vmatprep.subr.mxu0 0.0
        %8418 = vmatpush2.xpose.msra.mxu0 0.0
        %8419 = vmatprep.subr.mxu0 0.0
        %8420 = vmatpush2.xpose.msra.mxu0 0.0
        %8421 = vmatprep.subr.mxu0 0.0
        %8422 = vmatpush2.xpose.msra.mxu0 0.0
        %8423 = vmatprep.subr.mxu0 0.0
        %8424 = vmatpush2.xpose.msra.mxu0 0.0
        %8425 = vmatprep.subr.mxu0 0.0
        %8426 = vmatpush2.xpose.msra.mxu0 0.0
        %8427 = vmatprep.subr.mxu0 0.0
        %8428 = vmatpush2.xpose.msra.mxu0 0.0
        %8429 = vmatprep.subr.mxu0 0.0
        %8430 = vmatpush2.xpose.msra.mxu0 0.0
        %8431 = vmatprep.subr.mxu0 0.0
        %8432 = vmatpush2.xpose.msra.mxu0 0.0
        %8433 = vmatprep.subr.mxu0 0.0
        %8434 = vmatpush2.xpose.msra.mxu0 0.0
        %8435 = vmatprep.subr.mxu0 0.0
        %8436 = vmatpush2.xpose.msra.mxu0 0.0
        %8437 = vmatprep.subr.mxu0 0.0
        %8438 = vmatpush2.xpose.msra.mxu0 0.0
        %8439 = vmatprep.subr.mxu0 0.0
        %8440 = vmatpush2.xpose.msra.mxu0 0.0
        %8441 = vmatprep.subr.mxu0 0.0
        %8442 = vmatpush2.xpose.msra.mxu0 0.0
        %8443 = vmatprep.subr.mxu0 0.0
        %8444 = vmatpush2.xpose.msra.mxu0 0.0
        %8445 = vmatprep.mubr.f32.mxu0 0.0
        %8446 = vmatmul.mubr.f32.gmra.mxu0 %v8355
        %v8447 = vpop.f32.mrf.mxu0
        %v8448 = vadd.f32 0.0, %v8447
        %v8449 = vpop.f32.mrf.mxu0
        %8450 = vdwg.mxu0
        %v8451 = vld [vmem:[%s18] sm:$0xff]
        %8453 = vset.pattern.permute.xlu0 0
        %8454 = vperm.xlu0 %8453, %v8451
        %v8455 = vpop.permute.xlu0 %8454
        %v8457 = vmul.f32 %v8448, %v8455
        %v8458 = vld [vmem:[%s19] sm:$0xff]
        %8460 = vset.pattern.permute.xlu0 0
        %8461 = vperm.xlu0 %8460, %v8458
        %v8462 = vpop.permute.xlu0 %8461
        %v8464 = vadd.f32 %v8457, %v8462
        %8465 = vmatprep.subr.mxu0 0.0
        %8466 = vmatpush1.msra.mxu0 %v724
        %8467 = vmatprep.subr.mxu0 0.0
        %8468 = vmatpush1.msra.mxu0 %v723
        %8469 = vmatprep.subr.mxu0 0.0
        %8470 = vmatpush1.msra.mxu0 %v722
        %8471 = vmatprep.subr.mxu0 0.0
        %8472 = vmatpush1.msra.mxu0 %v721
        %8473 = vmatprep.subr.mxu0 0.0
        %8474 = vmatpush1.msra.mxu0 %v720
        %8475 = vmatprep.subr.mxu0 0.0
        %8476 = vmatpush1.msra.mxu0 %v719
        %8477 = vmatprep.subr.mxu0 0.0
        %8478 = vmatpush1.msra.mxu0 %v718
        %8479 = vmatprep.subr.mxu0 0.0
        %8480 = vmatpush1.msra.mxu0 %v717
        %8481 = vmatprep.subr.mxu0 0.0
        %8482 = vmatpush1.msra.mxu0 %v716
        %8483 = vmatprep.subr.mxu0 0.0
        %8484 = vmatpush1.msra.mxu0 %v715
        %8485 = vmatprep.subr.mxu0 0.0
        %8486 = vmatpush1.msra.mxu0 %v714
        %8487 = vmatprep.subr.mxu0 0.0
        %8488 = vmatpush1.msra.mxu0 %v713
        %8489 = vmatprep.subr.mxu0 0.0
        %8490 = vmatpush1.msra.mxu0 %v712
        %8491 = vmatprep.subr.mxu0 0.0
        %8492 = vmatpush1.msra.mxu0 %v711
        %8493 = vmatprep.subr.mxu0 0.0
        %8494 = vmatpush1.msra.mxu0 %v710
        %8495 = vmatprep.subr.mxu0 0.0
        %8496 = vmatpush1.msra.mxu0 %v709
        %8497 = vmatprep.subr.mxu0 0.0
        %8498 = vmatpush2.msra.mxu0 %v740
        %8499 = vmatprep.subr.mxu0 0.0
        %8500 = vmatpush2.msra.mxu0 %v739
        %8501 = vmatprep.subr.mxu0 0.0
        %8502 = vmatpush2.msra.mxu0 %v738
        %8503 = vmatprep.subr.mxu0 0.0
        %8504 = vmatpush2.msra.mxu0 %v737
        %8505 = vmatprep.subr.mxu0 0.0
        %8506 = vmatpush2.msra.mxu0 %v736
        %8507 = vmatprep.subr.mxu0 0.0
        %8508 = vmatpush2.msra.mxu0 %v735
        %8509 = vmatprep.subr.mxu0 0.0
        %8510 = vmatpush2.msra.mxu0 %v734
        %8511 = vmatprep.subr.mxu0 0.0
        %8512 = vmatpush2.msra.mxu0 %v733
        %8513 = vmatprep.subr.mxu0 0.0
        %8514 = vmatpush2.msra.mxu0 %v732
        %8515 = vmatprep.subr.mxu0 0.0
        %8516 = vmatpush2.msra.mxu0 %v731
        %8517 = vmatprep.subr.mxu0 0.0
        %8518 = vmatpush2.msra.mxu0 %v730
        %8519 = vmatprep.subr.mxu0 0.0
        %8520 = vmatpush2.msra.mxu0 %v729
        %8521 = vmatprep.subr.mxu0 0.0
        %8522 = vmatpush2.msra.mxu0 %v728
        %8523 = vmatprep.subr.mxu0 0.0
        %8524 = vmatpush2.msra.mxu0 %v727
        %8525 = vmatprep.subr.mxu0 0.0
        %8526 = vmatpush2.msra.mxu0 %v726
        %8527 = vmatprep.subr.mxu0 0.0
        %8528 = vmatpush2.msra.mxu0 %v725
        %8529 = vmatprep.mubr.f32.mxu0 %v8233
        %8530 = vmatmul.mubr.f32.gmra.mxu0 %v8232
        %v8531 = vpop.f32.mrf.mxu0
        %v8532 = vadd.f32 0.0, %v8531
        %v8533 = vpop.f32.mrf.mxu0
        %8534 = vmatprep.mubr.f32.mxu0 %v8235
        %8535 = vmatmul.mubr.f32.gmra.mxu0 %v8234
        %v8536 = vpop.f32.mrf.mxu0
        %v8537 = vadd.f32 0.0, %v8536
        %v8538 = vpop.f32.mrf.mxu0
        %8539 = vmatprep.mubr.f32.mxu0 %v8237
        %8540 = vmatmul.mubr.f32.gmra.mxu0 %v8236
        %v8541 = vpop.f32.mrf.mxu0
        %v8542 = vadd.f32 0.0, %v8541
        %v8543 = vpop.f32.mrf.mxu0
        %8544 = vmatprep.mubr.f32.mxu0 %v8239
        %8545 = vmatmul.mubr.f32.gmra.mxu0 %v8238
        %v8546 = vpop.f32.mrf.mxu0
        %v8547 = vadd.f32 0.0, %v8546
        %v8548 = vpop.f32.mrf.mxu0
        %8549 = vmatprep.mubr.f32.mxu0 %v8241
        %8550 = vmatmul.mubr.f32.gmra.mxu0 %v8240
        %v8551 = vpop.f32.mrf.mxu0
        %v8552 = vadd.f32 0.0, %v8551
        %v8553 = vpop.f32.mrf.mxu0
        %8554 = vmatprep.mubr.f32.mxu0 %v8243
        %8555 = vmatmul.mubr.f32.gmra.mxu0 %v8242
        %v8556 = vpop.f32.mrf.mxu0
        %v8557 = vadd.f32 0.0, %v8556
        %v8558 = vpop.f32.mrf.mxu0
        %8559 = vmatprep.mubr.f32.mxu0 %v8245
        %8560 = vmatmul.mubr.f32.gmra.mxu0 %v8244
        %v8561 = vpop.f32.mrf.mxu0
        %v8562 = vadd.f32 0.0, %v8561
        %v8563 = vpop.f32.mrf.mxu0
        %8564 = vmatprep.mubr.f32.mxu0 %v8247
        %8565 = vmatmul.mubr.f32.gmra.mxu0 %v8246
        %v8566 = vpop.f32.mrf.mxu0
        %v8567 = vadd.f32 0.0, %v8566
        %v8568 = vpop.f32.mrf.mxu0
        %8569 = vdwg.mxu0
        %v8570 = vld [vmem:[%s20] sm:$0xff]
        %v8572 = vsel %vm782, %v8570, 0
        %v8575 = vsel %vm782, %v8532, 0
        %v8578 = vsel %vm782, %v8537, 0
        %v8581 = vsel %vm782, %v8542, 0
        %v8584 = vsel %vm782, %v8547, 0
        %v8587 = vsel %vm782, %v8552, 0
        %v8590 = vsel %vm782, %v8557, 0
        %v8593 = vsel %vm782, %v8562, 0
        %v8596 = vsel %vm782, %v8567, 0
        %8598 = vmatprep.subr.mxu0 0.0
        %8599 = vmatpush1.xpose.msra.mxu0 0.0
        %8600 = vmatprep.subr.mxu0 0.0
        %8601 = vmatpush1.xpose.msra.mxu0 0.0
        %8602 = vmatprep.subr.mxu0 0.0
        %8603 = vmatpush1.xpose.msra.mxu0 0.0
        %8604 = vmatprep.subr.mxu0 0.0
        %8605 = vmatpush1.xpose.msra.mxu0 0.0
        %8606 = vmatprep.subr.mxu0 0.0
        %8607 = vmatpush1.xpose.msra.mxu0 0.0
        %8608 = vmatprep.subr.mxu0 0.0
        %8609 = vmatpush1.xpose.msra.mxu0 0.0
        %8610 = vmatprep.subr.mxu0 0.0
        %8611 = vmatpush1.xpose.msra.mxu0 0.0
        %8612 = vmatprep.subr.mxu0 0.0
        %8613 = vmatpush1.xpose.msra.mxu0 0.0
        %8614 = vmatprep.subr.mxu0 0.0
        %8615 = vmatpush1.xpose.msra.mxu0 %v8596
        %8616 = vmatprep.subr.mxu0 0.0
        %8617 = vmatpush1.xpose.msra.mxu0 %v8593
        %8618 = vmatprep.subr.mxu0 0.0
        %8619 = vmatpush1.xpose.msra.mxu0 %v8590
        %8620 = vmatprep.subr.mxu0 0.0
        %8621 = vmatpush1.xpose.msra.mxu0 %v8587
        %8622 = vmatprep.subr.mxu0 0.0
        %8623 = vmatpush1.xpose.msra.mxu0 %v8584
        %8624 = vmatprep.subr.mxu0 0.0
        %8625 = vmatpush1.xpose.msra.mxu0 %v8581
        %8626 = vmatprep.subr.mxu0 0.0
        %8627 = vmatpush1.xpose.msra.mxu0 %v8578
        %8628 = vmatprep.subr.mxu0 0.0
        %8629 = vmatpush1.xpose.msra.mxu0 %v8575
        %8630 = vmatprep.subr.mxu0 0.0
        %8631 = vmatpush2.xpose.msra.mxu0 0.0
        %8632 = vmatprep.subr.mxu0 0.0
        %8633 = vmatpush2.xpose.msra.mxu0 0.0
        %8634 = vmatprep.subr.mxu0 0.0
        %8635 = vmatpush2.xpose.msra.mxu0 0.0
        %8636 = vmatprep.subr.mxu0 0.0
        %8637 = vmatpush2.xpose.msra.mxu0 0.0
        %8638 = vmatprep.subr.mxu0 0.0
        %8639 = vmatpush2.xpose.msra.mxu0 0.0
        %8640 = vmatprep.subr.mxu0 0.0
        %8641 = vmatpush2.xpose.msra.mxu0 0.0
        %8642 = vmatprep.subr.mxu0 0.0
        %8643 = vmatpush2.xpose.msra.mxu0 0.0
        %8644 = vmatprep.subr.mxu0 0.0
        %8645 = vmatpush2.xpose.msra.mxu0 0.0
        %8646 = vmatprep.subr.mxu0 0.0
        %8647 = vmatpush2.xpose.msra.mxu0 0.0
        %8648 = vmatprep.subr.mxu0 0.0
        %8649 = vmatpush2.xpose.msra.mxu0 0.0
        %8650 = vmatprep.subr.mxu0 0.0
        %8651 = vmatpush2.xpose.msra.mxu0 0.0
        %8652 = vmatprep.subr.mxu0 0.0
        %8653 = vmatpush2.xpose.msra.mxu0 0.0
        %8654 = vmatprep.subr.mxu0 0.0
        %8655 = vmatpush2.xpose.msra.mxu0 0.0
        %8656 = vmatprep.subr.mxu0 0.0
        %8657 = vmatpush2.xpose.msra.mxu0 0.0
        %8658 = vmatprep.subr.mxu0 0.0
        %8659 = vmatpush2.xpose.msra.mxu0 0.0
        %8660 = vmatprep.subr.mxu0 0.0
        %8661 = vmatpush2.xpose.msra.mxu0 0.0
        %8662 = vmatprep.mubr.f32.mxu0 0.0
        %8663 = vmatmul.mubr.f32.gmra.mxu0 %v8572
        %v8664 = vpop.f32.mrf.mxu0
        %v8665 = vadd.f32 0.0, %v8664
        %v8666 = vpop.f32.mrf.mxu0
        %8667 = vdwg.mxu0
        %v8668 = vld [vmem:[%s21] sm:$0xff]
        %8670 = vset.pattern.permute.xlu0 0
        %8671 = vperm.xlu0 %8670, %v8668
        %v8672 = vpop.permute.xlu0 %8671
        %v8674 = vmul.f32 %v8665, %v8672
        %v8675 = vadd.f32 %v8464, %v8674
        %v8676 = vld [vmem:[%s22] sm:$0xff]
        %8678 = vset.pattern.permute.xlu0 0
        %8679 = vperm.xlu0 %8678, %v8676
        %v8680 = vpop.permute.xlu0 %8679
        %v8682 = vadd.f32 %v8675, %v8680
        %vm8683 = vcmask 523264
        %8684 = vst.msk [vmem:[%s703] sm:$0xff] %vm8683, %v8682
        %s8685 = sand.u32 %s533, 1
        %s8686 = scalar_lea.sflag [#allocation6], %s8685
        %s8687 = sand.u32 %s533, 1
        %s8688 = smul.addr %s8687, 8
        %s8689 = scalar_lea.vmem [#allocation5], %s8688
        // Predicated region
        $region113: #{tpu_custom_call.1} parent=111 // pred_check
          %p8690 = pneg %p543
        $region114: #{tpu_custom_call.1} parent=111 // pred_check_branch
          %8692 = sbr.rel (%p8690) target = $region116
        $region115: #{tpu_custom_call.1} parent=111 // pred_region
          %s8694 = ssub.s32 128, 128
          %8695 = vsyncadd %s8686, %s8694
          %s8696 = smul.addr %s37, 128
          %s8697 = scalar_lea.hbm %s23, %s8696
          %s8699 = sshll.u32 %s8689, 4
          %s8700 = int_to_ptr.vmem [resolvable:$true] %s8699
          %8702 = dma.vmem_to_hbm [thread:$0]  %s8700, 128, %s8697, %s8686
        $region116: #{tpu_custom_call.1} parent=111 // pred_fallthru
          _
      $region112: #{tpu_custom_call.1} parent=5 // pred_fallthru
        _
      %p8703 = scmp.le.s32.totalorder 2, %s32
      // Predicated region
      $region117: #{tpu_custom_call.1} parent=5 // pred_check
        %p8704 = pneg %p8703
      $region118: #{tpu_custom_call.1} parent=5 // pred_check_branch
        %8706 = sbr.rel (%p8704) target = $region120
      $region119: #{tpu_custom_call.1} parent=5 // pred_region
        %s8707 = ssub.s32 %s32, 2
        // Predicated region
        $region121: #{tpu_custom_call.1} parent=119 // pred_check
          %p8708 = pneg %p549
        $region122: #{tpu_custom_call.1} parent=119 // pred_check_branch
          %8710 = sbr.rel (%p8708) target = $region124
        $region123: #{tpu_custom_call.1} parent=119 // pred_region
          %s8711 = sand.u32 %s534, 1
          %s8712 = scalar_lea.sflag [#allocation6], %s8711
          %s8713 = sand.u32 %s534, 1
          %s8714 = smul.addr %s8713, 8
          %s8715 = scalar_lea.vmem [#allocation5], %s8714
          %8716 = dma.done %s8712, 128
        $region124: #{tpu_custom_call.1} parent=119 // pred_fallthru
          _
      $region120: #{tpu_custom_call.1} parent=5 // pred_fallthru
        _
    $region6: #{tpu_custom_call.1} parent=1 // loop_footer
      %s36 = sadd.s32 1, %s32
    $region7: #{tpu_custom_call.1} parent=1 // loop_footer_branch
      %31 = sbr.rel target = $region3
    $region8: #{tpu_custom_call.1} parent=1 // loop_exit
      _
    %8717 = vsyncpa [#allocation6], 1
    %s8718 = scalar_lea.sflag [#allocation6], 1
    %8719 = vsyncpa %s8718, 1

</llo_original>
